<compile_context>
chip_gen: v7x
topology: tpu7x:2x2x1
jax: 0.10.0
libtpu: 0.0.40
codegen_flags: <defaults>
</compile_context>

<pallas_src>
import functools

import jax
import jax.numpy as jnp
from jax import lax
from jax.experimental import pallas as pl
from jax.experimental.pallas import tpu as pltpu

VMEM_LIMIT = 32 * 1024 * 1024  # safe scoped-VMEM limit on v5e/v6e/v7x


# ---------------------------------------------------------------------------
# Kernel 1: fused query + key/value projection (two 1x1 convs in one pass)
# ---------------------------------------------------------------------------
def _proj_kernel(xo_ref, xt_ref, wq_ref, bq_ref, wkv_ref, bkv_ref,
                 q_ref, kv_ref):
    q = jnp.dot(xo_ref[...], wq_ref[...],
                preferred_element_type=jnp.float32) + bq_ref[...]
    kv = jnp.dot(xt_ref[...], wkv_ref[...],
                 preferred_element_type=jnp.float32) + bkv_ref[...]
    q_ref[...] = q.astype(q_ref.dtype)
    kv_ref[...] = kv.astype(kv_ref.dtype)


def project_qkv(xo, xt, wq, bq, wkv, bkv, *, tm=1024):
    """xo, xt: (M, C) channels-last pixels -> q:(M, IC), kv:(M, 2*IC)."""
    M, C = xo.shape
    IC = wq.shape[1]
    tm = min(tm, M)
    while M % tm:          # dividing tile: no pad copy, no masked tail block
        tm //= 2
    return pl.pallas_call(
        _proj_kernel,
        out_shape=(jax.ShapeDtypeStruct((M, IC), xo.dtype),
                   jax.ShapeDtypeStruct((M, 2 * IC), xo.dtype)),
        grid=(M // tm,),
        in_specs=[
            pl.BlockSpec((tm, C), lambda i: (i, 0)),
            pl.BlockSpec((tm, C), lambda i: (i, 0)),
            pl.BlockSpec((C, IC), lambda i: (0, 0)),        # weights resident
            pl.BlockSpec((1, IC), lambda i: (0, 0)),
            pl.BlockSpec((C, 2 * IC), lambda i: (0, 0)),
            pl.BlockSpec((1, 2 * IC), lambda i: (0, 0)),
        ],
        out_specs=(pl.BlockSpec((tm, IC), lambda i: (i, 0)),
                   pl.BlockSpec((tm, 2 * IC), lambda i: (i, 0))),
        compiler_params=pltpu.CompilerParams(
            dimension_semantics=("parallel",),
            vmem_limit_bytes=VMEM_LIMIT),
    )(xo, xt, wq, bq.reshape(1, IC), wkv, bkv.reshape(1, 2 * IC))


# ---------------------------------------------------------------------------
# Kernel 2: per-window multi-head attention with prepended global tokens,
#           fused with the W_z + BatchNorm(eval) epilogue.
# ---------------------------------------------------------------------------
def _attn_kernel(gt_ref, q_ref, kv_ref, wz_ref, shift_ref, z_ref, aw_ref, *,
                 num_heads, head_dim, num_global, scale):
    ws = q_ref.shape[1]
    IC = num_heads * head_dim
    N = ws * ws
    C = z_ref.shape[-1]

    # window tokens; heads stay folded in the channel axis
    qw = q_ref[...][0, :, 0].reshape(N, IC)            # (N, IC)
    kvw = kv_ref[...][0, :, 0].reshape(N, 2 * IC)      # (N, 2*IC)
    gt = gt_ref[...]                                    # (G, IC)

    qf = jnp.concatenate([gt, qw], axis=0) * scale      # pre-scaled q, (T, IC)
    kf = jnp.concatenate([gt, kvw[:, :IC]], axis=0)     # (T, IC)
    vf = jnp.concatenate([gt, kvw[:, IC:]], axis=0)     # (T, IC)

    # per-head QK^T via static lane slices, stacked on a leading axis
    # -> ONE softmax, ONE aw store (no per-head softmax / per-head aw stores)
    scores = [
        lax.dot_general(qf[:, h * head_dim:(h + 1) * head_dim],
                        kf[:, h * head_dim:(h + 1) * head_dim],
                        (((1,), (1,)), ((), ())),
                        preferred_element_type=jnp.float32)
        for h in range(num_heads)
    ]
    s = jnp.stack(scores, axis=0)                        # (nh, T, T)
    s = s - jnp.max(s, axis=-1, keepdims=True)
    p = jnp.exp(s)
    p = p * pl.reciprocal(jnp.sum(p, axis=-1, keepdims=True), approx=True)
    aw_ref[...] = p.reshape(aw_ref.shape)

    # P @ V batched over heads; global-token query rows dropped pre-matmul
    vh = jnp.stack(
        [vf[:, h * head_dim:(h + 1) * head_dim] for h in range(num_heads)],
        axis=0)                                          # (nh, T, hd)
    o = lax.dot_general(p[:, num_global:, :], vh,
                        (((2,), (1,)), ((0,), (0,))),
                        preferred_element_type=jnp.float32)  # (nh, N, hd)

    # fused W_z + BN epilogue: z = sum_h o_h @ Wz_h + shift
    # (no HBM round trip of o, no 4-lane channel concatenate)
    wz = wz_ref[...]                                     # (IC, C)
    acc = jnp.zeros((N, C), jnp.float32)
    for h in range(num_heads):
        acc = acc + jnp.dot(o[h], wz[h * head_dim:(h + 1) * head_dim, :],
                            preferred_element_type=jnp.float32)
    z = acc + shift_ref[...]
    z_ref[...] = z.reshape(z_ref.shape).astype(z_ref.dtype)


def window_attention(q5, kv5, gt, wz_eff, shift, *, num_heads, head_dim,
                     num_global):
    """q5:(B*nwh, ws, nww, ws, IC), kv5:(..., 2*IC) -> z5, aw5."""
    BR, ws, nww, _, IC = q5.shape
    C = wz_eff.shape[1]
    T = num_global + ws * ws
    kernel = functools.partial(
        _attn_kernel, num_heads=num_heads, head_dim=head_dim,
        num_global=num_global, scale=head_dim ** (-0.5))
    return pl.pallas_call(
        kernel,
        out_shape=(
            jax.ShapeDtypeStruct((BR, ws, nww, ws, C), q5.dtype),
            jax.ShapeDtypeStruct((BR, nww, num_heads, T, T), jnp.float32),
        ),
        grid=(BR, nww),
        in_specs=[
            pl.BlockSpec((num_global, IC), lambda i, j: (0, 0)),   # resident
            pl.BlockSpec((1, ws, 1, ws, IC), lambda i, j: (i, 0, j, 0, 0)),
            pl.BlockSpec((1, ws, 1, ws, 2 * IC), lambda i, j: (i, 0, j, 0, 0)),
            pl.BlockSpec((IC, C), lambda i, j: (0, 0)),            # resident
            pl.BlockSpec((1, C), lambda i, j: (0, 0)),             # resident
        ],
        out_specs=(
            pl.BlockSpec((1, ws, 1, ws, C), lambda i, j: (i, 0, j, 0, 0)),
            pl.BlockSpec((1, 1, num_heads, T, T), lambda i, j: (i, j, 0, 0, 0)),
        ),
        compiler_params=pltpu.CompilerParams(
            dimension_semantics=("parallel", "parallel"),
            vmem_limit_bytes=VMEM_LIMIT),
    )(gt, q5, kv5, wz_eff, shift)


# ---------------------------------------------------------------------------
# Module forward (wrapper: only the unavoidable NCHW<->NHWC transposes)
# ---------------------------------------------------------------------------
def nonlocal_block_forward(x_this, x_other, p, *, num_heads, window_size,
                           num_global_tokens):
    B, C, H, W = x_this.shape
    IC = p["q_w"].shape[1]
    hd = IC // num_heads
    ws = window_size
    G = num_global_tokens
    assert H % ws == 0 and W % ws == 0 and IC % num_heads == 0
    nwh, nww = H // ws, W // ws
    N = ws * ws
    T = G + N
    M = B * H * W

    # channels-last pixel rows (1x1 convs commute with window partitioning)
    xt = jnp.transpose(x_this, (0, 2, 3, 1)).reshape(M, C)
    xo = jnp.transpose(x_other, (0, 2, 3, 1)).reshape(M, C)

    q, kv = project_qkv(xo, xt, p["q_w"], p["q_b"], p["kv_w"], p["kv_b"])

    # free views exposing windows as rectangular tiles for the BlockSpecs
    q5 = q.reshape(B * nwh, ws, nww, ws, IC)
    kv5 = kv.reshape(B * nwh, ws, nww, ws, 2 * IC)

    # global tokens folded to the (G, IC = nh*hd) channel layout used
    # in-kernel; reproduces the PyTorch view(B_win, nh, G, hd) semantics.
    gt = (p["global_tokens"].reshape(num_heads, G, hd)
          .transpose(1, 0, 2).reshape(G, IC))

    # eval-mode BatchNorm folded into W_z as a per-channel affine
    # TODO(synk): training-mode BatchNorm (batch statistics) not implemented.
    bn_scale = p["bn_g"] * jax.lax.rsqrt(p["bn_rv"] + 1e-5)
    wz_eff = p["wz_w"] * bn_scale[None, :]
    shift = (p["bn_b"] - p["bn_rm"] * bn_scale).reshape(1, C)

    z5, aw5 = window_attention(q5, kv5, gt, wz_eff, shift,
                               num_heads=num_heads, head_dim=hd, num_global=G)

    # window un-partition back to (B, C, H, W); single fused XLA copy
    z = (z5.reshape(B, nwh, ws, nww, ws, C)
         .transpose(0, 5, 1, 2, 3, 4).reshape(B, C, H, W))
    aw = aw5.reshape(B * nwh * nww, num_heads, T, T)
    return z, aw


# ---------------------------------------------------------------------------
# Pure-JAX reference (mirrors the PyTorch forward, channels-first)
# ---------------------------------------------------------------------------
def reference_forward(x_this, x_other, p, *, num_heads, window_size,
                      num_global_tokens):
    B, C, H, W = x_this.shape
    IC = p["q_w"].shape[1]
    hd = IC // num_heads
    ws = window_size
    G = num_global_tokens
    hp = jax.lax.Precision.HIGHEST

    def conv1x1(x, w, b):
        return jnp.einsum('bchw,cd->bdhw', x, w, precision=hp) + b[None, :, None, None]

    def wpart(x):
        nwh, nww = H // ws, W // ws
        x = x.reshape(B, -1, nwh, ws, nww, ws).transpose(0, 2, 4, 1, 3, 5)
        return x.reshape(B * nwh * nww, -1, ws, ws)

    xtw, xow = wpart(x_this), wpart(x_other)
    q = conv1x1(xow, p["q_w"], p["q_b"])
    k = conv1x1(xtw, p["kv_w"][:, :IC], p["kv_b"][:IC])
    v = conv1x1(xtw, p["kv_w"][:, IC:], p["kv_b"][IC:])
    Bw = q.shape[0]
    N = ws * ws

    def split_heads(t):
        return t.reshape(Bw, num_heads, hd, N).transpose(0, 1, 3, 2)

    q, k, v = split_heads(q), split_heads(k), split_heads(v)
    g = jnp.broadcast_to(p["global_tokens"][None], (Bw, G, IC))
    g = g.reshape(Bw, num_heads, G, hd)
    q = jnp.concatenate([g, q], axis=2)
    k = jnp.concatenate([g, k], axis=2)
    v = jnp.concatenate([g, v], axis=2)
    s = jnp.einsum('bhtd,bhsd->bhts', q, k, precision=hp) / (hd ** 0.5)
    aw = jax.nn.softmax(s, axis=-1)
    out = jnp.einsum('bhts,bhsd->bhtd', aw, v, precision=hp)[:, :, G:, :]
    out = out.transpose(0, 1, 3, 2).reshape(Bw, IC, ws, ws)
    nwh, nww = H // ws, W // ws
    xu = out.reshape(B, nwh, nww, IC, ws, ws).transpose(0, 3, 1, 4, 2, 5)
    xu = xu.reshape(B, IC, H, W)
    zc = jnp.einsum('bchw,cd->bdhw', xu, p["wz_w"], precision=hp)
    bn_scale = p["bn_g"] / jnp.sqrt(p["bn_rv"] + 1e-5)
    z = (zc * bn_scale[None, :, None, None]
         + (p["bn_b"] - p["bn_rm"] * bn_scale)[None, :, None, None])
    return z, aw


# ---------------------------------------------------------------------------
# Deterministic parameter init (shapes mirror the PyTorch module)
# ---------------------------------------------------------------------------
def init_params(key, in_channels, inter_channels, num_global_tokens):
    ks = jax.random.split(key, 10)
    std = 0.15
    # NOTE: the PyTorch module initializes the BatchNorm weight/bias to 0
    # (which would make z identically zero); nonzero values are used here so
    # the correctness check exercises the whole W_z + BN path.
    return {
        "q_w": jax.random.normal(ks[0], (in_channels, inter_channels), jnp.float32) * std,
        "q_b": jax.random.normal(ks[1], (inter_channels,), jnp.float32) * std,
        "kv_w": jax.random.normal(ks[2], (in_channels, 2 * inter_channels), jnp.float32) * std,
        "kv_b": jax.random.normal(ks[3], (2 * inter_channels,), jnp.float32) * std,
        "global_tokens": jax.random.normal(ks[4], (num_global_tokens, inter_channels), jnp.float32),
        "wz_w": jax.random.normal(ks[5], (inter_channels, in_channels), jnp.float32) * std,
        "bn_g": 1.0 + 0.1 * jax.random.normal(ks[6], (in_channels,), jnp.float32),
        "bn_b": 0.1 * jax.random.normal(ks[7], (in_channels,), jnp.float32),
        "bn_rm": 0.1 * jax.random.normal(ks[8], (in_channels,), jnp.float32),
        "bn_rv": 0.5 + jax.random.uniform(ks[9], (in_channels,), jnp.float32),
    }


if __name__ == "__main__":
    B, C, H, W = 2, 32, 32, 32
    num_heads, window_size, num_global_tokens = 4, 8, 1
    inter_channels = C // 2                      # 16, head_dim = 4
    T = window_size * window_size + num_global_tokens
    B_win = B * (H // window_size) * (W // window_size)

    key = jax.random.PRNGKey(0)
    k1, k2, kp = jax.random.split(key, 3)
    x_this = jax.random.normal(k1, (B, C, H, W), jnp.float32)
    x_other = jax.random.normal(k2, (B, C, H, W), jnp.float32)
    params = init_params(kp, C, inter_channels, num_global_tokens)

    fwd = jax.jit(functools.partial(
        nonlocal_block_forward, num_heads=num_heads, window_size=window_size,
        num_global_tokens=num_global_tokens))
    z, aw = fwd(x_this, x_other, params)
    jax.block_until_ready((z, aw))

    z_ref, aw_ref = reference_forward(
        x_this, x_other, params, num_heads=num_heads, window_size=window_size,
        num_global_tokens=num_global_tokens)

    assert z.shape == (B, C, H, W), z.shape
    assert aw.shape == (B_win, num_heads, T, T), aw.shape
    # tolerance accommodates the EUP approximate reciprocal in the softmax
    # (<= ~2^-12 rel.) and MXU f32 pass-ordering vs. the HIGHEST reference.
    assert jnp.allclose(z, z_ref, rtol=2e-3, atol=2e-3), \
        float(jnp.max(jnp.abs(z - z_ref)))
    assert jnp.allclose(aw, aw_ref, rtol=2e-3, atol=2e-3), \
        float(jnp.max(jnp.abs(aw - aw_ref)))

    print("KERNEL_OK")
</pallas_src>

<mosaic_0001>
module attributes {stable_mosaic.version = 11 : i64} {
  func.func @_proj_kernel(%arg0: i32, %arg1: memref<1024x32xf32, #tpu.memory_space<vmem>>, %arg2: memref<1024x32xf32, #tpu.memory_space<vmem>>, %arg3: memref<32x16xf32, #tpu.memory_space<vmem>>, %arg4: memref<1x16xf32, #tpu.memory_space<vmem>>, %arg5: memref<32x32xf32, #tpu.memory_space<vmem>>, %arg6: memref<1x32xf32, #tpu.memory_space<vmem>>, %arg7: memref<1024x16xf32, #tpu.memory_space<vmem>>, %arg8: memref<1024x32xf32, #tpu.memory_space<vmem>>) attributes {dimension_semantics = [#tpu.dimension_semantics<parallel>], iteration_bounds = array<i64: 2>, scalar_prefetch = 0 : i64, scratch_operands = 0 : i64, tpu.core_type = #tpu.core_type<tc>, window_params = [{transform_indices = @transform_0, window_bounds = array<i64: 1024, 32>}, {transform_indices = @transform_1, window_bounds = array<i64: 1024, 32>}, {pipeline_mode = #tpu.pipeline_mode<synchronous>, transform_indices = @transform_2, window_bounds = array<i64: 32, 16>}, {pipeline_mode = #tpu.pipeline_mode<synchronous>, transform_indices = @transform_3, window_bounds = array<i64: 1, 16>}, {pipeline_mode = #tpu.pipeline_mode<synchronous>, transform_indices = @transform_4, window_bounds = array<i64: 32, 32>}, {pipeline_mode = #tpu.pipeline_mode<synchronous>, transform_indices = @transform_5, window_bounds = array<i64: 1, 32>}, {transform_indices = @transform_6, window_bounds = array<i64: 1024, 16>}, {transform_indices = @transform_7, window_bounds = array<i64: 1024, 32>}]} {
    %c0 = arith.constant 0 : index
    %c0_0 = arith.constant 0 : index
    %0 = vector.load %arg1[%c0, %c0_0] : memref<1024x32xf32, #tpu.memory_space<vmem>>, vector<1024x32xf32>
    %c0_1 = arith.constant 0 : index
    %c0_2 = arith.constant 0 : index
    %1 = vector.load %arg3[%c0_1, %c0_2] : memref<32x16xf32, #tpu.memory_space<vmem>>, vector<32x16xf32>
    %cst = arith.constant dense<0.000000e+00> : vector<1024x16xf32>
    %2 = tpu.matmul %0, %1, %cst {dimension_numbers = #tpu.dot_dimension_numbers<[1], [0], [0], [1], [0, 0, 1, 1], [], []>} : vector<1024x32xf32>, vector<32x16xf32>, vector<1024x16xf32> -> vector<1024x16xf32>
    %c0_3 = arith.constant 0 : index
    %c0_4 = arith.constant 0 : index
    %3 = vector.load %arg4[%c0_3, %c0_4] : memref<1x16xf32, #tpu.memory_space<vmem>>, vector<1x16xf32>
    %4 = vector.broadcast %3 : vector<1x16xf32> to vector<1024x16xf32>
    %5 = arith.addf %2, %4 : vector<1024x16xf32>
    %c0_5 = arith.constant 0 : index
    %c0_6 = arith.constant 0 : index
    %6 = vector.load %arg2[%c0_5, %c0_6] : memref<1024x32xf32, #tpu.memory_space<vmem>>, vector<1024x32xf32>
    %c0_7 = arith.constant 0 : index
    %c0_8 = arith.constant 0 : index
    %7 = vector.load %arg5[%c0_7, %c0_8] : memref<32x32xf32, #tpu.memory_space<vmem>>, vector<32x32xf32>
    %cst_9 = arith.constant dense<0.000000e+00> : vector<1024x32xf32>
    %8 = tpu.matmul %6, %7, %cst_9 {dimension_numbers = #tpu.dot_dimension_numbers<[1], [0], [0], [1], [0, 0, 1, 1], [], []>} : vector<1024x32xf32>, vector<32x32xf32>, vector<1024x32xf32> -> vector<1024x32xf32>
    %c0_10 = arith.constant 0 : index
    %c0_11 = arith.constant 0 : index
    %9 = vector.load %arg6[%c0_10, %c0_11] : memref<1x32xf32, #tpu.memory_space<vmem>>, vector<1x32xf32>
    %10 = vector.broadcast %9 : vector<1x32xf32> to vector<1024x32xf32>
    %11 = arith.addf %8, %10 : vector<1024x32xf32>
    %c0_12 = arith.constant 0 : index
    %c0_13 = arith.constant 0 : index
    %12 = vector.load %arg7[%c0_12, %c0_13] : memref<1024x16xf32, #tpu.memory_space<vmem>>, vector<1024x16xf32>
    tpu.vector_store %arg7[%c0_12, %c0_13], %5 {strides = array<i32>} : memref<1024x16xf32, #tpu.memory_space<vmem>>, vector<1024x16xf32>,
    %c0_14 = arith.constant 0 : index
    %c0_15 = arith.constant 0 : index
    %13 = vector.load %arg8[%c0_14, %c0_15] : memref<1024x32xf32, #tpu.memory_space<vmem>>, vector<1024x32xf32>
    tpu.vector_store %arg8[%c0_14, %c0_15], %11 {strides = array<i32>} : memref<1024x32xf32, #tpu.memory_space<vmem>>, vector<1024x32xf32>,
    return
  }
  func.func @transform_0(%arg0: i32) -> (i32, i32) {
    %c0_i32 = arith.constant 0 : i32
    %c0_i32_0 = arith.constant 0 : i32
    return %arg0, %c0_i32 : i32, i32
  }
  func.func @transform_1(%arg0: i32) -> (i32, i32) {
    %c0_i32 = arith.constant 0 : i32
    %c0_i32_0 = arith.constant 0 : i32
    return %arg0, %c0_i32 : i32, i32
  }
  func.func @transform_2(%arg0: i32) -> (i32, i32) {
    %c0_i32 = arith.constant 0 : i32
    %c0_i32_0 = arith.constant 0 : i32
    %c0_i32_1 = arith.constant 0 : i32
    return %c0_i32, %c0_i32_0 : i32, i32
  }
  func.func @transform_3(%arg0: i32) -> (i32, i32) {
    %c0_i32 = arith.constant 0 : i32
    %c0_i32_0 = arith.constant 0 : i32
    %c0_i32_1 = arith.constant 0 : i32
    return %c0_i32, %c0_i32_0 : i32, i32
  }
  func.func @transform_4(%arg0: i32) -> (i32, i32) {
    %c0_i32 = arith.constant 0 : i32
    %c0_i32_0 = arith.constant 0 : i32
    %c0_i32_1 = arith.constant 0 : i32
    return %c0_i32, %c0_i32_0 : i32, i32
  }
  func.func @transform_5(%arg0: i32) -> (i32, i32) {
    %c0_i32 = arith.constant 0 : i32
    %c0_i32_0 = arith.constant 0 : i32
    %c0_i32_1 = arith.constant 0 : i32
    return %c0_i32, %c0_i32_0 : i32, i32
  }
  func.func @transform_6(%arg0: i32) -> (i32, i32) {
    %c0_i32 = arith.constant 0 : i32
    %c0_i32_0 = arith.constant 0 : i32
    return %arg0, %c0_i32 : i32, i32
  }
  func.func @transform_7(%arg0: i32) -> (i32, i32) {
    %c0_i32 = arith.constant 0 : i32
    %c0_i32_0 = arith.constant 0 : i32
    return %arg0, %c0_i32 : i32, i32
  }
}

module attributes {stable_mosaic.version = 11 : i64} {
  func.func @_attn_kernel(%arg0: i32, %arg1: i32, %arg2: memref<1x16xf32, #tpu.memory_space<vmem>>, %arg3: memref<1x8x1x8x16xf32, #tpu.memory_space<vmem>>, %arg4: memref<1x8x1x8x32xf32, #tpu.memory_space<vmem>>, %arg5: memref<16x32xf32, #tpu.memory_space<vmem>>, %arg6: memref<1x32xf32, #tpu.memory_space<vmem>>, %arg7: memref<1x8x1x8x32xf32, #tpu.memory_space<vmem>>, %arg8: memref<1x1x4x65x65xf32, #tpu.memory_space<vmem>>) attributes {dimension_semantics = [#tpu.dimension_semantics<parallel>, #tpu.dimension_semantics<parallel>], iteration_bounds = array<i64: 8, 4>, scalar_prefetch = 0 : i64, scratch_operands = 0 : i64, tpu.core_type = #tpu.core_type<tc>, window_params = [{pipeline_mode = #tpu.pipeline_mode<synchronous>, transform_indices = @transform_0, window_bounds = array<i64: 1, 16>}, {transform_indices = @transform_1, window_bounds = array<i64: 1, 8, 1, 8, 16>}, {transform_indices = @transform_2, window_bounds = array<i64: 1, 8, 1, 8, 32>}, {pipeline_mode = #tpu.pipeline_mode<synchronous>, transform_indices = @transform_3, window_bounds = array<i64: 16, 32>}, {pipeline_mode = #tpu.pipeline_mode<synchronous>, transform_indices = @transform_4, window_bounds = array<i64: 1, 32>}, {transform_indices = @transform_5, window_bounds = array<i64: 1, 8, 1, 8, 32>}, {transform_indices = @transform_6, window_bounds = array<i64: 1, 1, 4, 65, 65>}]} {
    %c0 = arith.constant 0 : index
    %c0_0 = arith.constant 0 : index
    %c0_1 = arith.constant 0 : index
    %c0_2 = arith.constant 0 : index
    %c0_3 = arith.constant 0 : index
    %0 = vector.load %arg3[%c0, %c0_0, %c0_1, %c0_2, %c0_3] : memref<1x8x1x8x16xf32, #tpu.memory_space<vmem>>, vector<1x8x1x8x16xf32>
    %1 = vector.shape_cast %0 : vector<1x8x1x8x16xf32> to vector<8x8x16xf32>
    %2 = vector.shape_cast %1 : vector<8x8x16xf32> to vector<64x16xf32>
    %c0_4 = arith.constant 0 : index
    %c0_5 = arith.constant 0 : index
    %c0_6 = arith.constant 0 : index
    %c0_7 = arith.constant 0 : index
    %c0_8 = arith.constant 0 : index
    %3 = vector.load %arg4[%c0_4, %c0_5, %c0_6, %c0_7, %c0_8] : memref<1x8x1x8x32xf32, #tpu.memory_space<vmem>>, vector<1x8x1x8x32xf32>
    %4 = vector.shape_cast %3 : vector<1x8x1x8x32xf32> to vector<8x8x32xf32>
    %5 = vector.shape_cast %4 : vector<8x8x32xf32> to vector<64x32xf32>
    %c0_9 = arith.constant 0 : index
    %c0_10 = arith.constant 0 : index
    %6 = vector.load %arg2[%c0_9, %c0_10] : memref<1x16xf32, #tpu.memory_space<vmem>>, vector<1x16xf32>
    %7 = tpu.concatenate %6, %2 in 0 : vector<1x16xf32>, vector<64x16xf32> -> vector<65x16xf32>
    %cst = arith.constant 5.000000e-01 : f32
    %8 = vector.broadcast %cst : f32 to vector<65x16xf32>
    %9 = arith.mulf %7, %8 : vector<65x16xf32>
    %10 = vector.extract_strided_slice %5 {offsets = [0, 0], sizes = [64, 16], strides = [1, 1]} : vector<64x32xf32> to vector<64x16xf32>
    %11 = tpu.concatenate %6, %10 in 0 : vector<1x16xf32>, vector<64x16xf32> -> vector<65x16xf32>
    %12 = vector.extract_strided_slice %5 {offsets = [0, 16], sizes = [64, 16], strides = [1, 1]} : vector<64x32xf32> to vector<64x16xf32>
    %13 = tpu.concatenate %6, %12 in 0 : vector<1x16xf32>, vector<64x16xf32> -> vector<65x16xf32>
    %14 = vector.extract_strided_slice %9 {offsets = [0, 0], sizes = [65, 4], strides = [1, 1]} : vector<65x16xf32> to vector<65x4xf32>
    %15 = vector.extract_strided_slice %11 {offsets = [0, 0], sizes = [65, 4], strides = [1, 1]} : vector<65x16xf32> to vector<65x4xf32>
    %cst_11 = arith.constant dense<0.000000e+00> : vector<65x65xf32>
    %16 = tpu.matmul %14, %15, %cst_11 {dimension_numbers = #tpu.dot_dimension_numbers<[1], [1], [0], [0], [0, 0, 1, 0], [], []>} : vector<65x4xf32>, vector<65x4xf32>, vector<65x65xf32> -> vector<65x65xf32>
    %17 = vector.extract_strided_slice %9 {offsets = [0, 4], sizes = [65, 4], strides = [1, 1]} : vector<65x16xf32> to vector<65x4xf32>
    %18 = vector.extract_strided_slice %11 {offsets = [0, 4], sizes = [65, 4], strides = [1, 1]} : vector<65x16xf32> to vector<65x4xf32>
    %cst_12 = arith.constant dense<0.000000e+00> : vector<65x65xf32>
    %19 = tpu.matmul %17, %18, %cst_12 {dimension_numbers = #tpu.dot_dimension_numbers<[1], [1], [0], [0], [0, 0, 1, 0], [], []>} : vector<65x4xf32>, vector<65x4xf32>, vector<65x65xf32> -> vector<65x65xf32>
    %20 = vector.extract_strided_slice %9 {offsets = [0, 8], sizes = [65, 4], strides = [1, 1]} : vector<65x16xf32> to vector<65x4xf32>
    %21 = vector.extract_strided_slice %11 {offsets = [0, 8], sizes = [65, 4], strides = [1, 1]} : vector<65x16xf32> to vector<65x4xf32>
    %cst_13 = arith.constant dense<0.000000e+00> : vector<65x65xf32>
    %22 = tpu.matmul %20, %21, %cst_13 {dimension_numbers = #tpu.dot_dimension_numbers<[1], [1], [0], [0], [0, 0, 1, 0], [], []>} : vector<65x4xf32>, vector<65x4xf32>, vector<65x65xf32> -> vector<65x65xf32>
    %23 = vector.extract_strided_slice %9 {offsets = [0, 12], sizes = [65, 4], strides = [1, 1]} : vector<65x16xf32> to vector<65x4xf32>
    %24 = vector.extract_strided_slice %11 {offsets = [0, 12], sizes = [65, 4], strides = [1, 1]} : vector<65x16xf32> to vector<65x4xf32>
    %cst_14 = arith.constant dense<0.000000e+00> : vector<65x65xf32>
    %25 = tpu.matmul %23, %24, %cst_14 {dimension_numbers = #tpu.dot_dimension_numbers<[1], [1], [0], [0], [0, 0, 1, 0], [], []>} : vector<65x4xf32>, vector<65x4xf32>, vector<65x65xf32> -> vector<65x65xf32>
    %26 = vector.shape_cast %16 : vector<65x65xf32> to vector<1x65x65xf32>
    %27 = vector.shape_cast %19 : vector<65x65xf32> to vector<1x65x65xf32>
    %28 = vector.shape_cast %22 : vector<65x65xf32> to vector<1x65x65xf32>
    %29 = vector.shape_cast %25 : vector<65x65xf32> to vector<1x65x65xf32>
    %30 = tpu.concatenate %26, %27, %28, %29 in 0 : vector<1x65x65xf32>, vector<1x65x65xf32>, vector<1x65x65xf32>, vector<1x65x65xf32> -> vector<4x65x65xf32>
    %cst_15 = arith.constant dense<0xFF800000> : vector<4x65xf32>
    %31 = vector.multi_reduction <maximumf>, %30, %cst_15 [2] : vector<4x65x65xf32> to vector<4x65xf32>
    %32 = vector.shape_cast %31 : vector<4x65xf32> to vector<4x65x1xf32>
    %33 = vector.broadcast %32 : vector<4x65x1xf32> to vector<4x65x65xf32>
    %34 = arith.subf %30, %33 : vector<4x65x65xf32>
    %35 = math.exp %34 : vector<4x65x65xf32>
    %cst_16 = arith.constant dense<0.000000e+00> : vector<4x65xf32>
    %36 = vector.multi_reduction <add>, %35, %cst_16 [2] : vector<4x65x65xf32> to vector<4x65xf32>
    %37 = vector.shape_cast %36 : vector<4x65xf32> to vector<4x65x1xf32>
    %38 = tpu.reciprocal %37 {approx = true} : vector<4x65x1xf32> -> vector<4x65x1xf32>
    %39 = vector.broadcast %38 : vector<4x65x1xf32> to vector<4x65x65xf32>
    %40 = arith.mulf %35, %39 : vector<4x65x65xf32>
    %41 = vector.shape_cast %40 : vector<4x65x65xf32> to vector<1x1x4x65x65xf32>
    %c0_17 = arith.constant 0 : index
    %c0_18 = arith.constant 0 : index
    %c0_19 = arith.constant 0 : index
    %c0_20 = arith.constant 0 : index
    %c0_21 = arith.constant 0 : index
    %42 = vector.load %arg8[%c0_17, %c0_18, %c0_19, %c0_20, %c0_21] : memref<1x1x4x65x65xf32, #tpu.memory_space<vmem>>, vector<1x1x4x65x65xf32>
    tpu.vector_store %arg8[%c0_17, %c0_18, %c0_19, %c0_20, %c0_21], %41 {strides = array<i32>} : memref<1x1x4x65x65xf32, #tpu.memory_space<vmem>>, vector<1x1x4x65x65xf32>,
    %43 = vector.extract_strided_slice %13 {offsets = [0, 0], sizes = [65, 4], strides = [1, 1]} : vector<65x16xf32> to vector<65x4xf32>
    %44 = vector.extract_strided_slice %13 {offsets = [0, 4], sizes = [65, 4], strides = [1, 1]} : vector<65x16xf32> to vector<65x4xf32>
    %45 = vector.extract_strided_slice %13 {offsets = [0, 8], sizes = [65, 4], strides = [1, 1]} : vector<65x16xf32> to vector<65x4xf32>
    %46 = vector.extract_strided_slice %13 {offsets = [0, 12], sizes = [65, 4], strides = [1, 1]} : vector<65x16xf32> to vector<65x4xf32>
    %47 = vector.shape_cast %43 : vector<65x4xf32> to vector<1x65x4xf32>
    %48 = vector.shape_cast %44 : vector<65x4xf32> to vector<1x65x4xf32>
    %49 = vector.shape_cast %45 : vector<65x4xf32> to vector<1x65x4xf32>
    %50 = vector.shape_cast %46 : vector<65x4xf32> to vector<1x65x4xf32>
    %51 = tpu.concatenate %47, %48, %49, %50 in 0 : vector<1x65x4xf32>, vector<1x65x4xf32>, vector<1x65x4xf32>, vector<1x65x4xf32> -> vector<4x65x4xf32>
    %52 = vector.extract_strided_slice %40 {offsets = [0, 1, 0], sizes = [4, 64, 65], strides = [1, 1, 1]} : vector<4x65x65xf32> to vector<4x64x65xf32>
    %cst_22 = arith.constant dense<0.000000e+00> : vector<4x64x4xf32>
    %53 = tpu.matmul %52, %51, %cst_22 {dimension_numbers = #tpu.dot_dimension_numbers<[2], [1], [1], [2], [0, 0, 0, 1, 1, 2], [0], [0]>} : vector<4x64x65xf32>, vector<4x65x4xf32>, vector<4x64x4xf32> -> vector<4x64x4xf32>
    %c0_23 = arith.constant 0 : index
    %c0_24 = arith.constant 0 : index
    %54 = vector.load %arg5[%c0_23, %c0_24] : memref<16x32xf32, #tpu.memory_space<vmem>>, vector<16x32xf32>
    %cst_25 = arith.constant 0.000000e+00 : f32
    %55 = vector.broadcast %cst_25 : f32 to vector<64x32xf32>
    %56 = vector.extract_strided_slice %53 {offsets = [0, 0, 0], sizes = [1, 64, 4], strides = [1, 1, 1]} : vector<4x64x4xf32> to vector<1x64x4xf32>
    %57 = vector.shape_cast %56 : vector<1x64x4xf32> to vector<64x4xf32>
    %58 = vector.extract_strided_slice %54 {offsets = [0, 0], sizes = [4, 32], strides = [1, 1]} : vector<16x32xf32> to vector<4x32xf32>
    %cst_26 = arith.constant dense<0.000000e+00> : vector<64x32xf32>
    %59 = tpu.matmul %57, %58, %cst_26 {dimension_numbers = #tpu.dot_dimension_numbers<[1], [0], [0], [1], [0, 0, 1, 1], [], []>} : vector<64x4xf32>, vector<4x32xf32>, vector<64x32xf32> -> vector<64x32xf32>
    %60 = arith.addf %55, %59 : vector<64x32xf32>
    %61 = vector.extract_strided_slice %53 {offsets = [1, 0, 0], sizes = [1, 64, 4], strides = [1, 1, 1]} : vector<4x64x4xf32> to vector<1x64x4xf32>
    %62 = vector.shape_cast %61 : vector<1x64x4xf32> to vector<64x4xf32>
    %63 = vector.extract_strided_slice %54 {offsets = [4, 0], sizes = [4, 32], strides = [1, 1]} : vector<16x32xf32> to vector<4x32xf32>
    %cst_27 = arith.constant dense<0.000000e+00> : vector<64x32xf32>
    %64 = tpu.matmul %62, %63, %cst_27 {dimension_numbers = #tpu.dot_dimension_numbers<[1], [0], [0], [1], [0, 0, 1, 1], [], []>} : vector<64x4xf32>, vector<4x32xf32>, vector<64x32xf32> -> vector<64x32xf32>
    %65 = arith.addf %60, %64 : vector<64x32xf32>
    %66 = vector.extract_strided_slice %53 {offsets = [2, 0, 0], sizes = [1, 64, 4], strides = [1, 1, 1]} : vector<4x64x4xf32> to vector<1x64x4xf32>
    %67 = vector.shape_cast %66 : vector<1x64x4xf32> to vector<64x4xf32>
    %68 = vector.extract_strided_slice %54 {offsets = [8, 0], sizes = [4, 32], strides = [1, 1]} : vector<16x32xf32> to vector<4x32xf32>
    %cst_28 = arith.constant dense<0.000000e+00> : vector<64x32xf32>
    %69 = tpu.matmul %67, %68, %cst_28 {dimension_numbers = #tpu.dot_dimension_numbers<[1], [0], [0], [1], [0, 0, 1, 1], [], []>} : vector<64x4xf32>, vector<4x32xf32>, vector<64x32xf32> -> vector<64x32xf32>
    %70 = arith.addf %65, %69 : vector<64x32xf32>
    %71 = vector.extract_strided_slice %53 {offsets = [3, 0, 0], sizes = [1, 64, 4], strides = [1, 1, 1]} : vector<4x64x4xf32> to vector<1x64x4xf32>
    %72 = vector.shape_cast %71 : vector<1x64x4xf32> to vector<64x4xf32>
    %73 = vector.extract_strided_slice %54 {offsets = [12, 0], sizes = [4, 32], strides = [1, 1]} : vector<16x32xf32> to vector<4x32xf32>
    %cst_29 = arith.constant dense<0.000000e+00> : vector<64x32xf32>
    %74 = tpu.matmul %72, %73, %cst_29 {dimension_numbers = #tpu.dot_dimension_numbers<[1], [0], [0], [1], [0, 0, 1, 1], [], []>} : vector<64x4xf32>, vector<4x32xf32>, vector<64x32xf32> -> vector<64x32xf32>
    %75 = arith.addf %70, %74 : vector<64x32xf32>
    %c0_30 = arith.constant 0 : index
    %c0_31 = arith.constant 0 : index
    %76 = vector.load %arg6[%c0_30, %c0_31] : memref<1x32xf32, #tpu.memory_space<vmem>>, vector<1x32xf32>
    %77 = vector.broadcast %76 : vector<1x32xf32> to vector<64x32xf32>
    %78 = arith.addf %75, %77 : vector<64x32xf32>
    %79 = vector.shape_cast %78 : vector<64x32xf32> to vector<1x8x1x8x32xf32>
    %c0_32 = arith.constant 0 : index
    %c0_33 = arith.constant 0 : index
    %c0_34 = arith.constant 0 : index
    %c0_35 = arith.constant 0 : index
    %c0_36 = arith.constant 0 : index
    %80 = vector.load %arg7[%c0_32, %c0_33, %c0_34, %c0_35, %c0_36] : memref<1x8x1x8x32xf32, #tpu.memory_space<vmem>>, vector<1x8x1x8x32xf32>
    tpu.vector_store %arg7[%c0_32, %c0_33, %c0_34, %c0_35, %c0_36], %79 {strides = array<i32>} : memref<1x8x1x8x32xf32, #tpu.memory_space<vmem>>, vector<1x8x1x8x32xf32>,
    return
  }
  func.func @transform_0(%arg0: i32, %arg1: i32) -> (i32, i32) {
    %c0_i32 = arith.constant 0 : i32
    %c0_i32_0 = arith.constant 0 : i32
    %c0_i32_1 = arith.constant 0 : i32
    return %c0_i32, %c0_i32_0 : i32, i32
  }
  func.func @transform_1(%arg0: i32, %arg1: i32) -> (i32, i32, i32, i32, i32) {
    %c0_i32 = arith.constant 0 : i32
    %c0_i32_0 = arith.constant 0 : i32
    %c0_i32_1 = arith.constant 0 : i32
    %c0_i32_2 = arith.constant 0 : i32
    return %arg0, %c0_i32, %arg1, %c0_i32_0, %c0_i32_1 : i32, i32, i32, i32, i32
  }
  func.func @transform_2(%arg0: i32, %arg1: i32) -> (i32, i32, i32, i32, i32) {
    %c0_i32 = arith.constant 0 : i32
    %c0_i32_0 = arith.constant 0 : i32
    %c0_i32_1 = arith.constant 0 : i32
    %c0_i32_2 = arith.constant 0 : i32
    return %arg0, %c0_i32, %arg1, %c0_i32_0, %c0_i32_1 : i32, i32, i32, i32, i32
  }
  func.func @transform_3(%arg0: i32, %arg1: i32) -> (i32, i32) {
    %c0_i32 = arith.constant 0 : i32
    %c0_i32_0 = arith.constant 0 : i32
    %c0_i32_1 = arith.constant 0 : i32
    return %c0_i32, %c0_i32_0 : i32, i32
  }
  func.func @transform_4(%arg0: i32, %arg1: i32) -> (i32, i32) {
    %c0_i32 = arith.constant 0 : i32
    %c0_i32_0 = arith.constant 0 : i32
    %c0_i32_1 = arith.constant 0 : i32
    return %c0_i32, %c0_i32_0 : i32, i32
  }
  func.func @transform_5(%arg0: i32, %arg1: i32) -> (i32, i32, i32, i32, i32) {
    %c0_i32 = arith.constant 0 : i32
    %c0_i32_0 = arith.constant 0 : i32
    %c0_i32_1 = arith.constant 0 : i32
    %c0_i32_2 = arith.constant 0 : i32
    return %arg0, %c0_i32, %arg1, %c0_i32_0, %c0_i32_1 : i32, i32, i32, i32, i32
  }
  func.func @transform_6(%arg0: i32, %arg1: i32) -> (i32, i32, i32, i32, i32) {
    %c0_i32 = arith.constant 0 : i32
    %c0_i32_0 = arith.constant 0 : i32
    %c0_i32_1 = arith.constant 0 : i32
    %c0_i32_2 = arith.constant 0 : i32
    return %arg0, %arg1, %c0_i32, %c0_i32_0, %c0_i32_1 : i32, i32, i32, i32, i32
  }
}

</mosaic_0001>

<llo_original>
// kernel: nonlocal_block_forward.3
$region0: #{nonlocal_block_forward.3}
  #allocation0 [shape = 'u32[]', space=smem, size = 0x4, offset = 0x4, fixed_abs, tag = 'smem constant byte address 0x4 - core index']
  #allocation1 [shape = 'u32[144,128]{1,0:T(1,128)}', space=vmem, size = 0x12000, scoped, tag = 'internal scratch']
  %s0 = inlined_call_operand.vmem [shape: f32[1,16], index: 0, kind: input, shape index: {}]
  %s1 = inlined_call_operand.vmem [shape: f32[8,8,4,8,16], index: 1, kind: input, shape index: {}]
  %s2 = inlined_call_operand.vmem [shape: f32[8,8,4,8,32], index: 2, kind: input, shape index: {}]
  %s3 = inlined_call_operand.vmem [shape: f32[16,32], index: 3, kind: input, shape index: {}]
  %s4 = inlined_call_operand.vmem [shape: f32[1,32], index: 4, kind: input, shape index: {}]
  %s5 = inlined_call_operand.vmem [shape: f32[8,8,4,8,32], index: 5, kind: output, shape index: {0}]
  %s6 = inlined_call_operand.vmem [shape: f32[8,4,4,65,65], index: 6, kind: output, shape index: {1}]
  %7 = xla_tuple %s5, %s6
  %s8 = sld [smem:[#allocation0]]
  $region171: #{nonlocal_block_forward.3} parent=0
    _
  %s10 = ssub.s32 1, %s8
  %s11 = scalar_select 0, %s10, %s8
  $region1: #{nonlocal_block_forward.3} parent=0
    #allocation2 [shape = 'u8[65536]{0}', space=vmem, size = 0x10000, scoped, tag = 'input window, operand 1']
    #allocation3 [shape = 'u8[65536]{0}', space=vmem, size = 0x10000, scoped, tag = 'input window, operand 2']
    #allocation4 [shape = 'u8[65536]{0}', space=vmem, size = 0x10000, scoped, tag = 'output window, operand 0']
    loop: start=0, step=1, limit=34
    $region2: #{nonlocal_block_forward.3} parent=1 // loop_pre_header
      _
    $region3: #{nonlocal_block_forward.3} parent=1 // loop_header
      %s13 = sphi 0, %s17
      %p14 = scmp.ge.s32.totalorder %s13, 34
      %s20 = sphi 0, %s32
      %s21 = sphi 0, %s28
      %s22 = sphi 0, %s20
      %s23 = sphi 0, %s21
      %s24 = sphi 0, %s22
      %s25 = sphi 0, %s23
      %s33 = sphi 0, %s33
      %s35 = sphi 0, %s33
      %s36 = sphi 0, %s35
      %s50 = sphi 0, %s36
      %s58 = sphi 0, %s60
      %s61 = sphi 0, %s58
      %s62 = sphi 0, %s61
      %s78 = sphi 0, %s62
      %s86 = sphi 0, %s88
      %s89 = sphi 0, %s86
      %s90 = sphi 0, %s89
      %s106 = sphi 0, %s90
      %s110 = sphi 0, %s110
      %s112 = sphi 0, %s110
      %s113 = sphi 0, %s112
      %s127 = sphi 0, %s113
      %s131 = sphi 0, %s131
      %s133 = sphi 0, %s131
      %s134 = sphi 0, %s133
      %s148 = sphi 0, %s134
      %s156 = sphi 0, %s158
      %s159 = sphi 0, %s156
      %s160 = sphi 0, %s159
      %s176 = sphi 0, %s160
      %s184 = sphi 0, %s186
      %s187 = sphi 0, %s184
      %s188 = sphi 0, %s187
      %s204 = sphi 0, %s188
    $region4: #{nonlocal_block_forward.3} parent=1 // loop_header_branch
      %16 = sbr.rel (%p14) target = $region8
    $region5: #{nonlocal_block_forward.3} parent=1 // loop_body
      %s18 = ssub.s32 %s13, 1
      %s19 = ssub.s32 %s13, 2
      %s26 = sadd.s32 1, %s21
      %p27 = scmp.ge.s32.totalorder %s26, 4
      %s28 = scalar_select %p27, 0, %s26
      %s29 = sadd.s32 1, %s20
      %s30 = scalar_select %p27, %s29, %s20
      %p31 = scmp.ge.s32.totalorder %s30, 8
      %s32 = scalar_select %p31, 0, %s30
      %s34 = sadd.s32 %s33, 1
      %p37 = scmp.eq.s32.totalorder %s13, 31
      %p38 = scmp.ne.s32.totalorder %s33, %s35
      %p39 = scmp.eq.s32.totalorder %s13, 0
      %p40 = por %p38, %p39
      %p41 = scmp.ne.s32.totalorder %s33, %s35
      %p42 = scmp.eq.s32.totalorder %s18, 31
      %p43 = por %p41, %p42
      %p44 = scmp.ne.s32.totalorder %s35, %s36
      %p45 = scmp.eq.s32.totalorder %s18, 0
      %p46 = por %p44, %p45
      %p47 = scmp.ne.s32.totalorder %s35, %s36
      %p48 = scmp.eq.s32.totalorder %s19, 31
      %p49 = por %p47, %p48
      %p51 = scmp.ne.s32.totalorder %s36, %s50
      %p52 = scmp.eq.s32.totalorder %s19, 0
      %p53 = por %p51, %p52
      %s54 = ssub.s32 %s20, %s32
      %s55 = ssub.s32 %s21, %s28
      %s56 = sor.u32 %s54, %s55
      %p57 = scmp.eq.s32.totalorder %s56, 0
      %s59 = sadd.s32 %s58, 1
      %s60 = scalar_select %p57, %s58, %s59
      %p63 = pneg %p57
      %p64 = scmp.eq.s32.totalorder %s13, 31
      %p65 = por %p63, %p64
      %p66 = scmp.ne.s32.totalorder %s58, %s61
      %p67 = scmp.eq.s32.totalorder %s13, 0
      %p68 = por %p66, %p67
      %p69 = scmp.ne.s32.totalorder %s58, %s61
      %p70 = scmp.eq.s32.totalorder %s18, 31
      %p71 = por %p69, %p70
      %p72 = scmp.ne.s32.totalorder %s61, %s62
      %p73 = scmp.eq.s32.totalorder %s18, 0
      %p74 = por %p72, %p73
      %p75 = scmp.ne.s32.totalorder %s61, %s62
      %p76 = scmp.eq.s32.totalorder %s19, 31
      %p77 = por %p75, %p76
      %p79 = scmp.ne.s32.totalorder %s62, %s78
      %p80 = scmp.eq.s32.totalorder %s19, 0
      %p81 = por %p79, %p80
      %s82 = ssub.s32 %s20, %s32
      %s83 = ssub.s32 %s21, %s28
      %s84 = sor.u32 %s82, %s83
      %p85 = scmp.eq.s32.totalorder %s84, 0
      %s87 = sadd.s32 %s86, 1
      %s88 = scalar_select %p85, %s86, %s87
      %p91 = pneg %p85
      %p92 = scmp.eq.s32.totalorder %s13, 31
      %p93 = por %p91, %p92
      %p94 = scmp.ne.s32.totalorder %s86, %s89
      %p95 = scmp.eq.s32.totalorder %s13, 0
      %p96 = por %p94, %p95
      %p97 = scmp.ne.s32.totalorder %s86, %s89
      %p98 = scmp.eq.s32.totalorder %s18, 31
      %p99 = por %p97, %p98
      %p100 = scmp.ne.s32.totalorder %s89, %s90
      %p101 = scmp.eq.s32.totalorder %s18, 0
      %p102 = por %p100, %p101
      %p103 = scmp.ne.s32.totalorder %s89, %s90
      %p104 = scmp.eq.s32.totalorder %s19, 31
      %p105 = por %p103, %p104
      %p107 = scmp.ne.s32.totalorder %s90, %s106
      %p108 = scmp.eq.s32.totalorder %s19, 0
      %p109 = por %p107, %p108
      %s111 = sadd.s32 %s110, 1
      %p114 = scmp.eq.s32.totalorder %s13, 31
      %p115 = scmp.ne.s32.totalorder %s110, %s112
      %p116 = scmp.eq.s32.totalorder %s13, 0
      %p117 = por %p115, %p116
      %p118 = scmp.ne.s32.totalorder %s110, %s112
      %p119 = scmp.eq.s32.totalorder %s18, 31
      %p120 = por %p118, %p119
      %p121 = scmp.ne.s32.totalorder %s112, %s113
      %p122 = scmp.eq.s32.totalorder %s18, 0
      %p123 = por %p121, %p122
      %p124 = scmp.ne.s32.totalorder %s112, %s113
      %p125 = scmp.eq.s32.totalorder %s19, 31
      %p126 = por %p124, %p125
      %p128 = scmp.ne.s32.totalorder %s113, %s127
      %p129 = scmp.eq.s32.totalorder %s19, 0
      %p130 = por %p128, %p129
      %s132 = sadd.s32 %s131, 1
      %p135 = scmp.eq.s32.totalorder %s13, 31
      %p136 = scmp.ne.s32.totalorder %s131, %s133
      %p137 = scmp.eq.s32.totalorder %s13, 0
      %p138 = por %p136, %p137
      %p139 = scmp.ne.s32.totalorder %s131, %s133
      %p140 = scmp.eq.s32.totalorder %s18, 31
      %p141 = por %p139, %p140
      %p142 = scmp.ne.s32.totalorder %s133, %s134
      %p143 = scmp.eq.s32.totalorder %s18, 0
      %p144 = por %p142, %p143
      %p145 = scmp.ne.s32.totalorder %s133, %s134
      %p146 = scmp.eq.s32.totalorder %s19, 31
      %p147 = por %p145, %p146
      %p149 = scmp.ne.s32.totalorder %s134, %s148
      %p150 = scmp.eq.s32.totalorder %s19, 0
      %p151 = por %p149, %p150
      %s152 = ssub.s32 %s20, %s32
      %s153 = ssub.s32 %s21, %s28
      %s154 = sor.u32 %s152, %s153
      %p155 = scmp.eq.s32.totalorder %s154, 0
      %s157 = sadd.s32 %s156, 1
      %s158 = scalar_select %p155, %s156, %s157
      %p161 = pneg %p155
      %p162 = scmp.eq.s32.totalorder %s13, 31
      %p163 = por %p161, %p162
      %p164 = scmp.ne.s32.totalorder %s156, %s159
      %p165 = scmp.eq.s32.totalorder %s13, 0
      %p166 = por %p164, %p165
      %p167 = scmp.ne.s32.totalorder %s156, %s159
      %p168 = scmp.eq.s32.totalorder %s18, 31
      %p169 = por %p167, %p168
      %p170 = scmp.ne.s32.totalorder %s159, %s160
      %p171 = scmp.eq.s32.totalorder %s18, 0
      %p172 = por %p170, %p171
      %p173 = scmp.ne.s32.totalorder %s159, %s160
      %p174 = scmp.eq.s32.totalorder %s19, 31
      %p175 = por %p173, %p174
      %p177 = scmp.ne.s32.totalorder %s160, %s176
      %p178 = scmp.eq.s32.totalorder %s19, 0
      %p179 = por %p177, %p178
      %s180 = ssub.s32 %s20, %s32
      %s181 = ssub.s32 %s21, %s28
      %s182 = sor.u32 %s180, %s181
      %p183 = scmp.eq.s32.totalorder %s182, 0
      %s185 = sadd.s32 %s184, 1
      %s186 = scalar_select %p183, %s184, %s185
      %p189 = pneg %p183
      %p190 = scmp.eq.s32.totalorder %s13, 31
      %p191 = por %p189, %p190
      %p192 = scmp.ne.s32.totalorder %s184, %s187
      %p193 = scmp.eq.s32.totalorder %s13, 0
      %p194 = por %p192, %p193
      %p195 = scmp.ne.s32.totalorder %s184, %s187
      %p196 = scmp.eq.s32.totalorder %s18, 31
      %p197 = por %p195, %p196
      %p198 = scmp.ne.s32.totalorder %s187, %s188
      %p199 = scmp.eq.s32.totalorder %s18, 0
      %p200 = por %p198, %p199
      %p201 = scmp.ne.s32.totalorder %s187, %s188
      %p202 = scmp.eq.s32.totalorder %s19, 31
      %p203 = por %p201, %p202
      %p205 = scmp.ne.s32.totalorder %s188, %s204
      %p206 = scmp.eq.s32.totalorder %s19, 0
      %p207 = por %p205, %p206
      %p208 = scmp.le.s32.totalorder 1, %s13
      %p209 = scmp.lt.s32.totalorder %s13, 33
      %p210 = pnand %p208, %p209
      %p211 = pneg %p210
      // Predicated region
      $region9: #{nonlocal_block_forward.3} parent=5 // pred_check
        _
      $region10: #{nonlocal_block_forward.3} parent=5 // pred_check_branch
        %213 = sbr.rel (%p210) target = $region12
      $region11: #{nonlocal_block_forward.3} parent=5 // pred_region
        %s214 = ssub.s32 %s13, 1
        // Predicated region
        $region13: #{nonlocal_block_forward.3} parent=11 // pred_check
          %p215 = pneg %p46
        $region14: #{nonlocal_block_forward.3} parent=11 // pred_check_branch
          %217 = sbr.rel (%p215) target = $region16
        $region15: #{nonlocal_block_forward.3} parent=11 // pred_region
          _
        $region16: #{nonlocal_block_forward.3} parent=11 // pred_fallthru
          _
        // Predicated region
        $region17: #{nonlocal_block_forward.3} parent=11 // pred_check
          %p218 = pneg %p123
        $region18: #{nonlocal_block_forward.3} parent=11 // pred_check_branch
          %220 = sbr.rel (%p218) target = $region20
        $region19: #{nonlocal_block_forward.3} parent=11 // pred_region
          _
        $region20: #{nonlocal_block_forward.3} parent=11 // pred_fallthru
          _
        // Predicated region
        $region21: #{nonlocal_block_forward.3} parent=11 // pred_check
          %p221 = pneg %p144
        $region22: #{nonlocal_block_forward.3} parent=11 // pred_check_branch
          %223 = sbr.rel (%p221) target = $region24
        $region23: #{nonlocal_block_forward.3} parent=11 // pred_region
          _
        $region24: #{nonlocal_block_forward.3} parent=11 // pred_fallthru
          _
      $region12: #{nonlocal_block_forward.3} parent=5 // pred_fallthru
        _
      %p224 = scmp.lt.s32.totalorder %s13, 32
      // Predicated region
      $region25: #{nonlocal_block_forward.3} parent=5 // pred_check
        %p225 = pneg %p224
      $region26: #{nonlocal_block_forward.3} parent=5 // pred_check_branch
        %227 = sbr.rel (%p225) target = $region28
      $region27: #{nonlocal_block_forward.3} parent=5 // pred_region
        // Predicated region
        $region29: #{nonlocal_block_forward.3} parent=27 // pred_check
          %p228 = pneg %p68
        $region30: #{nonlocal_block_forward.3} parent=27 // pred_check_branch
          %230 = sbr.rel (%p228) target = $region32
        $region31: #{nonlocal_block_forward.3} parent=27 // pred_region
          %s231 = sand.u32 %s58, 1
          %s232 = sand.u32 %s58, 1
          %s233 = smul.addr %s232, 64
          %s234 = scalar_lea.vmem [#allocation2], %s233
          %s235 = smul.addr %s20, 32
          %s236 = sadd.s32 %s21, %s235
          %s237 = smul.addr %s236, 8
          %s238 = scalar_lea.vmem %s1, %s237
          // Predicated region
          $region33: #{nonlocal_block_forward.3} parent=31 // pred_check
            _
          $region34: #{nonlocal_block_forward.3} parent=31 // pred_check_branch
            %240 = sbr.rel (0) target = $region36
          $region35: #{nonlocal_block_forward.3} parent=31 // pred_region
            // Predicated region
            $region37: #{nonlocal_block_forward.3} parent=35 // pred_check
              _
            $region38: #{nonlocal_block_forward.3} parent=35 // pred_check_branch
              %242 = sbr.rel (0) target = $region40
            $region39: #{nonlocal_block_forward.3} parent=35 // pred_region
              // Predicated region
              $region52: #{nonlocal_block_forward.3} parent=39 // pred_check
                _
              $region53: #{nonlocal_block_forward.3} parent=39 // pred_check_branch
                %271 = sbr.rel (0) target = $region55
              $region54: #{nonlocal_block_forward.3} parent=39 // pred_region
                loop: start=0, step=1, limit=1
                $region56: #{nonlocal_block_forward.3} parent=54 // loop_pre_header
                  _
                $region57: #{nonlocal_block_forward.3} parent=54 // loop_header
                  %s273 = sphi 0, %s277
                  %p274 = scmp.ge.s32.totalorder %s273, 1
                  %s278 = sphi %s238, %s238
                  %s279 = sphi %s234, %s234
                $region58: #{nonlocal_block_forward.3} parent=54 // loop_header_branch
                  %276 = sbr.rel (%p274) target = $region62
                $region59: #{nonlocal_block_forward.3} parent=54 // loop_body
                  %v280 = vld [vmem:[%s278] sm:$0xff]
                  %281 = vst [vmem:[%s279] sm:$0xff] %v280
                  %v282 = vld [vmem:[%s278 + $0x20] sm:$0xff]
                  %283 = vst [vmem:[%s279 + $0x8] sm:$0xff] %v282
                  %v284 = vld [vmem:[%s278 + $0x40] sm:$0xff]
                  %285 = vst [vmem:[%s279 + $0x10] sm:$0xff] %v284
                  %v286 = vld [vmem:[%s278 + $0x60] sm:$0xff]
                  %287 = vst [vmem:[%s279 + $0x18] sm:$0xff] %v286
                  %v288 = vld [vmem:[%s278 + $0x80] sm:$0xff]
                  %289 = vst [vmem:[%s279 + $0x20] sm:$0xff] %v288
                  %v290 = vld [vmem:[%s278 + $0xa0] sm:$0xff]
                  %291 = vst [vmem:[%s279 + $0x28] sm:$0xff] %v290
                  %v292 = vld [vmem:[%s278 + $0xc0] sm:$0xff]
                  %293 = vst [vmem:[%s279 + $0x30] sm:$0xff] %v292
                  %v294 = vld [vmem:[%s278 + $0xe0] sm:$0xff]
                  %295 = vst [vmem:[%s279 + $0x38] sm:$0xff] %v294
                $region60: #{nonlocal_block_forward.3} parent=54 // loop_footer
                  %s277 = sadd.s32 1, %s273
                $region61: #{nonlocal_block_forward.3} parent=54 // loop_footer_branch
                  %272 = sbr.rel target = $region57
                $region62: #{nonlocal_block_forward.3} parent=54 // loop_exit
                  _
              $region55: #{nonlocal_block_forward.3} parent=39 // pred_fallthru
                _
              // Predicated region
              $region63: #{nonlocal_block_forward.3} parent=39 // pred_check
                _
              $region64: #{nonlocal_block_forward.3} parent=39 // pred_check_branch
                %297 = sbr.rel target = $region66
              $region65: #{nonlocal_block_forward.3} parent=39 // pred_region
                _
              $region66: #{nonlocal_block_forward.3} parent=39 // pred_fallthru
                _
            $region40: #{nonlocal_block_forward.3} parent=35 // pred_fallthru
              _
            // Predicated region
            $region41: #{nonlocal_block_forward.3} parent=35 // pred_check
              _
            $region42: #{nonlocal_block_forward.3} parent=35 // pred_check_branch
              %244 = sbr.rel target = $region44
            $region43: #{nonlocal_block_forward.3} parent=35 // pred_region
              loop: start=0, step=1, limit=1
              $region45: #{nonlocal_block_forward.3} parent=43 // loop_pre_header
                _
              $region46: #{nonlocal_block_forward.3} parent=43 // loop_header
                %s247 = sphi 0, %s251
                %p248 = scmp.ge.s32.totalorder %s247, 1
                %s252 = sphi %s238, %s238
                %s253 = sphi %s234, %s234
              $region47: #{nonlocal_block_forward.3} parent=43 // loop_header_branch
                %250 = sbr.rel (%p248) target = $region51
              $region48: #{nonlocal_block_forward.3} parent=43 // loop_body
                %v254 = vld [vmem:[%s252] sm:$0xff]
                %255 = vst [vmem:[%s253] sm:$0xff] %v254
                %v256 = vld [vmem:[%s252 + $0x20] sm:$0xff]
                %257 = vst [vmem:[%s253 + $0x8] sm:$0xff] %v256
                %v258 = vld [vmem:[%s252 + $0x40] sm:$0xff]
                %259 = vst [vmem:[%s253 + $0x10] sm:$0xff] %v258
                %v260 = vld [vmem:[%s252 + $0x60] sm:$0xff]
                %261 = vst [vmem:[%s253 + $0x18] sm:$0xff] %v260
                %v262 = vld [vmem:[%s252 + $0x80] sm:$0xff]
                %263 = vst [vmem:[%s253 + $0x20] sm:$0xff] %v262
                %v264 = vld [vmem:[%s252 + $0xa0] sm:$0xff]
                %265 = vst [vmem:[%s253 + $0x28] sm:$0xff] %v264
                %v266 = vld [vmem:[%s252 + $0xc0] sm:$0xff]
                %267 = vst [vmem:[%s253 + $0x30] sm:$0xff] %v266
                %v268 = vld [vmem:[%s252 + $0xe0] sm:$0xff]
                %269 = vst [vmem:[%s253 + $0x38] sm:$0xff] %v268
              $region49: #{nonlocal_block_forward.3} parent=43 // loop_footer
                %s251 = sadd.s32 1, %s247
              $region50: #{nonlocal_block_forward.3} parent=43 // loop_footer_branch
                %246 = sbr.rel target = $region46
              $region51: #{nonlocal_block_forward.3} parent=43 // loop_exit
                _
            $region44: #{nonlocal_block_forward.3} parent=35 // pred_fallthru
              _
          $region36: #{nonlocal_block_forward.3} parent=31 // pred_fallthru
            _
          %298 = vnop
        $region32: #{nonlocal_block_forward.3} parent=27 // pred_fallthru
          _
        // Predicated region
        $region67: #{nonlocal_block_forward.3} parent=27 // pred_check
          %p299 = pneg %p96
        $region68: #{nonlocal_block_forward.3} parent=27 // pred_check_branch
          %301 = sbr.rel (%p299) target = $region70
        $region69: #{nonlocal_block_forward.3} parent=27 // pred_region
          %s302 = sand.u32 %s86, 1
          %s303 = sand.u32 %s86, 1
          %s304 = smul.addr %s303, 64
          %s305 = scalar_lea.vmem [#allocation3], %s304
          %s306 = smul.addr %s20, 32
          %s307 = sadd.s32 %s21, %s306
          %s308 = smul.addr %s307, 8
          %s309 = scalar_lea.vmem %s2, %s308
          // Predicated region
          $region71: #{nonlocal_block_forward.3} parent=69 // pred_check
            _
          $region72: #{nonlocal_block_forward.3} parent=69 // pred_check_branch
            %311 = sbr.rel (0) target = $region74
          $region73: #{nonlocal_block_forward.3} parent=69 // pred_region
            // Predicated region
            $region75: #{nonlocal_block_forward.3} parent=73 // pred_check
              _
            $region76: #{nonlocal_block_forward.3} parent=73 // pred_check_branch
              %313 = sbr.rel (0) target = $region78
            $region77: #{nonlocal_block_forward.3} parent=73 // pred_region
              // Predicated region
              $region90: #{nonlocal_block_forward.3} parent=77 // pred_check
                _
              $region91: #{nonlocal_block_forward.3} parent=77 // pred_check_branch
                %342 = sbr.rel (0) target = $region93
              $region92: #{nonlocal_block_forward.3} parent=77 // pred_region
                loop: start=0, step=1, limit=1
                $region94: #{nonlocal_block_forward.3} parent=92 // loop_pre_header
                  _
                $region95: #{nonlocal_block_forward.3} parent=92 // loop_header
                  %s344 = sphi 0, %s348
                  %p345 = scmp.ge.s32.totalorder %s344, 1
                  %s349 = sphi %s309, %s309
                  %s350 = sphi %s305, %s305
                $region96: #{nonlocal_block_forward.3} parent=92 // loop_header_branch
                  %347 = sbr.rel (%p345) target = $region100
                $region97: #{nonlocal_block_forward.3} parent=92 // loop_body
                  %v351 = vld [vmem:[%s349] sm:$0xff]
                  %352 = vst [vmem:[%s350] sm:$0xff] %v351
                  %v353 = vld [vmem:[%s349 + $0x20] sm:$0xff]
                  %354 = vst [vmem:[%s350 + $0x8] sm:$0xff] %v353
                  %v355 = vld [vmem:[%s349 + $0x40] sm:$0xff]
                  %356 = vst [vmem:[%s350 + $0x10] sm:$0xff] %v355
                  %v357 = vld [vmem:[%s349 + $0x60] sm:$0xff]
                  %358 = vst [vmem:[%s350 + $0x18] sm:$0xff] %v357
                  %v359 = vld [vmem:[%s349 + $0x80] sm:$0xff]
                  %360 = vst [vmem:[%s350 + $0x20] sm:$0xff] %v359
                  %v361 = vld [vmem:[%s349 + $0xa0] sm:$0xff]
                  %362 = vst [vmem:[%s350 + $0x28] sm:$0xff] %v361
                  %v363 = vld [vmem:[%s349 + $0xc0] sm:$0xff]
                  %364 = vst [vmem:[%s350 + $0x30] sm:$0xff] %v363
                  %v365 = vld [vmem:[%s349 + $0xe0] sm:$0xff]
                  %366 = vst [vmem:[%s350 + $0x38] sm:$0xff] %v365
                $region98: #{nonlocal_block_forward.3} parent=92 // loop_footer
                  %s348 = sadd.s32 1, %s344
                $region99: #{nonlocal_block_forward.3} parent=92 // loop_footer_branch
                  %343 = sbr.rel target = $region95
                $region100: #{nonlocal_block_forward.3} parent=92 // loop_exit
                  _
              $region93: #{nonlocal_block_forward.3} parent=77 // pred_fallthru
                _
              // Predicated region
              $region101: #{nonlocal_block_forward.3} parent=77 // pred_check
                _
              $region102: #{nonlocal_block_forward.3} parent=77 // pred_check_branch
                %368 = sbr.rel target = $region104
              $region103: #{nonlocal_block_forward.3} parent=77 // pred_region
                _
              $region104: #{nonlocal_block_forward.3} parent=77 // pred_fallthru
                _
            $region78: #{nonlocal_block_forward.3} parent=73 // pred_fallthru
              _
            // Predicated region
            $region79: #{nonlocal_block_forward.3} parent=73 // pred_check
              _
            $region80: #{nonlocal_block_forward.3} parent=73 // pred_check_branch
              %315 = sbr.rel target = $region82
            $region81: #{nonlocal_block_forward.3} parent=73 // pred_region
              loop: start=0, step=1, limit=1
              $region83: #{nonlocal_block_forward.3} parent=81 // loop_pre_header
                _
              $region84: #{nonlocal_block_forward.3} parent=81 // loop_header
                %s318 = sphi 0, %s322
                %p319 = scmp.ge.s32.totalorder %s318, 1
                %s323 = sphi %s309, %s309
                %s324 = sphi %s305, %s305
              $region85: #{nonlocal_block_forward.3} parent=81 // loop_header_branch
                %321 = sbr.rel (%p319) target = $region89
              $region86: #{nonlocal_block_forward.3} parent=81 // loop_body
                %v325 = vld [vmem:[%s323] sm:$0xff]
                %326 = vst [vmem:[%s324] sm:$0xff] %v325
                %v327 = vld [vmem:[%s323 + $0x20] sm:$0xff]
                %328 = vst [vmem:[%s324 + $0x8] sm:$0xff] %v327
                %v329 = vld [vmem:[%s323 + $0x40] sm:$0xff]
                %330 = vst [vmem:[%s324 + $0x10] sm:$0xff] %v329
                %v331 = vld [vmem:[%s323 + $0x60] sm:$0xff]
                %332 = vst [vmem:[%s324 + $0x18] sm:$0xff] %v331
                %v333 = vld [vmem:[%s323 + $0x80] sm:$0xff]
                %334 = vst [vmem:[%s324 + $0x20] sm:$0xff] %v333
                %v335 = vld [vmem:[%s323 + $0xa0] sm:$0xff]
                %336 = vst [vmem:[%s324 + $0x28] sm:$0xff] %v335
                %v337 = vld [vmem:[%s323 + $0xc0] sm:$0xff]
                %338 = vst [vmem:[%s324 + $0x30] sm:$0xff] %v337
                %v339 = vld [vmem:[%s323 + $0xe0] sm:$0xff]
                %340 = vst [vmem:[%s324 + $0x38] sm:$0xff] %v339
              $region87: #{nonlocal_block_forward.3} parent=81 // loop_footer
                %s322 = sadd.s32 1, %s318
              $region88: #{nonlocal_block_forward.3} parent=81 // loop_footer_branch
                %317 = sbr.rel target = $region84
              $region89: #{nonlocal_block_forward.3} parent=81 // loop_exit
                _
            $region82: #{nonlocal_block_forward.3} parent=73 // pred_fallthru
              _
          $region74: #{nonlocal_block_forward.3} parent=69 // pred_fallthru
            _
          %369 = vnop
        $region70: #{nonlocal_block_forward.3} parent=27 // pred_fallthru
          _
      $region28: #{nonlocal_block_forward.3} parent=5 // pred_fallthru
        _
      %p370 = scmp.le.s32.totalorder 1, %s13
      %p371 = scmp.lt.s32.totalorder %s13, 33
      %p372 = pnand %p370, %p371
      %p373 = pneg %p372
      // Predicated region
      $region105: #{nonlocal_block_forward.3} parent=5 // pred_check
        _
      $region106: #{nonlocal_block_forward.3} parent=5 // pred_check_branch
        %375 = sbr.rel (%p372) target = $region108
      $region107: #{nonlocal_block_forward.3} parent=5 // pred_region
        %s376 = ssub.s32 %s13, 1
        %s377 = sand.u32 %s61, 1
        %s378 = sand.u32 %s61, 1
        %s379 = smul.addr %s378, 64
        %s380 = scalar_lea.vmem [#allocation2], %s379
        // Predicated region
        $region109: #{nonlocal_block_forward.3} parent=107 // pred_check
          %p381 = pneg %p74
        $region110: #{nonlocal_block_forward.3} parent=107 // pred_check_branch
          %383 = sbr.rel (%p381) target = $region112
        $region111: #{nonlocal_block_forward.3} parent=107 // pred_region
          _
        $region112: #{nonlocal_block_forward.3} parent=107 // pred_fallthru
          _
        %s384 = sand.u32 %s89, 1
        %s385 = sand.u32 %s89, 1
        %s386 = smul.addr %s385, 64
        %s387 = scalar_lea.vmem [#allocation3], %s386
        // Predicated region
        $region113: #{nonlocal_block_forward.3} parent=107 // pred_check
          %p388 = pneg %p102
        $region114: #{nonlocal_block_forward.3} parent=107 // pred_check_branch
          %390 = sbr.rel (%p388) target = $region116
        $region115: #{nonlocal_block_forward.3} parent=107 // pred_region
          _
        $region116: #{nonlocal_block_forward.3} parent=107 // pred_fallthru
          _
        %p391 = pneg %p46
        %p392 = pneg %p43
        %s393 = sand.u32 %s61, 1
        %s394 = sand.u32 %s61, 1
        %s395 = smul.addr %s394, 64
        %s396 = scalar_lea.vmem [#allocation2], %s395
        %p397 = pneg %p74
        %p398 = pneg %p71
        %s399 = sand.u32 %s89, 1
        %s400 = sand.u32 %s89, 1
        %s401 = smul.addr %s400, 64
        %s402 = scalar_lea.vmem [#allocation3], %s401
        %p403 = pneg %p102
        %p404 = pneg %p99
        %p405 = pneg %p123
        %p406 = pneg %p120
        %p407 = pneg %p144
        %p408 = pneg %p141
        %p409 = pneg %p172
        %p410 = pneg %p169
        %s411 = sand.u32 %s159, 1
        %s412 = sand.u32 %s159, 1
        %s413 = smul.addr %s412, 64
        %s414 = scalar_lea.vmem [#allocation4], %s413
        %p415 = pneg %p200
        %p416 = pneg %p197
        %p417 = scmp.lt.s32.totalorder %s22, 7
        %s418 = scalar_select %p417, %s22, 7
        %p419 = scmp.lt.s32.totalorder %s23, 3
        %s420 = scalar_select %p419, %s23, 3
        %s421 = smul.addr %s420, 36
        %s422 = smul.addr %s418, 144
        %s423 = sadd.s32 %s421, %s422
        %s424 = smul.addr %s423, 8
        %s425 = scalar_lea.vmem %s6, %s424
        %p426 = scmp.lt.s32.totalorder %s22, 7
        %s427 = scalar_select %p426, %s22, 7
        %p428 = scmp.lt.s32.totalorder %s23, 3
        %s429 = scalar_select %p428, %s23, 3
        %s430 = smul.addr %s429, 36
        %s431 = smul.addr %s427, 144
        %s432 = sadd.s32 %s430, %s431
        %s433 = smul.addr %s432, 8
        %s434 = scalar_lea.vmem %s6, %s433
        %v435 = vld [vmem:[%s380] sm:$0xff]
        %v436 = vld [vmem:[%s380 + $0x8] sm:$0xff]
        %v437 = vld [vmem:[%s380 + $0x10] sm:$0xff]
        %v438 = vld [vmem:[%s380 + $0x18] sm:$0xff]
        %v439 = vld [vmem:[%s380 + $0x20] sm:$0xff]
        %v440 = vld [vmem:[%s380 + $0x28] sm:$0xff]
        %v441 = vld [vmem:[%s380 + $0x30] sm:$0xff]
        %v442 = vld [vmem:[%s380 + $0x38] sm:$0xff]
        %v443 = vld [vmem:[%s387] sm:$0xff]
        %v444 = vld [vmem:[%s387 + $0x8] sm:$0xff]
        %v445 = vld [vmem:[%s387 + $0x10] sm:$0xff]
        %v446 = vld [vmem:[%s387 + $0x18] sm:$0xff]
        %v447 = vld [vmem:[%s387 + $0x20] sm:$0xff]
        %v448 = vld [vmem:[%s387 + $0x28] sm:$0xff]
        %v449 = vld [vmem:[%s387 + $0x30] sm:$0xff]
        %v450 = vld [vmem:[%s387 + $0x38] sm:$0xff]
        %v451 = vld [vmem:[%s0] sm:$0x1]
        %vm460 = vcmask 1040384
        %v461 = vrot.slane %v435, 7
        %v462 = vrot.slane %v436, 7
        %v463 = vsel %vm460, %v461, %v462
        %v464 = vrot.slane %v437, 7
        %v465 = vsel %vm460, %v462, %v464
        %v466 = vrot.slane %v438, 7
        %v467 = vsel %vm460, %v464, %v466
        %v468 = vrot.slane %v439, 7
        %v469 = vsel %vm460, %v466, %v468
        %v470 = vrot.slane %v440, 7
        %v471 = vsel %vm460, %v468, %v470
        %v472 = vrot.slane %v441, 7
        %v473 = vsel %vm460, %v470, %v472
        %v474 = vrot.slane %v442, 7
        %v475 = vsel %vm460, %v472, %v474
        %v485 = vsel %vm460, %v451, %v461
        %v486 = vmul.f32 %v485, 0.5
        %v487 = vmul.f32 %v463, 0.5
        %v488 = vmul.f32 %v465, 0.5
        %v489 = vmul.f32 %v467, 0.5
        %v490 = vmul.f32 %v469, 0.5
        %v491 = vmul.f32 %v471, 0.5
        %v492 = vmul.f32 %v473, 0.5
        %v493 = vmul.f32 %v475, 0.5
        %v494 = vmul.f32 %v474, 0.5
        %v503 = vrot.slane %v443, 7
        %v504 = vrot.slane %v444, 7
        %v505 = vsel %vm460, %v503, %v504
        %v506 = vrot.slane %v445, 7
        %v507 = vsel %vm460, %v504, %v506
        %v508 = vrot.slane %v446, 7
        %v509 = vsel %vm460, %v506, %v508
        %v510 = vrot.slane %v447, 7
        %v511 = vsel %vm460, %v508, %v510
        %v512 = vrot.slane %v448, 7
        %v513 = vsel %vm460, %v510, %v512
        %v514 = vrot.slane %v449, 7
        %v515 = vsel %vm460, %v512, %v514
        %v516 = vrot.slane %v450, 7
        %v517 = vsel %vm460, %v514, %v516
        %v519 = vsel %vm460, %v451, %v503
        %520 = vrot.lane.b32.xlu0 %v503, 112
        %v521 = vpop.permute.xlu0 %520
        %522 = vrot.lane.b32.xlu0 %v505, 112
        %v523 = vpop.permute.xlu0 %522
        %524 = vrot.lane.b32.xlu0 %v507, 112
        %v525 = vpop.permute.xlu0 %524
        %526 = vrot.lane.b32.xlu0 %v509, 112
        %v527 = vpop.permute.xlu0 %526
        %528 = vrot.lane.b32.xlu0 %v511, 112
        %v529 = vpop.permute.xlu0 %528
        %530 = vrot.lane.b32.xlu0 %v513, 112
        %v531 = vpop.permute.xlu0 %530
        %532 = vrot.lane.b32.xlu0 %v515, 112
        %v533 = vpop.permute.xlu0 %532
        %534 = vrot.lane.b32.xlu0 %v517, 112
        %v535 = vpop.permute.xlu0 %534
        %536 = vrot.lane.b32.xlu0 %v516, 112
        %v537 = vpop.permute.xlu0 %536
        %v546 = vsel %vm460, %v451, %v521
        %vm547 = vcmask 31744
        %v549 = vsel %vm547, %v486, 0
        %v552 = vsel %vm547, %v487, 0
        %v555 = vsel %vm547, %v488, 0
        %v558 = vsel %vm547, %v489, 0
        %v561 = vsel %vm547, %v490, 0
        %v564 = vsel %vm547, %v491, 0
        %v567 = vsel %vm547, %v492, 0
        %v570 = vsel %vm547, %v493, 0
        %v573 = vsel %vm547, %v494, 0
        %v576 = vsel %vm547, %v519, 0
        %v578 = vsel %vm547, %v505, 0
        %v580 = vsel %vm547, %v507, 0
        %v582 = vsel %vm547, %v509, 0
        %v584 = vsel %vm547, %v511, 0
        %v586 = vsel %vm547, %v513, 0
        %v588 = vsel %vm547, %v515, 0
        %v590 = vsel %vm547, %v517, 0
        %v592 = vsel %vm547, %v516, 0
        %594 = vmatprep.subr.mxu0 0.0
        %595 = vmatpush1.xpose.msra.mxu0 %v576
        %596 = vmatprep.subr.mxu0 0.0
        %597 = vmatpush1.xpose.msra.mxu0 %v578
        %598 = vmatprep.subr.mxu0 0.0
        %599 = vmatpush1.xpose.msra.mxu0 %v580
        %600 = vmatprep.subr.mxu0 0.0
        %601 = vmatpush1.xpose.msra.mxu0 %v582
        %602 = vmatprep.subr.mxu0 0.0
        %603 = vmatpush1.xpose.msra.mxu0 %v584
        %604 = vmatprep.subr.mxu0 0.0
        %605 = vmatpush1.xpose.msra.mxu0 %v586
        %606 = vmatprep.subr.mxu0 0.0
        %607 = vmatpush1.xpose.msra.mxu0 %v588
        %608 = vmatprep.subr.mxu0 0.0
        %609 = vmatpush1.xpose.msra.mxu0 %v590
        %610 = vmatprep.subr.mxu0 0.0
        %611 = vmatpush1.xpose.msra.mxu0 %v592
        %612 = vmatprep.subr.mxu0 0.0
        %613 = vmatpush1.xpose.msra.mxu0 0.0
        %614 = vmatprep.subr.mxu0 0.0
        %615 = vmatpush1.xpose.msra.mxu0 0.0
        %616 = vmatprep.subr.mxu0 0.0
        %617 = vmatpush1.xpose.msra.mxu0 0.0
        %618 = vmatprep.subr.mxu0 0.0
        %619 = vmatpush1.xpose.msra.mxu0 0.0
        %620 = vmatprep.subr.mxu0 0.0
        %621 = vmatpush1.xpose.msra.mxu0 0.0
        %622 = vmatprep.subr.mxu0 0.0
        %623 = vmatpush1.xpose.msra.mxu0 0.0
        %624 = vmatprep.subr.mxu0 0.0
        %625 = vmatpush1.xpose.msra.mxu0 0.0
        %626 = vmatprep.subr.mxu0 0.0
        %627 = vmatpush1.xpose.msra.mxu0 0.0
        %628 = vmatprep.subr.mxu0 0.0
        %629 = vmatpush1.xpose.msra.mxu0 0.0
        %630 = vmatprep.subr.mxu0 0.0
        %631 = vmatpush1.xpose.msra.mxu0 0.0
        %632 = vmatprep.subr.mxu0 0.0
        %633 = vmatpush1.xpose.msra.mxu0 0.0
        %634 = vmatprep.subr.mxu0 0.0
        %635 = vmatpush1.xpose.msra.mxu0 0.0
        %636 = vmatprep.subr.mxu0 0.0
        %637 = vmatpush1.xpose.msra.mxu0 0.0
        %638 = vmatprep.subr.mxu0 0.0
        %639 = vmatpush1.xpose.msra.mxu0 0.0
        %640 = vmatprep.subr.mxu0 0.0
        %641 = vmatpush1.xpose.msra.mxu0 0.0
        %642 = vmatprep.subr.mxu0 0.0
        %643 = vmatpush1.xpose.msra.mxu0 0.0
        %644 = vmatprep.subr.mxu0 0.0
        %645 = vmatpush1.xpose.msra.mxu0 0.0
        %646 = vmatprep.subr.mxu0 0.0
        %647 = vmatpush1.xpose.msra.mxu0 0.0
        %648 = vmatprep.subr.mxu0 0.0
        %649 = vmatpush1.xpose.msra.mxu0 0.0
        %650 = vmatprep.subr.mxu0 0.0
        %651 = vmatpush1.xpose.msra.mxu0 0.0
        %652 = vmatprep.subr.mxu0 0.0
        %653 = vmatpush1.xpose.msra.mxu0 0.0
        %654 = vmatprep.subr.mxu0 0.0
        %655 = vmatpush1.xpose.msra.mxu0 0.0
        %656 = vmatprep.subr.mxu0 0.0
        %657 = vmatpush1.xpose.msra.mxu0 0.0
        %658 = vmatprep.mubr.f32.mxu0 0.0
        %659 = vmatmul.mubr.f32.gmra.mrb[0].mxu0 %v549
        %v660 = vpop.f32.mrb[0].mxu0
        %v661 = vadd.f32 0.0, %v660
        %v662 = vpop.f32.mrb[0].mxu0
        %663 = vmatprep.mubr.f32.mxu0 0.0
        %664 = vmatmul.mubr.f32.gmra.mrb[0].mxu0 %v552
        %v665 = vpop.f32.mrb[0].mxu0
        %v666 = vadd.f32 0.0, %v665
        %v667 = vpop.f32.mrb[0].mxu0
        %668 = vmatprep.mubr.f32.mxu0 0.0
        %669 = vmatmul.mubr.f32.gmra.mrb[0].mxu0 %v555
        %v670 = vpop.f32.mrb[0].mxu0
        %v671 = vadd.f32 0.0, %v670
        %v672 = vpop.f32.mrb[0].mxu0
        %673 = vmatprep.mubr.f32.mxu0 0.0
        %674 = vmatmul.mubr.f32.gmra.mrb[0].mxu0 %v558
        %v675 = vpop.f32.mrb[0].mxu0
        %v676 = vadd.f32 0.0, %v675
        %v677 = vpop.f32.mrb[0].mxu0
        %678 = vmatprep.mubr.f32.mxu0 0.0
        %679 = vmatmul.mubr.f32.gmra.mrb[0].mxu0 %v561
        %v680 = vpop.f32.mrb[0].mxu0
        %v681 = vadd.f32 0.0, %v680
        %v682 = vpop.f32.mrb[0].mxu0
        %683 = vmatprep.mubr.f32.mxu0 0.0
        %684 = vmatmul.mubr.f32.gmra.mrb[0].mxu0 %v564
        %v685 = vpop.f32.mrb[0].mxu0
        %v686 = vadd.f32 0.0, %v685
        %v687 = vpop.f32.mrb[0].mxu0
        %688 = vmatprep.mubr.f32.mxu0 0.0
        %689 = vmatmul.mubr.f32.gmra.mrb[0].mxu0 %v567
        %v690 = vpop.f32.mrb[0].mxu0
        %v691 = vadd.f32 0.0, %v690
        %v692 = vpop.f32.mrb[0].mxu0
        %693 = vmatprep.mubr.f32.mxu0 0.0
        %694 = vmatmul.mubr.f32.gmra.mrb[0].mxu0 %v570
        %v695 = vpop.f32.mrb[0].mxu0
        %v696 = vadd.f32 0.0, %v695
        %v697 = vpop.f32.mrb[0].mxu0
        %698 = vmatprep.mubr.f32.mxu0 0.0
        %699 = vmatmul.mubr.f32.gmra.mrb[0].mxu0 %v573
        %v700 = vpop.f32.mrb[0].mxu0
        %v701 = vadd.f32 0.0, %v700
        %v702 = vpop.f32.mrb[0].mxu0
        %703 = vdwg.mxu0
        %704 = vrot.lane.b32.xlu0 %v486, 124
        %v705 = vpop.permute.xlu0 %704
        %706 = vrot.lane.b32.xlu0 %v487, 124
        %v707 = vpop.permute.xlu0 %706
        %708 = vrot.lane.b32.xlu0 %v488, 124
        %v709 = vpop.permute.xlu0 %708
        %710 = vrot.lane.b32.xlu0 %v489, 124
        %v711 = vpop.permute.xlu0 %710
        %712 = vrot.lane.b32.xlu0 %v490, 124
        %v713 = vpop.permute.xlu0 %712
        %714 = vrot.lane.b32.xlu0 %v491, 124
        %v715 = vpop.permute.xlu0 %714
        %716 = vrot.lane.b32.xlu0 %v492, 124
        %v717 = vpop.permute.xlu0 %716
        %718 = vrot.lane.b32.xlu0 %v493, 124
        %v719 = vpop.permute.xlu0 %718
        %720 = vrot.lane.b32.xlu0 %v494, 124
        %v721 = vpop.permute.xlu0 %720
        %722 = vrot.lane.b32.xlu0 %v519, 124
        %v723 = vpop.permute.xlu0 %722
        %724 = vrot.lane.b32.xlu0 %v505, 124
        %v725 = vpop.permute.xlu0 %724
        %726 = vrot.lane.b32.xlu0 %v507, 124
        %v727 = vpop.permute.xlu0 %726
        %728 = vrot.lane.b32.xlu0 %v509, 124
        %v729 = vpop.permute.xlu0 %728
        %730 = vrot.lane.b32.xlu0 %v511, 124
        %v731 = vpop.permute.xlu0 %730
        %732 = vrot.lane.b32.xlu0 %v513, 124
        %v733 = vpop.permute.xlu0 %732
        %734 = vrot.lane.b32.xlu0 %v515, 124
        %v735 = vpop.permute.xlu0 %734
        %736 = vrot.lane.b32.xlu0 %v517, 124
        %v737 = vpop.permute.xlu0 %736
        %738 = vrot.lane.b32.xlu0 %v516, 124
        %v739 = vpop.permute.xlu0 %738
        %v740 = vsel %vm547, %v705, 0
        %v742 = vsel %vm547, %v707, 0
        %v744 = vsel %vm547, %v709, 0
        %v746 = vsel %vm547, %v711, 0
        %v748 = vsel %vm547, %v713, 0
        %v750 = vsel %vm547, %v715, 0
        %v752 = vsel %vm547, %v717, 0
        %v754 = vsel %vm547, %v719, 0
        %v756 = vsel %vm547, %v721, 0
        %v758 = vsel %vm547, %v723, 0
        %v760 = vsel %vm547, %v725, 0
        %v762 = vsel %vm547, %v727, 0
        %v764 = vsel %vm547, %v729, 0
        %v766 = vsel %vm547, %v731, 0
        %v768 = vsel %vm547, %v733, 0
        %v770 = vsel %vm547, %v735, 0
        %v772 = vsel %vm547, %v737, 0
        %v774 = vsel %vm547, %v739, 0
        %776 = vmatprep.subr.mxu0 0.0
        %777 = vmatpush1.xpose.msra.mxu0 %v758
        %778 = vmatprep.subr.mxu0 0.0
        %779 = vmatpush1.xpose.msra.mxu0 %v760
        %780 = vmatprep.subr.mxu0 0.0
        %781 = vmatpush1.xpose.msra.mxu0 %v762
        %782 = vmatprep.subr.mxu0 0.0
        %783 = vmatpush1.xpose.msra.mxu0 %v764
        %784 = vmatprep.subr.mxu0 0.0
        %785 = vmatpush1.xpose.msra.mxu0 %v766
        %786 = vmatprep.subr.mxu0 0.0
        %787 = vmatpush1.xpose.msra.mxu0 %v768
        %788 = vmatprep.subr.mxu0 0.0
        %789 = vmatpush1.xpose.msra.mxu0 %v770
        %790 = vmatprep.subr.mxu0 0.0
        %791 = vmatpush1.xpose.msra.mxu0 %v772
        %792 = vmatprep.subr.mxu0 0.0
        %793 = vmatpush1.xpose.msra.mxu0 %v774
        %794 = vmatprep.subr.mxu0 0.0
        %795 = vmatpush1.xpose.msra.mxu0 0.0
        %796 = vmatprep.subr.mxu0 0.0
        %797 = vmatpush1.xpose.msra.mxu0 0.0
        %798 = vmatprep.subr.mxu0 0.0
        %799 = vmatpush1.xpose.msra.mxu0 0.0
        %800 = vmatprep.subr.mxu0 0.0
        %801 = vmatpush1.xpose.msra.mxu0 0.0
        %802 = vmatprep.subr.mxu0 0.0
        %803 = vmatpush1.xpose.msra.mxu0 0.0
        %804 = vmatprep.subr.mxu0 0.0
        %805 = vmatpush1.xpose.msra.mxu0 0.0
        %806 = vmatprep.subr.mxu0 0.0
        %807 = vmatpush1.xpose.msra.mxu0 0.0
        %808 = vmatprep.subr.mxu0 0.0
        %809 = vmatpush1.xpose.msra.mxu0 0.0
        %810 = vmatprep.subr.mxu0 0.0
        %811 = vmatpush1.xpose.msra.mxu0 0.0
        %812 = vmatprep.subr.mxu0 0.0
        %813 = vmatpush1.xpose.msra.mxu0 0.0
        %814 = vmatprep.subr.mxu0 0.0
        %815 = vmatpush1.xpose.msra.mxu0 0.0
        %816 = vmatprep.subr.mxu0 0.0
        %817 = vmatpush1.xpose.msra.mxu0 0.0
        %818 = vmatprep.subr.mxu0 0.0
        %819 = vmatpush1.xpose.msra.mxu0 0.0
        %820 = vmatprep.subr.mxu0 0.0
        %821 = vmatpush1.xpose.msra.mxu0 0.0
        %822 = vmatprep.subr.mxu0 0.0
        %823 = vmatpush1.xpose.msra.mxu0 0.0
        %824 = vmatprep.subr.mxu0 0.0
        %825 = vmatpush1.xpose.msra.mxu0 0.0
        %826 = vmatprep.subr.mxu0 0.0
        %827 = vmatpush1.xpose.msra.mxu0 0.0
        %828 = vmatprep.subr.mxu0 0.0
        %829 = vmatpush1.xpose.msra.mxu0 0.0
        %830 = vmatprep.subr.mxu0 0.0
        %831 = vmatpush1.xpose.msra.mxu0 0.0
        %832 = vmatprep.subr.mxu0 0.0
        %833 = vmatpush1.xpose.msra.mxu0 0.0
        %834 = vmatprep.subr.mxu0 0.0
        %835 = vmatpush1.xpose.msra.mxu0 0.0
        %836 = vmatprep.subr.mxu0 0.0
        %837 = vmatpush1.xpose.msra.mxu0 0.0
        %838 = vmatprep.subr.mxu0 0.0
        %839 = vmatpush1.xpose.msra.mxu0 0.0
        %840 = vmatprep.mubr.f32.mxu0 0.0
        %841 = vmatmul.mubr.f32.gmra.mrb[0].mxu0 %v740
        %v842 = vpop.f32.mrb[0].mxu0
        %v843 = vadd.f32 0.0, %v842
        %v844 = vpop.f32.mrb[0].mxu0
        %845 = vmatprep.mubr.f32.mxu0 0.0
        %846 = vmatmul.mubr.f32.gmra.mrb[0].mxu0 %v742
        %v847 = vpop.f32.mrb[0].mxu0
        %v848 = vadd.f32 0.0, %v847
        %v849 = vpop.f32.mrb[0].mxu0
        %850 = vmatprep.mubr.f32.mxu0 0.0
        %851 = vmatmul.mubr.f32.gmra.mrb[0].mxu0 %v744
        %v852 = vpop.f32.mrb[0].mxu0
        %v853 = vadd.f32 0.0, %v852
        %v854 = vpop.f32.mrb[0].mxu0
        %855 = vmatprep.mubr.f32.mxu0 0.0
        %856 = vmatmul.mubr.f32.gmra.mrb[0].mxu0 %v746
        %v857 = vpop.f32.mrb[0].mxu0
        %v858 = vadd.f32 0.0, %v857
        %v859 = vpop.f32.mrb[0].mxu0
        %860 = vmatprep.mubr.f32.mxu0 0.0
        %861 = vmatmul.mubr.f32.gmra.mrb[0].mxu0 %v748
        %v862 = vpop.f32.mrb[0].mxu0
        %v863 = vadd.f32 0.0, %v862
        %v864 = vpop.f32.mrb[0].mxu0
        %865 = vmatprep.mubr.f32.mxu0 0.0
        %866 = vmatmul.mubr.f32.gmra.mrb[0].mxu0 %v750
        %v867 = vpop.f32.mrb[0].mxu0
        %v868 = vadd.f32 0.0, %v867
        %v869 = vpop.f32.mrb[0].mxu0
        %870 = vmatprep.mubr.f32.mxu0 0.0
        %871 = vmatmul.mubr.f32.gmra.mrb[0].mxu0 %v752
        %v872 = vpop.f32.mrb[0].mxu0
        %v873 = vadd.f32 0.0, %v872
        %v874 = vpop.f32.mrb[0].mxu0
        %875 = vmatprep.mubr.f32.mxu0 0.0
        %876 = vmatmul.mubr.f32.gmra.mrb[0].mxu0 %v754
        %v877 = vpop.f32.mrb[0].mxu0
        %v878 = vadd.f32 0.0, %v877
        %v879 = vpop.f32.mrb[0].mxu0
        %880 = vmatprep.mubr.f32.mxu0 0.0
        %881 = vmatmul.mubr.f32.gmra.mrb[0].mxu0 %v756
        %v882 = vpop.f32.mrb[0].mxu0
        %v883 = vadd.f32 0.0, %v882
        %v884 = vpop.f32.mrb[0].mxu0
        %885 = vdwg.mxu0
        %886 = vrot.lane.b32.xlu0 %v486, 120
        %v887 = vpop.permute.xlu0 %886
        %888 = vrot.lane.b32.xlu0 %v487, 120
        %v889 = vpop.permute.xlu0 %888
        %890 = vrot.lane.b32.xlu0 %v488, 120
        %v891 = vpop.permute.xlu0 %890
        %892 = vrot.lane.b32.xlu0 %v489, 120
        %v893 = vpop.permute.xlu0 %892
        %894 = vrot.lane.b32.xlu0 %v490, 120
        %v895 = vpop.permute.xlu0 %894
        %896 = vrot.lane.b32.xlu0 %v491, 120
        %v897 = vpop.permute.xlu0 %896
        %898 = vrot.lane.b32.xlu0 %v492, 120
        %v899 = vpop.permute.xlu0 %898
        %900 = vrot.lane.b32.xlu0 %v493, 120
        %v901 = vpop.permute.xlu0 %900
        %902 = vrot.lane.b32.xlu0 %v494, 120
        %v903 = vpop.permute.xlu0 %902
        %904 = vrot.lane.b32.xlu0 %v519, 120
        %v905 = vpop.permute.xlu0 %904
        %906 = vrot.lane.b32.xlu0 %v505, 120
        %v907 = vpop.permute.xlu0 %906
        %908 = vrot.lane.b32.xlu0 %v507, 120
        %v909 = vpop.permute.xlu0 %908
        %910 = vrot.lane.b32.xlu0 %v509, 120
        %v911 = vpop.permute.xlu0 %910
        %912 = vrot.lane.b32.xlu0 %v511, 120
        %v913 = vpop.permute.xlu0 %912
        %914 = vrot.lane.b32.xlu0 %v513, 120
        %v915 = vpop.permute.xlu0 %914
        %916 = vrot.lane.b32.xlu0 %v515, 120
        %v917 = vpop.permute.xlu0 %916
        %918 = vrot.lane.b32.xlu0 %v517, 120
        %v919 = vpop.permute.xlu0 %918
        %920 = vrot.lane.b32.xlu0 %v516, 120
        %v921 = vpop.permute.xlu0 %920
        %v922 = vsel %vm547, %v887, 0
        %v924 = vsel %vm547, %v889, 0
        %v926 = vsel %vm547, %v891, 0
        %v928 = vsel %vm547, %v893, 0
        %v930 = vsel %vm547, %v895, 0
        %v932 = vsel %vm547, %v897, 0
        %v934 = vsel %vm547, %v899, 0
        %v936 = vsel %vm547, %v901, 0
        %v938 = vsel %vm547, %v903, 0
        %v940 = vsel %vm547, %v905, 0
        %v942 = vsel %vm547, %v907, 0
        %v944 = vsel %vm547, %v909, 0
        %v946 = vsel %vm547, %v911, 0
        %v948 = vsel %vm547, %v913, 0
        %v950 = vsel %vm547, %v915, 0
        %v952 = vsel %vm547, %v917, 0
        %v954 = vsel %vm547, %v919, 0
        %v956 = vsel %vm547, %v921, 0
        %958 = vmatprep.subr.mxu0 0.0
        %959 = vmatpush1.xpose.msra.mxu0 %v940
        %960 = vmatprep.subr.mxu0 0.0
        %961 = vmatpush1.xpose.msra.mxu0 %v942
        %962 = vmatprep.subr.mxu0 0.0
        %963 = vmatpush1.xpose.msra.mxu0 %v944
        %964 = vmatprep.subr.mxu0 0.0
        %965 = vmatpush1.xpose.msra.mxu0 %v946
        %966 = vmatprep.subr.mxu0 0.0
        %967 = vmatpush1.xpose.msra.mxu0 %v948
        %968 = vmatprep.subr.mxu0 0.0
        %969 = vmatpush1.xpose.msra.mxu0 %v950
        %970 = vmatprep.subr.mxu0 0.0
        %971 = vmatpush1.xpose.msra.mxu0 %v952
        %972 = vmatprep.subr.mxu0 0.0
        %973 = vmatpush1.xpose.msra.mxu0 %v954
        %974 = vmatprep.subr.mxu0 0.0
        %975 = vmatpush1.xpose.msra.mxu0 %v956
        %976 = vmatprep.subr.mxu0 0.0
        %977 = vmatpush1.xpose.msra.mxu0 0.0
        %978 = vmatprep.subr.mxu0 0.0
        %979 = vmatpush1.xpose.msra.mxu0 0.0
        %980 = vmatprep.subr.mxu0 0.0
        %981 = vmatpush1.xpose.msra.mxu0 0.0
        %982 = vmatprep.subr.mxu0 0.0
        %983 = vmatpush1.xpose.msra.mxu0 0.0
        %984 = vmatprep.subr.mxu0 0.0
        %985 = vmatpush1.xpose.msra.mxu0 0.0
        %986 = vmatprep.subr.mxu0 0.0
        %987 = vmatpush1.xpose.msra.mxu0 0.0
        %988 = vmatprep.subr.mxu0 0.0
        %989 = vmatpush1.xpose.msra.mxu0 0.0
        %990 = vmatprep.subr.mxu0 0.0
        %991 = vmatpush1.xpose.msra.mxu0 0.0
        %992 = vmatprep.subr.mxu0 0.0
        %993 = vmatpush1.xpose.msra.mxu0 0.0
        %994 = vmatprep.subr.mxu0 0.0
        %995 = vmatpush1.xpose.msra.mxu0 0.0
        %996 = vmatprep.subr.mxu0 0.0
        %997 = vmatpush1.xpose.msra.mxu0 0.0
        %998 = vmatprep.subr.mxu0 0.0
        %999 = vmatpush1.xpose.msra.mxu0 0.0
        %1000 = vmatprep.subr.mxu0 0.0
        %1001 = vmatpush1.xpose.msra.mxu0 0.0
        %1002 = vmatprep.subr.mxu0 0.0
        %1003 = vmatpush1.xpose.msra.mxu0 0.0
        %1004 = vmatprep.subr.mxu0 0.0
        %1005 = vmatpush1.xpose.msra.mxu0 0.0
        %1006 = vmatprep.subr.mxu0 0.0
        %1007 = vmatpush1.xpose.msra.mxu0 0.0
        %1008 = vmatprep.subr.mxu0 0.0
        %1009 = vmatpush1.xpose.msra.mxu0 0.0
        %1010 = vmatprep.subr.mxu0 0.0
        %1011 = vmatpush1.xpose.msra.mxu0 0.0
        %1012 = vmatprep.subr.mxu0 0.0
        %1013 = vmatpush1.xpose.msra.mxu0 0.0
        %1014 = vmatprep.subr.mxu0 0.0
        %1015 = vmatpush1.xpose.msra.mxu0 0.0
        %1016 = vmatprep.subr.mxu0 0.0
        %1017 = vmatpush1.xpose.msra.mxu0 0.0
        %1018 = vmatprep.subr.mxu0 0.0
        %1019 = vmatpush1.xpose.msra.mxu0 0.0
        %1020 = vmatprep.subr.mxu0 0.0
        %1021 = vmatpush1.xpose.msra.mxu0 0.0
        %1022 = vmatprep.mubr.f32.mxu0 0.0
        %1023 = vmatmul.mubr.f32.gmra.mrb[0].mxu0 %v922
        %v1024 = vpop.f32.mrb[0].mxu0
        %v1025 = vadd.f32 0.0, %v1024
        %v1026 = vpop.f32.mrb[0].mxu0
        %1027 = vmatprep.mubr.f32.mxu0 0.0
        %1028 = vmatmul.mubr.f32.gmra.mrb[0].mxu0 %v924
        %v1029 = vpop.f32.mrb[0].mxu0
        %v1030 = vadd.f32 0.0, %v1029
        %v1031 = vpop.f32.mrb[0].mxu0
        %1032 = vmatprep.mubr.f32.mxu0 0.0
        %1033 = vmatmul.mubr.f32.gmra.mrb[0].mxu0 %v926
        %v1034 = vpop.f32.mrb[0].mxu0
        %v1035 = vadd.f32 0.0, %v1034
        %v1036 = vpop.f32.mrb[0].mxu0
        %1037 = vmatprep.mubr.f32.mxu0 0.0
        %1038 = vmatmul.mubr.f32.gmra.mrb[0].mxu0 %v928
        %v1039 = vpop.f32.mrb[0].mxu0
        %v1040 = vadd.f32 0.0, %v1039
        %v1041 = vpop.f32.mrb[0].mxu0
        %1042 = vmatprep.mubr.f32.mxu0 0.0
        %1043 = vmatmul.mubr.f32.gmra.mrb[0].mxu0 %v930
        %v1044 = vpop.f32.mrb[0].mxu0
        %v1045 = vadd.f32 0.0, %v1044
        %v1046 = vpop.f32.mrb[0].mxu0
        %1047 = vmatprep.mubr.f32.mxu0 0.0
        %1048 = vmatmul.mubr.f32.gmra.mrb[0].mxu0 %v932
        %v1049 = vpop.f32.mrb[0].mxu0
        %v1050 = vadd.f32 0.0, %v1049
        %v1051 = vpop.f32.mrb[0].mxu0
        %1052 = vmatprep.mubr.f32.mxu0 0.0
        %1053 = vmatmul.mubr.f32.gmra.mrb[0].mxu0 %v934
        %v1054 = vpop.f32.mrb[0].mxu0
        %v1055 = vadd.f32 0.0, %v1054
        %v1056 = vpop.f32.mrb[0].mxu0
        %1057 = vmatprep.mubr.f32.mxu0 0.0
        %1058 = vmatmul.mubr.f32.gmra.mrb[0].mxu0 %v936
        %v1059 = vpop.f32.mrb[0].mxu0
        %v1060 = vadd.f32 0.0, %v1059
        %v1061 = vpop.f32.mrb[0].mxu0
        %1062 = vmatprep.mubr.f32.mxu0 0.0
        %1063 = vmatmul.mubr.f32.gmra.mrb[0].mxu0 %v938
        %v1064 = vpop.f32.mrb[0].mxu0
        %v1065 = vadd.f32 0.0, %v1064
        %v1066 = vpop.f32.mrb[0].mxu0
        %1067 = vdwg.mxu0
        %1068 = vrot.lane.b32.xlu0 %v486, 116
        %v1069 = vpop.permute.xlu0 %1068
        %1070 = vrot.lane.b32.xlu0 %v487, 116
        %v1071 = vpop.permute.xlu0 %1070
        %1072 = vrot.lane.b32.xlu0 %v488, 116
        %v1073 = vpop.permute.xlu0 %1072
        %1074 = vrot.lane.b32.xlu0 %v489, 116
        %v1075 = vpop.permute.xlu0 %1074
        %1076 = vrot.lane.b32.xlu0 %v490, 116
        %v1077 = vpop.permute.xlu0 %1076
        %1078 = vrot.lane.b32.xlu0 %v491, 116
        %v1079 = vpop.permute.xlu0 %1078
        %1080 = vrot.lane.b32.xlu0 %v492, 116
        %v1081 = vpop.permute.xlu0 %1080
        %1082 = vrot.lane.b32.xlu0 %v493, 116
        %v1083 = vpop.permute.xlu0 %1082
        %1084 = vrot.lane.b32.xlu0 %v494, 116
        %v1085 = vpop.permute.xlu0 %1084
        %1086 = vrot.lane.b32.xlu0 %v519, 116
        %v1087 = vpop.permute.xlu0 %1086
        %1088 = vrot.lane.b32.xlu0 %v505, 116
        %v1089 = vpop.permute.xlu0 %1088
        %1090 = vrot.lane.b32.xlu0 %v507, 116
        %v1091 = vpop.permute.xlu0 %1090
        %1092 = vrot.lane.b32.xlu0 %v509, 116
        %v1093 = vpop.permute.xlu0 %1092
        %1094 = vrot.lane.b32.xlu0 %v511, 116
        %v1095 = vpop.permute.xlu0 %1094
        %1096 = vrot.lane.b32.xlu0 %v513, 116
        %v1097 = vpop.permute.xlu0 %1096
        %1098 = vrot.lane.b32.xlu0 %v515, 116
        %v1099 = vpop.permute.xlu0 %1098
        %1100 = vrot.lane.b32.xlu0 %v517, 116
        %v1101 = vpop.permute.xlu0 %1100
        %1102 = vrot.lane.b32.xlu0 %v516, 116
        %v1103 = vpop.permute.xlu0 %1102
        %v1104 = vsel %vm547, %v1069, 0
        %v1106 = vsel %vm547, %v1071, 0
        %v1108 = vsel %vm547, %v1073, 0
        %v1110 = vsel %vm547, %v1075, 0
        %v1112 = vsel %vm547, %v1077, 0
        %v1114 = vsel %vm547, %v1079, 0
        %v1116 = vsel %vm547, %v1081, 0
        %v1118 = vsel %vm547, %v1083, 0
        %v1120 = vsel %vm547, %v1085, 0
        %v1122 = vsel %vm547, %v1087, 0
        %v1124 = vsel %vm547, %v1089, 0
        %v1126 = vsel %vm547, %v1091, 0
        %v1128 = vsel %vm547, %v1093, 0
        %v1130 = vsel %vm547, %v1095, 0
        %v1132 = vsel %vm547, %v1097, 0
        %v1134 = vsel %vm547, %v1099, 0
        %v1136 = vsel %vm547, %v1101, 0
        %v1138 = vsel %vm547, %v1103, 0
        %1140 = vmatprep.subr.mxu0 0.0
        %1141 = vmatpush1.xpose.msra.mxu0 %v1122
        %1142 = vmatprep.subr.mxu0 0.0
        %1143 = vmatpush1.xpose.msra.mxu0 %v1124
        %1144 = vmatprep.subr.mxu0 0.0
        %1145 = vmatpush1.xpose.msra.mxu0 %v1126
        %1146 = vmatprep.subr.mxu0 0.0
        %1147 = vmatpush1.xpose.msra.mxu0 %v1128
        %1148 = vmatprep.subr.mxu0 0.0
        %1149 = vmatpush1.xpose.msra.mxu0 %v1130
        %1150 = vmatprep.subr.mxu0 0.0
        %1151 = vmatpush1.xpose.msra.mxu0 %v1132
        %1152 = vmatprep.subr.mxu0 0.0
        %1153 = vmatpush1.xpose.msra.mxu0 %v1134
        %1154 = vmatprep.subr.mxu0 0.0
        %1155 = vmatpush1.xpose.msra.mxu0 %v1136
        %1156 = vmatprep.subr.mxu0 0.0
        %1157 = vmatpush1.xpose.msra.mxu0 %v1138
        %1158 = vmatprep.subr.mxu0 0.0
        %1159 = vmatpush1.xpose.msra.mxu0 0.0
        %1160 = vmatprep.subr.mxu0 0.0
        %1161 = vmatpush1.xpose.msra.mxu0 0.0
        %1162 = vmatprep.subr.mxu0 0.0
        %1163 = vmatpush1.xpose.msra.mxu0 0.0
        %1164 = vmatprep.subr.mxu0 0.0
        %1165 = vmatpush1.xpose.msra.mxu0 0.0
        %1166 = vmatprep.subr.mxu0 0.0
        %1167 = vmatpush1.xpose.msra.mxu0 0.0
        %1168 = vmatprep.subr.mxu0 0.0
        %1169 = vmatpush1.xpose.msra.mxu0 0.0
        %1170 = vmatprep.subr.mxu0 0.0
        %1171 = vmatpush1.xpose.msra.mxu0 0.0
        %1172 = vmatprep.subr.mxu0 0.0
        %1173 = vmatpush1.xpose.msra.mxu0 0.0
        %1174 = vmatprep.subr.mxu0 0.0
        %1175 = vmatpush1.xpose.msra.mxu0 0.0
        %1176 = vmatprep.subr.mxu0 0.0
        %1177 = vmatpush1.xpose.msra.mxu0 0.0
        %1178 = vmatprep.subr.mxu0 0.0
        %1179 = vmatpush1.xpose.msra.mxu0 0.0
        %1180 = vmatprep.subr.mxu0 0.0
        %1181 = vmatpush1.xpose.msra.mxu0 0.0
        %1182 = vmatprep.subr.mxu0 0.0
        %1183 = vmatpush1.xpose.msra.mxu0 0.0
        %1184 = vmatprep.subr.mxu0 0.0
        %1185 = vmatpush1.xpose.msra.mxu0 0.0
        %1186 = vmatprep.subr.mxu0 0.0
        %1187 = vmatpush1.xpose.msra.mxu0 0.0
        %1188 = vmatprep.subr.mxu0 0.0
        %1189 = vmatpush1.xpose.msra.mxu0 0.0
        %1190 = vmatprep.subr.mxu0 0.0
        %1191 = vmatpush1.xpose.msra.mxu0 0.0
        %1192 = vmatprep.subr.mxu0 0.0
        %1193 = vmatpush1.xpose.msra.mxu0 0.0
        %1194 = vmatprep.subr.mxu0 0.0
        %1195 = vmatpush1.xpose.msra.mxu0 0.0
        %1196 = vmatprep.subr.mxu0 0.0
        %1197 = vmatpush1.xpose.msra.mxu0 0.0
        %1198 = vmatprep.subr.mxu0 0.0
        %1199 = vmatpush1.xpose.msra.mxu0 0.0
        %1200 = vmatprep.subr.mxu0 0.0
        %1201 = vmatpush1.xpose.msra.mxu0 0.0
        %1202 = vmatprep.subr.mxu0 0.0
        %1203 = vmatpush1.xpose.msra.mxu0 0.0
        %1204 = vmatprep.mubr.f32.mxu0 0.0
        %1205 = vmatmul.mubr.f32.gmra.mrb[0].mxu0 %v1104
        %v1206 = vpop.f32.mrb[0].mxu0
        %v1207 = vadd.f32 0.0, %v1206
        %v1208 = vpop.f32.mrb[0].mxu0
        %1209 = vmatprep.mubr.f32.mxu0 0.0
        %1210 = vmatmul.mubr.f32.gmra.mrb[0].mxu0 %v1106
        %v1211 = vpop.f32.mrb[0].mxu0
        %v1212 = vadd.f32 0.0, %v1211
        %v1213 = vpop.f32.mrb[0].mxu0
        %1214 = vmatprep.mubr.f32.mxu0 0.0
        %1215 = vmatmul.mubr.f32.gmra.mrb[0].mxu0 %v1108
        %v1216 = vpop.f32.mrb[0].mxu0
        %v1217 = vadd.f32 0.0, %v1216
        %v1218 = vpop.f32.mrb[0].mxu0
        %1219 = vmatprep.mubr.f32.mxu0 0.0
        %1220 = vmatmul.mubr.f32.gmra.mrb[0].mxu0 %v1110
        %v1221 = vpop.f32.mrb[0].mxu0
        %v1222 = vadd.f32 0.0, %v1221
        %v1223 = vpop.f32.mrb[0].mxu0
        %1224 = vmatprep.mubr.f32.mxu0 0.0
        %1225 = vmatmul.mubr.f32.gmra.mrb[0].mxu0 %v1112
        %v1226 = vpop.f32.mrb[0].mxu0
        %v1227 = vadd.f32 0.0, %v1226
        %v1228 = vpop.f32.mrb[0].mxu0
        %1229 = vmatprep.mubr.f32.mxu0 0.0
        %1230 = vmatmul.mubr.f32.gmra.mrb[0].mxu0 %v1114
        %v1231 = vpop.f32.mrb[0].mxu0
        %v1232 = vadd.f32 0.0, %v1231
        %v1233 = vpop.f32.mrb[0].mxu0
        %1234 = vmatprep.mubr.f32.mxu0 0.0
        %1235 = vmatmul.mubr.f32.gmra.mrb[0].mxu0 %v1116
        %v1236 = vpop.f32.mrb[0].mxu0
        %v1237 = vadd.f32 0.0, %v1236
        %v1238 = vpop.f32.mrb[0].mxu0
        %1239 = vmatprep.mubr.f32.mxu0 0.0
        %1240 = vmatmul.mubr.f32.gmra.mrb[0].mxu0 %v1118
        %v1241 = vpop.f32.mrb[0].mxu0
        %v1242 = vadd.f32 0.0, %v1241
        %v1243 = vpop.f32.mrb[0].mxu0
        %1244 = vmatprep.mubr.f32.mxu0 0.0
        %1245 = vmatmul.mubr.f32.gmra.mrb[0].mxu0 %v1120
        %v1246 = vpop.f32.mrb[0].mxu0
        %v1247 = vadd.f32 0.0, %v1246
        %v1248 = vpop.f32.mrb[0].mxu0
        %1249 = vdwg.mxu0
        %vm1250 = vcmask 531456
        %v1251 = vsel %vm1250, %v661, -inf
        %1252 = vmax.xlane.f32.xlu0 %v1251
        %v1253 = vpop.xlane.xlu0 %1252
        %v1254 = vsel %vm1250, %v666, -inf
        %1255 = vmax.xlane.f32.xlu0 %v1254
        %v1256 = vpop.xlane.xlu0 %1255
        %v1257 = vsel %vm1250, %v671, -inf
        %1258 = vmax.xlane.f32.xlu0 %v1257
        %v1259 = vpop.xlane.xlu0 %1258
        %v1260 = vsel %vm1250, %v676, -inf
        %1261 = vmax.xlane.f32.xlu0 %v1260
        %v1262 = vpop.xlane.xlu0 %1261
        %v1263 = vsel %vm1250, %v681, -inf
        %1264 = vmax.xlane.f32.xlu0 %v1263
        %v1265 = vpop.xlane.xlu0 %1264
        %v1266 = vsel %vm1250, %v686, -inf
        %1267 = vmax.xlane.f32.xlu0 %v1266
        %v1268 = vpop.xlane.xlu0 %1267
        %v1269 = vsel %vm1250, %v691, -inf
        %1270 = vmax.xlane.f32.xlu0 %v1269
        %v1271 = vpop.xlane.xlu0 %1270
        %v1272 = vsel %vm1250, %v696, -inf
        %1273 = vmax.xlane.f32.xlu0 %v1272
        %v1274 = vpop.xlane.xlu0 %1273
        %vm1275 = vcmask 524288
        %v1276 = vsel %vm1275, %v701, -inf
        %1277 = vmax.xlane.f32.xlu0 %v1276
        %v1278 = vpop.xlane.xlu0 %1277
        %v1279 = vsel %vm1250, %v843, -inf
        %1280 = vmax.xlane.f32.xlu0 %v1279
        %v1281 = vpop.xlane.xlu0 %1280
        %v1282 = vsel %vm1250, %v848, -inf
        %1283 = vmax.xlane.f32.xlu0 %v1282
        %v1284 = vpop.xlane.xlu0 %1283
        %v1285 = vsel %vm1250, %v853, -inf
        %1286 = vmax.xlane.f32.xlu0 %v1285
        %v1287 = vpop.xlane.xlu0 %1286
        %v1288 = vsel %vm1250, %v858, -inf
        %1289 = vmax.xlane.f32.xlu0 %v1288
        %v1290 = vpop.xlane.xlu0 %1289
        %v1291 = vsel %vm1250, %v863, -inf
        %1292 = vmax.xlane.f32.xlu0 %v1291
        %v1293 = vpop.xlane.xlu0 %1292
        %v1294 = vsel %vm1250, %v868, -inf
        %1295 = vmax.xlane.f32.xlu0 %v1294
        %v1296 = vpop.xlane.xlu0 %1295
        %v1297 = vsel %vm1250, %v873, -inf
        %1298 = vmax.xlane.f32.xlu0 %v1297
        %v1299 = vpop.xlane.xlu0 %1298
        %v1300 = vsel %vm1250, %v878, -inf
        %1301 = vmax.xlane.f32.xlu0 %v1300
        %v1302 = vpop.xlane.xlu0 %1301
        %v1303 = vsel %vm1275, %v883, -inf
        %1304 = vmax.xlane.f32.xlu0 %v1303
        %v1305 = vpop.xlane.xlu0 %1304
        %v1306 = vsel %vm1250, %v1025, -inf
        %1307 = vmax.xlane.f32.xlu0 %v1306
        %v1308 = vpop.xlane.xlu0 %1307
        %v1309 = vsel %vm1250, %v1030, -inf
        %1310 = vmax.xlane.f32.xlu0 %v1309
        %v1311 = vpop.xlane.xlu0 %1310
        %v1312 = vsel %vm1250, %v1035, -inf
        %1313 = vmax.xlane.f32.xlu0 %v1312
        %v1314 = vpop.xlane.xlu0 %1313
        %v1315 = vsel %vm1250, %v1040, -inf
        %1316 = vmax.xlane.f32.xlu0 %v1315
        %v1317 = vpop.xlane.xlu0 %1316
        %v1318 = vsel %vm1250, %v1045, -inf
        %1319 = vmax.xlane.f32.xlu0 %v1318
        %v1320 = vpop.xlane.xlu0 %1319
        %v1321 = vsel %vm1250, %v1050, -inf
        %1322 = vmax.xlane.f32.xlu0 %v1321
        %v1323 = vpop.xlane.xlu0 %1322
        %v1324 = vsel %vm1250, %v1055, -inf
        %1325 = vmax.xlane.f32.xlu0 %v1324
        %v1326 = vpop.xlane.xlu0 %1325
        %v1327 = vsel %vm1250, %v1060, -inf
        %1328 = vmax.xlane.f32.xlu0 %v1327
        %v1329 = vpop.xlane.xlu0 %1328
        %v1330 = vsel %vm1275, %v1065, -inf
        %1331 = vmax.xlane.f32.xlu0 %v1330
        %v1332 = vpop.xlane.xlu0 %1331
        %v1333 = vsel %vm1250, %v1207, -inf
        %1334 = vmax.xlane.f32.xlu0 %v1333
        %v1335 = vpop.xlane.xlu0 %1334
        %v1336 = vsel %vm1250, %v1212, -inf
        %1337 = vmax.xlane.f32.xlu0 %v1336
        %v1338 = vpop.xlane.xlu0 %1337
        %v1339 = vsel %vm1250, %v1217, -inf
        %1340 = vmax.xlane.f32.xlu0 %v1339
        %v1341 = vpop.xlane.xlu0 %1340
        %v1342 = vsel %vm1250, %v1222, -inf
        %1343 = vmax.xlane.f32.xlu0 %v1342
        %v1344 = vpop.xlane.xlu0 %1343
        %v1345 = vsel %vm1250, %v1227, -inf
        %1346 = vmax.xlane.f32.xlu0 %v1345
        %v1347 = vpop.xlane.xlu0 %1346
        %v1348 = vsel %vm1250, %v1232, -inf
        %1349 = vmax.xlane.f32.xlu0 %v1348
        %v1350 = vpop.xlane.xlu0 %1349
        %v1351 = vsel %vm1250, %v1237, -inf
        %1352 = vmax.xlane.f32.xlu0 %v1351
        %v1353 = vpop.xlane.xlu0 %1352
        %v1354 = vsel %vm1250, %v1242, -inf
        %1355 = vmax.xlane.f32.xlu0 %v1354
        %v1356 = vpop.xlane.xlu0 %1355
        %v1357 = vsel %vm1275, %v1247, -inf
        %1358 = vmax.xlane.f32.xlu0 %v1357
        %v1359 = vpop.xlane.xlu0 %1358
        %v1360 = vsub.f32 %v661, %v1253
        %v1361 = vsub.f32 %v666, %v1256
        %v1362 = vsub.f32 %v671, %v1259
        %v1363 = vsub.f32 %v676, %v1262
        %v1364 = vsub.f32 %v681, %v1265
        %v1365 = vsub.f32 %v686, %v1268
        %v1366 = vsub.f32 %v691, %v1271
        %v1367 = vsub.f32 %v696, %v1274
        %v1368 = vsub.f32 %v701, %v1278
        %v1369 = vsub.f32 %v843, %v1281
        %v1370 = vsub.f32 %v848, %v1284
        %v1371 = vsub.f32 %v853, %v1287
        %v1372 = vsub.f32 %v858, %v1290
        %v1373 = vsub.f32 %v863, %v1293
        %v1374 = vsub.f32 %v868, %v1296
        %v1375 = vsub.f32 %v873, %v1299
        %v1376 = vsub.f32 %v878, %v1302
        %v1377 = vsub.f32 %v883, %v1305
        %v1378 = vsub.f32 %v1025, %v1308
        %v1379 = vsub.f32 %v1030, %v1311
        %v1380 = vsub.f32 %v1035, %v1314
        %v1381 = vsub.f32 %v1040, %v1317
        %v1382 = vsub.f32 %v1045, %v1320
        %v1383 = vsub.f32 %v1050, %v1323
        %v1384 = vsub.f32 %v1055, %v1326
        %v1385 = vsub.f32 %v1060, %v1329
        %v1386 = vsub.f32 %v1065, %v1332
        %v1387 = vsub.f32 %v1207, %v1335
        %v1388 = vsub.f32 %v1212, %v1338
        %v1389 = vsub.f32 %v1217, %v1341
        %v1390 = vsub.f32 %v1222, %v1344
        %v1391 = vsub.f32 %v1227, %v1347
        %v1392 = vsub.f32 %v1232, %v1350
        %v1393 = vsub.f32 %v1237, %v1353
        %v1394 = vsub.f32 %v1242, %v1356
        %v1395 = vsub.f32 %v1247, %v1359
        %v1396 = vmul.f32 %v1360, 1.442695
        %v1397 = vpow.pop %v1396
        %v1398 = vmul.f32 %v1361, 1.442695
        %v1399 = vpow.pop %v1398
        %v1400 = vmul.f32 %v1362, 1.442695
        %v1401 = vpow.pop %v1400
        %v1402 = vmul.f32 %v1363, 1.442695
        %v1403 = vpow.pop %v1402
        %v1404 = vmul.f32 %v1364, 1.442695
        %v1405 = vpow.pop %v1404
        %v1406 = vmul.f32 %v1365, 1.442695
        %v1407 = vpow.pop %v1406
        %v1408 = vmul.f32 %v1366, 1.442695
        %v1409 = vpow.pop %v1408
        %v1410 = vmul.f32 %v1367, 1.442695
        %v1411 = vpow.pop %v1410
        %v1412 = vmul.f32 %v1368, 1.442695
        %v1413 = vpow.pop %v1412
        %v1414 = vmul.f32 %v1369, 1.442695
        %v1415 = vpow.pop %v1414
        %v1416 = vmul.f32 %v1370, 1.442695
        %v1417 = vpow.pop %v1416
        %v1418 = vmul.f32 %v1371, 1.442695
        %v1419 = vpow.pop %v1418
        %v1420 = vmul.f32 %v1372, 1.442695
        %v1421 = vpow.pop %v1420
        %v1422 = vmul.f32 %v1373, 1.442695
        %v1423 = vpow.pop %v1422
        %v1424 = vmul.f32 %v1374, 1.442695
        %v1425 = vpow.pop %v1424
        %v1426 = vmul.f32 %v1375, 1.442695
        %v1427 = vpow.pop %v1426
        %v1428 = vmul.f32 %v1376, 1.442695
        %v1429 = vpow.pop %v1428
        %v1430 = vmul.f32 %v1377, 1.442695
        %v1431 = vpow.pop %v1430
        %v1432 = vmul.f32 %v1378, 1.442695
        %v1433 = vpow.pop %v1432
        %v1434 = vmul.f32 %v1379, 1.442695
        %v1435 = vpow.pop %v1434
        %v1436 = vmul.f32 %v1380, 1.442695
        %v1437 = vpow.pop %v1436
        %v1438 = vmul.f32 %v1381, 1.442695
        %v1439 = vpow.pop %v1438
        %v1440 = vmul.f32 %v1382, 1.442695
        %v1441 = vpow.pop %v1440
        %v1442 = vmul.f32 %v1383, 1.442695
        %v1443 = vpow.pop %v1442
        %v1444 = vmul.f32 %v1384, 1.442695
        %v1445 = vpow.pop %v1444
        %v1446 = vmul.f32 %v1385, 1.442695
        %v1447 = vpow.pop %v1446
        %v1448 = vmul.f32 %v1386, 1.442695
        %v1449 = vpow.pop %v1448
        %v1450 = vmul.f32 %v1387, 1.442695
        %v1451 = vpow.pop %v1450
        %v1452 = vmul.f32 %v1388, 1.442695
        %v1453 = vpow.pop %v1452
        %v1454 = vmul.f32 %v1389, 1.442695
        %v1455 = vpow.pop %v1454
        %v1456 = vmul.f32 %v1390, 1.442695
        %v1457 = vpow.pop %v1456
        %v1458 = vmul.f32 %v1391, 1.442695
        %v1459 = vpow.pop %v1458
        %v1460 = vmul.f32 %v1392, 1.442695
        %v1461 = vpow.pop %v1460
        %v1462 = vmul.f32 %v1393, 1.442695
        %v1463 = vpow.pop %v1462
        %v1464 = vmul.f32 %v1394, 1.442695
        %v1465 = vpow.pop %v1464
        %v1466 = vmul.f32 %v1395, 1.442695
        %v1467 = vpow.pop %v1466
        %v1468 = vsel %vm1250, %v1397, 0.0
        %1469 = vadd.xlane.f32.xlu0 %v1468
        %v1470 = vpop.xlane.xlu0 %1469
        %v1471 = vsel %vm1250, %v1399, 0.0
        %1472 = vadd.xlane.f32.xlu0 %v1471
        %v1473 = vpop.xlane.xlu0 %1472
        %v1474 = vsel %vm1250, %v1401, 0.0
        %1475 = vadd.xlane.f32.xlu0 %v1474
        %v1476 = vpop.xlane.xlu0 %1475
        %v1477 = vsel %vm1250, %v1403, 0.0
        %1478 = vadd.xlane.f32.xlu0 %v1477
        %v1479 = vpop.xlane.xlu0 %1478
        %v1480 = vsel %vm1250, %v1405, 0.0
        %1481 = vadd.xlane.f32.xlu0 %v1480
        %v1482 = vpop.xlane.xlu0 %1481
        %v1483 = vsel %vm1250, %v1407, 0.0
        %1484 = vadd.xlane.f32.xlu0 %v1483
        %v1485 = vpop.xlane.xlu0 %1484
        %v1486 = vsel %vm1250, %v1409, 0.0
        %1487 = vadd.xlane.f32.xlu0 %v1486
        %v1488 = vpop.xlane.xlu0 %1487
        %v1489 = vsel %vm1250, %v1411, 0.0
        %1490 = vadd.xlane.f32.xlu0 %v1489
        %v1491 = vpop.xlane.xlu0 %1490
        %v1492 = vsel %vm1275, %v1413, 0.0
        %1493 = vadd.xlane.f32.xlu0 %v1492
        %v1494 = vpop.xlane.xlu0 %1493
        %v1495 = vsel %vm1250, %v1415, 0.0
        %1496 = vadd.xlane.f32.xlu0 %v1495
        %v1497 = vpop.xlane.xlu0 %1496
        %v1498 = vsel %vm1250, %v1417, 0.0
        %1499 = vadd.xlane.f32.xlu0 %v1498
        %v1500 = vpop.xlane.xlu0 %1499
        %v1501 = vsel %vm1250, %v1419, 0.0
        %1502 = vadd.xlane.f32.xlu0 %v1501
        %v1503 = vpop.xlane.xlu0 %1502
        %v1504 = vsel %vm1250, %v1421, 0.0
        %1505 = vadd.xlane.f32.xlu0 %v1504
        %v1506 = vpop.xlane.xlu0 %1505
        %v1507 = vsel %vm1250, %v1423, 0.0
        %1508 = vadd.xlane.f32.xlu0 %v1507
        %v1509 = vpop.xlane.xlu0 %1508
        %v1510 = vsel %vm1250, %v1425, 0.0
        %1511 = vadd.xlane.f32.xlu0 %v1510
        %v1512 = vpop.xlane.xlu0 %1511
        %v1513 = vsel %vm1250, %v1427, 0.0
        %1514 = vadd.xlane.f32.xlu0 %v1513
        %v1515 = vpop.xlane.xlu0 %1514
        %v1516 = vsel %vm1250, %v1429, 0.0
        %1517 = vadd.xlane.f32.xlu0 %v1516
        %v1518 = vpop.xlane.xlu0 %1517
        %v1519 = vsel %vm1275, %v1431, 0.0
        %1520 = vadd.xlane.f32.xlu0 %v1519
        %v1521 = vpop.xlane.xlu0 %1520
        %v1522 = vsel %vm1250, %v1433, 0.0
        %1523 = vadd.xlane.f32.xlu0 %v1522
        %v1524 = vpop.xlane.xlu0 %1523
        %v1525 = vsel %vm1250, %v1435, 0.0
        %1526 = vadd.xlane.f32.xlu0 %v1525
        %v1527 = vpop.xlane.xlu0 %1526
        %v1528 = vsel %vm1250, %v1437, 0.0
        %1529 = vadd.xlane.f32.xlu0 %v1528
        %v1530 = vpop.xlane.xlu0 %1529
        %v1531 = vsel %vm1250, %v1439, 0.0
        %1532 = vadd.xlane.f32.xlu0 %v1531
        %v1533 = vpop.xlane.xlu0 %1532
        %v1534 = vsel %vm1250, %v1441, 0.0
        %1535 = vadd.xlane.f32.xlu0 %v1534
        %v1536 = vpop.xlane.xlu0 %1535
        %v1537 = vsel %vm1250, %v1443, 0.0
        %1538 = vadd.xlane.f32.xlu0 %v1537
        %v1539 = vpop.xlane.xlu0 %1538
        %v1540 = vsel %vm1250, %v1445, 0.0
        %1541 = vadd.xlane.f32.xlu0 %v1540
        %v1542 = vpop.xlane.xlu0 %1541
        %v1543 = vsel %vm1250, %v1447, 0.0
        %1544 = vadd.xlane.f32.xlu0 %v1543
        %v1545 = vpop.xlane.xlu0 %1544
        %v1546 = vsel %vm1275, %v1449, 0.0
        %1547 = vadd.xlane.f32.xlu0 %v1546
        %v1548 = vpop.xlane.xlu0 %1547
        %v1549 = vsel %vm1250, %v1451, 0.0
        %1550 = vadd.xlane.f32.xlu0 %v1549
        %v1551 = vpop.xlane.xlu0 %1550
        %v1552 = vsel %vm1250, %v1453, 0.0
        %1553 = vadd.xlane.f32.xlu0 %v1552
        %v1554 = vpop.xlane.xlu0 %1553
        %v1555 = vsel %vm1250, %v1455, 0.0
        %1556 = vadd.xlane.f32.xlu0 %v1555
        %v1557 = vpop.xlane.xlu0 %1556
        %v1558 = vsel %vm1250, %v1457, 0.0
        %1559 = vadd.xlane.f32.xlu0 %v1558
        %v1560 = vpop.xlane.xlu0 %1559
        %v1561 = vsel %vm1250, %v1459, 0.0
        %1562 = vadd.xlane.f32.xlu0 %v1561
        %v1563 = vpop.xlane.xlu0 %1562
        %v1564 = vsel %vm1250, %v1461, 0.0
        %1565 = vadd.xlane.f32.xlu0 %v1564
        %v1566 = vpop.xlane.xlu0 %1565
        %v1567 = vsel %vm1250, %v1463, 0.0
        %1568 = vadd.xlane.f32.xlu0 %v1567
        %v1569 = vpop.xlane.xlu0 %1568
        %v1570 = vsel %vm1250, %v1465, 0.0
        %1571 = vadd.xlane.f32.xlu0 %v1570
        %v1572 = vpop.xlane.xlu0 %1571
        %v1573 = vsel %vm1275, %v1467, 0.0
        %1574 = vadd.xlane.f32.xlu0 %v1573
        %v1575 = vpop.xlane.xlu0 %1574
        %v1576 = vrcp.pop %v1470
        %v1577 = vrcp.pop %v1473
        %v1578 = vrcp.pop %v1476
        %v1579 = vrcp.pop %v1479
        %v1580 = vrcp.pop %v1482
        %v1581 = vrcp.pop %v1485
        %v1582 = vrcp.pop %v1488
        %v1583 = vrcp.pop %v1491
        %v1584 = vrcp.pop %v1494
        %v1585 = vrcp.pop %v1497
        %v1586 = vrcp.pop %v1500
        %v1587 = vrcp.pop %v1503
        %v1588 = vrcp.pop %v1506
        %v1589 = vrcp.pop %v1509
        %v1590 = vrcp.pop %v1512
        %v1591 = vrcp.pop %v1515
        %v1592 = vrcp.pop %v1518
        %v1593 = vrcp.pop %v1521
        %v1594 = vrcp.pop %v1524
        %v1595 = vrcp.pop %v1527
        %v1596 = vrcp.pop %v1530
        %v1597 = vrcp.pop %v1533
        %v1598 = vrcp.pop %v1536
        %v1599 = vrcp.pop %v1539
        %v1600 = vrcp.pop %v1542
        %v1601 = vrcp.pop %v1545
        %v1602 = vrcp.pop %v1548
        %v1603 = vrcp.pop %v1551
        %v1604 = vrcp.pop %v1554
        %v1605 = vrcp.pop %v1557
        %v1606 = vrcp.pop %v1560
        %v1607 = vrcp.pop %v1563
        %v1608 = vrcp.pop %v1566
        %v1609 = vrcp.pop %v1569
        %v1610 = vrcp.pop %v1572
        %v1611 = vrcp.pop %v1575
        %v1612 = vmul.f32 %v1397, %v1576
        %v1613 = vmul.f32 %v1399, %v1577
        %v1614 = vmul.f32 %v1401, %v1578
        %v1615 = vmul.f32 %v1403, %v1579
        %v1616 = vmul.f32 %v1405, %v1580
        %v1617 = vmul.f32 %v1407, %v1581
        %v1618 = vmul.f32 %v1409, %v1582
        %v1619 = vmul.f32 %v1411, %v1583
        %v1620 = vmul.f32 %v1413, %v1584
        %v1621 = vmul.f32 %v1415, %v1585
        %v1622 = vmul.f32 %v1417, %v1586
        %v1623 = vmul.f32 %v1419, %v1587
        %v1624 = vmul.f32 %v1421, %v1588
        %v1625 = vmul.f32 %v1423, %v1589
        %v1626 = vmul.f32 %v1425, %v1590
        %v1627 = vmul.f32 %v1427, %v1591
        %v1628 = vmul.f32 %v1429, %v1592
        %v1629 = vmul.f32 %v1431, %v1593
        %v1630 = vmul.f32 %v1433, %v1594
        %v1631 = vmul.f32 %v1435, %v1595
        %v1632 = vmul.f32 %v1437, %v1596
        %v1633 = vmul.f32 %v1439, %v1597
        %v1634 = vmul.f32 %v1441, %v1598
        %v1635 = vmul.f32 %v1443, %v1599
        %v1636 = vmul.f32 %v1445, %v1600
        %v1637 = vmul.f32 %v1447, %v1601
        %v1638 = vmul.f32 %v1449, %v1602
        %v1639 = vmul.f32 %v1451, %v1603
        %v1640 = vmul.f32 %v1453, %v1604
        %v1641 = vmul.f32 %v1455, %v1605
        %v1642 = vmul.f32 %v1457, %v1606
        %v1643 = vmul.f32 %v1459, %v1607
        %v1644 = vmul.f32 %v1461, %v1608
        %v1645 = vmul.f32 %v1463, %v1609
        %v1646 = vmul.f32 %v1465, %v1610
        %v1647 = vmul.f32 %v1467, %v1611
        %1648 = vst.msk [vmem:[%s434] sm:$0xff] %vm1250, %v1612
        %1649 = vst.msk [vmem:[%s434 + $0x8] sm:$0xff] %vm1250, %v1613
        %1650 = vst.msk [vmem:[%s434 + $0x10] sm:$0xff] %vm1250, %v1614
        %1651 = vst.msk [vmem:[%s434 + $0x18] sm:$0xff] %vm1250, %v1615
        %1652 = vst.msk [vmem:[%s434 + $0x20] sm:$0xff] %vm1250, %v1616
        %1653 = vst.msk [vmem:[%s434 + $0x28] sm:$0xff] %vm1250, %v1617
        %1654 = vst.msk [vmem:[%s434 + $0x30] sm:$0xff] %vm1250, %v1618
        %1655 = vst.msk [vmem:[%s434 + $0x38] sm:$0xff] %vm1250, %v1619
        %1656 = vst.msk [vmem:[%s434 + $0x40] sm:$0x1] %vm1275, %v1620
        %1657 = vst.msk [vmem:[%s434 + $0x48] sm:$0xff] %vm1250, %v1621
        %1658 = vst.msk [vmem:[%s434 + $0x50] sm:$0xff] %vm1250, %v1622
        %1659 = vst.msk [vmem:[%s434 + $0x58] sm:$0xff] %vm1250, %v1623
        %1660 = vst.msk [vmem:[%s434 + $0x60] sm:$0xff] %vm1250, %v1624
        %1661 = vst.msk [vmem:[%s434 + $0x68] sm:$0xff] %vm1250, %v1625
        %1662 = vst.msk [vmem:[%s434 + $0x70] sm:$0xff] %vm1250, %v1626
        %1663 = vst.msk [vmem:[%s434 + $0x78] sm:$0xff] %vm1250, %v1627
        %1664 = vst.msk [vmem:[%s434 + $0x80] sm:$0xff] %vm1250, %v1628
        %1665 = vst.msk [vmem:[%s434 + $0x88] sm:$0x1] %vm1275, %v1629
        %1666 = vst.msk [vmem:[%s434 + $0x90] sm:$0xff] %vm1250, %v1630
        %1667 = vst.msk [vmem:[%s434 + $0x98] sm:$0xff] %vm1250, %v1631
        %1668 = vst.msk [vmem:[%s434 + $0xa0] sm:$0xff] %vm1250, %v1632
        %1669 = vst.msk [vmem:[%s434 + $0xa8] sm:$0xff] %vm1250, %v1633
        %1670 = vst.msk [vmem:[%s434 + $0xb0] sm:$0xff] %vm1250, %v1634
        %1671 = vst.msk [vmem:[%s434 + $0xb8] sm:$0xff] %vm1250, %v1635
        %1672 = vst.msk [vmem:[%s434 + $0xc0] sm:$0xff] %vm1250, %v1636
        %1673 = vst.msk [vmem:[%s434 + $0xc8] sm:$0xff] %vm1250, %v1637
        %1674 = vst.msk [vmem:[%s434 + $0xd0] sm:$0x1] %vm1275, %v1638
        %1675 = vst.msk [vmem:[%s434 + $0xd8] sm:$0xff] %vm1250, %v1639
        %1676 = vst.msk [vmem:[%s434 + $0xe0] sm:$0xff] %vm1250, %v1640
        %1677 = vst.msk [vmem:[%s434 + $0xe8] sm:$0xff] %vm1250, %v1641
        %1678 = vst.msk [vmem:[%s434 + $0xf0] sm:$0xff] %vm1250, %v1642
        %1679 = vst.msk [vmem:[%s434 + $0xf8] sm:$0xff] %vm1250, %v1643
        %1680 = vst.msk [vmem:[%s434 + $0x100] sm:$0xff] %vm1250, %v1644
        %1681 = vst.msk [vmem:[%s434 + $0x108] sm:$0xff] %vm1250, %v1645
        %1682 = vst.msk [vmem:[%s434 + $0x110] sm:$0xff] %vm1250, %v1646
        %1683 = vst.msk [vmem:[%s434 + $0x118] sm:$0x1] %vm1275, %v1647
        %1685 = vrot.lane.b32.xlu0 %v546, 124
        %v1686 = vpop.permute.xlu0 %1685
        %1687 = vrot.lane.b32.xlu0 %v523, 124
        %v1688 = vpop.permute.xlu0 %1687
        %1689 = vrot.lane.b32.xlu0 %v525, 124
        %v1690 = vpop.permute.xlu0 %1689
        %1691 = vrot.lane.b32.xlu0 %v527, 124
        %v1692 = vpop.permute.xlu0 %1691
        %1693 = vrot.lane.b32.xlu0 %v529, 124
        %v1694 = vpop.permute.xlu0 %1693
        %1695 = vrot.lane.b32.xlu0 %v531, 124
        %v1696 = vpop.permute.xlu0 %1695
        %1697 = vrot.lane.b32.xlu0 %v533, 124
        %v1698 = vpop.permute.xlu0 %1697
        %1699 = vrot.lane.b32.xlu0 %v535, 124
        %v1700 = vpop.permute.xlu0 %1699
        %1701 = vrot.lane.b32.xlu0 %v537, 124
        %v1702 = vpop.permute.xlu0 %1701
        %1711 = vrot.lane.b32.xlu0 %v546, 120
        %v1712 = vpop.permute.xlu0 %1711
        %1713 = vrot.lane.b32.xlu0 %v523, 120
        %v1714 = vpop.permute.xlu0 %1713
        %1715 = vrot.lane.b32.xlu0 %v525, 120
        %v1716 = vpop.permute.xlu0 %1715
        %1717 = vrot.lane.b32.xlu0 %v527, 120
        %v1718 = vpop.permute.xlu0 %1717
        %1719 = vrot.lane.b32.xlu0 %v529, 120
        %v1720 = vpop.permute.xlu0 %1719
        %1721 = vrot.lane.b32.xlu0 %v531, 120
        %v1722 = vpop.permute.xlu0 %1721
        %1723 = vrot.lane.b32.xlu0 %v533, 120
        %v1724 = vpop.permute.xlu0 %1723
        %1725 = vrot.lane.b32.xlu0 %v535, 120
        %v1726 = vpop.permute.xlu0 %1725
        %1727 = vrot.lane.b32.xlu0 %v537, 120
        %v1728 = vpop.permute.xlu0 %1727
        %1737 = vrot.lane.b32.xlu0 %v546, 116
        %v1738 = vpop.permute.xlu0 %1737
        %1739 = vrot.lane.b32.xlu0 %v523, 116
        %v1740 = vpop.permute.xlu0 %1739
        %1741 = vrot.lane.b32.xlu0 %v525, 116
        %v1742 = vpop.permute.xlu0 %1741
        %1743 = vrot.lane.b32.xlu0 %v527, 116
        %v1744 = vpop.permute.xlu0 %1743
        %1745 = vrot.lane.b32.xlu0 %v529, 116
        %v1746 = vpop.permute.xlu0 %1745
        %1747 = vrot.lane.b32.xlu0 %v531, 116
        %v1748 = vpop.permute.xlu0 %1747
        %1749 = vrot.lane.b32.xlu0 %v533, 116
        %v1750 = vpop.permute.xlu0 %1749
        %1751 = vrot.lane.b32.xlu0 %v535, 116
        %v1752 = vpop.permute.xlu0 %1751
        %1753 = vrot.lane.b32.xlu0 %v537, 116
        %v1754 = vpop.permute.xlu0 %1753
        %vm1772 = vcmask 1046528
        %v1773 = vrot.slane %v1612, 1
        %v1774 = vrot.slane %v1613, 1
        %v1775 = vsel %vm1772, %v1773, %v1774
        %v1776 = vrot.slane %v1614, 1
        %v1777 = vsel %vm1772, %v1774, %v1776
        %v1778 = vrot.slane %v1615, 1
        %v1779 = vsel %vm1772, %v1776, %v1778
        %v1780 = vrot.slane %v1616, 1
        %v1781 = vsel %vm1772, %v1778, %v1780
        %v1782 = vrot.slane %v1617, 1
        %v1783 = vsel %vm1772, %v1780, %v1782
        %v1784 = vrot.slane %v1618, 1
        %v1785 = vsel %vm1772, %v1782, %v1784
        %v1786 = vrot.slane %v1619, 1
        %v1787 = vsel %vm1772, %v1784, %v1786
        %v1788 = vrot.slane %v1620, 1
        %v1789 = vsel %vm1772, %v1786, %v1788
        %v1790 = vsel %vm1250, %v1775, 0
        %v1792 = vsel %vm1250, %v1777, 0
        %v1794 = vsel %vm1250, %v1779, 0
        %v1796 = vsel %vm1250, %v1781, 0
        %v1798 = vsel %vm1250, %v1783, 0
        %v1800 = vsel %vm1250, %v1785, 0
        %v1802 = vsel %vm1250, %v1787, 0
        %v1804 = vsel %vm1250, %v1789, 0
        %v1806 = vsel %vm460, %v537, 0
        %1808 = vmatprep.subr.mxu0 0.0
        %1809 = vmatpush1.msra.mxu0 %v546
        %1810 = vmatprep.subr.mxu0 0.0
        %1811 = vmatpush1.msra.mxu0 %v523
        %1812 = vmatprep.subr.mxu0 0.0
        %1813 = vmatpush1.msra.mxu0 %v525
        %1814 = vmatprep.subr.mxu0 0.0
        %1815 = vmatpush1.msra.mxu0 %v527
        %1816 = vmatprep.subr.mxu0 0.0
        %1817 = vmatpush1.msra.mxu0 %v529
        %1818 = vmatprep.subr.mxu0 0.0
        %1819 = vmatpush1.msra.mxu0 %v531
        %1820 = vmatprep.subr.mxu0 0.0
        %1821 = vmatpush1.msra.mxu0 %v533
        %1822 = vmatprep.subr.mxu0 0.0
        %1823 = vmatpush1.msra.mxu0 %v535
        %1824 = vmatprep.subr.mxu0 0.0
        %1825 = vmatpush1.msra.mxu0 %v1806
        %1826 = vmatprep.subr.mxu0 0.0
        %1827 = vmatpush1.msra.mxu0 0.0
        %1828 = vmatprep.subr.mxu0 0.0
        %1829 = vmatpush1.msra.mxu0 0.0
        %1830 = vmatprep.subr.mxu0 0.0
        %1831 = vmatpush1.msra.mxu0 0.0
        %1832 = vmatprep.subr.mxu0 0.0
        %1833 = vmatpush1.msra.mxu0 0.0
        %1834 = vmatprep.subr.mxu0 0.0
        %1835 = vmatpush1.msra.mxu0 0.0
        %1836 = vmatprep.subr.mxu0 0.0
        %1837 = vmatpush1.msra.mxu0 0.0
        %1838 = vmatprep.subr.mxu0 0.0
        %1839 = vmatpush1.msra.mxu0 0.0
        %1840 = vmatprep.subr.mxu0 0.0
        %1841 = vmatpush1.msra.mxu0 0.0
        %1842 = vmatprep.subr.mxu0 0.0
        %1843 = vmatpush1.msra.mxu0 0.0
        %1844 = vmatprep.subr.mxu0 0.0
        %1845 = vmatpush1.msra.mxu0 0.0
        %1846 = vmatprep.subr.mxu0 0.0
        %1847 = vmatpush1.msra.mxu0 0.0
        %1848 = vmatprep.subr.mxu0 0.0
        %1849 = vmatpush1.msra.mxu0 0.0
        %1850 = vmatprep.subr.mxu0 0.0
        %1851 = vmatpush1.msra.mxu0 0.0
        %1852 = vmatprep.subr.mxu0 0.0
        %1853 = vmatpush1.msra.mxu0 0.0
        %1854 = vmatprep.subr.mxu0 0.0
        %1855 = vmatpush1.msra.mxu0 0.0
        %1856 = vmatprep.subr.mxu0 0.0
        %1857 = vmatpush1.msra.mxu0 0.0
        %1858 = vmatprep.subr.mxu0 0.0
        %1859 = vmatpush1.msra.mxu0 0.0
        %1860 = vmatprep.subr.mxu0 0.0
        %1861 = vmatpush1.msra.mxu0 0.0
        %1862 = vmatprep.subr.mxu0 0.0
        %1863 = vmatpush1.msra.mxu0 0.0
        %1864 = vmatprep.subr.mxu0 0.0
        %1865 = vmatpush1.msra.mxu0 0.0
        %1866 = vmatprep.subr.mxu0 0.0
        %1867 = vmatpush1.msra.mxu0 0.0
        %1868 = vmatprep.subr.mxu0 0.0
        %1869 = vmatpush1.msra.mxu0 0.0
        %1870 = vmatprep.subr.mxu0 0.0
        %1871 = vmatpush1.msra.mxu0 0.0
        %1872 = vmatprep.mubr.f32.mxu0 0.0
        %1873 = vmatmul.mubr.f32.gmra.mrb[0].mxu0 %v1790
        %v1874 = vpop.f32.mrb[0].mxu0
        %v1875 = vadd.f32 0.0, %v1874
        %v1876 = vpop.f32.mrb[0].mxu0
        %1877 = vmatprep.mubr.f32.mxu0 0.0
        %1878 = vmatmul.mubr.f32.gmra.mrb[0].mxu0 %v1792
        %v1879 = vpop.f32.mrb[0].mxu0
        %v1880 = vadd.f32 0.0, %v1879
        %v1881 = vpop.f32.mrb[0].mxu0
        %1882 = vmatprep.mubr.f32.mxu0 0.0
        %1883 = vmatmul.mubr.f32.gmra.mrb[0].mxu0 %v1794
        %v1884 = vpop.f32.mrb[0].mxu0
        %v1885 = vadd.f32 0.0, %v1884
        %v1886 = vpop.f32.mrb[0].mxu0
        %1887 = vmatprep.mubr.f32.mxu0 0.0
        %1888 = vmatmul.mubr.f32.gmra.mrb[0].mxu0 %v1796
        %v1889 = vpop.f32.mrb[0].mxu0
        %v1890 = vadd.f32 0.0, %v1889
        %v1891 = vpop.f32.mrb[0].mxu0
        %1892 = vmatprep.mubr.f32.mxu0 0.0
        %1893 = vmatmul.mubr.f32.gmra.mrb[0].mxu0 %v1798
        %v1894 = vpop.f32.mrb[0].mxu0
        %v1895 = vadd.f32 0.0, %v1894
        %v1896 = vpop.f32.mrb[0].mxu0
        %1897 = vmatprep.mubr.f32.mxu0 0.0
        %1898 = vmatmul.mubr.f32.gmra.mrb[0].mxu0 %v1800
        %v1899 = vpop.f32.mrb[0].mxu0
        %v1900 = vadd.f32 0.0, %v1899
        %v1901 = vpop.f32.mrb[0].mxu0
        %1902 = vmatprep.mubr.f32.mxu0 0.0
        %1903 = vmatmul.mubr.f32.gmra.mrb[0].mxu0 %v1802
        %v1904 = vpop.f32.mrb[0].mxu0
        %v1905 = vadd.f32 0.0, %v1904
        %v1906 = vpop.f32.mrb[0].mxu0
        %1907 = vmatprep.mubr.f32.mxu0 0.0
        %1908 = vmatmul.mubr.f32.gmra.mrb[0].mxu0 %v1804
        %v1909 = vpop.f32.mrb[0].mxu0
        %v1910 = vadd.f32 0.0, %v1909
        %v1911 = vpop.f32.mrb[0].mxu0
        %1912 = vdwg.mxu0
        %v1922 = vrot.slane %v1621, 1
        %v1923 = vrot.slane %v1622, 1
        %v1924 = vsel %vm1772, %v1922, %v1923
        %v1925 = vrot.slane %v1623, 1
        %v1926 = vsel %vm1772, %v1923, %v1925
        %v1927 = vrot.slane %v1624, 1
        %v1928 = vsel %vm1772, %v1925, %v1927
        %v1929 = vrot.slane %v1625, 1
        %v1930 = vsel %vm1772, %v1927, %v1929
        %v1931 = vrot.slane %v1626, 1
        %v1932 = vsel %vm1772, %v1929, %v1931
        %v1933 = vrot.slane %v1627, 1
        %v1934 = vsel %vm1772, %v1931, %v1933
        %v1935 = vrot.slane %v1628, 1
        %v1936 = vsel %vm1772, %v1933, %v1935
        %v1937 = vrot.slane %v1629, 1
        %v1938 = vsel %vm1772, %v1935, %v1937
        %v1939 = vsel %vm1250, %v1924, 0
        %v1941 = vsel %vm1250, %v1926, 0
        %v1943 = vsel %vm1250, %v1928, 0
        %v1945 = vsel %vm1250, %v1930, 0
        %v1947 = vsel %vm1250, %v1932, 0
        %v1949 = vsel %vm1250, %v1934, 0
        %v1951 = vsel %vm1250, %v1936, 0
        %v1953 = vsel %vm1250, %v1938, 0
        %v1955 = vsel %vm460, %v1702, 0
        %1957 = vmatprep.subr.mxu0 0.0
        %1958 = vmatpush1.msra.mxu0 %v1686
        %1959 = vmatprep.subr.mxu0 0.0
        %1960 = vmatpush1.msra.mxu0 %v1688
        %1961 = vmatprep.subr.mxu0 0.0
        %1962 = vmatpush1.msra.mxu0 %v1690
        %1963 = vmatprep.subr.mxu0 0.0
        %1964 = vmatpush1.msra.mxu0 %v1692
        %1965 = vmatprep.subr.mxu0 0.0
        %1966 = vmatpush1.msra.mxu0 %v1694
        %1967 = vmatprep.subr.mxu0 0.0
        %1968 = vmatpush1.msra.mxu0 %v1696
        %1969 = vmatprep.subr.mxu0 0.0
        %1970 = vmatpush1.msra.mxu0 %v1698
        %1971 = vmatprep.subr.mxu0 0.0
        %1972 = vmatpush1.msra.mxu0 %v1700
        %1973 = vmatprep.subr.mxu0 0.0
        %1974 = vmatpush1.msra.mxu0 %v1955
        %1975 = vmatprep.subr.mxu0 0.0
        %1976 = vmatpush1.msra.mxu0 0.0
        %1977 = vmatprep.subr.mxu0 0.0
        %1978 = vmatpush1.msra.mxu0 0.0
        %1979 = vmatprep.subr.mxu0 0.0
        %1980 = vmatpush1.msra.mxu0 0.0
        %1981 = vmatprep.subr.mxu0 0.0
        %1982 = vmatpush1.msra.mxu0 0.0
        %1983 = vmatprep.subr.mxu0 0.0
        %1984 = vmatpush1.msra.mxu0 0.0
        %1985 = vmatprep.subr.mxu0 0.0
        %1986 = vmatpush1.msra.mxu0 0.0
        %1987 = vmatprep.subr.mxu0 0.0
        %1988 = vmatpush1.msra.mxu0 0.0
        %1989 = vmatprep.subr.mxu0 0.0
        %1990 = vmatpush1.msra.mxu0 0.0
        %1991 = vmatprep.subr.mxu0 0.0
        %1992 = vmatpush1.msra.mxu0 0.0
        %1993 = vmatprep.subr.mxu0 0.0
        %1994 = vmatpush1.msra.mxu0 0.0
        %1995 = vmatprep.subr.mxu0 0.0
        %1996 = vmatpush1.msra.mxu0 0.0
        %1997 = vmatprep.subr.mxu0 0.0
        %1998 = vmatpush1.msra.mxu0 0.0
        %1999 = vmatprep.subr.mxu0 0.0
        %2000 = vmatpush1.msra.mxu0 0.0
        %2001 = vmatprep.subr.mxu0 0.0
        %2002 = vmatpush1.msra.mxu0 0.0
        %2003 = vmatprep.subr.mxu0 0.0
        %2004 = vmatpush1.msra.mxu0 0.0
        %2005 = vmatprep.subr.mxu0 0.0
        %2006 = vmatpush1.msra.mxu0 0.0
        %2007 = vmatprep.subr.mxu0 0.0
        %2008 = vmatpush1.msra.mxu0 0.0
        %2009 = vmatprep.subr.mxu0 0.0
        %2010 = vmatpush1.msra.mxu0 0.0
        %2011 = vmatprep.subr.mxu0 0.0
        %2012 = vmatpush1.msra.mxu0 0.0
        %2013 = vmatprep.subr.mxu0 0.0
        %2014 = vmatpush1.msra.mxu0 0.0
        %2015 = vmatprep.subr.mxu0 0.0
        %2016 = vmatpush1.msra.mxu0 0.0
        %2017 = vmatprep.subr.mxu0 0.0
        %2018 = vmatpush1.msra.mxu0 0.0
        %2019 = vmatprep.subr.mxu0 0.0
        %2020 = vmatpush1.msra.mxu0 0.0
        %2021 = vmatprep.mubr.f32.mxu0 0.0
        %2022 = vmatmul.mubr.f32.gmra.mrb[0].mxu0 %v1939
        %v2023 = vpop.f32.mrb[0].mxu0
        %v2024 = vadd.f32 0.0, %v2023
        %v2025 = vpop.f32.mrb[0].mxu0
        %2026 = vmatprep.mubr.f32.mxu0 0.0
        %2027 = vmatmul.mubr.f32.gmra.mrb[0].mxu0 %v1941
        %v2028 = vpop.f32.mrb[0].mxu0
        %v2029 = vadd.f32 0.0, %v2028
        %v2030 = vpop.f32.mrb[0].mxu0
        %2031 = vmatprep.mubr.f32.mxu0 0.0
        %2032 = vmatmul.mubr.f32.gmra.mrb[0].mxu0 %v1943
        %v2033 = vpop.f32.mrb[0].mxu0
        %v2034 = vadd.f32 0.0, %v2033
        %v2035 = vpop.f32.mrb[0].mxu0
        %2036 = vmatprep.mubr.f32.mxu0 0.0
        %2037 = vmatmul.mubr.f32.gmra.mrb[0].mxu0 %v1945
        %v2038 = vpop.f32.mrb[0].mxu0
        %v2039 = vadd.f32 0.0, %v2038
        %v2040 = vpop.f32.mrb[0].mxu0
        %2041 = vmatprep.mubr.f32.mxu0 0.0
        %2042 = vmatmul.mubr.f32.gmra.mrb[0].mxu0 %v1947
        %v2043 = vpop.f32.mrb[0].mxu0
        %v2044 = vadd.f32 0.0, %v2043
        %v2045 = vpop.f32.mrb[0].mxu0
        %2046 = vmatprep.mubr.f32.mxu0 0.0
        %2047 = vmatmul.mubr.f32.gmra.mrb[0].mxu0 %v1949
        %v2048 = vpop.f32.mrb[0].mxu0
        %v2049 = vadd.f32 0.0, %v2048
        %v2050 = vpop.f32.mrb[0].mxu0
        %2051 = vmatprep.mubr.f32.mxu0 0.0
        %2052 = vmatmul.mubr.f32.gmra.mrb[0].mxu0 %v1951
        %v2053 = vpop.f32.mrb[0].mxu0
        %v2054 = vadd.f32 0.0, %v2053
        %v2055 = vpop.f32.mrb[0].mxu0
        %2056 = vmatprep.mubr.f32.mxu0 0.0
        %2057 = vmatmul.mubr.f32.gmra.mrb[0].mxu0 %v1953
        %v2058 = vpop.f32.mrb[0].mxu0
        %v2059 = vadd.f32 0.0, %v2058
        %v2060 = vpop.f32.mrb[0].mxu0
        %2061 = vdwg.mxu0
        %v2071 = vrot.slane %v1630, 1
        %v2072 = vrot.slane %v1631, 1
        %v2073 = vsel %vm1772, %v2071, %v2072
        %v2074 = vrot.slane %v1632, 1
        %v2075 = vsel %vm1772, %v2072, %v2074
        %v2076 = vrot.slane %v1633, 1
        %v2077 = vsel %vm1772, %v2074, %v2076
        %v2078 = vrot.slane %v1634, 1
        %v2079 = vsel %vm1772, %v2076, %v2078
        %v2080 = vrot.slane %v1635, 1
        %v2081 = vsel %vm1772, %v2078, %v2080
        %v2082 = vrot.slane %v1636, 1
        %v2083 = vsel %vm1772, %v2080, %v2082
        %v2084 = vrot.slane %v1637, 1
        %v2085 = vsel %vm1772, %v2082, %v2084
        %v2086 = vrot.slane %v1638, 1
        %v2087 = vsel %vm1772, %v2084, %v2086
        %v2088 = vsel %vm1250, %v2073, 0
        %v2090 = vsel %vm1250, %v2075, 0
        %v2092 = vsel %vm1250, %v2077, 0
        %v2094 = vsel %vm1250, %v2079, 0
        %v2096 = vsel %vm1250, %v2081, 0
        %v2098 = vsel %vm1250, %v2083, 0
        %v2100 = vsel %vm1250, %v2085, 0
        %v2102 = vsel %vm1250, %v2087, 0
        %v2104 = vsel %vm460, %v1728, 0
        %2106 = vmatprep.subr.mxu0 0.0
        %2107 = vmatpush1.msra.mxu0 %v1712
        %2108 = vmatprep.subr.mxu0 0.0
        %2109 = vmatpush1.msra.mxu0 %v1714
        %2110 = vmatprep.subr.mxu0 0.0
        %2111 = vmatpush1.msra.mxu0 %v1716
        %2112 = vmatprep.subr.mxu0 0.0
        %2113 = vmatpush1.msra.mxu0 %v1718
        %2114 = vmatprep.subr.mxu0 0.0
        %2115 = vmatpush1.msra.mxu0 %v1720
        %2116 = vmatprep.subr.mxu0 0.0
        %2117 = vmatpush1.msra.mxu0 %v1722
        %2118 = vmatprep.subr.mxu0 0.0
        %2119 = vmatpush1.msra.mxu0 %v1724
        %2120 = vmatprep.subr.mxu0 0.0
        %2121 = vmatpush1.msra.mxu0 %v1726
        %2122 = vmatprep.subr.mxu0 0.0
        %2123 = vmatpush1.msra.mxu0 %v2104
        %2124 = vmatprep.subr.mxu0 0.0
        %2125 = vmatpush1.msra.mxu0 0.0
        %2126 = vmatprep.subr.mxu0 0.0
        %2127 = vmatpush1.msra.mxu0 0.0
        %2128 = vmatprep.subr.mxu0 0.0
        %2129 = vmatpush1.msra.mxu0 0.0
        %2130 = vmatprep.subr.mxu0 0.0
        %2131 = vmatpush1.msra.mxu0 0.0
        %2132 = vmatprep.subr.mxu0 0.0
        %2133 = vmatpush1.msra.mxu0 0.0
        %2134 = vmatprep.subr.mxu0 0.0
        %2135 = vmatpush1.msra.mxu0 0.0
        %2136 = vmatprep.subr.mxu0 0.0
        %2137 = vmatpush1.msra.mxu0 0.0
        %2138 = vmatprep.subr.mxu0 0.0
        %2139 = vmatpush1.msra.mxu0 0.0
        %2140 = vmatprep.subr.mxu0 0.0
        %2141 = vmatpush1.msra.mxu0 0.0
        %2142 = vmatprep.subr.mxu0 0.0
        %2143 = vmatpush1.msra.mxu0 0.0
        %2144 = vmatprep.subr.mxu0 0.0
        %2145 = vmatpush1.msra.mxu0 0.0
        %2146 = vmatprep.subr.mxu0 0.0
        %2147 = vmatpush1.msra.mxu0 0.0
        %2148 = vmatprep.subr.mxu0 0.0
        %2149 = vmatpush1.msra.mxu0 0.0
        %2150 = vmatprep.subr.mxu0 0.0
        %2151 = vmatpush1.msra.mxu0 0.0
        %2152 = vmatprep.subr.mxu0 0.0
        %2153 = vmatpush1.msra.mxu0 0.0
        %2154 = vmatprep.subr.mxu0 0.0
        %2155 = vmatpush1.msra.mxu0 0.0
        %2156 = vmatprep.subr.mxu0 0.0
        %2157 = vmatpush1.msra.mxu0 0.0
        %2158 = vmatprep.subr.mxu0 0.0
        %2159 = vmatpush1.msra.mxu0 0.0
        %2160 = vmatprep.subr.mxu0 0.0
        %2161 = vmatpush1.msra.mxu0 0.0
        %2162 = vmatprep.subr.mxu0 0.0
        %2163 = vmatpush1.msra.mxu0 0.0
        %2164 = vmatprep.subr.mxu0 0.0
        %2165 = vmatpush1.msra.mxu0 0.0
        %2166 = vmatprep.subr.mxu0 0.0
        %2167 = vmatpush1.msra.mxu0 0.0
        %2168 = vmatprep.subr.mxu0 0.0
        %2169 = vmatpush1.msra.mxu0 0.0
        %2170 = vmatprep.mubr.f32.mxu0 0.0
        %2171 = vmatmul.mubr.f32.gmra.mrb[0].mxu0 %v2088
        %v2172 = vpop.f32.mrb[0].mxu0
        %v2173 = vadd.f32 0.0, %v2172
        %v2174 = vpop.f32.mrb[0].mxu0
        %2175 = vmatprep.mubr.f32.mxu0 0.0
        %2176 = vmatmul.mubr.f32.gmra.mrb[0].mxu0 %v2090
        %v2177 = vpop.f32.mrb[0].mxu0
        %v2178 = vadd.f32 0.0, %v2177
        %v2179 = vpop.f32.mrb[0].mxu0
        %2180 = vmatprep.mubr.f32.mxu0 0.0
        %2181 = vmatmul.mubr.f32.gmra.mrb[0].mxu0 %v2092
        %v2182 = vpop.f32.mrb[0].mxu0
        %v2183 = vadd.f32 0.0, %v2182
        %v2184 = vpop.f32.mrb[0].mxu0
        %2185 = vmatprep.mubr.f32.mxu0 0.0
        %2186 = vmatmul.mubr.f32.gmra.mrb[0].mxu0 %v2094
        %v2187 = vpop.f32.mrb[0].mxu0
        %v2188 = vadd.f32 0.0, %v2187
        %v2189 = vpop.f32.mrb[0].mxu0
        %2190 = vmatprep.mubr.f32.mxu0 0.0
        %2191 = vmatmul.mubr.f32.gmra.mrb[0].mxu0 %v2096
        %v2192 = vpop.f32.mrb[0].mxu0
        %v2193 = vadd.f32 0.0, %v2192
        %v2194 = vpop.f32.mrb[0].mxu0
        %2195 = vmatprep.mubr.f32.mxu0 0.0
        %2196 = vmatmul.mubr.f32.gmra.mrb[0].mxu0 %v2098
        %v2197 = vpop.f32.mrb[0].mxu0
        %v2198 = vadd.f32 0.0, %v2197
        %v2199 = vpop.f32.mrb[0].mxu0
        %2200 = vmatprep.mubr.f32.mxu0 0.0
        %2201 = vmatmul.mubr.f32.gmra.mrb[0].mxu0 %v2100
        %v2202 = vpop.f32.mrb[0].mxu0
        %v2203 = vadd.f32 0.0, %v2202
        %v2204 = vpop.f32.mrb[0].mxu0
        %2205 = vmatprep.mubr.f32.mxu0 0.0
        %2206 = vmatmul.mubr.f32.gmra.mrb[0].mxu0 %v2102
        %v2207 = vpop.f32.mrb[0].mxu0
        %v2208 = vadd.f32 0.0, %v2207
        %v2209 = vpop.f32.mrb[0].mxu0
        %2210 = vdwg.mxu0
        %v2220 = vrot.slane %v1639, 1
        %v2221 = vrot.slane %v1640, 1
        %v2222 = vsel %vm1772, %v2220, %v2221
        %v2223 = vrot.slane %v1641, 1
        %v2224 = vsel %vm1772, %v2221, %v2223
        %v2225 = vrot.slane %v1642, 1
        %v2226 = vsel %vm1772, %v2223, %v2225
        %v2227 = vrot.slane %v1643, 1
        %v2228 = vsel %vm1772, %v2225, %v2227
        %v2229 = vrot.slane %v1644, 1
        %v2230 = vsel %vm1772, %v2227, %v2229
        %v2231 = vrot.slane %v1645, 1
        %v2232 = vsel %vm1772, %v2229, %v2231
        %v2233 = vrot.slane %v1646, 1
        %v2234 = vsel %vm1772, %v2231, %v2233
        %v2235 = vrot.slane %v1647, 1
        %v2236 = vsel %vm1772, %v2233, %v2235
        %v2237 = vsel %vm1250, %v2222, 0
        %v2239 = vsel %vm1250, %v2224, 0
        %v2241 = vsel %vm1250, %v2226, 0
        %v2243 = vsel %vm1250, %v2228, 0
        %v2245 = vsel %vm1250, %v2230, 0
        %v2247 = vsel %vm1250, %v2232, 0
        %v2249 = vsel %vm1250, %v2234, 0
        %v2251 = vsel %vm1250, %v2236, 0
        %v2253 = vsel %vm460, %v1754, 0
        %2255 = vmatprep.subr.mxu0 0.0
        %2256 = vmatpush1.msra.mxu0 %v1738
        %2257 = vmatprep.subr.mxu0 0.0
        %2258 = vmatpush1.msra.mxu0 %v1740
        %2259 = vmatprep.subr.mxu0 0.0
        %2260 = vmatpush1.msra.mxu0 %v1742
        %2261 = vmatprep.subr.mxu0 0.0
        %2262 = vmatpush1.msra.mxu0 %v1744
        %2263 = vmatprep.subr.mxu0 0.0
        %2264 = vmatpush1.msra.mxu0 %v1746
        %2265 = vmatprep.subr.mxu0 0.0
        %2266 = vmatpush1.msra.mxu0 %v1748
        %2267 = vmatprep.subr.mxu0 0.0
        %2268 = vmatpush1.msra.mxu0 %v1750
        %2269 = vmatprep.subr.mxu0 0.0
        %2270 = vmatpush1.msra.mxu0 %v1752
        %2271 = vmatprep.subr.mxu0 0.0
        %2272 = vmatpush1.msra.mxu0 %v2253
        %2273 = vmatprep.subr.mxu0 0.0
        %2274 = vmatpush1.msra.mxu0 0.0
        %2275 = vmatprep.subr.mxu0 0.0
        %2276 = vmatpush1.msra.mxu0 0.0
        %2277 = vmatprep.subr.mxu0 0.0
        %2278 = vmatpush1.msra.mxu0 0.0
        %2279 = vmatprep.subr.mxu0 0.0
        %2280 = vmatpush1.msra.mxu0 0.0
        %2281 = vmatprep.subr.mxu0 0.0
        %2282 = vmatpush1.msra.mxu0 0.0
        %2283 = vmatprep.subr.mxu0 0.0
        %2284 = vmatpush1.msra.mxu0 0.0
        %2285 = vmatprep.subr.mxu0 0.0
        %2286 = vmatpush1.msra.mxu0 0.0
        %2287 = vmatprep.subr.mxu0 0.0
        %2288 = vmatpush1.msra.mxu0 0.0
        %2289 = vmatprep.subr.mxu0 0.0
        %2290 = vmatpush1.msra.mxu0 0.0
        %2291 = vmatprep.subr.mxu0 0.0
        %2292 = vmatpush1.msra.mxu0 0.0
        %2293 = vmatprep.subr.mxu0 0.0
        %2294 = vmatpush1.msra.mxu0 0.0
        %2295 = vmatprep.subr.mxu0 0.0
        %2296 = vmatpush1.msra.mxu0 0.0
        %2297 = vmatprep.subr.mxu0 0.0
        %2298 = vmatpush1.msra.mxu0 0.0
        %2299 = vmatprep.subr.mxu0 0.0
        %2300 = vmatpush1.msra.mxu0 0.0
        %2301 = vmatprep.subr.mxu0 0.0
        %2302 = vmatpush1.msra.mxu0 0.0
        %2303 = vmatprep.subr.mxu0 0.0
        %2304 = vmatpush1.msra.mxu0 0.0
        %2305 = vmatprep.subr.mxu0 0.0
        %2306 = vmatpush1.msra.mxu0 0.0
        %2307 = vmatprep.subr.mxu0 0.0
        %2308 = vmatpush1.msra.mxu0 0.0
        %2309 = vmatprep.subr.mxu0 0.0
        %2310 = vmatpush1.msra.mxu0 0.0
        %2311 = vmatprep.subr.mxu0 0.0
        %2312 = vmatpush1.msra.mxu0 0.0
        %2313 = vmatprep.subr.mxu0 0.0
        %2314 = vmatpush1.msra.mxu0 0.0
        %2315 = vmatprep.subr.mxu0 0.0
        %2316 = vmatpush1.msra.mxu0 0.0
        %2317 = vmatprep.subr.mxu0 0.0
        %2318 = vmatpush1.msra.mxu0 0.0
        %2319 = vmatprep.mubr.f32.mxu0 0.0
        %2320 = vmatmul.mubr.f32.gmra.mrb[0].mxu0 %v2237
        %v2321 = vpop.f32.mrb[0].mxu0
        %v2322 = vadd.f32 0.0, %v2321
        %v2323 = vpop.f32.mrb[0].mxu0
        %2324 = vmatprep.mubr.f32.mxu0 0.0
        %2325 = vmatmul.mubr.f32.gmra.mrb[0].mxu0 %v2239
        %v2326 = vpop.f32.mrb[0].mxu0
        %v2327 = vadd.f32 0.0, %v2326
        %v2328 = vpop.f32.mrb[0].mxu0
        %2329 = vmatprep.mubr.f32.mxu0 0.0
        %2330 = vmatmul.mubr.f32.gmra.mrb[0].mxu0 %v2241
        %v2331 = vpop.f32.mrb[0].mxu0
        %v2332 = vadd.f32 0.0, %v2331
        %v2333 = vpop.f32.mrb[0].mxu0
        %2334 = vmatprep.mubr.f32.mxu0 0.0
        %2335 = vmatmul.mubr.f32.gmra.mrb[0].mxu0 %v2243
        %v2336 = vpop.f32.mrb[0].mxu0
        %v2337 = vadd.f32 0.0, %v2336
        %v2338 = vpop.f32.mrb[0].mxu0
        %2339 = vmatprep.mubr.f32.mxu0 0.0
        %2340 = vmatmul.mubr.f32.gmra.mrb[0].mxu0 %v2245
        %v2341 = vpop.f32.mrb[0].mxu0
        %v2342 = vadd.f32 0.0, %v2341
        %v2343 = vpop.f32.mrb[0].mxu0
        %2344 = vmatprep.mubr.f32.mxu0 0.0
        %2345 = vmatmul.mubr.f32.gmra.mrb[0].mxu0 %v2247
        %v2346 = vpop.f32.mrb[0].mxu0
        %v2347 = vadd.f32 0.0, %v2346
        %v2348 = vpop.f32.mrb[0].mxu0
        %2349 = vmatprep.mubr.f32.mxu0 0.0
        %2350 = vmatmul.mubr.f32.gmra.mrb[0].mxu0 %v2249
        %v2351 = vpop.f32.mrb[0].mxu0
        %v2352 = vadd.f32 0.0, %v2351
        %v2353 = vpop.f32.mrb[0].mxu0
        %2354 = vmatprep.mubr.f32.mxu0 0.0
        %2355 = vmatmul.mubr.f32.gmra.mrb[0].mxu0 %v2251
        %v2356 = vpop.f32.mrb[0].mxu0
        %v2357 = vadd.f32 0.0, %v2356
        %v2358 = vpop.f32.mrb[0].mxu0
        %2359 = vdwg.mxu0
        %v2360 = vld [vmem:[%s3] sm:$0xff]
        %v2361 = vld [vmem:[%s3 + $0x8] sm:$0xff]
        %v2363 = vrot.slane %v2360, 4
        %v2365 = vsel %vm547, %v2024, 0
        %v2368 = vsel %vm547, %v2029, 0
        %v2371 = vsel %vm547, %v2034, 0
        %v2374 = vsel %vm547, %v2039, 0
        %v2377 = vsel %vm547, %v2044, 0
        %v2380 = vsel %vm547, %v2049, 0
        %v2383 = vsel %vm547, %v2054, 0
        %v2386 = vsel %vm547, %v2059, 0
        %vm2388 = vcmask 1043456
        %v2389 = vsel %vm2388, %v2363, 0
        %2391 = vmatprep.subr.mxu0 0.0
        %2392 = vmatpush1.msra.mxu0 %v2389
        %2393 = vmatprep.subr.mxu0 0.0
        %2394 = vmatpush1.msra.mxu0 0.0
        %2395 = vmatprep.subr.mxu0 0.0
        %2396 = vmatpush1.msra.mxu0 0.0
        %2397 = vmatprep.subr.mxu0 0.0
        %2398 = vmatpush1.msra.mxu0 0.0
        %2399 = vmatprep.subr.mxu0 0.0
        %2400 = vmatpush1.msra.mxu0 0.0
        %2401 = vmatprep.subr.mxu0 0.0
        %2402 = vmatpush1.msra.mxu0 0.0
        %2403 = vmatprep.subr.mxu0 0.0
        %2404 = vmatpush1.msra.mxu0 0.0
        %2405 = vmatprep.subr.mxu0 0.0
        %2406 = vmatpush1.msra.mxu0 0.0
        %2407 = vmatprep.subr.mxu0 0.0
        %2408 = vmatpush1.msra.mxu0 0.0
        %2409 = vmatprep.subr.mxu0 0.0
        %2410 = vmatpush1.msra.mxu0 0.0
        %2411 = vmatprep.subr.mxu0 0.0
        %2412 = vmatpush1.msra.mxu0 0.0
        %2413 = vmatprep.subr.mxu0 0.0
        %2414 = vmatpush1.msra.mxu0 0.0
        %2415 = vmatprep.subr.mxu0 0.0
        %2416 = vmatpush1.msra.mxu0 0.0
        %2417 = vmatprep.subr.mxu0 0.0
        %2418 = vmatpush1.msra.mxu0 0.0
        %2419 = vmatprep.subr.mxu0 0.0
        %2420 = vmatpush1.msra.mxu0 0.0
        %2421 = vmatprep.subr.mxu0 0.0
        %2422 = vmatpush1.msra.mxu0 0.0
        %2423 = vmatprep.subr.mxu0 0.0
        %2424 = vmatpush1.msra.mxu0 0.0
        %2425 = vmatprep.subr.mxu0 0.0
        %2426 = vmatpush1.msra.mxu0 0.0
        %2427 = vmatprep.subr.mxu0 0.0
        %2428 = vmatpush1.msra.mxu0 0.0
        %2429 = vmatprep.subr.mxu0 0.0
        %2430 = vmatpush1.msra.mxu0 0.0
        %2431 = vmatprep.subr.mxu0 0.0
        %2432 = vmatpush1.msra.mxu0 0.0
        %2433 = vmatprep.subr.mxu0 0.0
        %2434 = vmatpush1.msra.mxu0 0.0
        %2435 = vmatprep.subr.mxu0 0.0
        %2436 = vmatpush1.msra.mxu0 0.0
        %2437 = vmatprep.subr.mxu0 0.0
        %2438 = vmatpush1.msra.mxu0 0.0
        %2439 = vmatprep.subr.mxu0 0.0
        %2440 = vmatpush1.msra.mxu0 0.0
        %2441 = vmatprep.subr.mxu0 0.0
        %2442 = vmatpush1.msra.mxu0 0.0
        %2443 = vmatprep.subr.mxu0 0.0
        %2444 = vmatpush1.msra.mxu0 0.0
        %2445 = vmatprep.subr.mxu0 0.0
        %2446 = vmatpush1.msra.mxu0 0.0
        %2447 = vmatprep.subr.mxu0 0.0
        %2448 = vmatpush1.msra.mxu0 0.0
        %2449 = vmatprep.subr.mxu0 0.0
        %2450 = vmatpush1.msra.mxu0 0.0
        %2451 = vmatprep.subr.mxu0 0.0
        %2452 = vmatpush1.msra.mxu0 0.0
        %2453 = vmatprep.subr.mxu0 0.0
        %2454 = vmatpush1.msra.mxu0 0.0
        %2455 = vmatprep.mubr.f32.mxu0 0.0
        %2456 = vmatmul.mubr.f32.gmra.mrb[0].mxu0 %v2365
        %v2457 = vpop.f32.mrb[0].mxu0
        %v2458 = vadd.f32 0.0, %v2457
        %v2459 = vpop.f32.mrb[0].mxu0
        %2460 = vmatprep.mubr.f32.mxu0 0.0
        %2461 = vmatmul.mubr.f32.gmra.mrb[0].mxu0 %v2368
        %v2462 = vpop.f32.mrb[0].mxu0
        %v2463 = vadd.f32 0.0, %v2462
        %v2464 = vpop.f32.mrb[0].mxu0
        %2465 = vmatprep.mubr.f32.mxu0 0.0
        %2466 = vmatmul.mubr.f32.gmra.mrb[0].mxu0 %v2371
        %v2467 = vpop.f32.mrb[0].mxu0
        %v2468 = vadd.f32 0.0, %v2467
        %v2469 = vpop.f32.mrb[0].mxu0
        %2470 = vmatprep.mubr.f32.mxu0 0.0
        %2471 = vmatmul.mubr.f32.gmra.mrb[0].mxu0 %v2374
        %v2472 = vpop.f32.mrb[0].mxu0
        %v2473 = vadd.f32 0.0, %v2472
        %v2474 = vpop.f32.mrb[0].mxu0
        %2475 = vmatprep.mubr.f32.mxu0 0.0
        %2476 = vmatmul.mubr.f32.gmra.mrb[0].mxu0 %v2377
        %v2477 = vpop.f32.mrb[0].mxu0
        %v2478 = vadd.f32 0.0, %v2477
        %v2479 = vpop.f32.mrb[0].mxu0
        %2480 = vmatprep.mubr.f32.mxu0 0.0
        %2481 = vmatmul.mubr.f32.gmra.mrb[0].mxu0 %v2380
        %v2482 = vpop.f32.mrb[0].mxu0
        %v2483 = vadd.f32 0.0, %v2482
        %v2484 = vpop.f32.mrb[0].mxu0
        %2485 = vmatprep.mubr.f32.mxu0 0.0
        %2486 = vmatmul.mubr.f32.gmra.mrb[0].mxu0 %v2383
        %v2487 = vpop.f32.mrb[0].mxu0
        %v2488 = vadd.f32 0.0, %v2487
        %v2489 = vpop.f32.mrb[0].mxu0
        %2490 = vmatprep.mubr.f32.mxu0 0.0
        %2491 = vmatmul.mubr.f32.gmra.mrb[0].mxu0 %v2386
        %v2492 = vpop.f32.mrb[0].mxu0
        %v2493 = vadd.f32 0.0, %v2492
        %v2494 = vpop.f32.mrb[0].mxu0
        %2495 = vdwg.mxu0
        %v2497 = vsel %vm547, %v1875, 0
        %v2500 = vsel %vm547, %v1880, 0
        %v2503 = vsel %vm547, %v1885, 0
        %v2506 = vsel %vm547, %v1890, 0
        %v2509 = vsel %vm547, %v1895, 0
        %v2512 = vsel %vm547, %v1900, 0
        %v2515 = vsel %vm547, %v1905, 0
        %v2518 = vsel %vm547, %v1910, 0
        %v2520 = vsel %vm2388, %v2360, 0
        %2522 = vmatprep.subr.mxu0 0.0
        %2523 = vmatpush1.msra.mxu0 %v2520
        %2524 = vmatprep.subr.mxu0 0.0
        %2525 = vmatpush1.msra.mxu0 0.0
        %2526 = vmatprep.subr.mxu0 0.0
        %2527 = vmatpush1.msra.mxu0 0.0
        %2528 = vmatprep.subr.mxu0 0.0
        %2529 = vmatpush1.msra.mxu0 0.0
        %2530 = vmatprep.subr.mxu0 0.0
        %2531 = vmatpush1.msra.mxu0 0.0
        %2532 = vmatprep.subr.mxu0 0.0
        %2533 = vmatpush1.msra.mxu0 0.0
        %2534 = vmatprep.subr.mxu0 0.0
        %2535 = vmatpush1.msra.mxu0 0.0
        %2536 = vmatprep.subr.mxu0 0.0
        %2537 = vmatpush1.msra.mxu0 0.0
        %2538 = vmatprep.subr.mxu0 0.0
        %2539 = vmatpush1.msra.mxu0 0.0
        %2540 = vmatprep.subr.mxu0 0.0
        %2541 = vmatpush1.msra.mxu0 0.0
        %2542 = vmatprep.subr.mxu0 0.0
        %2543 = vmatpush1.msra.mxu0 0.0
        %2544 = vmatprep.subr.mxu0 0.0
        %2545 = vmatpush1.msra.mxu0 0.0
        %2546 = vmatprep.subr.mxu0 0.0
        %2547 = vmatpush1.msra.mxu0 0.0
        %2548 = vmatprep.subr.mxu0 0.0
        %2549 = vmatpush1.msra.mxu0 0.0
        %2550 = vmatprep.subr.mxu0 0.0
        %2551 = vmatpush1.msra.mxu0 0.0
        %2552 = vmatprep.subr.mxu0 0.0
        %2553 = vmatpush1.msra.mxu0 0.0
        %2554 = vmatprep.subr.mxu0 0.0
        %2555 = vmatpush1.msra.mxu0 0.0
        %2556 = vmatprep.subr.mxu0 0.0
        %2557 = vmatpush1.msra.mxu0 0.0
        %2558 = vmatprep.subr.mxu0 0.0
        %2559 = vmatpush1.msra.mxu0 0.0
        %2560 = vmatprep.subr.mxu0 0.0
        %2561 = vmatpush1.msra.mxu0 0.0
        %2562 = vmatprep.subr.mxu0 0.0
        %2563 = vmatpush1.msra.mxu0 0.0
        %2564 = vmatprep.subr.mxu0 0.0
        %2565 = vmatpush1.msra.mxu0 0.0
        %2566 = vmatprep.subr.mxu0 0.0
        %2567 = vmatpush1.msra.mxu0 0.0
        %2568 = vmatprep.subr.mxu0 0.0
        %2569 = vmatpush1.msra.mxu0 0.0
        %2570 = vmatprep.subr.mxu0 0.0
        %2571 = vmatpush1.msra.mxu0 0.0
        %2572 = vmatprep.subr.mxu0 0.0
        %2573 = vmatpush1.msra.mxu0 0.0
        %2574 = vmatprep.subr.mxu0 0.0
        %2575 = vmatpush1.msra.mxu0 0.0
        %2576 = vmatprep.subr.mxu0 0.0
        %2577 = vmatpush1.msra.mxu0 0.0
        %2578 = vmatprep.subr.mxu0 0.0
        %2579 = vmatpush1.msra.mxu0 0.0
        %2580 = vmatprep.subr.mxu0 0.0
        %2581 = vmatpush1.msra.mxu0 0.0
        %2582 = vmatprep.subr.mxu0 0.0
        %2583 = vmatpush1.msra.mxu0 0.0
        %2584 = vmatprep.subr.mxu0 0.0
        %2585 = vmatpush1.msra.mxu0 0.0
        %2586 = vmatprep.mubr.f32.mxu0 0.0
        %2587 = vmatmul.mubr.f32.gmra.mrb[0].mxu0 %v2497
        %v2588 = vpop.f32.mrb[0].mxu0
        %v2589 = vadd.f32 %v2458, %v2588
        %v2590 = vpop.f32.mrb[0].mxu0
        %2591 = vmatprep.mubr.f32.mxu0 0.0
        %2592 = vmatmul.mubr.f32.gmra.mrb[0].mxu0 %v2500
        %v2593 = vpop.f32.mrb[0].mxu0
        %v2594 = vadd.f32 %v2463, %v2593
        %v2595 = vpop.f32.mrb[0].mxu0
        %2596 = vmatprep.mubr.f32.mxu0 0.0
        %2597 = vmatmul.mubr.f32.gmra.mrb[0].mxu0 %v2503
        %v2598 = vpop.f32.mrb[0].mxu0
        %v2599 = vadd.f32 %v2468, %v2598
        %v2600 = vpop.f32.mrb[0].mxu0
        %2601 = vmatprep.mubr.f32.mxu0 0.0
        %2602 = vmatmul.mubr.f32.gmra.mrb[0].mxu0 %v2506
        %v2603 = vpop.f32.mrb[0].mxu0
        %v2604 = vadd.f32 %v2473, %v2603
        %v2605 = vpop.f32.mrb[0].mxu0
        %2606 = vmatprep.mubr.f32.mxu0 0.0
        %2607 = vmatmul.mubr.f32.gmra.mrb[0].mxu0 %v2509
        %v2608 = vpop.f32.mrb[0].mxu0
        %v2609 = vadd.f32 %v2478, %v2608
        %v2610 = vpop.f32.mrb[0].mxu0
        %2611 = vmatprep.mubr.f32.mxu0 0.0
        %2612 = vmatmul.mubr.f32.gmra.mrb[0].mxu0 %v2512
        %v2613 = vpop.f32.mrb[0].mxu0
        %v2614 = vadd.f32 %v2483, %v2613
        %v2615 = vpop.f32.mrb[0].mxu0
        %2616 = vmatprep.mubr.f32.mxu0 0.0
        %2617 = vmatmul.mubr.f32.gmra.mrb[0].mxu0 %v2515
        %v2618 = vpop.f32.mrb[0].mxu0
        %v2619 = vadd.f32 %v2488, %v2618
        %v2620 = vpop.f32.mrb[0].mxu0
        %2621 = vmatprep.mubr.f32.mxu0 0.0
        %2622 = vmatmul.mubr.f32.gmra.mrb[0].mxu0 %v2518
        %v2623 = vpop.f32.mrb[0].mxu0
        %v2624 = vadd.f32 %v2493, %v2623
        %v2625 = vpop.f32.mrb[0].mxu0
        %2626 = vdwg.mxu0
        %v2628 = vsel %vm547, %v2173, 0
        %v2631 = vsel %vm547, %v2178, 0
        %v2634 = vsel %vm547, %v2183, 0
        %v2637 = vsel %vm547, %v2188, 0
        %v2640 = vsel %vm547, %v2193, 0
        %v2643 = vsel %vm547, %v2198, 0
        %v2646 = vsel %vm547, %v2203, 0
        %v2649 = vsel %vm547, %v2208, 0
        %v2652 = vsel %vm2388, %v2361, 0
        %2654 = vmatprep.subr.mxu0 0.0
        %2655 = vmatpush1.msra.mxu0 %v2652
        %2656 = vmatprep.subr.mxu0 0.0
        %2657 = vmatpush1.msra.mxu0 0.0
        %2658 = vmatprep.subr.mxu0 0.0
        %2659 = vmatpush1.msra.mxu0 0.0
        %2660 = vmatprep.subr.mxu0 0.0
        %2661 = vmatpush1.msra.mxu0 0.0
        %2662 = vmatprep.subr.mxu0 0.0
        %2663 = vmatpush1.msra.mxu0 0.0
        %2664 = vmatprep.subr.mxu0 0.0
        %2665 = vmatpush1.msra.mxu0 0.0
        %2666 = vmatprep.subr.mxu0 0.0
        %2667 = vmatpush1.msra.mxu0 0.0
        %2668 = vmatprep.subr.mxu0 0.0
        %2669 = vmatpush1.msra.mxu0 0.0
        %2670 = vmatprep.subr.mxu0 0.0
        %2671 = vmatpush1.msra.mxu0 0.0
        %2672 = vmatprep.subr.mxu0 0.0
        %2673 = vmatpush1.msra.mxu0 0.0
        %2674 = vmatprep.subr.mxu0 0.0
        %2675 = vmatpush1.msra.mxu0 0.0
        %2676 = vmatprep.subr.mxu0 0.0
        %2677 = vmatpush1.msra.mxu0 0.0
        %2678 = vmatprep.subr.mxu0 0.0
        %2679 = vmatpush1.msra.mxu0 0.0
        %2680 = vmatprep.subr.mxu0 0.0
        %2681 = vmatpush1.msra.mxu0 0.0
        %2682 = vmatprep.subr.mxu0 0.0
        %2683 = vmatpush1.msra.mxu0 0.0
        %2684 = vmatprep.subr.mxu0 0.0
        %2685 = vmatpush1.msra.mxu0 0.0
        %2686 = vmatprep.subr.mxu0 0.0
        %2687 = vmatpush1.msra.mxu0 0.0
        %2688 = vmatprep.subr.mxu0 0.0
        %2689 = vmatpush1.msra.mxu0 0.0
        %2690 = vmatprep.subr.mxu0 0.0
        %2691 = vmatpush1.msra.mxu0 0.0
        %2692 = vmatprep.subr.mxu0 0.0
        %2693 = vmatpush1.msra.mxu0 0.0
        %2694 = vmatprep.subr.mxu0 0.0
        %2695 = vmatpush1.msra.mxu0 0.0
        %2696 = vmatprep.subr.mxu0 0.0
        %2697 = vmatpush1.msra.mxu0 0.0
        %2698 = vmatprep.subr.mxu0 0.0
        %2699 = vmatpush1.msra.mxu0 0.0
        %2700 = vmatprep.subr.mxu0 0.0
        %2701 = vmatpush1.msra.mxu0 0.0
        %2702 = vmatprep.subr.mxu0 0.0
        %2703 = vmatpush1.msra.mxu0 0.0
        %2704 = vmatprep.subr.mxu0 0.0
        %2705 = vmatpush1.msra.mxu0 0.0
        %2706 = vmatprep.subr.mxu0 0.0
        %2707 = vmatpush1.msra.mxu0 0.0
        %2708 = vmatprep.subr.mxu0 0.0
        %2709 = vmatpush1.msra.mxu0 0.0
        %2710 = vmatprep.subr.mxu0 0.0
        %2711 = vmatpush1.msra.mxu0 0.0
        %2712 = vmatprep.subr.mxu0 0.0
        %2713 = vmatpush1.msra.mxu0 0.0
        %2714 = vmatprep.subr.mxu0 0.0
        %2715 = vmatpush1.msra.mxu0 0.0
        %2716 = vmatprep.subr.mxu0 0.0
        %2717 = vmatpush1.msra.mxu0 0.0
        %2718 = vmatprep.mubr.f32.mxu0 0.0
        %2719 = vmatmul.mubr.f32.gmra.mrb[0].mxu0 %v2628
        %v2720 = vpop.f32.mrb[0].mxu0
        %v2721 = vadd.f32 0.0, %v2720
        %v2722 = vpop.f32.mrb[0].mxu0
        %2723 = vmatprep.mubr.f32.mxu0 0.0
        %2724 = vmatmul.mubr.f32.gmra.mrb[0].mxu0 %v2631
        %v2725 = vpop.f32.mrb[0].mxu0
        %v2726 = vadd.f32 0.0, %v2725
        %v2727 = vpop.f32.mrb[0].mxu0
        %2728 = vmatprep.mubr.f32.mxu0 0.0
        %2729 = vmatmul.mubr.f32.gmra.mrb[0].mxu0 %v2634
        %v2730 = vpop.f32.mrb[0].mxu0
        %v2731 = vadd.f32 0.0, %v2730
        %v2732 = vpop.f32.mrb[0].mxu0
        %2733 = vmatprep.mubr.f32.mxu0 0.0
        %2734 = vmatmul.mubr.f32.gmra.mrb[0].mxu0 %v2637
        %v2735 = vpop.f32.mrb[0].mxu0
        %v2736 = vadd.f32 0.0, %v2735
        %v2737 = vpop.f32.mrb[0].mxu0
        %2738 = vmatprep.mubr.f32.mxu0 0.0
        %2739 = vmatmul.mubr.f32.gmra.mrb[0].mxu0 %v2640
        %v2740 = vpop.f32.mrb[0].mxu0
        %v2741 = vadd.f32 0.0, %v2740
        %v2742 = vpop.f32.mrb[0].mxu0
        %2743 = vmatprep.mubr.f32.mxu0 0.0
        %2744 = vmatmul.mubr.f32.gmra.mrb[0].mxu0 %v2643
        %v2745 = vpop.f32.mrb[0].mxu0
        %v2746 = vadd.f32 0.0, %v2745
        %v2747 = vpop.f32.mrb[0].mxu0
        %2748 = vmatprep.mubr.f32.mxu0 0.0
        %2749 = vmatmul.mubr.f32.gmra.mrb[0].mxu0 %v2646
        %v2750 = vpop.f32.mrb[0].mxu0
        %v2751 = vadd.f32 0.0, %v2750
        %v2752 = vpop.f32.mrb[0].mxu0
        %2753 = vmatprep.mubr.f32.mxu0 0.0
        %2754 = vmatmul.mubr.f32.gmra.mrb[0].mxu0 %v2649
        %v2755 = vpop.f32.mrb[0].mxu0
        %v2756 = vadd.f32 0.0, %v2755
        %v2757 = vpop.f32.mrb[0].mxu0
        %2758 = vdwg.mxu0
        %v2759 = vadd.f32 %v2589, %v2721
        %v2760 = vadd.f32 %v2594, %v2726
        %v2761 = vadd.f32 %v2599, %v2731
        %v2762 = vadd.f32 %v2604, %v2736
        %v2763 = vadd.f32 %v2609, %v2741
        %v2764 = vadd.f32 %v2614, %v2746
        %v2765 = vadd.f32 %v2619, %v2751
        %v2766 = vadd.f32 %v2624, %v2756
        %v2767 = vrot.slane %v2361, 4
        %v2769 = vsel %vm547, %v2322, 0
        %v2772 = vsel %vm547, %v2327, 0
        %v2775 = vsel %vm547, %v2332, 0
        %v2778 = vsel %vm547, %v2337, 0
        %v2781 = vsel %vm547, %v2342, 0
        %v2784 = vsel %vm547, %v2347, 0
        %v2787 = vsel %vm547, %v2352, 0
        %v2790 = vsel %vm547, %v2357, 0
        %v2792 = vsel %vm2388, %v2767, 0
        %2794 = vmatprep.subr.mxu0 0.0
        %2795 = vmatpush1.msra.mxu0 %v2792
        %2796 = vmatprep.subr.mxu0 0.0
        %2797 = vmatpush1.msra.mxu0 0.0
        %2798 = vmatprep.subr.mxu0 0.0
        %2799 = vmatpush1.msra.mxu0 0.0
        %2800 = vmatprep.subr.mxu0 0.0
        %2801 = vmatpush1.msra.mxu0 0.0
        %2802 = vmatprep.subr.mxu0 0.0
        %2803 = vmatpush1.msra.mxu0 0.0
        %2804 = vmatprep.subr.mxu0 0.0
        %2805 = vmatpush1.msra.mxu0 0.0
        %2806 = vmatprep.subr.mxu0 0.0
        %2807 = vmatpush1.msra.mxu0 0.0
        %2808 = vmatprep.subr.mxu0 0.0
        %2809 = vmatpush1.msra.mxu0 0.0
        %2810 = vmatprep.subr.mxu0 0.0
        %2811 = vmatpush1.msra.mxu0 0.0
        %2812 = vmatprep.subr.mxu0 0.0
        %2813 = vmatpush1.msra.mxu0 0.0
        %2814 = vmatprep.subr.mxu0 0.0
        %2815 = vmatpush1.msra.mxu0 0.0
        %2816 = vmatprep.subr.mxu0 0.0
        %2817 = vmatpush1.msra.mxu0 0.0
        %2818 = vmatprep.subr.mxu0 0.0
        %2819 = vmatpush1.msra.mxu0 0.0
        %2820 = vmatprep.subr.mxu0 0.0
        %2821 = vmatpush1.msra.mxu0 0.0
        %2822 = vmatprep.subr.mxu0 0.0
        %2823 = vmatpush1.msra.mxu0 0.0
        %2824 = vmatprep.subr.mxu0 0.0
        %2825 = vmatpush1.msra.mxu0 0.0
        %2826 = vmatprep.subr.mxu0 0.0
        %2827 = vmatpush1.msra.mxu0 0.0
        %2828 = vmatprep.subr.mxu0 0.0
        %2829 = vmatpush1.msra.mxu0 0.0
        %2830 = vmatprep.subr.mxu0 0.0
        %2831 = vmatpush1.msra.mxu0 0.0
        %2832 = vmatprep.subr.mxu0 0.0
        %2833 = vmatpush1.msra.mxu0 0.0
        %2834 = vmatprep.subr.mxu0 0.0
        %2835 = vmatpush1.msra.mxu0 0.0
        %2836 = vmatprep.subr.mxu0 0.0
        %2837 = vmatpush1.msra.mxu0 0.0
        %2838 = vmatprep.subr.mxu0 0.0
        %2839 = vmatpush1.msra.mxu0 0.0
        %2840 = vmatprep.subr.mxu0 0.0
        %2841 = vmatpush1.msra.mxu0 0.0
        %2842 = vmatprep.subr.mxu0 0.0
        %2843 = vmatpush1.msra.mxu0 0.0
        %2844 = vmatprep.subr.mxu0 0.0
        %2845 = vmatpush1.msra.mxu0 0.0
        %2846 = vmatprep.subr.mxu0 0.0
        %2847 = vmatpush1.msra.mxu0 0.0
        %2848 = vmatprep.subr.mxu0 0.0
        %2849 = vmatpush1.msra.mxu0 0.0
        %2850 = vmatprep.subr.mxu0 0.0
        %2851 = vmatpush1.msra.mxu0 0.0
        %2852 = vmatprep.subr.mxu0 0.0
        %2853 = vmatpush1.msra.mxu0 0.0
        %2854 = vmatprep.subr.mxu0 0.0
        %2855 = vmatpush1.msra.mxu0 0.0
        %2856 = vmatprep.subr.mxu0 0.0
        %2857 = vmatpush1.msra.mxu0 0.0
        %2858 = vmatprep.mubr.f32.mxu0 0.0
        %2859 = vmatmul.mubr.f32.gmra.mrb[0].mxu0 %v2769
        %v2860 = vpop.f32.mrb[0].mxu0
        %v2861 = vadd.f32 0.0, %v2860
        %v2862 = vpop.f32.mrb[0].mxu0
        %2863 = vmatprep.mubr.f32.mxu0 0.0
        %2864 = vmatmul.mubr.f32.gmra.mrb[0].mxu0 %v2772
        %v2865 = vpop.f32.mrb[0].mxu0
        %v2866 = vadd.f32 0.0, %v2865
        %v2867 = vpop.f32.mrb[0].mxu0
        %2868 = vmatprep.mubr.f32.mxu0 0.0
        %2869 = vmatmul.mubr.f32.gmra.mrb[0].mxu0 %v2775
        %v2870 = vpop.f32.mrb[0].mxu0
        %v2871 = vadd.f32 0.0, %v2870
        %v2872 = vpop.f32.mrb[0].mxu0
        %2873 = vmatprep.mubr.f32.mxu0 0.0
        %2874 = vmatmul.mubr.f32.gmra.mrb[0].mxu0 %v2778
        %v2875 = vpop.f32.mrb[0].mxu0
        %v2876 = vadd.f32 0.0, %v2875
        %v2877 = vpop.f32.mrb[0].mxu0
        %2878 = vmatprep.mubr.f32.mxu0 0.0
        %2879 = vmatmul.mubr.f32.gmra.mrb[0].mxu0 %v2781
        %v2880 = vpop.f32.mrb[0].mxu0
        %v2881 = vadd.f32 0.0, %v2880
        %v2882 = vpop.f32.mrb[0].mxu0
        %2883 = vmatprep.mubr.f32.mxu0 0.0
        %2884 = vmatmul.mubr.f32.gmra.mrb[0].mxu0 %v2784
        %v2885 = vpop.f32.mrb[0].mxu0
        %v2886 = vadd.f32 0.0, %v2885
        %v2887 = vpop.f32.mrb[0].mxu0
        %2888 = vmatprep.mubr.f32.mxu0 0.0
        %2889 = vmatmul.mubr.f32.gmra.mrb[0].mxu0 %v2787
        %v2890 = vpop.f32.mrb[0].mxu0
        %v2891 = vadd.f32 0.0, %v2890
        %v2892 = vpop.f32.mrb[0].mxu0
        %2893 = vmatprep.mubr.f32.mxu0 0.0
        %2894 = vmatmul.mubr.f32.gmra.mrb[0].mxu0 %v2790
        %v2895 = vpop.f32.mrb[0].mxu0
        %v2896 = vadd.f32 0.0, %v2895
        %v2897 = vpop.f32.mrb[0].mxu0
        %2898 = vdwg.mxu0
        %v2899 = vadd.f32 %v2759, %v2861
        %v2900 = vadd.f32 %v2760, %v2866
        %v2901 = vadd.f32 %v2761, %v2871
        %v2902 = vadd.f32 %v2762, %v2876
        %v2903 = vadd.f32 %v2763, %v2881
        %v2904 = vadd.f32 %v2764, %v2886
        %v2905 = vadd.f32 %v2765, %v2891
        %v2906 = vadd.f32 %v2766, %v2896
        %v2907 = vld [vmem:[%s4] sm:$0x1]
        %v2909 = vlaneseq
        %v2910 = vshrl.u32 %v2909, 7
        %v2911 = vsub.s32 0, %v2910
        %v2912 = vrot.slane %v2907, %v2911
        %v2914 = vadd.f32 %v2899, %v2912
        %v2915 = vadd.f32 %v2900, %v2912
        %v2916 = vadd.f32 %v2901, %v2912
        %v2917 = vadd.f32 %v2902, %v2912
        %v2918 = vadd.f32 %v2903, %v2912
        %v2919 = vadd.f32 %v2904, %v2912
        %v2920 = vadd.f32 %v2905, %v2912
        %v2921 = vadd.f32 %v2906, %v2912
        %vm2922 = vcmask 261120
        %2923 = vst.msk [vmem:[%s414] sm:$0xff] %vm2922, %v2914
        %2924 = vst.msk [vmem:[%s414 + $0x8] sm:$0xff] %vm2922, %v2915
        %2925 = vst.msk [vmem:[%s414 + $0x10] sm:$0xff] %vm2922, %v2916
        %2926 = vst.msk [vmem:[%s414 + $0x18] sm:$0xff] %vm2922, %v2917
        %2927 = vst.msk [vmem:[%s414 + $0x20] sm:$0xff] %vm2922, %v2918
        %2928 = vst.msk [vmem:[%s414 + $0x28] sm:$0xff] %vm2922, %v2919
        %2929 = vst.msk [vmem:[%s414 + $0x30] sm:$0xff] %vm2922, %v2920
        %2930 = vst.msk [vmem:[%s414 + $0x38] sm:$0xff] %vm2922, %v2921
        %s2931 = sand.u32 %s159, 1
        %s2932 = sand.u32 %s159, 1
        %s2933 = smul.addr %s2932, 64
        %s2934 = scalar_lea.vmem [#allocation4], %s2933
        %p2935 = scmp.lt.s32.totalorder %s22, 7
        %s2936 = scalar_select %p2935, %s22, 7
        %p2937 = scmp.lt.s32.totalorder %s23, 3
        %s2938 = scalar_select %p2937, %s23, 3
        %s2939 = smul.addr %s2938, 36
        %s2940 = smul.addr %s2936, 144
        %s2941 = sadd.s32 %s2939, %s2940
        %s2942 = smul.addr %s2941, 8
        %s2943 = scalar_lea.vmem %s6, %s2942
        // Predicated region
        $region117: #{nonlocal_block_forward.3} parent=107 // pred_check
          %p2944 = pneg %p169
        $region118: #{nonlocal_block_forward.3} parent=107 // pred_check_branch
          %2946 = sbr.rel (%p2944) target = $region120
        $region119: #{nonlocal_block_forward.3} parent=107 // pred_region
          %s2947 = smul.addr %s22, 32
          %s2948 = sadd.s32 %s23, %s2947
          %s2949 = smul.addr %s2948, 8
          %s2950 = scalar_lea.vmem %s5, %s2949
          // Predicated region
          $region121: #{nonlocal_block_forward.3} parent=119 // pred_check
            _
          $region122: #{nonlocal_block_forward.3} parent=119 // pred_check_branch
            %2952 = sbr.rel (0) target = $region124
          $region123: #{nonlocal_block_forward.3} parent=119 // pred_region
            // Predicated region
            $region125: #{nonlocal_block_forward.3} parent=123 // pred_check
              _
            $region126: #{nonlocal_block_forward.3} parent=123 // pred_check_branch
              %2954 = sbr.rel (0) target = $region128
            $region127: #{nonlocal_block_forward.3} parent=123 // pred_region
              // Predicated region
              $region140: #{nonlocal_block_forward.3} parent=127 // pred_check
                _
              $region141: #{nonlocal_block_forward.3} parent=127 // pred_check_branch
                %2983 = sbr.rel (0) target = $region143
              $region142: #{nonlocal_block_forward.3} parent=127 // pred_region
                loop: start=0, step=1, limit=1
                $region144: #{nonlocal_block_forward.3} parent=142 // loop_pre_header
                  _
                $region145: #{nonlocal_block_forward.3} parent=142 // loop_header
                  %s2985 = sphi 0, %s2989
                  %p2986 = scmp.ge.s32.totalorder %s2985, 1
                  %s2990 = sphi %s2934, %s2934
                  %s2991 = sphi %s2950, %s2950
                $region146: #{nonlocal_block_forward.3} parent=142 // loop_header_branch
                  %2988 = sbr.rel (%p2986) target = $region150
                $region147: #{nonlocal_block_forward.3} parent=142 // loop_body
                  %v2992 = vld [vmem:[%s2990] sm:$0xff]
                  %2993 = vst [vmem:[%s2991] sm:$0xff] %v2992
                  %v2994 = vld [vmem:[%s2990 + $0x8] sm:$0xff]
                  %2995 = vst [vmem:[%s2991 + $0x20] sm:$0xff] %v2994
                  %v2996 = vld [vmem:[%s2990 + $0x10] sm:$0xff]
                  %2997 = vst [vmem:[%s2991 + $0x40] sm:$0xff] %v2996
                  %v2998 = vld [vmem:[%s2990 + $0x18] sm:$0xff]
                  %2999 = vst [vmem:[%s2991 + $0x60] sm:$0xff] %v2998
                  %v3000 = vld [vmem:[%s2990 + $0x20] sm:$0xff]
                  %3001 = vst [vmem:[%s2991 + $0x80] sm:$0xff] %v3000
                  %v3002 = vld [vmem:[%s2990 + $0x28] sm:$0xff]
                  %3003 = vst [vmem:[%s2991 + $0xa0] sm:$0xff] %v3002
                  %v3004 = vld [vmem:[%s2990 + $0x30] sm:$0xff]
                  %3005 = vst [vmem:[%s2991 + $0xc0] sm:$0xff] %v3004
                  %v3006 = vld [vmem:[%s2990 + $0x38] sm:$0xff]
                  %3007 = vst [vmem:[%s2991 + $0xe0] sm:$0xff] %v3006
                $region148: #{nonlocal_block_forward.3} parent=142 // loop_footer
                  %s2989 = sadd.s32 1, %s2985
                $region149: #{nonlocal_block_forward.3} parent=142 // loop_footer_branch
                  %2984 = sbr.rel target = $region145
                $region150: #{nonlocal_block_forward.3} parent=142 // loop_exit
                  _
              $region143: #{nonlocal_block_forward.3} parent=127 // pred_fallthru
                _
              // Predicated region
              $region151: #{nonlocal_block_forward.3} parent=127 // pred_check
                _
              $region152: #{nonlocal_block_forward.3} parent=127 // pred_check_branch
                %3009 = sbr.rel target = $region154
              $region153: #{nonlocal_block_forward.3} parent=127 // pred_region
                _
              $region154: #{nonlocal_block_forward.3} parent=127 // pred_fallthru
                _
            $region128: #{nonlocal_block_forward.3} parent=123 // pred_fallthru
              _
            // Predicated region
            $region129: #{nonlocal_block_forward.3} parent=123 // pred_check
              _
            $region130: #{nonlocal_block_forward.3} parent=123 // pred_check_branch
              %2956 = sbr.rel target = $region132
            $region131: #{nonlocal_block_forward.3} parent=123 // pred_region
              loop: start=0, step=1, limit=1
              $region133: #{nonlocal_block_forward.3} parent=131 // loop_pre_header
                _
              $region134: #{nonlocal_block_forward.3} parent=131 // loop_header
                %s2959 = sphi 0, %s2963
                %p2960 = scmp.ge.s32.totalorder %s2959, 1
                %s2964 = sphi %s2934, %s2934
                %s2965 = sphi %s2950, %s2950
              $region135: #{nonlocal_block_forward.3} parent=131 // loop_header_branch
                %2962 = sbr.rel (%p2960) target = $region139
              $region136: #{nonlocal_block_forward.3} parent=131 // loop_body
                %v2966 = vld [vmem:[%s2964] sm:$0xff]
                %2967 = vst [vmem:[%s2965] sm:$0xff] %v2966
                %v2968 = vld [vmem:[%s2964 + $0x8] sm:$0xff]
                %2969 = vst [vmem:[%s2965 + $0x20] sm:$0xff] %v2968
                %v2970 = vld [vmem:[%s2964 + $0x10] sm:$0xff]
                %2971 = vst [vmem:[%s2965 + $0x40] sm:$0xff] %v2970
                %v2972 = vld [vmem:[%s2964 + $0x18] sm:$0xff]
                %2973 = vst [vmem:[%s2965 + $0x60] sm:$0xff] %v2972
                %v2974 = vld [vmem:[%s2964 + $0x20] sm:$0xff]
                %2975 = vst [vmem:[%s2965 + $0x80] sm:$0xff] %v2974
                %v2976 = vld [vmem:[%s2964 + $0x28] sm:$0xff]
                %2977 = vst [vmem:[%s2965 + $0xa0] sm:$0xff] %v2976
                %v2978 = vld [vmem:[%s2964 + $0x30] sm:$0xff]
                %2979 = vst [vmem:[%s2965 + $0xc0] sm:$0xff] %v2978
                %v2980 = vld [vmem:[%s2964 + $0x38] sm:$0xff]
                %2981 = vst [vmem:[%s2965 + $0xe0] sm:$0xff] %v2980
              $region137: #{nonlocal_block_forward.3} parent=131 // loop_footer
                %s2963 = sadd.s32 1, %s2959
              $region138: #{nonlocal_block_forward.3} parent=131 // loop_footer_branch
                %2958 = sbr.rel target = $region134
              $region139: #{nonlocal_block_forward.3} parent=131 // loop_exit
                _
            $region132: #{nonlocal_block_forward.3} parent=123 // pred_fallthru
              _
          $region124: #{nonlocal_block_forward.3} parent=119 // pred_fallthru
            _
          %3010 = vnop
        $region120: #{nonlocal_block_forward.3} parent=107 // pred_fallthru
          _
        // Predicated region
        $region155: #{nonlocal_block_forward.3} parent=107 // pred_check
          %p3011 = pneg %p197
        $region156: #{nonlocal_block_forward.3} parent=107 // pred_check_branch
          %3013 = sbr.rel (%p3011) target = $region158
        $region157: #{nonlocal_block_forward.3} parent=107 // pred_region
          _
        $region158: #{nonlocal_block_forward.3} parent=107 // pred_fallthru
          _
      $region108: #{nonlocal_block_forward.3} parent=5 // pred_fallthru
        _
      %p3014 = scmp.le.s32.totalorder 2, %s13
      // Predicated region
      $region159: #{nonlocal_block_forward.3} parent=5 // pred_check
        %p3015 = pneg %p3014
      $region160: #{nonlocal_block_forward.3} parent=5 // pred_check_branch
        %3017 = sbr.rel (%p3015) target = $region162
      $region161: #{nonlocal_block_forward.3} parent=5 // pred_region
        %s3018 = ssub.s32 %s13, 2
        // Predicated region
        $region163: #{nonlocal_block_forward.3} parent=161 // pred_check
          %p3019 = pneg %p175
        $region164: #{nonlocal_block_forward.3} parent=161 // pred_check_branch
          %3021 = sbr.rel (%p3019) target = $region166
        $region165: #{nonlocal_block_forward.3} parent=161 // pred_region
          %s3022 = sand.u32 %s160, 1
          %s3023 = sand.u32 %s160, 1
          %s3024 = smul.addr %s3023, 64
          %s3025 = scalar_lea.vmem [#allocation4], %s3024
        $region166: #{nonlocal_block_forward.3} parent=161 // pred_fallthru
          _
        // Predicated region
        $region167: #{nonlocal_block_forward.3} parent=161 // pred_check
          %p3026 = pneg %p203
        $region168: #{nonlocal_block_forward.3} parent=161 // pred_check_branch
          %3028 = sbr.rel (%p3026) target = $region170
        $region169: #{nonlocal_block_forward.3} parent=161 // pred_region
          %p3029 = scmp.lt.s32.totalorder %s24, 7
          %s3030 = scalar_select %p3029, %s24, 7
          %p3031 = scmp.lt.s32.totalorder %s25, 3
          %s3032 = scalar_select %p3031, %s25, 3
          %s3033 = smul.addr %s3032, 36
          %s3034 = smul.addr %s3030, 144
          %s3035 = sadd.s32 %s3033, %s3034
          %s3036 = smul.addr %s3035, 8
          %s3037 = scalar_lea.vmem %s6, %s3036
        $region170: #{nonlocal_block_forward.3} parent=161 // pred_fallthru
          _
      $region162: #{nonlocal_block_forward.3} parent=5 // pred_fallthru
        _
    $region6: #{nonlocal_block_forward.3} parent=1 // loop_footer
      %s17 = sadd.s32 1, %s13
    $region7: #{nonlocal_block_forward.3} parent=1 // loop_footer_branch
      %12 = sbr.rel target = $region3
    $region8: #{nonlocal_block_forward.3} parent=1 // loop_exit
      _

// kernel: nonlocal_block_forward.2
$region0: #{nonlocal_block_forward.2}
  #allocation0 [shape = 'u32[]', space=smem, size = 0x4, offset = 0x4, fixed_abs, tag = 'smem constant byte address 0x4 - core index']
  #allocation1 [shape = 'u32[144,128]{1,0:T(1,128)}', space=vmem, size = 0x12000, scoped, tag = 'internal scratch']
  %s0 = inlined_call_operand.vmem [shape: f32[2048,32], index: 0, kind: input, shape index: {}]
  %s1 = inlined_call_operand.vmem [shape: f32[2048,32], index: 1, kind: input, shape index: {}]
  %s2 = inlined_call_operand.vmem [shape: f32[32,16], index: 2, kind: input, shape index: {}]
  %s3 = inlined_call_operand.hbm [shape: f32[1,16], index: 3, kind: input, shape index: {}]
  %s4 = inlined_call_operand.hbm [shape: f32[32,32], index: 4, kind: input, shape index: {}]
  %s5 = inlined_call_operand.hbm [shape: f32[1,32], index: 5, kind: input, shape index: {}]
  %s6 = inlined_call_operand.vmem [shape: f32[2048,16], index: 6, kind: output, shape index: {0}]
  %s7 = inlined_call_operand.vmem [shape: f32[2048,32], index: 7, kind: output, shape index: {1}]
  %8 = xla_tuple %s6, %s7
  %s9 = sld [smem:[#allocation0]]
  $region77: #{nonlocal_block_forward.2} parent=0
    _
  %s11 = ssub.s32 1, %s9
  %s12 = scalar_select 0, %s11, %s9
  $region1: #{nonlocal_block_forward.2} parent=0
    #allocation2 [shape = 'u8[512]{0}', space=vmem, size = 0x400, scoped, tag = 'input window, operand 3, single buffered']
    #allocation3 [shape = 's32[2]{0}', space=sflag, size = 0x8, scoped, tag = 'scoped memory for nonlocal_block_forward.2']
    #allocation4 [shape = 'u8[16384]{0}', space=vmem, size = 0x4000, scoped, tag = 'input window, operand 4, single buffered']
    #allocation5 [shape = 's32[1]{0}', space=sflag, size = 0x4, scoped, tag = 'scoped memory for nonlocal_block_forward.2']
    #allocation6 [shape = 'u8[512]{0}', space=vmem, size = 0x400, scoped, tag = 'input window, operand 5, single buffered']
    %13 = vsyncpa [#allocation3], 0
    %14 = vsyncpa [#allocation5], 0
    loop: start=0, step=1, limit=4
    $region2: #{nonlocal_block_forward.2} parent=1 // loop_pre_header
      _
    $region3: #{nonlocal_block_forward.2} parent=1 // loop_header
      %s16 = sphi 0, %s20
      %p17 = scmp.ge.s32.totalorder %s16, 4
      %s26 = sphi 0, %s28
      %s29 = sphi 0, %s26
      %s30 = sphi 0, %s29
      %s46 = sphi 0, %s30
      %s52 = sphi 0, %s54
      %s55 = sphi 0, %s52
      %s56 = sphi 0, %s55
      %s72 = sphi 0, %s56
      %s76 = sphi 0, %s76
      %s78 = sphi 0, %s76
      %s79 = sphi 0, %s78
      %s93 = sphi 0, %s79
      %s97 = sphi 0, %s97
      %s99 = sphi 0, %s97
      %s100 = sphi 0, %s99
      %s114 = sphi 0, %s100
      %s118 = sphi 0, %s118
      %s120 = sphi 0, %s118
      %s121 = sphi 0, %s120
      %s135 = sphi 0, %s121
      %s139 = sphi 0, %s139
      %s141 = sphi 0, %s139
      %s142 = sphi 0, %s141
      %s156 = sphi 0, %s142
      %s162 = sphi 0, %s164
      %s165 = sphi 0, %s162
      %s166 = sphi 0, %s165
      %s182 = sphi 0, %s166
      %s188 = sphi 0, %s190
      %s191 = sphi 0, %s188
      %s192 = sphi 0, %s191
      %s208 = sphi 0, %s192
    $region4: #{nonlocal_block_forward.2} parent=1 // loop_header_branch
      %19 = sbr.rel (%p17) target = $region8
    $region5: #{nonlocal_block_forward.2} parent=1 // loop_body
      %s21 = ssub.s32 %s16, 1
      %s22 = ssub.s32 %s16, 2
      %s23 = sadd.s32 %s16, 1
      %s24 = ssub.s32 %s16, %s23
      %p25 = scmp.eq.s32.totalorder %s24, 0
      %s27 = sadd.s32 %s26, 1
      %s28 = scalar_select %p25, %s26, %s27
      %p31 = pneg %p25
      %p32 = scmp.eq.s32.totalorder %s16, 1
      %p33 = por %p31, %p32
      %p34 = scmp.ne.s32.totalorder %s26, %s29
      %p35 = scmp.eq.s32.totalorder %s16, 0
      %p36 = por %p34, %p35
      %p37 = scmp.ne.s32.totalorder %s26, %s29
      %p38 = scmp.eq.s32.totalorder %s21, 1
      %p39 = por %p37, %p38
      %p40 = scmp.ne.s32.totalorder %s29, %s30
      %p41 = scmp.eq.s32.totalorder %s21, 0
      %p42 = por %p40, %p41
      %p43 = scmp.ne.s32.totalorder %s29, %s30
      %p44 = scmp.eq.s32.totalorder %s22, 1
      %p45 = por %p43, %p44
      %p47 = scmp.ne.s32.totalorder %s30, %s46
      %p48 = scmp.eq.s32.totalorder %s22, 0
      %p49 = por %p47, %p48
      %s50 = ssub.s32 %s16, %s23
      %p51 = scmp.eq.s32.totalorder %s50, 0
      %s53 = sadd.s32 %s52, 1
      %s54 = scalar_select %p51, %s52, %s53
      %p57 = pneg %p51
      %p58 = scmp.eq.s32.totalorder %s16, 1
      %p59 = por %p57, %p58
      %p60 = scmp.ne.s32.totalorder %s52, %s55
      %p61 = scmp.eq.s32.totalorder %s16, 0
      %p62 = por %p60, %p61
      %p63 = scmp.ne.s32.totalorder %s52, %s55
      %p64 = scmp.eq.s32.totalorder %s21, 1
      %p65 = por %p63, %p64
      %p66 = scmp.ne.s32.totalorder %s55, %s56
      %p67 = scmp.eq.s32.totalorder %s21, 0
      %p68 = por %p66, %p67
      %p69 = scmp.ne.s32.totalorder %s55, %s56
      %p70 = scmp.eq.s32.totalorder %s22, 1
      %p71 = por %p69, %p70
      %p73 = scmp.ne.s32.totalorder %s56, %s72
      %p74 = scmp.eq.s32.totalorder %s22, 0
      %p75 = por %p73, %p74
      %s77 = sadd.s32 %s76, 1
      %p80 = scmp.eq.s32.totalorder %s16, 1
      %p81 = scmp.ne.s32.totalorder %s76, %s78
      %p82 = scmp.eq.s32.totalorder %s16, 0
      %p83 = por %p81, %p82
      %p84 = scmp.ne.s32.totalorder %s76, %s78
      %p85 = scmp.eq.s32.totalorder %s21, 1
      %p86 = por %p84, %p85
      %p87 = scmp.ne.s32.totalorder %s78, %s79
      %p88 = scmp.eq.s32.totalorder %s21, 0
      %p89 = por %p87, %p88
      %p90 = scmp.ne.s32.totalorder %s78, %s79
      %p91 = scmp.eq.s32.totalorder %s22, 1
      %p92 = por %p90, %p91
      %p94 = scmp.ne.s32.totalorder %s79, %s93
      %p95 = scmp.eq.s32.totalorder %s22, 0
      %p96 = por %p94, %p95
      %s98 = sadd.s32 %s97, 1
      %p101 = scmp.eq.s32.totalorder %s16, 1
      %p102 = scmp.ne.s32.totalorder %s97, %s99
      %p103 = scmp.eq.s32.totalorder %s16, 0
      %p104 = por %p102, %p103
      %p105 = scmp.ne.s32.totalorder %s97, %s99
      %p106 = scmp.eq.s32.totalorder %s21, 1
      %p107 = por %p105, %p106
      %p108 = scmp.ne.s32.totalorder %s99, %s100
      %p109 = scmp.eq.s32.totalorder %s21, 0
      %p110 = por %p108, %p109
      %p111 = scmp.ne.s32.totalorder %s99, %s100
      %p112 = scmp.eq.s32.totalorder %s22, 1
      %p113 = por %p111, %p112
      %p115 = scmp.ne.s32.totalorder %s100, %s114
      %p116 = scmp.eq.s32.totalorder %s22, 0
      %p117 = por %p115, %p116
      %s119 = sadd.s32 %s118, 1
      %p122 = scmp.eq.s32.totalorder %s16, 1
      %p123 = scmp.ne.s32.totalorder %s118, %s120
      %p124 = scmp.eq.s32.totalorder %s16, 0
      %p125 = por %p123, %p124
      %p126 = scmp.ne.s32.totalorder %s118, %s120
      %p127 = scmp.eq.s32.totalorder %s21, 1
      %p128 = por %p126, %p127
      %p129 = scmp.ne.s32.totalorder %s120, %s121
      %p130 = scmp.eq.s32.totalorder %s21, 0
      %p131 = por %p129, %p130
      %p132 = scmp.ne.s32.totalorder %s120, %s121
      %p133 = scmp.eq.s32.totalorder %s22, 1
      %p134 = por %p132, %p133
      %p136 = scmp.ne.s32.totalorder %s121, %s135
      %p137 = scmp.eq.s32.totalorder %s22, 0
      %p138 = por %p136, %p137
      %s140 = sadd.s32 %s139, 1
      %p143 = scmp.eq.s32.totalorder %s16, 1
      %p144 = scmp.ne.s32.totalorder %s139, %s141
      %p145 = scmp.eq.s32.totalorder %s16, 0
      %p146 = por %p144, %p145
      %p147 = scmp.ne.s32.totalorder %s139, %s141
      %p148 = scmp.eq.s32.totalorder %s21, 1
      %p149 = por %p147, %p148
      %p150 = scmp.ne.s32.totalorder %s141, %s142
      %p151 = scmp.eq.s32.totalorder %s21, 0
      %p152 = por %p150, %p151
      %p153 = scmp.ne.s32.totalorder %s141, %s142
      %p154 = scmp.eq.s32.totalorder %s22, 1
      %p155 = por %p153, %p154
      %p157 = scmp.ne.s32.totalorder %s142, %s156
      %p158 = scmp.eq.s32.totalorder %s22, 0
      %p159 = por %p157, %p158
      %s160 = ssub.s32 %s16, %s23
      %p161 = scmp.eq.s32.totalorder %s160, 0
      %s163 = sadd.s32 %s162, 1
      %s164 = scalar_select %p161, %s162, %s163
      %p167 = pneg %p161
      %p168 = scmp.eq.s32.totalorder %s16, 1
      %p169 = por %p167, %p168
      %p170 = scmp.ne.s32.totalorder %s162, %s165
      %p171 = scmp.eq.s32.totalorder %s16, 0
      %p172 = por %p170, %p171
      %p173 = scmp.ne.s32.totalorder %s162, %s165
      %p174 = scmp.eq.s32.totalorder %s21, 1
      %p175 = por %p173, %p174
      %p176 = scmp.ne.s32.totalorder %s165, %s166
      %p177 = scmp.eq.s32.totalorder %s21, 0
      %p178 = por %p176, %p177
      %p179 = scmp.ne.s32.totalorder %s165, %s166
      %p180 = scmp.eq.s32.totalorder %s22, 1
      %p181 = por %p179, %p180
      %p183 = scmp.ne.s32.totalorder %s166, %s182
      %p184 = scmp.eq.s32.totalorder %s22, 0
      %p185 = por %p183, %p184
      %s186 = ssub.s32 %s16, %s23
      %p187 = scmp.eq.s32.totalorder %s186, 0
      %s189 = sadd.s32 %s188, 1
      %s190 = scalar_select %p187, %s188, %s189
      %p193 = pneg %p187
      %p194 = scmp.eq.s32.totalorder %s16, 1
      %p195 = por %p193, %p194
      %p196 = scmp.ne.s32.totalorder %s188, %s191
      %p197 = scmp.eq.s32.totalorder %s16, 0
      %p198 = por %p196, %p197
      %p199 = scmp.ne.s32.totalorder %s188, %s191
      %p200 = scmp.eq.s32.totalorder %s21, 1
      %p201 = por %p199, %p200
      %p202 = scmp.ne.s32.totalorder %s191, %s192
      %p203 = scmp.eq.s32.totalorder %s21, 0
      %p204 = por %p202, %p203
      %p205 = scmp.ne.s32.totalorder %s191, %s192
      %p206 = scmp.eq.s32.totalorder %s22, 1
      %p207 = por %p205, %p206
      %p209 = scmp.ne.s32.totalorder %s192, %s208
      %p210 = scmp.eq.s32.totalorder %s22, 0
      %p211 = por %p209, %p210
      %p212 = scmp.le.s32.totalorder 1, %s16
      %p213 = scmp.lt.s32.totalorder %s16, 3
      %p214 = pnand %p212, %p213
      %p215 = pneg %p214
      // Predicated region
      $region9: #{nonlocal_block_forward.2} parent=5 // pred_check
        _
      $region10: #{nonlocal_block_forward.2} parent=5 // pred_check_branch
        %217 = sbr.rel (%p214) target = $region12
      $region11: #{nonlocal_block_forward.2} parent=5 // pred_region
        %s218 = ssub.s32 %s16, 1
        // Predicated region
        $region13: #{nonlocal_block_forward.2} parent=11 // pred_check
          %p219 = pneg %p89
        $region14: #{nonlocal_block_forward.2} parent=11 // pred_check_branch
          %221 = sbr.rel (%p219) target = $region16
        $region15: #{nonlocal_block_forward.2} parent=11 // pred_region
          _
        $region16: #{nonlocal_block_forward.2} parent=11 // pred_fallthru
          _
        // Predicated region
        $region17: #{nonlocal_block_forward.2} parent=11 // pred_check
          %p222 = pneg %p110
        $region18: #{nonlocal_block_forward.2} parent=11 // pred_check_branch
          %224 = sbr.rel (%p222) target = $region20
        $region19: #{nonlocal_block_forward.2} parent=11 // pred_region
          %s226 = ssub.s32 16, 16
          %227 = vsyncadd [#allocation3], %s226
          %s229 = sshll.u32 [#allocation2], 4
          %s230 = int_to_ptr.vmem [resolvable:$true] %s229
          %232 = dma.hbm_to_vmem [thread:$0]  %s3, 16, %s230, [#allocation3]
        $region20: #{nonlocal_block_forward.2} parent=11 // pred_fallthru
          _
        // Predicated region
        $region21: #{nonlocal_block_forward.2} parent=11 // pred_check
          %p233 = pneg %p131
        $region22: #{nonlocal_block_forward.2} parent=11 // pred_check_branch
          %235 = sbr.rel (%p233) target = $region24
        $region23: #{nonlocal_block_forward.2} parent=11 // pred_region
          %s237 = ssub.s32 512, 512
          %238 = vsyncadd [#allocation5], %s237
          %s239 = sshll.u32 [#allocation4], 4
          %s240 = int_to_ptr.vmem [resolvable:$true] %s239
          %245 = dma.hbm_to_vmem [thread:$0]  %s4, 512, %s240, [#allocation5], 128, 128, 8
        $region24: #{nonlocal_block_forward.2} parent=11 // pred_fallthru
          _
        // Predicated region
        $region25: #{nonlocal_block_forward.2} parent=11 // pred_check
          %p246 = pneg %p152
        $region26: #{nonlocal_block_forward.2} parent=11 // pred_check_branch
          %248 = sbr.rel (%p246) target = $region28
        $region27: #{nonlocal_block_forward.2} parent=11 // pred_region
          %s250 = ssub.s32 16, 16
          %251 = vsyncadd [#allocation5], %s250
          %s253 = sshll.u32 [#allocation6], 4
          %s254 = int_to_ptr.vmem [resolvable:$true] %s253
          %256 = dma.hbm_to_vmem [thread:$0]  %s5, 16, %s254, [#allocation5]
        $region28: #{nonlocal_block_forward.2} parent=11 // pred_fallthru
          _
      $region12: #{nonlocal_block_forward.2} parent=5 // pred_fallthru
        _
      %p257 = scmp.lt.s32.totalorder %s16, 2
      // Predicated region
      $region29: #{nonlocal_block_forward.2} parent=5 // pred_check
        %p258 = pneg %p257
      $region30: #{nonlocal_block_forward.2} parent=5 // pred_check_branch
        %260 = sbr.rel (%p258) target = $region32
      $region31: #{nonlocal_block_forward.2} parent=5 // pred_region
        // Predicated region
        $region33: #{nonlocal_block_forward.2} parent=31 // pred_check
          %p261 = pneg %p36
        $region34: #{nonlocal_block_forward.2} parent=31 // pred_check_branch
          %263 = sbr.rel (%p261) target = $region36
        $region35: #{nonlocal_block_forward.2} parent=31 // pred_region
          %s264 = smul.u32 128, %s16
          %p265 = scmp.lt.s32.totalorder %s264, 255
          %s266 = scalar_select %p265, %s264, 255
          %s267 = smul.addr %s266, 8
          %s268 = scalar_lea.vmem %s0, %s267
          %s269 = smul.u32 128, %s16
        $region36: #{nonlocal_block_forward.2} parent=31 // pred_fallthru
          _
        // Predicated region
        $region37: #{nonlocal_block_forward.2} parent=31 // pred_check
          %p270 = pneg %p62
        $region38: #{nonlocal_block_forward.2} parent=31 // pred_check_branch
          %272 = sbr.rel (%p270) target = $region40
        $region39: #{nonlocal_block_forward.2} parent=31 // pred_region
          %s273 = smul.u32 128, %s16
          %p274 = scmp.lt.s32.totalorder %s273, 255
          %s275 = scalar_select %p274, %s273, 255
          %s276 = smul.addr %s275, 8
          %s277 = scalar_lea.vmem %s1, %s276
          %s278 = smul.u32 128, %s16
        $region40: #{nonlocal_block_forward.2} parent=31 // pred_fallthru
          _
      $region32: #{nonlocal_block_forward.2} parent=5 // pred_fallthru
        _
      %p279 = scmp.le.s32.totalorder 1, %s16
      %p280 = scmp.lt.s32.totalorder %s16, 3
      %p281 = pnand %p279, %p280
      %p282 = pneg %p281
      // Predicated region
      $region41: #{nonlocal_block_forward.2} parent=5 // pred_check
        _
      $region42: #{nonlocal_block_forward.2} parent=5 // pred_check_branch
        %284 = sbr.rel (%p281) target = $region44
      $region43: #{nonlocal_block_forward.2} parent=5 // pred_region
        %s285 = ssub.s32 %s16, 1
        // Predicated region
        $region45: #{nonlocal_block_forward.2} parent=43 // pred_check
          %p286 = pneg %p110
        $region46: #{nonlocal_block_forward.2} parent=43 // pred_check_branch
          %288 = sbr.rel (%p286) target = $region48
        $region47: #{nonlocal_block_forward.2} parent=43 // pred_region
          %289 = dma.done [#allocation3], 16
        $region48: #{nonlocal_block_forward.2} parent=43 // pred_fallthru
          _
        // Predicated region
        $region49: #{nonlocal_block_forward.2} parent=43 // pred_check
          %p290 = pneg %p131
        $region50: #{nonlocal_block_forward.2} parent=43 // pred_check_branch
          %292 = sbr.rel (%p290) target = $region52
        $region51: #{nonlocal_block_forward.2} parent=43 // pred_region
          %293 = dma.done [#allocation5], 512
        $region52: #{nonlocal_block_forward.2} parent=43 // pred_fallthru
          _
        // Predicated region
        $region53: #{nonlocal_block_forward.2} parent=43 // pred_check
          %p294 = pneg %p152
        $region54: #{nonlocal_block_forward.2} parent=43 // pred_check_branch
          %296 = sbr.rel (%p294) target = $region56
        $region55: #{nonlocal_block_forward.2} parent=43 // pred_region
          %297 = dma.done [#allocation5], 16
        $region56: #{nonlocal_block_forward.2} parent=43 // pred_fallthru
          _
        %s298 = smul.u32 128, %s21
        %p299 = scmp.lt.s32.totalorder %s298, 255
        %s300 = scalar_select %p299, %s298, 255
        %s301 = smul.addr %s300, 8
        %s302 = scalar_lea.vmem %s0, %s301
        %p303 = pneg %p42
        %p304 = pneg %p39
        %s305 = smul.u32 128, %s21
        %p306 = scmp.lt.s32.totalorder %s305, 255
        %s307 = scalar_select %p306, %s305, 255
        %s308 = smul.addr %s307, 8
        %s309 = scalar_lea.vmem %s1, %s308
        %p310 = pneg %p68
        %p311 = pneg %p65
        %p312 = pneg %p89
        %p313 = pneg %p86
        %p314 = pneg %p110
        %p315 = pneg %p107
        %p316 = pneg %p131
        %p317 = pneg %p128
        %p318 = pneg %p152
        %p319 = pneg %p149
        %p320 = pneg %p178
        %p321 = pneg %p175
        %s322 = smul.u32 128, %s21
        %p323 = scmp.lt.s32.totalorder %s322, 255
        %s324 = scalar_select %p323, %s322, 255
        %s325 = smul.addr %s324, 8
        %s326 = scalar_lea.vmem %s6, %s325
        %p327 = pneg %p204
        %p328 = pneg %p201
        %s329 = smul.u32 128, %s21
        %p330 = scmp.lt.s32.totalorder %s329, 255
        %s331 = scalar_select %p330, %s329, 255
        %s332 = smul.addr %s331, 8
        %s333 = scalar_lea.vmem %s7, %s332
        %s334 = smul.u32 128, %s21
        %p335 = scmp.lt.s32.totalorder %s334, 255
        %s336 = scalar_select %p335, %s334, 255
        %s337 = smul.addr %s336, 8
        %s338 = scalar_lea.vmem %s0, %s337
        %s339 = smul.u32 128, %s21
        %s340 = smul.u32 128, %s21
        %p341 = scmp.lt.s32.totalorder %s340, 255
        %s342 = scalar_select %p341, %s340, 255
        %s343 = smul.addr %s342, 8
        %s344 = scalar_lea.vmem %s1, %s343
        %s345 = smul.u32 128, %s21
        %s346 = smul.u32 128, %s21
        %p347 = scmp.lt.s32.totalorder %s346, 255
        %s348 = scalar_select %p347, %s346, 255
        %s349 = smul.addr %s348, 8
        %s350 = scalar_lea.vmem %s6, %s349
        %s351 = smul.u32 128, %s21
        %s352 = smul.u32 128, %s21
        %p353 = scmp.lt.s32.totalorder %s352, 255
        %s354 = scalar_select %p353, %s352, 255
        %s355 = smul.addr %s354, 8
        %s356 = scalar_lea.vmem %s7, %s355
        %s357 = smul.u32 128, %s21
        %v358 = vld [vmem:[%s338] sm:$0xff]
        %v359 = vld [vmem:[%s338 + $0x8] sm:$0xff]
        %v360 = vld [vmem:[%s338 + $0x10] sm:$0xff]
        %v361 = vld [vmem:[%s338 + $0x18] sm:$0xff]
        %v362 = vld [vmem:[%s338 + $0x20] sm:$0xff]
        %v363 = vld [vmem:[%s338 + $0x28] sm:$0xff]
        %v364 = vld [vmem:[%s338 + $0x30] sm:$0xff]
        %v365 = vld [vmem:[%s338 + $0x38] sm:$0xff]
        %v366 = vld [vmem:[%s338 + $0x40] sm:$0xff]
        %v367 = vld [vmem:[%s338 + $0x48] sm:$0xff]
        %v368 = vld [vmem:[%s338 + $0x50] sm:$0xff]
        %v369 = vld [vmem:[%s338 + $0x58] sm:$0xff]
        %v370 = vld [vmem:[%s338 + $0x60] sm:$0xff]
        %v371 = vld [vmem:[%s338 + $0x68] sm:$0xff]
        %v372 = vld [vmem:[%s338 + $0x70] sm:$0xff]
        %v373 = vld [vmem:[%s338 + $0x78] sm:$0xff]
        %v374 = vld [vmem:[%s338 + $0x80] sm:$0xff]
        %v375 = vld [vmem:[%s338 + $0x88] sm:$0xff]
        %v376 = vld [vmem:[%s338 + $0x90] sm:$0xff]
        %v377 = vld [vmem:[%s338 + $0x98] sm:$0xff]
        %v378 = vld [vmem:[%s338 + $0xa0] sm:$0xff]
        %v379 = vld [vmem:[%s338 + $0xa8] sm:$0xff]
        %v380 = vld [vmem:[%s338 + $0xb0] sm:$0xff]
        %v381 = vld [vmem:[%s338 + $0xb8] sm:$0xff]
        %v382 = vld [vmem:[%s338 + $0xc0] sm:$0xff]
        %v383 = vld [vmem:[%s338 + $0xc8] sm:$0xff]
        %v384 = vld [vmem:[%s338 + $0xd0] sm:$0xff]
        %v385 = vld [vmem:[%s338 + $0xd8] sm:$0xff]
        %v386 = vld [vmem:[%s338 + $0xe0] sm:$0xff]
        %v387 = vld [vmem:[%s338 + $0xe8] sm:$0xff]
        %v388 = vld [vmem:[%s338 + $0xf0] sm:$0xff]
        %v389 = vld [vmem:[%s338 + $0xf8] sm:$0xff]
        %v390 = vld [vmem:[%s338 + $0x100] sm:$0xff]
        %v391 = vld [vmem:[%s338 + $0x108] sm:$0xff]
        %v392 = vld [vmem:[%s338 + $0x110] sm:$0xff]
        %v393 = vld [vmem:[%s338 + $0x118] sm:$0xff]
        %v394 = vld [vmem:[%s338 + $0x120] sm:$0xff]
        %v395 = vld [vmem:[%s338 + $0x128] sm:$0xff]
        %v396 = vld [vmem:[%s338 + $0x130] sm:$0xff]
        %v397 = vld [vmem:[%s338 + $0x138] sm:$0xff]
        %v398 = vld [vmem:[%s338 + $0x140] sm:$0xff]
        %v399 = vld [vmem:[%s338 + $0x148] sm:$0xff]
        %v400 = vld [vmem:[%s338 + $0x150] sm:$0xff]
        %v401 = vld [vmem:[%s338 + $0x158] sm:$0xff]
        %v402 = vld [vmem:[%s338 + $0x160] sm:$0xff]
        %v403 = vld [vmem:[%s338 + $0x168] sm:$0xff]
        %v404 = vld [vmem:[%s338 + $0x170] sm:$0xff]
        %v405 = vld [vmem:[%s338 + $0x178] sm:$0xff]
        %v406 = vld [vmem:[%s338 + $0x180] sm:$0xff]
        %v407 = vld [vmem:[%s338 + $0x188] sm:$0xff]
        %v408 = vld [vmem:[%s338 + $0x190] sm:$0xff]
        %v409 = vld [vmem:[%s338 + $0x198] sm:$0xff]
        %v410 = vld [vmem:[%s338 + $0x1a0] sm:$0xff]
        %v411 = vld [vmem:[%s338 + $0x1a8] sm:$0xff]
        %v412 = vld [vmem:[%s338 + $0x1b0] sm:$0xff]
        %v413 = vld [vmem:[%s338 + $0x1b8] sm:$0xff]
        %v414 = vld [vmem:[%s338 + $0x1c0] sm:$0xff]
        %v415 = vld [vmem:[%s338 + $0x1c8] sm:$0xff]
        %v416 = vld [vmem:[%s338 + $0x1d0] sm:$0xff]
        %v417 = vld [vmem:[%s338 + $0x1d8] sm:$0xff]
        %v418 = vld [vmem:[%s338 + $0x1e0] sm:$0xff]
        %v419 = vld [vmem:[%s338 + $0x1e8] sm:$0xff]
        %v420 = vld [vmem:[%s338 + $0x1f0] sm:$0xff]
        %v421 = vld [vmem:[%s338 + $0x1f8] sm:$0xff]
        %v422 = vld [vmem:[%s338 + $0x200] sm:$0xff]
        %v423 = vld [vmem:[%s338 + $0x208] sm:$0xff]
        %v424 = vld [vmem:[%s338 + $0x210] sm:$0xff]
        %v425 = vld [vmem:[%s338 + $0x218] sm:$0xff]
        %v426 = vld [vmem:[%s338 + $0x220] sm:$0xff]
        %v427 = vld [vmem:[%s338 + $0x228] sm:$0xff]
        %v428 = vld [vmem:[%s338 + $0x230] sm:$0xff]
        %v429 = vld [vmem:[%s338 + $0x238] sm:$0xff]
        %v430 = vld [vmem:[%s338 + $0x240] sm:$0xff]
        %v431 = vld [vmem:[%s338 + $0x248] sm:$0xff]
        %v432 = vld [vmem:[%s338 + $0x250] sm:$0xff]
        %v433 = vld [vmem:[%s338 + $0x258] sm:$0xff]
        %v434 = vld [vmem:[%s338 + $0x260] sm:$0xff]
        %v435 = vld [vmem:[%s338 + $0x268] sm:$0xff]
        %v436 = vld [vmem:[%s338 + $0x270] sm:$0xff]
        %v437 = vld [vmem:[%s338 + $0x278] sm:$0xff]
        %v438 = vld [vmem:[%s338 + $0x280] sm:$0xff]
        %v439 = vld [vmem:[%s338 + $0x288] sm:$0xff]
        %v440 = vld [vmem:[%s338 + $0x290] sm:$0xff]
        %v441 = vld [vmem:[%s338 + $0x298] sm:$0xff]
        %v442 = vld [vmem:[%s338 + $0x2a0] sm:$0xff]
        %v443 = vld [vmem:[%s338 + $0x2a8] sm:$0xff]
        %v444 = vld [vmem:[%s338 + $0x2b0] sm:$0xff]
        %v445 = vld [vmem:[%s338 + $0x2b8] sm:$0xff]
        %v446 = vld [vmem:[%s338 + $0x2c0] sm:$0xff]
        %v447 = vld [vmem:[%s338 + $0x2c8] sm:$0xff]
        %v448 = vld [vmem:[%s338 + $0x2d0] sm:$0xff]
        %v449 = vld [vmem:[%s338 + $0x2d8] sm:$0xff]
        %v450 = vld [vmem:[%s338 + $0x2e0] sm:$0xff]
        %v451 = vld [vmem:[%s338 + $0x2e8] sm:$0xff]
        %v452 = vld [vmem:[%s338 + $0x2f0] sm:$0xff]
        %v453 = vld [vmem:[%s338 + $0x2f8] sm:$0xff]
        %v454 = vld [vmem:[%s338 + $0x300] sm:$0xff]
        %v455 = vld [vmem:[%s338 + $0x308] sm:$0xff]
        %v456 = vld [vmem:[%s338 + $0x310] sm:$0xff]
        %v457 = vld [vmem:[%s338 + $0x318] sm:$0xff]
        %v458 = vld [vmem:[%s338 + $0x320] sm:$0xff]
        %v459 = vld [vmem:[%s338 + $0x328] sm:$0xff]
        %v460 = vld [vmem:[%s338 + $0x330] sm:$0xff]
        %v461 = vld [vmem:[%s338 + $0x338] sm:$0xff]
        %v462 = vld [vmem:[%s338 + $0x340] sm:$0xff]
        %v463 = vld [vmem:[%s338 + $0x348] sm:$0xff]
        %v464 = vld [vmem:[%s338 + $0x350] sm:$0xff]
        %v465 = vld [vmem:[%s338 + $0x358] sm:$0xff]
        %v466 = vld [vmem:[%s338 + $0x360] sm:$0xff]
        %v467 = vld [vmem:[%s338 + $0x368] sm:$0xff]
        %v468 = vld [vmem:[%s338 + $0x370] sm:$0xff]
        %v469 = vld [vmem:[%s338 + $0x378] sm:$0xff]
        %v470 = vld [vmem:[%s338 + $0x380] sm:$0xff]
        %v471 = vld [vmem:[%s338 + $0x388] sm:$0xff]
        %v472 = vld [vmem:[%s338 + $0x390] sm:$0xff]
        %v473 = vld [vmem:[%s338 + $0x398] sm:$0xff]
        %v474 = vld [vmem:[%s338 + $0x3a0] sm:$0xff]
        %v475 = vld [vmem:[%s338 + $0x3a8] sm:$0xff]
        %v476 = vld [vmem:[%s338 + $0x3b0] sm:$0xff]
        %v477 = vld [vmem:[%s338 + $0x3b8] sm:$0xff]
        %v478 = vld [vmem:[%s338 + $0x3c0] sm:$0xff]
        %v479 = vld [vmem:[%s338 + $0x3c8] sm:$0xff]
        %v480 = vld [vmem:[%s338 + $0x3d0] sm:$0xff]
        %v481 = vld [vmem:[%s338 + $0x3d8] sm:$0xff]
        %v482 = vld [vmem:[%s338 + $0x3e0] sm:$0xff]
        %v483 = vld [vmem:[%s338 + $0x3e8] sm:$0xff]
        %v484 = vld [vmem:[%s338 + $0x3f0] sm:$0xff]
        %v485 = vld [vmem:[%s338 + $0x3f8] sm:$0xff]
        %v486 = vld [vmem:[%s2] sm:$0xff]
        %v487 = vld [vmem:[%s2 + $0x8] sm:$0xff]
        %v488 = vld [vmem:[%s2 + $0x10] sm:$0xff]
        %v489 = vld [vmem:[%s2 + $0x18] sm:$0xff]
        %v490 = vld [vmem:[#allocation2] sm:$0x1]
        %v492 = vlaneseq
        %v493 = vshrl.u32 %v492, 7
        %v494 = vsub.s32 0, %v493
        %v495 = vrot.slane %v490, %v494
        %vm497 = vcmask 261120
        %v499 = vsel %vm497, %v358, 0
        %v502 = vsel %vm497, %v359, 0
        %v505 = vsel %vm497, %v360, 0
        %v508 = vsel %vm497, %v361, 0
        %v511 = vsel %vm497, %v362, 0
        %v514 = vsel %vm497, %v363, 0
        %v517 = vsel %vm497, %v364, 0
        %v520 = vsel %vm497, %v365, 0
        %v523 = vsel %vm497, %v366, 0
        %v526 = vsel %vm497, %v367, 0
        %v529 = vsel %vm497, %v368, 0
        %v532 = vsel %vm497, %v369, 0
        %v535 = vsel %vm497, %v370, 0
        %v538 = vsel %vm497, %v371, 0
        %v541 = vsel %vm497, %v372, 0
        %v544 = vsel %vm497, %v373, 0
        %v547 = vsel %vm497, %v374, 0
        %v550 = vsel %vm497, %v375, 0
        %v553 = vsel %vm497, %v376, 0
        %v556 = vsel %vm497, %v377, 0
        %v559 = vsel %vm497, %v378, 0
        %v562 = vsel %vm497, %v379, 0
        %v565 = vsel %vm497, %v380, 0
        %v568 = vsel %vm497, %v381, 0
        %v571 = vsel %vm497, %v382, 0
        %v574 = vsel %vm497, %v383, 0
        %v577 = vsel %vm497, %v384, 0
        %v580 = vsel %vm497, %v385, 0
        %v583 = vsel %vm497, %v386, 0
        %v586 = vsel %vm497, %v387, 0
        %v589 = vsel %vm497, %v388, 0
        %v592 = vsel %vm497, %v389, 0
        %v595 = vsel %vm497, %v390, 0
        %v598 = vsel %vm497, %v391, 0
        %v601 = vsel %vm497, %v392, 0
        %v604 = vsel %vm497, %v393, 0
        %v607 = vsel %vm497, %v394, 0
        %v610 = vsel %vm497, %v395, 0
        %v613 = vsel %vm497, %v396, 0
        %v616 = vsel %vm497, %v397, 0
        %v619 = vsel %vm497, %v398, 0
        %v622 = vsel %vm497, %v399, 0
        %v625 = vsel %vm497, %v400, 0
        %v628 = vsel %vm497, %v401, 0
        %v631 = vsel %vm497, %v402, 0
        %v634 = vsel %vm497, %v403, 0
        %v637 = vsel %vm497, %v404, 0
        %v640 = vsel %vm497, %v405, 0
        %v643 = vsel %vm497, %v406, 0
        %v646 = vsel %vm497, %v407, 0
        %v649 = vsel %vm497, %v408, 0
        %v652 = vsel %vm497, %v409, 0
        %v655 = vsel %vm497, %v410, 0
        %v658 = vsel %vm497, %v411, 0
        %v661 = vsel %vm497, %v412, 0
        %v664 = vsel %vm497, %v413, 0
        %v667 = vsel %vm497, %v414, 0
        %v670 = vsel %vm497, %v415, 0
        %v673 = vsel %vm497, %v416, 0
        %v676 = vsel %vm497, %v417, 0
        %v679 = vsel %vm497, %v418, 0
        %v682 = vsel %vm497, %v419, 0
        %v685 = vsel %vm497, %v420, 0
        %v688 = vsel %vm497, %v421, 0
        %v691 = vsel %vm497, %v422, 0
        %v694 = vsel %vm497, %v423, 0
        %v697 = vsel %vm497, %v424, 0
        %v700 = vsel %vm497, %v425, 0
        %v703 = vsel %vm497, %v426, 0
        %v706 = vsel %vm497, %v427, 0
        %v709 = vsel %vm497, %v428, 0
        %v712 = vsel %vm497, %v429, 0
        %v715 = vsel %vm497, %v430, 0
        %v718 = vsel %vm497, %v431, 0
        %v721 = vsel %vm497, %v432, 0
        %v724 = vsel %vm497, %v433, 0
        %v727 = vsel %vm497, %v434, 0
        %v730 = vsel %vm497, %v435, 0
        %v733 = vsel %vm497, %v436, 0
        %v736 = vsel %vm497, %v437, 0
        %v739 = vsel %vm497, %v438, 0
        %v742 = vsel %vm497, %v439, 0
        %v745 = vsel %vm497, %v440, 0
        %v748 = vsel %vm497, %v441, 0
        %v751 = vsel %vm497, %v442, 0
        %v754 = vsel %vm497, %v443, 0
        %v757 = vsel %vm497, %v444, 0
        %v760 = vsel %vm497, %v445, 0
        %v763 = vsel %vm497, %v446, 0
        %v766 = vsel %vm497, %v447, 0
        %v769 = vsel %vm497, %v448, 0
        %v772 = vsel %vm497, %v449, 0
        %v775 = vsel %vm497, %v450, 0
        %v778 = vsel %vm497, %v451, 0
        %v781 = vsel %vm497, %v452, 0
        %v784 = vsel %vm497, %v453, 0
        %v787 = vsel %vm497, %v454, 0
        %v790 = vsel %vm497, %v455, 0
        %v793 = vsel %vm497, %v456, 0
        %v796 = vsel %vm497, %v457, 0
        %v799 = vsel %vm497, %v458, 0
        %v802 = vsel %vm497, %v459, 0
        %v805 = vsel %vm497, %v460, 0
        %v808 = vsel %vm497, %v461, 0
        %v811 = vsel %vm497, %v462, 0
        %v814 = vsel %vm497, %v463, 0
        %v817 = vsel %vm497, %v464, 0
        %v820 = vsel %vm497, %v465, 0
        %v823 = vsel %vm497, %v466, 0
        %v826 = vsel %vm497, %v467, 0
        %v829 = vsel %vm497, %v468, 0
        %v832 = vsel %vm497, %v469, 0
        %v835 = vsel %vm497, %v470, 0
        %v838 = vsel %vm497, %v471, 0
        %v841 = vsel %vm497, %v472, 0
        %v844 = vsel %vm497, %v473, 0
        %v847 = vsel %vm497, %v474, 0
        %v850 = vsel %vm497, %v475, 0
        %v853 = vsel %vm497, %v476, 0
        %v856 = vsel %vm497, %v477, 0
        %v859 = vsel %vm497, %v478, 0
        %v862 = vsel %vm497, %v479, 0
        %v865 = vsel %vm497, %v480, 0
        %v868 = vsel %vm497, %v481, 0
        %v871 = vsel %vm497, %v482, 0
        %v874 = vsel %vm497, %v483, 0
        %v877 = vsel %vm497, %v484, 0
        %v880 = vsel %vm497, %v485, 0
        %882 = vmatprep.subr.mxu0 0.0
        %883 = vmatpush1.msra.mxu0 %v486
        %884 = vmatprep.subr.mxu0 0.0
        %885 = vmatpush1.msra.mxu0 %v487
        %886 = vmatprep.subr.mxu0 0.0
        %887 = vmatpush1.msra.mxu0 %v488
        %888 = vmatprep.subr.mxu0 0.0
        %889 = vmatpush1.msra.mxu0 %v489
        %890 = vmatprep.subr.mxu0 0.0
        %891 = vmatpush1.msra.mxu0 0.0
        %892 = vmatprep.subr.mxu0 0.0
        %893 = vmatpush1.msra.mxu0 0.0
        %894 = vmatprep.subr.mxu0 0.0
        %895 = vmatpush1.msra.mxu0 0.0
        %896 = vmatprep.subr.mxu0 0.0
        %897 = vmatpush1.msra.mxu0 0.0
        %898 = vmatprep.subr.mxu0 0.0
        %899 = vmatpush1.msra.mxu0 0.0
        %900 = vmatprep.subr.mxu0 0.0
        %901 = vmatpush1.msra.mxu0 0.0
        %902 = vmatprep.subr.mxu0 0.0
        %903 = vmatpush1.msra.mxu0 0.0
        %904 = vmatprep.subr.mxu0 0.0
        %905 = vmatpush1.msra.mxu0 0.0
        %906 = vmatprep.subr.mxu0 0.0
        %907 = vmatpush1.msra.mxu0 0.0
        %908 = vmatprep.subr.mxu0 0.0
        %909 = vmatpush1.msra.mxu0 0.0
        %910 = vmatprep.subr.mxu0 0.0
        %911 = vmatpush1.msra.mxu0 0.0
        %912 = vmatprep.subr.mxu0 0.0
        %913 = vmatpush1.msra.mxu0 0.0
        %914 = vmatprep.subr.mxu0 0.0
        %915 = vmatpush1.msra.mxu0 0.0
        %916 = vmatprep.subr.mxu0 0.0
        %917 = vmatpush1.msra.mxu0 0.0
        %918 = vmatprep.subr.mxu0 0.0
        %919 = vmatpush1.msra.mxu0 0.0
        %920 = vmatprep.subr.mxu0 0.0
        %921 = vmatpush1.msra.mxu0 0.0
        %922 = vmatprep.subr.mxu0 0.0
        %923 = vmatpush1.msra.mxu0 0.0
        %924 = vmatprep.subr.mxu0 0.0
        %925 = vmatpush1.msra.mxu0 0.0
        %926 = vmatprep.subr.mxu0 0.0
        %927 = vmatpush1.msra.mxu0 0.0
        %928 = vmatprep.subr.mxu0 0.0
        %929 = vmatpush1.msra.mxu0 0.0
        %930 = vmatprep.subr.mxu0 0.0
        %931 = vmatpush1.msra.mxu0 0.0
        %932 = vmatprep.subr.mxu0 0.0
        %933 = vmatpush1.msra.mxu0 0.0
        %934 = vmatprep.subr.mxu0 0.0
        %935 = vmatpush1.msra.mxu0 0.0
        %936 = vmatprep.subr.mxu0 0.0
        %937 = vmatpush1.msra.mxu0 0.0
        %938 = vmatprep.subr.mxu0 0.0
        %939 = vmatpush1.msra.mxu0 0.0
        %940 = vmatprep.subr.mxu0 0.0
        %941 = vmatpush1.msra.mxu0 0.0
        %942 = vmatprep.subr.mxu0 0.0
        %943 = vmatpush1.msra.mxu0 0.0
        %944 = vmatprep.subr.mxu0 0.0
        %945 = vmatpush1.msra.mxu0 0.0
        %946 = vmatprep.mubr.f32.mxu0 0.0
        %947 = vmatmul.mubr.f32.gmra.mrb[0].mxu0 %v499
        %v948 = vpop.f32.mrb[0].mxu0
        %v949 = vadd.f32 %v495, %v948
        %v950 = vpop.f32.mrb[0].mxu0
        %951 = vmatprep.mubr.f32.mxu0 0.0
        %952 = vmatmul.mubr.f32.gmra.mrb[0].mxu0 %v502
        %v953 = vpop.f32.mrb[0].mxu0
        %v954 = vadd.f32 %v495, %v953
        %v955 = vpop.f32.mrb[0].mxu0
        %956 = vmatprep.mubr.f32.mxu0 0.0
        %957 = vmatmul.mubr.f32.gmra.mrb[0].mxu0 %v505
        %v958 = vpop.f32.mrb[0].mxu0
        %v959 = vadd.f32 %v495, %v958
        %v960 = vpop.f32.mrb[0].mxu0
        %961 = vmatprep.mubr.f32.mxu0 0.0
        %962 = vmatmul.mubr.f32.gmra.mrb[0].mxu0 %v508
        %v963 = vpop.f32.mrb[0].mxu0
        %v964 = vadd.f32 %v495, %v963
        %v965 = vpop.f32.mrb[0].mxu0
        %966 = vmatprep.mubr.f32.mxu0 0.0
        %967 = vmatmul.mubr.f32.gmra.mrb[0].mxu0 %v511
        %v968 = vpop.f32.mrb[0].mxu0
        %v969 = vadd.f32 %v495, %v968
        %v970 = vpop.f32.mrb[0].mxu0
        %971 = vmatprep.mubr.f32.mxu0 0.0
        %972 = vmatmul.mubr.f32.gmra.mrb[0].mxu0 %v514
        %v973 = vpop.f32.mrb[0].mxu0
        %v974 = vadd.f32 %v495, %v973
        %v975 = vpop.f32.mrb[0].mxu0
        %976 = vmatprep.mubr.f32.mxu0 0.0
        %977 = vmatmul.mubr.f32.gmra.mrb[0].mxu0 %v517
        %v978 = vpop.f32.mrb[0].mxu0
        %v979 = vadd.f32 %v495, %v978
        %v980 = vpop.f32.mrb[0].mxu0
        %981 = vmatprep.mubr.f32.mxu0 0.0
        %982 = vmatmul.mubr.f32.gmra.mrb[0].mxu0 %v520
        %v983 = vpop.f32.mrb[0].mxu0
        %v984 = vadd.f32 %v495, %v983
        %v985 = vpop.f32.mrb[0].mxu0
        %986 = vmatprep.mubr.f32.mxu0 0.0
        %987 = vmatmul.mubr.f32.gmra.mrb[0].mxu0 %v523
        %v988 = vpop.f32.mrb[0].mxu0
        %v989 = vadd.f32 %v495, %v988
        %v990 = vpop.f32.mrb[0].mxu0
        %991 = vmatprep.mubr.f32.mxu0 0.0
        %992 = vmatmul.mubr.f32.gmra.mrb[0].mxu0 %v526
        %v993 = vpop.f32.mrb[0].mxu0
        %v994 = vadd.f32 %v495, %v993
        %v995 = vpop.f32.mrb[0].mxu0
        %996 = vmatprep.mubr.f32.mxu0 0.0
        %997 = vmatmul.mubr.f32.gmra.mrb[0].mxu0 %v529
        %v998 = vpop.f32.mrb[0].mxu0
        %v999 = vadd.f32 %v495, %v998
        %v1000 = vpop.f32.mrb[0].mxu0
        %1001 = vmatprep.mubr.f32.mxu0 0.0
        %1002 = vmatmul.mubr.f32.gmra.mrb[0].mxu0 %v532
        %v1003 = vpop.f32.mrb[0].mxu0
        %v1004 = vadd.f32 %v495, %v1003
        %v1005 = vpop.f32.mrb[0].mxu0
        %1006 = vmatprep.mubr.f32.mxu0 0.0
        %1007 = vmatmul.mubr.f32.gmra.mrb[0].mxu0 %v535
        %v1008 = vpop.f32.mrb[0].mxu0
        %v1009 = vadd.f32 %v495, %v1008
        %v1010 = vpop.f32.mrb[0].mxu0
        %1011 = vmatprep.mubr.f32.mxu0 0.0
        %1012 = vmatmul.mubr.f32.gmra.mrb[0].mxu0 %v538
        %v1013 = vpop.f32.mrb[0].mxu0
        %v1014 = vadd.f32 %v495, %v1013
        %v1015 = vpop.f32.mrb[0].mxu0
        %1016 = vmatprep.mubr.f32.mxu0 0.0
        %1017 = vmatmul.mubr.f32.gmra.mrb[0].mxu0 %v541
        %v1018 = vpop.f32.mrb[0].mxu0
        %v1019 = vadd.f32 %v495, %v1018
        %v1020 = vpop.f32.mrb[0].mxu0
        %1021 = vmatprep.mubr.f32.mxu0 0.0
        %1022 = vmatmul.mubr.f32.gmra.mrb[0].mxu0 %v544
        %v1023 = vpop.f32.mrb[0].mxu0
        %v1024 = vadd.f32 %v495, %v1023
        %v1025 = vpop.f32.mrb[0].mxu0
        %1026 = vmatprep.mubr.f32.mxu0 0.0
        %1027 = vmatmul.mubr.f32.gmra.mrb[0].mxu0 %v547
        %v1028 = vpop.f32.mrb[0].mxu0
        %v1029 = vadd.f32 %v495, %v1028
        %v1030 = vpop.f32.mrb[0].mxu0
        %1031 = vmatprep.mubr.f32.mxu0 0.0
        %1032 = vmatmul.mubr.f32.gmra.mrb[0].mxu0 %v550
        %v1033 = vpop.f32.mrb[0].mxu0
        %v1034 = vadd.f32 %v495, %v1033
        %v1035 = vpop.f32.mrb[0].mxu0
        %1036 = vmatprep.mubr.f32.mxu0 0.0
        %1037 = vmatmul.mubr.f32.gmra.mrb[0].mxu0 %v553
        %v1038 = vpop.f32.mrb[0].mxu0
        %v1039 = vadd.f32 %v495, %v1038
        %v1040 = vpop.f32.mrb[0].mxu0
        %1041 = vmatprep.mubr.f32.mxu0 0.0
        %1042 = vmatmul.mubr.f32.gmra.mrb[0].mxu0 %v556
        %v1043 = vpop.f32.mrb[0].mxu0
        %v1044 = vadd.f32 %v495, %v1043
        %v1045 = vpop.f32.mrb[0].mxu0
        %1046 = vmatprep.mubr.f32.mxu0 0.0
        %1047 = vmatmul.mubr.f32.gmra.mrb[0].mxu0 %v559
        %v1048 = vpop.f32.mrb[0].mxu0
        %v1049 = vadd.f32 %v495, %v1048
        %v1050 = vpop.f32.mrb[0].mxu0
        %1051 = vmatprep.mubr.f32.mxu0 0.0
        %1052 = vmatmul.mubr.f32.gmra.mrb[0].mxu0 %v562
        %v1053 = vpop.f32.mrb[0].mxu0
        %v1054 = vadd.f32 %v495, %v1053
        %v1055 = vpop.f32.mrb[0].mxu0
        %1056 = vmatprep.mubr.f32.mxu0 0.0
        %1057 = vmatmul.mubr.f32.gmra.mrb[0].mxu0 %v565
        %v1058 = vpop.f32.mrb[0].mxu0
        %v1059 = vadd.f32 %v495, %v1058
        %v1060 = vpop.f32.mrb[0].mxu0
        %1061 = vmatprep.mubr.f32.mxu0 0.0
        %1062 = vmatmul.mubr.f32.gmra.mrb[0].mxu0 %v568
        %v1063 = vpop.f32.mrb[0].mxu0
        %v1064 = vadd.f32 %v495, %v1063
        %v1065 = vpop.f32.mrb[0].mxu0
        %1066 = vmatprep.mubr.f32.mxu0 0.0
        %1067 = vmatmul.mubr.f32.gmra.mrb[0].mxu0 %v571
        %v1068 = vpop.f32.mrb[0].mxu0
        %v1069 = vadd.f32 %v495, %v1068
        %v1070 = vpop.f32.mrb[0].mxu0
        %1071 = vmatprep.mubr.f32.mxu0 0.0
        %1072 = vmatmul.mubr.f32.gmra.mrb[0].mxu0 %v574
        %v1073 = vpop.f32.mrb[0].mxu0
        %v1074 = vadd.f32 %v495, %v1073
        %v1075 = vpop.f32.mrb[0].mxu0
        %1076 = vmatprep.mubr.f32.mxu0 0.0
        %1077 = vmatmul.mubr.f32.gmra.mrb[0].mxu0 %v577
        %v1078 = vpop.f32.mrb[0].mxu0
        %v1079 = vadd.f32 %v495, %v1078
        %v1080 = vpop.f32.mrb[0].mxu0
        %1081 = vmatprep.mubr.f32.mxu0 0.0
        %1082 = vmatmul.mubr.f32.gmra.mrb[0].mxu0 %v580
        %v1083 = vpop.f32.mrb[0].mxu0
        %v1084 = vadd.f32 %v495, %v1083
        %v1085 = vpop.f32.mrb[0].mxu0
        %1086 = vmatprep.mubr.f32.mxu0 0.0
        %1087 = vmatmul.mubr.f32.gmra.mrb[0].mxu0 %v583
        %v1088 = vpop.f32.mrb[0].mxu0
        %v1089 = vadd.f32 %v495, %v1088
        %v1090 = vpop.f32.mrb[0].mxu0
        %1091 = vmatprep.mubr.f32.mxu0 0.0
        %1092 = vmatmul.mubr.f32.gmra.mrb[0].mxu0 %v586
        %v1093 = vpop.f32.mrb[0].mxu0
        %v1094 = vadd.f32 %v495, %v1093
        %v1095 = vpop.f32.mrb[0].mxu0
        %1096 = vmatprep.mubr.f32.mxu0 0.0
        %1097 = vmatmul.mubr.f32.gmra.mrb[0].mxu0 %v589
        %v1098 = vpop.f32.mrb[0].mxu0
        %v1099 = vadd.f32 %v495, %v1098
        %v1100 = vpop.f32.mrb[0].mxu0
        %1101 = vmatprep.mubr.f32.mxu0 0.0
        %1102 = vmatmul.mubr.f32.gmra.mrb[0].mxu0 %v592
        %v1103 = vpop.f32.mrb[0].mxu0
        %v1104 = vadd.f32 %v495, %v1103
        %v1105 = vpop.f32.mrb[0].mxu0
        %1106 = vmatprep.mubr.f32.mxu0 0.0
        %1107 = vmatmul.mubr.f32.gmra.mrb[0].mxu0 %v595
        %v1108 = vpop.f32.mrb[0].mxu0
        %v1109 = vadd.f32 %v495, %v1108
        %v1110 = vpop.f32.mrb[0].mxu0
        %1111 = vmatprep.mubr.f32.mxu0 0.0
        %1112 = vmatmul.mubr.f32.gmra.mrb[0].mxu0 %v598
        %v1113 = vpop.f32.mrb[0].mxu0
        %v1114 = vadd.f32 %v495, %v1113
        %v1115 = vpop.f32.mrb[0].mxu0
        %1116 = vmatprep.mubr.f32.mxu0 0.0
        %1117 = vmatmul.mubr.f32.gmra.mrb[0].mxu0 %v601
        %v1118 = vpop.f32.mrb[0].mxu0
        %v1119 = vadd.f32 %v495, %v1118
        %v1120 = vpop.f32.mrb[0].mxu0
        %1121 = vmatprep.mubr.f32.mxu0 0.0
        %1122 = vmatmul.mubr.f32.gmra.mrb[0].mxu0 %v604
        %v1123 = vpop.f32.mrb[0].mxu0
        %v1124 = vadd.f32 %v495, %v1123
        %v1125 = vpop.f32.mrb[0].mxu0
        %1126 = vmatprep.mubr.f32.mxu0 0.0
        %1127 = vmatmul.mubr.f32.gmra.mrb[0].mxu0 %v607
        %v1128 = vpop.f32.mrb[0].mxu0
        %v1129 = vadd.f32 %v495, %v1128
        %v1130 = vpop.f32.mrb[0].mxu0
        %1131 = vmatprep.mubr.f32.mxu0 0.0
        %1132 = vmatmul.mubr.f32.gmra.mrb[0].mxu0 %v610
        %v1133 = vpop.f32.mrb[0].mxu0
        %v1134 = vadd.f32 %v495, %v1133
        %v1135 = vpop.f32.mrb[0].mxu0
        %1136 = vmatprep.mubr.f32.mxu0 0.0
        %1137 = vmatmul.mubr.f32.gmra.mrb[0].mxu0 %v613
        %v1138 = vpop.f32.mrb[0].mxu0
        %v1139 = vadd.f32 %v495, %v1138
        %v1140 = vpop.f32.mrb[0].mxu0
        %1141 = vmatprep.mubr.f32.mxu0 0.0
        %1142 = vmatmul.mubr.f32.gmra.mrb[0].mxu0 %v616
        %v1143 = vpop.f32.mrb[0].mxu0
        %v1144 = vadd.f32 %v495, %v1143
        %v1145 = vpop.f32.mrb[0].mxu0
        %1146 = vmatprep.mubr.f32.mxu0 0.0
        %1147 = vmatmul.mubr.f32.gmra.mrb[0].mxu0 %v619
        %v1148 = vpop.f32.mrb[0].mxu0
        %v1149 = vadd.f32 %v495, %v1148
        %v1150 = vpop.f32.mrb[0].mxu0
        %1151 = vmatprep.mubr.f32.mxu0 0.0
        %1152 = vmatmul.mubr.f32.gmra.mrb[0].mxu0 %v622
        %v1153 = vpop.f32.mrb[0].mxu0
        %v1154 = vadd.f32 %v495, %v1153
        %v1155 = vpop.f32.mrb[0].mxu0
        %1156 = vmatprep.mubr.f32.mxu0 0.0
        %1157 = vmatmul.mubr.f32.gmra.mrb[0].mxu0 %v625
        %v1158 = vpop.f32.mrb[0].mxu0
        %v1159 = vadd.f32 %v495, %v1158
        %v1160 = vpop.f32.mrb[0].mxu0
        %1161 = vmatprep.mubr.f32.mxu0 0.0
        %1162 = vmatmul.mubr.f32.gmra.mrb[0].mxu0 %v628
        %v1163 = vpop.f32.mrb[0].mxu0
        %v1164 = vadd.f32 %v495, %v1163
        %v1165 = vpop.f32.mrb[0].mxu0
        %1166 = vmatprep.mubr.f32.mxu0 0.0
        %1167 = vmatmul.mubr.f32.gmra.mrb[0].mxu0 %v631
        %v1168 = vpop.f32.mrb[0].mxu0
        %v1169 = vadd.f32 %v495, %v1168
        %v1170 = vpop.f32.mrb[0].mxu0
        %1171 = vmatprep.mubr.f32.mxu0 0.0
        %1172 = vmatmul.mubr.f32.gmra.mrb[0].mxu0 %v634
        %v1173 = vpop.f32.mrb[0].mxu0
        %v1174 = vadd.f32 %v495, %v1173
        %v1175 = vpop.f32.mrb[0].mxu0
        %1176 = vmatprep.mubr.f32.mxu0 0.0
        %1177 = vmatmul.mubr.f32.gmra.mrb[0].mxu0 %v637
        %v1178 = vpop.f32.mrb[0].mxu0
        %v1179 = vadd.f32 %v495, %v1178
        %v1180 = vpop.f32.mrb[0].mxu0
        %1181 = vmatprep.mubr.f32.mxu0 0.0
        %1182 = vmatmul.mubr.f32.gmra.mrb[0].mxu0 %v640
        %v1183 = vpop.f32.mrb[0].mxu0
        %v1184 = vadd.f32 %v495, %v1183
        %v1185 = vpop.f32.mrb[0].mxu0
        %1186 = vmatprep.mubr.f32.mxu0 0.0
        %1187 = vmatmul.mubr.f32.gmra.mrb[0].mxu0 %v643
        %v1188 = vpop.f32.mrb[0].mxu0
        %v1189 = vadd.f32 %v495, %v1188
        %v1190 = vpop.f32.mrb[0].mxu0
        %1191 = vmatprep.mubr.f32.mxu0 0.0
        %1192 = vmatmul.mubr.f32.gmra.mrb[0].mxu0 %v646
        %v1193 = vpop.f32.mrb[0].mxu0
        %v1194 = vadd.f32 %v495, %v1193
        %v1195 = vpop.f32.mrb[0].mxu0
        %1196 = vmatprep.mubr.f32.mxu0 0.0
        %1197 = vmatmul.mubr.f32.gmra.mrb[0].mxu0 %v649
        %v1198 = vpop.f32.mrb[0].mxu0
        %v1199 = vadd.f32 %v495, %v1198
        %v1200 = vpop.f32.mrb[0].mxu0
        %1201 = vmatprep.mubr.f32.mxu0 0.0
        %1202 = vmatmul.mubr.f32.gmra.mrb[0].mxu0 %v652
        %v1203 = vpop.f32.mrb[0].mxu0
        %v1204 = vadd.f32 %v495, %v1203
        %v1205 = vpop.f32.mrb[0].mxu0
        %1206 = vmatprep.mubr.f32.mxu0 0.0
        %1207 = vmatmul.mubr.f32.gmra.mrb[0].mxu0 %v655
        %v1208 = vpop.f32.mrb[0].mxu0
        %v1209 = vadd.f32 %v495, %v1208
        %v1210 = vpop.f32.mrb[0].mxu0
        %1211 = vmatprep.mubr.f32.mxu0 0.0
        %1212 = vmatmul.mubr.f32.gmra.mrb[0].mxu0 %v658
        %v1213 = vpop.f32.mrb[0].mxu0
        %v1214 = vadd.f32 %v495, %v1213
        %v1215 = vpop.f32.mrb[0].mxu0
        %1216 = vmatprep.mubr.f32.mxu0 0.0
        %1217 = vmatmul.mubr.f32.gmra.mrb[0].mxu0 %v661
        %v1218 = vpop.f32.mrb[0].mxu0
        %v1219 = vadd.f32 %v495, %v1218
        %v1220 = vpop.f32.mrb[0].mxu0
        %1221 = vmatprep.mubr.f32.mxu0 0.0
        %1222 = vmatmul.mubr.f32.gmra.mrb[0].mxu0 %v664
        %v1223 = vpop.f32.mrb[0].mxu0
        %v1224 = vadd.f32 %v495, %v1223
        %v1225 = vpop.f32.mrb[0].mxu0
        %1226 = vmatprep.mubr.f32.mxu0 0.0
        %1227 = vmatmul.mubr.f32.gmra.mrb[0].mxu0 %v667
        %v1228 = vpop.f32.mrb[0].mxu0
        %v1229 = vadd.f32 %v495, %v1228
        %v1230 = vpop.f32.mrb[0].mxu0
        %1231 = vmatprep.mubr.f32.mxu0 0.0
        %1232 = vmatmul.mubr.f32.gmra.mrb[0].mxu0 %v670
        %v1233 = vpop.f32.mrb[0].mxu0
        %v1234 = vadd.f32 %v495, %v1233
        %v1235 = vpop.f32.mrb[0].mxu0
        %1236 = vmatprep.mubr.f32.mxu0 0.0
        %1237 = vmatmul.mubr.f32.gmra.mrb[0].mxu0 %v673
        %v1238 = vpop.f32.mrb[0].mxu0
        %v1239 = vadd.f32 %v495, %v1238
        %v1240 = vpop.f32.mrb[0].mxu0
        %1241 = vmatprep.mubr.f32.mxu0 0.0
        %1242 = vmatmul.mubr.f32.gmra.mrb[0].mxu0 %v676
        %v1243 = vpop.f32.mrb[0].mxu0
        %v1244 = vadd.f32 %v495, %v1243
        %v1245 = vpop.f32.mrb[0].mxu0
        %1246 = vmatprep.mubr.f32.mxu0 0.0
        %1247 = vmatmul.mubr.f32.gmra.mrb[0].mxu0 %v679
        %v1248 = vpop.f32.mrb[0].mxu0
        %v1249 = vadd.f32 %v495, %v1248
        %v1250 = vpop.f32.mrb[0].mxu0
        %1251 = vmatprep.mubr.f32.mxu0 0.0
        %1252 = vmatmul.mubr.f32.gmra.mrb[0].mxu0 %v682
        %v1253 = vpop.f32.mrb[0].mxu0
        %v1254 = vadd.f32 %v495, %v1253
        %v1255 = vpop.f32.mrb[0].mxu0
        %1256 = vmatprep.mubr.f32.mxu0 0.0
        %1257 = vmatmul.mubr.f32.gmra.mrb[0].mxu0 %v685
        %v1258 = vpop.f32.mrb[0].mxu0
        %v1259 = vadd.f32 %v495, %v1258
        %v1260 = vpop.f32.mrb[0].mxu0
        %1261 = vmatprep.mubr.f32.mxu0 0.0
        %1262 = vmatmul.mubr.f32.gmra.mrb[0].mxu0 %v688
        %v1263 = vpop.f32.mrb[0].mxu0
        %v1264 = vadd.f32 %v495, %v1263
        %v1265 = vpop.f32.mrb[0].mxu0
        %1266 = vmatprep.mubr.f32.mxu0 0.0
        %1267 = vmatmul.mubr.f32.gmra.mrb[0].mxu0 %v691
        %v1268 = vpop.f32.mrb[0].mxu0
        %v1269 = vadd.f32 %v495, %v1268
        %v1270 = vpop.f32.mrb[0].mxu0
        %1271 = vmatprep.mubr.f32.mxu0 0.0
        %1272 = vmatmul.mubr.f32.gmra.mrb[0].mxu0 %v694
        %v1273 = vpop.f32.mrb[0].mxu0
        %v1274 = vadd.f32 %v495, %v1273
        %v1275 = vpop.f32.mrb[0].mxu0
        %1276 = vmatprep.mubr.f32.mxu0 0.0
        %1277 = vmatmul.mubr.f32.gmra.mrb[0].mxu0 %v697
        %v1278 = vpop.f32.mrb[0].mxu0
        %v1279 = vadd.f32 %v495, %v1278
        %v1280 = vpop.f32.mrb[0].mxu0
        %1281 = vmatprep.mubr.f32.mxu0 0.0
        %1282 = vmatmul.mubr.f32.gmra.mrb[0].mxu0 %v700
        %v1283 = vpop.f32.mrb[0].mxu0
        %v1284 = vadd.f32 %v495, %v1283
        %v1285 = vpop.f32.mrb[0].mxu0
        %1286 = vmatprep.mubr.f32.mxu0 0.0
        %1287 = vmatmul.mubr.f32.gmra.mrb[0].mxu0 %v703
        %v1288 = vpop.f32.mrb[0].mxu0
        %v1289 = vadd.f32 %v495, %v1288
        %v1290 = vpop.f32.mrb[0].mxu0
        %1291 = vmatprep.mubr.f32.mxu0 0.0
        %1292 = vmatmul.mubr.f32.gmra.mrb[0].mxu0 %v706
        %v1293 = vpop.f32.mrb[0].mxu0
        %v1294 = vadd.f32 %v495, %v1293
        %v1295 = vpop.f32.mrb[0].mxu0
        %1296 = vmatprep.mubr.f32.mxu0 0.0
        %1297 = vmatmul.mubr.f32.gmra.mrb[0].mxu0 %v709
        %v1298 = vpop.f32.mrb[0].mxu0
        %v1299 = vadd.f32 %v495, %v1298
        %v1300 = vpop.f32.mrb[0].mxu0
        %1301 = vmatprep.mubr.f32.mxu0 0.0
        %1302 = vmatmul.mubr.f32.gmra.mrb[0].mxu0 %v712
        %v1303 = vpop.f32.mrb[0].mxu0
        %v1304 = vadd.f32 %v495, %v1303
        %v1305 = vpop.f32.mrb[0].mxu0
        %1306 = vmatprep.mubr.f32.mxu0 0.0
        %1307 = vmatmul.mubr.f32.gmra.mrb[0].mxu0 %v715
        %v1308 = vpop.f32.mrb[0].mxu0
        %v1309 = vadd.f32 %v495, %v1308
        %v1310 = vpop.f32.mrb[0].mxu0
        %1311 = vmatprep.mubr.f32.mxu0 0.0
        %1312 = vmatmul.mubr.f32.gmra.mrb[0].mxu0 %v718
        %v1313 = vpop.f32.mrb[0].mxu0
        %v1314 = vadd.f32 %v495, %v1313
        %v1315 = vpop.f32.mrb[0].mxu0
        %1316 = vmatprep.mubr.f32.mxu0 0.0
        %1317 = vmatmul.mubr.f32.gmra.mrb[0].mxu0 %v721
        %v1318 = vpop.f32.mrb[0].mxu0
        %v1319 = vadd.f32 %v495, %v1318
        %v1320 = vpop.f32.mrb[0].mxu0
        %1321 = vmatprep.mubr.f32.mxu0 0.0
        %1322 = vmatmul.mubr.f32.gmra.mrb[0].mxu0 %v724
        %v1323 = vpop.f32.mrb[0].mxu0
        %v1324 = vadd.f32 %v495, %v1323
        %v1325 = vpop.f32.mrb[0].mxu0
        %1326 = vmatprep.mubr.f32.mxu0 0.0
        %1327 = vmatmul.mubr.f32.gmra.mrb[0].mxu0 %v727
        %v1328 = vpop.f32.mrb[0].mxu0
        %v1329 = vadd.f32 %v495, %v1328
        %v1330 = vpop.f32.mrb[0].mxu0
        %1331 = vmatprep.mubr.f32.mxu0 0.0
        %1332 = vmatmul.mubr.f32.gmra.mrb[0].mxu0 %v730
        %v1333 = vpop.f32.mrb[0].mxu0
        %v1334 = vadd.f32 %v495, %v1333
        %v1335 = vpop.f32.mrb[0].mxu0
        %1336 = vmatprep.mubr.f32.mxu0 0.0
        %1337 = vmatmul.mubr.f32.gmra.mrb[0].mxu0 %v733
        %v1338 = vpop.f32.mrb[0].mxu0
        %v1339 = vadd.f32 %v495, %v1338
        %v1340 = vpop.f32.mrb[0].mxu0
        %1341 = vmatprep.mubr.f32.mxu0 0.0
        %1342 = vmatmul.mubr.f32.gmra.mrb[0].mxu0 %v736
        %v1343 = vpop.f32.mrb[0].mxu0
        %v1344 = vadd.f32 %v495, %v1343
        %v1345 = vpop.f32.mrb[0].mxu0
        %1346 = vmatprep.mubr.f32.mxu0 0.0
        %1347 = vmatmul.mubr.f32.gmra.mrb[0].mxu0 %v739
        %v1348 = vpop.f32.mrb[0].mxu0
        %v1349 = vadd.f32 %v495, %v1348
        %v1350 = vpop.f32.mrb[0].mxu0
        %1351 = vmatprep.mubr.f32.mxu0 0.0
        %1352 = vmatmul.mubr.f32.gmra.mrb[0].mxu0 %v742
        %v1353 = vpop.f32.mrb[0].mxu0
        %v1354 = vadd.f32 %v495, %v1353
        %v1355 = vpop.f32.mrb[0].mxu0
        %1356 = vmatprep.mubr.f32.mxu0 0.0
        %1357 = vmatmul.mubr.f32.gmra.mrb[0].mxu0 %v745
        %v1358 = vpop.f32.mrb[0].mxu0
        %v1359 = vadd.f32 %v495, %v1358
        %v1360 = vpop.f32.mrb[0].mxu0
        %1361 = vmatprep.mubr.f32.mxu0 0.0
        %1362 = vmatmul.mubr.f32.gmra.mrb[0].mxu0 %v748
        %v1363 = vpop.f32.mrb[0].mxu0
        %v1364 = vadd.f32 %v495, %v1363
        %v1365 = vpop.f32.mrb[0].mxu0
        %1366 = vmatprep.mubr.f32.mxu0 0.0
        %1367 = vmatmul.mubr.f32.gmra.mrb[0].mxu0 %v751
        %v1368 = vpop.f32.mrb[0].mxu0
        %v1369 = vadd.f32 %v495, %v1368
        %v1370 = vpop.f32.mrb[0].mxu0
        %1371 = vmatprep.mubr.f32.mxu0 0.0
        %1372 = vmatmul.mubr.f32.gmra.mrb[0].mxu0 %v754
        %v1373 = vpop.f32.mrb[0].mxu0
        %v1374 = vadd.f32 %v495, %v1373
        %v1375 = vpop.f32.mrb[0].mxu0
        %1376 = vmatprep.mubr.f32.mxu0 0.0
        %1377 = vmatmul.mubr.f32.gmra.mrb[0].mxu0 %v757
        %v1378 = vpop.f32.mrb[0].mxu0
        %v1379 = vadd.f32 %v495, %v1378
        %v1380 = vpop.f32.mrb[0].mxu0
        %1381 = vmatprep.mubr.f32.mxu0 0.0
        %1382 = vmatmul.mubr.f32.gmra.mrb[0].mxu0 %v760
        %v1383 = vpop.f32.mrb[0].mxu0
        %v1384 = vadd.f32 %v495, %v1383
        %v1385 = vpop.f32.mrb[0].mxu0
        %1386 = vmatprep.mubr.f32.mxu0 0.0
        %1387 = vmatmul.mubr.f32.gmra.mrb[0].mxu0 %v763
        %v1388 = vpop.f32.mrb[0].mxu0
        %v1389 = vadd.f32 %v495, %v1388
        %v1390 = vpop.f32.mrb[0].mxu0
        %1391 = vmatprep.mubr.f32.mxu0 0.0
        %1392 = vmatmul.mubr.f32.gmra.mrb[0].mxu0 %v766
        %v1393 = vpop.f32.mrb[0].mxu0
        %v1394 = vadd.f32 %v495, %v1393
        %v1395 = vpop.f32.mrb[0].mxu0
        %1396 = vmatprep.mubr.f32.mxu0 0.0
        %1397 = vmatmul.mubr.f32.gmra.mrb[0].mxu0 %v769
        %v1398 = vpop.f32.mrb[0].mxu0
        %v1399 = vadd.f32 %v495, %v1398
        %v1400 = vpop.f32.mrb[0].mxu0
        %1401 = vmatprep.mubr.f32.mxu0 0.0
        %1402 = vmatmul.mubr.f32.gmra.mrb[0].mxu0 %v772
        %v1403 = vpop.f32.mrb[0].mxu0
        %v1404 = vadd.f32 %v495, %v1403
        %v1405 = vpop.f32.mrb[0].mxu0
        %1406 = vmatprep.mubr.f32.mxu0 0.0
        %1407 = vmatmul.mubr.f32.gmra.mrb[0].mxu0 %v775
        %v1408 = vpop.f32.mrb[0].mxu0
        %v1409 = vadd.f32 %v495, %v1408
        %v1410 = vpop.f32.mrb[0].mxu0
        %1411 = vmatprep.mubr.f32.mxu0 0.0
        %1412 = vmatmul.mubr.f32.gmra.mrb[0].mxu0 %v778
        %v1413 = vpop.f32.mrb[0].mxu0
        %v1414 = vadd.f32 %v495, %v1413
        %v1415 = vpop.f32.mrb[0].mxu0
        %1416 = vmatprep.mubr.f32.mxu0 0.0
        %1417 = vmatmul.mubr.f32.gmra.mrb[0].mxu0 %v781
        %v1418 = vpop.f32.mrb[0].mxu0
        %v1419 = vadd.f32 %v495, %v1418
        %v1420 = vpop.f32.mrb[0].mxu0
        %1421 = vmatprep.mubr.f32.mxu0 0.0
        %1422 = vmatmul.mubr.f32.gmra.mrb[0].mxu0 %v784
        %v1423 = vpop.f32.mrb[0].mxu0
        %v1424 = vadd.f32 %v495, %v1423
        %v1425 = vpop.f32.mrb[0].mxu0
        %1426 = vmatprep.mubr.f32.mxu0 0.0
        %1427 = vmatmul.mubr.f32.gmra.mrb[0].mxu0 %v787
        %v1428 = vpop.f32.mrb[0].mxu0
        %v1429 = vadd.f32 %v495, %v1428
        %v1430 = vpop.f32.mrb[0].mxu0
        %1431 = vmatprep.mubr.f32.mxu0 0.0
        %1432 = vmatmul.mubr.f32.gmra.mrb[0].mxu0 %v790
        %v1433 = vpop.f32.mrb[0].mxu0
        %v1434 = vadd.f32 %v495, %v1433
        %v1435 = vpop.f32.mrb[0].mxu0
        %1436 = vmatprep.mubr.f32.mxu0 0.0
        %1437 = vmatmul.mubr.f32.gmra.mrb[0].mxu0 %v793
        %v1438 = vpop.f32.mrb[0].mxu0
        %v1439 = vadd.f32 %v495, %v1438
        %v1440 = vpop.f32.mrb[0].mxu0
        %1441 = vmatprep.mubr.f32.mxu0 0.0
        %1442 = vmatmul.mubr.f32.gmra.mrb[0].mxu0 %v796
        %v1443 = vpop.f32.mrb[0].mxu0
        %v1444 = vadd.f32 %v495, %v1443
        %v1445 = vpop.f32.mrb[0].mxu0
        %1446 = vmatprep.mubr.f32.mxu0 0.0
        %1447 = vmatmul.mubr.f32.gmra.mrb[0].mxu0 %v799
        %v1448 = vpop.f32.mrb[0].mxu0
        %v1449 = vadd.f32 %v495, %v1448
        %v1450 = vpop.f32.mrb[0].mxu0
        %1451 = vmatprep.mubr.f32.mxu0 0.0
        %1452 = vmatmul.mubr.f32.gmra.mrb[0].mxu0 %v802
        %v1453 = vpop.f32.mrb[0].mxu0
        %v1454 = vadd.f32 %v495, %v1453
        %v1455 = vpop.f32.mrb[0].mxu0
        %1456 = vmatprep.mubr.f32.mxu0 0.0
        %1457 = vmatmul.mubr.f32.gmra.mrb[0].mxu0 %v805
        %v1458 = vpop.f32.mrb[0].mxu0
        %v1459 = vadd.f32 %v495, %v1458
        %v1460 = vpop.f32.mrb[0].mxu0
        %1461 = vmatprep.mubr.f32.mxu0 0.0
        %1462 = vmatmul.mubr.f32.gmra.mrb[0].mxu0 %v808
        %v1463 = vpop.f32.mrb[0].mxu0
        %v1464 = vadd.f32 %v495, %v1463
        %v1465 = vpop.f32.mrb[0].mxu0
        %1466 = vmatprep.mubr.f32.mxu0 0.0
        %1467 = vmatmul.mubr.f32.gmra.mrb[0].mxu0 %v811
        %v1468 = vpop.f32.mrb[0].mxu0
        %v1469 = vadd.f32 %v495, %v1468
        %v1470 = vpop.f32.mrb[0].mxu0
        %1471 = vmatprep.mubr.f32.mxu0 0.0
        %1472 = vmatmul.mubr.f32.gmra.mrb[0].mxu0 %v814
        %v1473 = vpop.f32.mrb[0].mxu0
        %v1474 = vadd.f32 %v495, %v1473
        %v1475 = vpop.f32.mrb[0].mxu0
        %1476 = vmatprep.mubr.f32.mxu0 0.0
        %1477 = vmatmul.mubr.f32.gmra.mrb[0].mxu0 %v817
        %v1478 = vpop.f32.mrb[0].mxu0
        %v1479 = vadd.f32 %v495, %v1478
        %v1480 = vpop.f32.mrb[0].mxu0
        %1481 = vmatprep.mubr.f32.mxu0 0.0
        %1482 = vmatmul.mubr.f32.gmra.mrb[0].mxu0 %v820
        %v1483 = vpop.f32.mrb[0].mxu0
        %v1484 = vadd.f32 %v495, %v1483
        %v1485 = vpop.f32.mrb[0].mxu0
        %1486 = vmatprep.mubr.f32.mxu0 0.0
        %1487 = vmatmul.mubr.f32.gmra.mrb[0].mxu0 %v823
        %v1488 = vpop.f32.mrb[0].mxu0
        %v1489 = vadd.f32 %v495, %v1488
        %v1490 = vpop.f32.mrb[0].mxu0
        %1491 = vmatprep.mubr.f32.mxu0 0.0
        %1492 = vmatmul.mubr.f32.gmra.mrb[0].mxu0 %v826
        %v1493 = vpop.f32.mrb[0].mxu0
        %v1494 = vadd.f32 %v495, %v1493
        %v1495 = vpop.f32.mrb[0].mxu0
        %1496 = vmatprep.mubr.f32.mxu0 0.0
        %1497 = vmatmul.mubr.f32.gmra.mrb[0].mxu0 %v829
        %v1498 = vpop.f32.mrb[0].mxu0
        %v1499 = vadd.f32 %v495, %v1498
        %v1500 = vpop.f32.mrb[0].mxu0
        %1501 = vmatprep.mubr.f32.mxu0 0.0
        %1502 = vmatmul.mubr.f32.gmra.mrb[0].mxu0 %v832
        %v1503 = vpop.f32.mrb[0].mxu0
        %v1504 = vadd.f32 %v495, %v1503
        %v1505 = vpop.f32.mrb[0].mxu0
        %1506 = vmatprep.mubr.f32.mxu0 0.0
        %1507 = vmatmul.mubr.f32.gmra.mrb[0].mxu0 %v835
        %v1508 = vpop.f32.mrb[0].mxu0
        %v1509 = vadd.f32 %v495, %v1508
        %v1510 = vpop.f32.mrb[0].mxu0
        %1511 = vmatprep.mubr.f32.mxu0 0.0
        %1512 = vmatmul.mubr.f32.gmra.mrb[0].mxu0 %v838
        %v1513 = vpop.f32.mrb[0].mxu0
        %v1514 = vadd.f32 %v495, %v1513
        %v1515 = vpop.f32.mrb[0].mxu0
        %1516 = vmatprep.mubr.f32.mxu0 0.0
        %1517 = vmatmul.mubr.f32.gmra.mrb[0].mxu0 %v841
        %v1518 = vpop.f32.mrb[0].mxu0
        %v1519 = vadd.f32 %v495, %v1518
        %v1520 = vpop.f32.mrb[0].mxu0
        %1521 = vmatprep.mubr.f32.mxu0 0.0
        %1522 = vmatmul.mubr.f32.gmra.mrb[0].mxu0 %v844
        %v1523 = vpop.f32.mrb[0].mxu0
        %v1524 = vadd.f32 %v495, %v1523
        %v1525 = vpop.f32.mrb[0].mxu0
        %1526 = vmatprep.mubr.f32.mxu0 0.0
        %1527 = vmatmul.mubr.f32.gmra.mrb[0].mxu0 %v847
        %v1528 = vpop.f32.mrb[0].mxu0
        %v1529 = vadd.f32 %v495, %v1528
        %v1530 = vpop.f32.mrb[0].mxu0
        %1531 = vmatprep.mubr.f32.mxu0 0.0
        %1532 = vmatmul.mubr.f32.gmra.mrb[0].mxu0 %v850
        %v1533 = vpop.f32.mrb[0].mxu0
        %v1534 = vadd.f32 %v495, %v1533
        %v1535 = vpop.f32.mrb[0].mxu0
        %1536 = vmatprep.mubr.f32.mxu0 0.0
        %1537 = vmatmul.mubr.f32.gmra.mrb[0].mxu0 %v853
        %v1538 = vpop.f32.mrb[0].mxu0
        %v1539 = vadd.f32 %v495, %v1538
        %v1540 = vpop.f32.mrb[0].mxu0
        %1541 = vmatprep.mubr.f32.mxu0 0.0
        %1542 = vmatmul.mubr.f32.gmra.mrb[0].mxu0 %v856
        %v1543 = vpop.f32.mrb[0].mxu0
        %v1544 = vadd.f32 %v495, %v1543
        %v1545 = vpop.f32.mrb[0].mxu0
        %1546 = vmatprep.mubr.f32.mxu0 0.0
        %1547 = vmatmul.mubr.f32.gmra.mrb[0].mxu0 %v859
        %v1548 = vpop.f32.mrb[0].mxu0
        %v1549 = vadd.f32 %v495, %v1548
        %v1550 = vpop.f32.mrb[0].mxu0
        %1551 = vmatprep.mubr.f32.mxu0 0.0
        %1552 = vmatmul.mubr.f32.gmra.mrb[0].mxu0 %v862
        %v1553 = vpop.f32.mrb[0].mxu0
        %v1554 = vadd.f32 %v495, %v1553
        %v1555 = vpop.f32.mrb[0].mxu0
        %1556 = vmatprep.mubr.f32.mxu0 0.0
        %1557 = vmatmul.mubr.f32.gmra.mrb[0].mxu0 %v865
        %v1558 = vpop.f32.mrb[0].mxu0
        %v1559 = vadd.f32 %v495, %v1558
        %v1560 = vpop.f32.mrb[0].mxu0
        %1561 = vmatprep.mubr.f32.mxu0 0.0
        %1562 = vmatmul.mubr.f32.gmra.mrb[0].mxu0 %v868
        %v1563 = vpop.f32.mrb[0].mxu0
        %v1564 = vadd.f32 %v495, %v1563
        %v1565 = vpop.f32.mrb[0].mxu0
        %1566 = vmatprep.mubr.f32.mxu0 0.0
        %1567 = vmatmul.mubr.f32.gmra.mrb[0].mxu0 %v871
        %v1568 = vpop.f32.mrb[0].mxu0
        %v1569 = vadd.f32 %v495, %v1568
        %v1570 = vpop.f32.mrb[0].mxu0
        %1571 = vmatprep.mubr.f32.mxu0 0.0
        %1572 = vmatmul.mubr.f32.gmra.mrb[0].mxu0 %v874
        %v1573 = vpop.f32.mrb[0].mxu0
        %v1574 = vadd.f32 %v495, %v1573
        %v1575 = vpop.f32.mrb[0].mxu0
        %1576 = vmatprep.mubr.f32.mxu0 0.0
        %1577 = vmatmul.mubr.f32.gmra.mrb[0].mxu0 %v877
        %v1578 = vpop.f32.mrb[0].mxu0
        %v1579 = vadd.f32 %v495, %v1578
        %v1580 = vpop.f32.mrb[0].mxu0
        %1581 = vmatprep.mubr.f32.mxu0 0.0
        %1582 = vmatmul.mubr.f32.gmra.mrb[0].mxu0 %v880
        %v1583 = vpop.f32.mrb[0].mxu0
        %v1584 = vadd.f32 %v495, %v1583
        %v1585 = vpop.f32.mrb[0].mxu0
        %1586 = vdwg.mxu0
        %v1587 = vld [vmem:[%s344] sm:$0xff]
        %v1588 = vld [vmem:[%s344 + $0x8] sm:$0xff]
        %v1589 = vld [vmem:[%s344 + $0x10] sm:$0xff]
        %v1590 = vld [vmem:[%s344 + $0x18] sm:$0xff]
        %v1591 = vld [vmem:[%s344 + $0x20] sm:$0xff]
        %v1592 = vld [vmem:[%s344 + $0x28] sm:$0xff]
        %v1593 = vld [vmem:[%s344 + $0x30] sm:$0xff]
        %v1594 = vld [vmem:[%s344 + $0x38] sm:$0xff]
        %v1595 = vld [vmem:[%s344 + $0x40] sm:$0xff]
        %v1596 = vld [vmem:[%s344 + $0x48] sm:$0xff]
        %v1597 = vld [vmem:[%s344 + $0x50] sm:$0xff]
        %v1598 = vld [vmem:[%s344 + $0x58] sm:$0xff]
        %v1599 = vld [vmem:[%s344 + $0x60] sm:$0xff]
        %v1600 = vld [vmem:[%s344 + $0x68] sm:$0xff]
        %v1601 = vld [vmem:[%s344 + $0x70] sm:$0xff]
        %v1602 = vld [vmem:[%s344 + $0x78] sm:$0xff]
        %v1603 = vld [vmem:[%s344 + $0x80] sm:$0xff]
        %v1604 = vld [vmem:[%s344 + $0x88] sm:$0xff]
        %v1605 = vld [vmem:[%s344 + $0x90] sm:$0xff]
        %v1606 = vld [vmem:[%s344 + $0x98] sm:$0xff]
        %v1607 = vld [vmem:[%s344 + $0xa0] sm:$0xff]
        %v1608 = vld [vmem:[%s344 + $0xa8] sm:$0xff]
        %v1609 = vld [vmem:[%s344 + $0xb0] sm:$0xff]
        %v1610 = vld [vmem:[%s344 + $0xb8] sm:$0xff]
        %v1611 = vld [vmem:[%s344 + $0xc0] sm:$0xff]
        %v1612 = vld [vmem:[%s344 + $0xc8] sm:$0xff]
        %v1613 = vld [vmem:[%s344 + $0xd0] sm:$0xff]
        %v1614 = vld [vmem:[%s344 + $0xd8] sm:$0xff]
        %v1615 = vld [vmem:[%s344 + $0xe0] sm:$0xff]
        %v1616 = vld [vmem:[%s344 + $0xe8] sm:$0xff]
        %v1617 = vld [vmem:[%s344 + $0xf0] sm:$0xff]
        %v1618 = vld [vmem:[%s344 + $0xf8] sm:$0xff]
        %v1619 = vld [vmem:[%s344 + $0x100] sm:$0xff]
        %v1620 = vld [vmem:[%s344 + $0x108] sm:$0xff]
        %v1621 = vld [vmem:[%s344 + $0x110] sm:$0xff]
        %v1622 = vld [vmem:[%s344 + $0x118] sm:$0xff]
        %v1623 = vld [vmem:[%s344 + $0x120] sm:$0xff]
        %v1624 = vld [vmem:[%s344 + $0x128] sm:$0xff]
        %v1625 = vld [vmem:[%s344 + $0x130] sm:$0xff]
        %v1626 = vld [vmem:[%s344 + $0x138] sm:$0xff]
        %v1627 = vld [vmem:[%s344 + $0x140] sm:$0xff]
        %v1628 = vld [vmem:[%s344 + $0x148] sm:$0xff]
        %v1629 = vld [vmem:[%s344 + $0x150] sm:$0xff]
        %v1630 = vld [vmem:[%s344 + $0x158] sm:$0xff]
        %v1631 = vld [vmem:[%s344 + $0x160] sm:$0xff]
        %v1632 = vld [vmem:[%s344 + $0x168] sm:$0xff]
        %v1633 = vld [vmem:[%s344 + $0x170] sm:$0xff]
        %v1634 = vld [vmem:[%s344 + $0x178] sm:$0xff]
        %v1635 = vld [vmem:[%s344 + $0x180] sm:$0xff]
        %v1636 = vld [vmem:[%s344 + $0x188] sm:$0xff]
        %v1637 = vld [vmem:[%s344 + $0x190] sm:$0xff]
        %v1638 = vld [vmem:[%s344 + $0x198] sm:$0xff]
        %v1639 = vld [vmem:[%s344 + $0x1a0] sm:$0xff]
        %v1640 = vld [vmem:[%s344 + $0x1a8] sm:$0xff]
        %v1641 = vld [vmem:[%s344 + $0x1b0] sm:$0xff]
        %v1642 = vld [vmem:[%s344 + $0x1b8] sm:$0xff]
        %v1643 = vld [vmem:[%s344 + $0x1c0] sm:$0xff]
        %v1644 = vld [vmem:[%s344 + $0x1c8] sm:$0xff]
        %v1645 = vld [vmem:[%s344 + $0x1d0] sm:$0xff]
        %v1646 = vld [vmem:[%s344 + $0x1d8] sm:$0xff]
        %v1647 = vld [vmem:[%s344 + $0x1e0] sm:$0xff]
        %v1648 = vld [vmem:[%s344 + $0x1e8] sm:$0xff]
        %v1649 = vld [vmem:[%s344 + $0x1f0] sm:$0xff]
        %v1650 = vld [vmem:[%s344 + $0x1f8] sm:$0xff]
        %v1651 = vld [vmem:[%s344 + $0x200] sm:$0xff]
        %v1652 = vld [vmem:[%s344 + $0x208] sm:$0xff]
        %v1653 = vld [vmem:[%s344 + $0x210] sm:$0xff]
        %v1654 = vld [vmem:[%s344 + $0x218] sm:$0xff]
        %v1655 = vld [vmem:[%s344 + $0x220] sm:$0xff]
        %v1656 = vld [vmem:[%s344 + $0x228] sm:$0xff]
        %v1657 = vld [vmem:[%s344 + $0x230] sm:$0xff]
        %v1658 = vld [vmem:[%s344 + $0x238] sm:$0xff]
        %v1659 = vld [vmem:[%s344 + $0x240] sm:$0xff]
        %v1660 = vld [vmem:[%s344 + $0x248] sm:$0xff]
        %v1661 = vld [vmem:[%s344 + $0x250] sm:$0xff]
        %v1662 = vld [vmem:[%s344 + $0x258] sm:$0xff]
        %v1663 = vld [vmem:[%s344 + $0x260] sm:$0xff]
        %v1664 = vld [vmem:[%s344 + $0x268] sm:$0xff]
        %v1665 = vld [vmem:[%s344 + $0x270] sm:$0xff]
        %v1666 = vld [vmem:[%s344 + $0x278] sm:$0xff]
        %v1667 = vld [vmem:[%s344 + $0x280] sm:$0xff]
        %v1668 = vld [vmem:[%s344 + $0x288] sm:$0xff]
        %v1669 = vld [vmem:[%s344 + $0x290] sm:$0xff]
        %v1670 = vld [vmem:[%s344 + $0x298] sm:$0xff]
        %v1671 = vld [vmem:[%s344 + $0x2a0] sm:$0xff]
        %v1672 = vld [vmem:[%s344 + $0x2a8] sm:$0xff]
        %v1673 = vld [vmem:[%s344 + $0x2b0] sm:$0xff]
        %v1674 = vld [vmem:[%s344 + $0x2b8] sm:$0xff]
        %v1675 = vld [vmem:[%s344 + $0x2c0] sm:$0xff]
        %v1676 = vld [vmem:[%s344 + $0x2c8] sm:$0xff]
        %v1677 = vld [vmem:[%s344 + $0x2d0] sm:$0xff]
        %v1678 = vld [vmem:[%s344 + $0x2d8] sm:$0xff]
        %v1679 = vld [vmem:[%s344 + $0x2e0] sm:$0xff]
        %v1680 = vld [vmem:[%s344 + $0x2e8] sm:$0xff]
        %v1681 = vld [vmem:[%s344 + $0x2f0] sm:$0xff]
        %v1682 = vld [vmem:[%s344 + $0x2f8] sm:$0xff]
        %v1683 = vld [vmem:[%s344 + $0x300] sm:$0xff]
        %v1684 = vld [vmem:[%s344 + $0x308] sm:$0xff]
        %v1685 = vld [vmem:[%s344 + $0x310] sm:$0xff]
        %v1686 = vld [vmem:[%s344 + $0x318] sm:$0xff]
        %v1687 = vld [vmem:[%s344 + $0x320] sm:$0xff]
        %v1688 = vld [vmem:[%s344 + $0x328] sm:$0xff]
        %v1689 = vld [vmem:[%s344 + $0x330] sm:$0xff]
        %v1690 = vld [vmem:[%s344 + $0x338] sm:$0xff]
        %v1691 = vld [vmem:[%s344 + $0x340] sm:$0xff]
        %v1692 = vld [vmem:[%s344 + $0x348] sm:$0xff]
        %v1693 = vld [vmem:[%s344 + $0x350] sm:$0xff]
        %v1694 = vld [vmem:[%s344 + $0x358] sm:$0xff]
        %v1695 = vld [vmem:[%s344 + $0x360] sm:$0xff]
        %v1696 = vld [vmem:[%s344 + $0x368] sm:$0xff]
        %v1697 = vld [vmem:[%s344 + $0x370] sm:$0xff]
        %v1698 = vld [vmem:[%s344 + $0x378] sm:$0xff]
        %v1699 = vld [vmem:[%s344 + $0x380] sm:$0xff]
        %v1700 = vld [vmem:[%s344 + $0x388] sm:$0xff]
        %v1701 = vld [vmem:[%s344 + $0x390] sm:$0xff]
        %v1702 = vld [vmem:[%s344 + $0x398] sm:$0xff]
        %v1703 = vld [vmem:[%s344 + $0x3a0] sm:$0xff]
        %v1704 = vld [vmem:[%s344 + $0x3a8] sm:$0xff]
        %v1705 = vld [vmem:[%s344 + $0x3b0] sm:$0xff]
        %v1706 = vld [vmem:[%s344 + $0x3b8] sm:$0xff]
        %v1707 = vld [vmem:[%s344 + $0x3c0] sm:$0xff]
        %v1708 = vld [vmem:[%s344 + $0x3c8] sm:$0xff]
        %v1709 = vld [vmem:[%s344 + $0x3d0] sm:$0xff]
        %v1710 = vld [vmem:[%s344 + $0x3d8] sm:$0xff]
        %v1711 = vld [vmem:[%s344 + $0x3e0] sm:$0xff]
        %v1712 = vld [vmem:[%s344 + $0x3e8] sm:$0xff]
        %v1713 = vld [vmem:[%s344 + $0x3f0] sm:$0xff]
        %v1714 = vld [vmem:[%s344 + $0x3f8] sm:$0xff]
        %v1715 = vld [vmem:[#allocation4] sm:$0xff]
        %v1716 = vld [vmem:[#allocation4 + $0x8] sm:$0xff]
        %v1717 = vld [vmem:[#allocation4 + $0x10] sm:$0xff]
        %v1718 = vld [vmem:[#allocation4 + $0x18] sm:$0xff]
        %v1719 = vld [vmem:[#allocation6] sm:$0x1]
        %v1721 = vlaneseq
        %v1722 = vshrl.u32 %v1721, 7
        %v1723 = vsub.s32 0, %v1722
        %v1724 = vrot.slane %v1719, %v1723
        %v1727 = vsel %vm497, %v1587, 0
        %v1730 = vsel %vm497, %v1588, 0
        %v1733 = vsel %vm497, %v1589, 0
        %v1736 = vsel %vm497, %v1590, 0
        %v1739 = vsel %vm497, %v1591, 0
        %v1742 = vsel %vm497, %v1592, 0
        %v1745 = vsel %vm497, %v1593, 0
        %v1748 = vsel %vm497, %v1594, 0
        %v1751 = vsel %vm497, %v1595, 0
        %v1754 = vsel %vm497, %v1596, 0
        %v1757 = vsel %vm497, %v1597, 0
        %v1760 = vsel %vm497, %v1598, 0
        %v1763 = vsel %vm497, %v1599, 0
        %v1766 = vsel %vm497, %v1600, 0
        %v1769 = vsel %vm497, %v1601, 0
        %v1772 = vsel %vm497, %v1602, 0
        %v1775 = vsel %vm497, %v1603, 0
        %v1778 = vsel %vm497, %v1604, 0
        %v1781 = vsel %vm497, %v1605, 0
        %v1784 = vsel %vm497, %v1606, 0
        %v1787 = vsel %vm497, %v1607, 0
        %v1790 = vsel %vm497, %v1608, 0
        %v1793 = vsel %vm497, %v1609, 0
        %v1796 = vsel %vm497, %v1610, 0
        %v1799 = vsel %vm497, %v1611, 0
        %v1802 = vsel %vm497, %v1612, 0
        %v1805 = vsel %vm497, %v1613, 0
        %v1808 = vsel %vm497, %v1614, 0
        %v1811 = vsel %vm497, %v1615, 0
        %v1814 = vsel %vm497, %v1616, 0
        %v1817 = vsel %vm497, %v1617, 0
        %v1820 = vsel %vm497, %v1618, 0
        %v1823 = vsel %vm497, %v1619, 0
        %v1826 = vsel %vm497, %v1620, 0
        %v1829 = vsel %vm497, %v1621, 0
        %v1832 = vsel %vm497, %v1622, 0
        %v1835 = vsel %vm497, %v1623, 0
        %v1838 = vsel %vm497, %v1624, 0
        %v1841 = vsel %vm497, %v1625, 0
        %v1844 = vsel %vm497, %v1626, 0
        %v1847 = vsel %vm497, %v1627, 0
        %v1850 = vsel %vm497, %v1628, 0
        %v1853 = vsel %vm497, %v1629, 0
        %v1856 = vsel %vm497, %v1630, 0
        %v1859 = vsel %vm497, %v1631, 0
        %v1862 = vsel %vm497, %v1632, 0
        %v1865 = vsel %vm497, %v1633, 0
        %v1868 = vsel %vm497, %v1634, 0
        %v1871 = vsel %vm497, %v1635, 0
        %v1874 = vsel %vm497, %v1636, 0
        %v1877 = vsel %vm497, %v1637, 0
        %v1880 = vsel %vm497, %v1638, 0
        %v1883 = vsel %vm497, %v1639, 0
        %v1886 = vsel %vm497, %v1640, 0
        %v1889 = vsel %vm497, %v1641, 0
        %v1892 = vsel %vm497, %v1642, 0
        %v1895 = vsel %vm497, %v1643, 0
        %v1898 = vsel %vm497, %v1644, 0
        %v1901 = vsel %vm497, %v1645, 0
        %v1904 = vsel %vm497, %v1646, 0
        %v1907 = vsel %vm497, %v1647, 0
        %v1910 = vsel %vm497, %v1648, 0
        %v1913 = vsel %vm497, %v1649, 0
        %v1916 = vsel %vm497, %v1650, 0
        %v1919 = vsel %vm497, %v1651, 0
        %v1922 = vsel %vm497, %v1652, 0
        %v1925 = vsel %vm497, %v1653, 0
        %v1928 = vsel %vm497, %v1654, 0
        %v1931 = vsel %vm497, %v1655, 0
        %v1934 = vsel %vm497, %v1656, 0
        %v1937 = vsel %vm497, %v1657, 0
        %v1940 = vsel %vm497, %v1658, 0
        %v1943 = vsel %vm497, %v1659, 0
        %v1946 = vsel %vm497, %v1660, 0
        %v1949 = vsel %vm497, %v1661, 0
        %v1952 = vsel %vm497, %v1662, 0
        %v1955 = vsel %vm497, %v1663, 0
        %v1958 = vsel %vm497, %v1664, 0
        %v1961 = vsel %vm497, %v1665, 0
        %v1964 = vsel %vm497, %v1666, 0
        %v1967 = vsel %vm497, %v1667, 0
        %v1970 = vsel %vm497, %v1668, 0
        %v1973 = vsel %vm497, %v1669, 0
        %v1976 = vsel %vm497, %v1670, 0
        %v1979 = vsel %vm497, %v1671, 0
        %v1982 = vsel %vm497, %v1672, 0
        %v1985 = vsel %vm497, %v1673, 0
        %v1988 = vsel %vm497, %v1674, 0
        %v1991 = vsel %vm497, %v1675, 0
        %v1994 = vsel %vm497, %v1676, 0
        %v1997 = vsel %vm497, %v1677, 0
        %v2000 = vsel %vm497, %v1678, 0
        %v2003 = vsel %vm497, %v1679, 0
        %v2006 = vsel %vm497, %v1680, 0
        %v2009 = vsel %vm497, %v1681, 0
        %v2012 = vsel %vm497, %v1682, 0
        %v2015 = vsel %vm497, %v1683, 0
        %v2018 = vsel %vm497, %v1684, 0
        %v2021 = vsel %vm497, %v1685, 0
        %v2024 = vsel %vm497, %v1686, 0
        %v2027 = vsel %vm497, %v1687, 0
        %v2030 = vsel %vm497, %v1688, 0
        %v2033 = vsel %vm497, %v1689, 0
        %v2036 = vsel %vm497, %v1690, 0
        %v2039 = vsel %vm497, %v1691, 0
        %v2042 = vsel %vm497, %v1692, 0
        %v2045 = vsel %vm497, %v1693, 0
        %v2048 = vsel %vm497, %v1694, 0
        %v2051 = vsel %vm497, %v1695, 0
        %v2054 = vsel %vm497, %v1696, 0
        %v2057 = vsel %vm497, %v1697, 0
        %v2060 = vsel %vm497, %v1698, 0
        %v2063 = vsel %vm497, %v1699, 0
        %v2066 = vsel %vm497, %v1700, 0
        %v2069 = vsel %vm497, %v1701, 0
        %v2072 = vsel %vm497, %v1702, 0
        %v2075 = vsel %vm497, %v1703, 0
        %v2078 = vsel %vm497, %v1704, 0
        %v2081 = vsel %vm497, %v1705, 0
        %v2084 = vsel %vm497, %v1706, 0
        %v2087 = vsel %vm497, %v1707, 0
        %v2090 = vsel %vm497, %v1708, 0
        %v2093 = vsel %vm497, %v1709, 0
        %v2096 = vsel %vm497, %v1710, 0
        %v2099 = vsel %vm497, %v1711, 0
        %v2102 = vsel %vm497, %v1712, 0
        %v2105 = vsel %vm497, %v1713, 0
        %v2108 = vsel %vm497, %v1714, 0
        %2110 = vmatprep.subr.mxu0 0.0
        %2111 = vmatpush1.msra.mxu0 %v1715
        %2112 = vmatprep.subr.mxu0 0.0
        %2113 = vmatpush1.msra.mxu0 %v1716
        %2114 = vmatprep.subr.mxu0 0.0
        %2115 = vmatpush1.msra.mxu0 %v1717
        %2116 = vmatprep.subr.mxu0 0.0
        %2117 = vmatpush1.msra.mxu0 %v1718
        %2118 = vmatprep.subr.mxu0 0.0
        %2119 = vmatpush1.msra.mxu0 0.0
        %2120 = vmatprep.subr.mxu0 0.0
        %2121 = vmatpush1.msra.mxu0 0.0
        %2122 = vmatprep.subr.mxu0 0.0
        %2123 = vmatpush1.msra.mxu0 0.0
        %2124 = vmatprep.subr.mxu0 0.0
        %2125 = vmatpush1.msra.mxu0 0.0
        %2126 = vmatprep.subr.mxu0 0.0
        %2127 = vmatpush1.msra.mxu0 0.0
        %2128 = vmatprep.subr.mxu0 0.0
        %2129 = vmatpush1.msra.mxu0 0.0
        %2130 = vmatprep.subr.mxu0 0.0
        %2131 = vmatpush1.msra.mxu0 0.0
        %2132 = vmatprep.subr.mxu0 0.0
        %2133 = vmatpush1.msra.mxu0 0.0
        %2134 = vmatprep.subr.mxu0 0.0
        %2135 = vmatpush1.msra.mxu0 0.0
        %2136 = vmatprep.subr.mxu0 0.0
        %2137 = vmatpush1.msra.mxu0 0.0
        %2138 = vmatprep.subr.mxu0 0.0
        %2139 = vmatpush1.msra.mxu0 0.0
        %2140 = vmatprep.subr.mxu0 0.0
        %2141 = vmatpush1.msra.mxu0 0.0
        %2142 = vmatprep.subr.mxu0 0.0
        %2143 = vmatpush1.msra.mxu0 0.0
        %2144 = vmatprep.subr.mxu0 0.0
        %2145 = vmatpush1.msra.mxu0 0.0
        %2146 = vmatprep.subr.mxu0 0.0
        %2147 = vmatpush1.msra.mxu0 0.0
        %2148 = vmatprep.subr.mxu0 0.0
        %2149 = vmatpush1.msra.mxu0 0.0
        %2150 = vmatprep.subr.mxu0 0.0
        %2151 = vmatpush1.msra.mxu0 0.0
        %2152 = vmatprep.subr.mxu0 0.0
        %2153 = vmatpush1.msra.mxu0 0.0
        %2154 = vmatprep.subr.mxu0 0.0
        %2155 = vmatpush1.msra.mxu0 0.0
        %2156 = vmatprep.subr.mxu0 0.0
        %2157 = vmatpush1.msra.mxu0 0.0
        %2158 = vmatprep.subr.mxu0 0.0
        %2159 = vmatpush1.msra.mxu0 0.0
        %2160 = vmatprep.subr.mxu0 0.0
        %2161 = vmatpush1.msra.mxu0 0.0
        %2162 = vmatprep.subr.mxu0 0.0
        %2163 = vmatpush1.msra.mxu0 0.0
        %2164 = vmatprep.subr.mxu0 0.0
        %2165 = vmatpush1.msra.mxu0 0.0
        %2166 = vmatprep.subr.mxu0 0.0
        %2167 = vmatpush1.msra.mxu0 0.0
        %2168 = vmatprep.subr.mxu0 0.0
        %2169 = vmatpush1.msra.mxu0 0.0
        %2170 = vmatprep.subr.mxu0 0.0
        %2171 = vmatpush1.msra.mxu0 0.0
        %2172 = vmatprep.subr.mxu0 0.0
        %2173 = vmatpush1.msra.mxu0 0.0
        %2174 = vmatprep.mubr.f32.mxu0 0.0
        %2175 = vmatmul.mubr.f32.gmra.mrb[0].mxu0 %v1727
        %v2176 = vpop.f32.mrb[0].mxu0
        %v2177 = vadd.f32 %v1724, %v2176
        %v2178 = vpop.f32.mrb[0].mxu0
        %2179 = vmatprep.mubr.f32.mxu0 0.0
        %2180 = vmatmul.mubr.f32.gmra.mrb[0].mxu0 %v1730
        %v2181 = vpop.f32.mrb[0].mxu0
        %v2182 = vadd.f32 %v1724, %v2181
        %v2183 = vpop.f32.mrb[0].mxu0
        %2184 = vmatprep.mubr.f32.mxu0 0.0
        %2185 = vmatmul.mubr.f32.gmra.mrb[0].mxu0 %v1733
        %v2186 = vpop.f32.mrb[0].mxu0
        %v2187 = vadd.f32 %v1724, %v2186
        %v2188 = vpop.f32.mrb[0].mxu0
        %2189 = vmatprep.mubr.f32.mxu0 0.0
        %2190 = vmatmul.mubr.f32.gmra.mrb[0].mxu0 %v1736
        %v2191 = vpop.f32.mrb[0].mxu0
        %v2192 = vadd.f32 %v1724, %v2191
        %v2193 = vpop.f32.mrb[0].mxu0
        %2194 = vmatprep.mubr.f32.mxu0 0.0
        %2195 = vmatmul.mubr.f32.gmra.mrb[0].mxu0 %v1739
        %v2196 = vpop.f32.mrb[0].mxu0
        %v2197 = vadd.f32 %v1724, %v2196
        %v2198 = vpop.f32.mrb[0].mxu0
        %2199 = vmatprep.mubr.f32.mxu0 0.0
        %2200 = vmatmul.mubr.f32.gmra.mrb[0].mxu0 %v1742
        %v2201 = vpop.f32.mrb[0].mxu0
        %v2202 = vadd.f32 %v1724, %v2201
        %v2203 = vpop.f32.mrb[0].mxu0
        %2204 = vmatprep.mubr.f32.mxu0 0.0
        %2205 = vmatmul.mubr.f32.gmra.mrb[0].mxu0 %v1745
        %v2206 = vpop.f32.mrb[0].mxu0
        %v2207 = vadd.f32 %v1724, %v2206
        %v2208 = vpop.f32.mrb[0].mxu0
        %2209 = vmatprep.mubr.f32.mxu0 0.0
        %2210 = vmatmul.mubr.f32.gmra.mrb[0].mxu0 %v1748
        %v2211 = vpop.f32.mrb[0].mxu0
        %v2212 = vadd.f32 %v1724, %v2211
        %v2213 = vpop.f32.mrb[0].mxu0
        %2214 = vmatprep.mubr.f32.mxu0 0.0
        %2215 = vmatmul.mubr.f32.gmra.mrb[0].mxu0 %v1751
        %v2216 = vpop.f32.mrb[0].mxu0
        %v2217 = vadd.f32 %v1724, %v2216
        %v2218 = vpop.f32.mrb[0].mxu0
        %2219 = vmatprep.mubr.f32.mxu0 0.0
        %2220 = vmatmul.mubr.f32.gmra.mrb[0].mxu0 %v1754
        %v2221 = vpop.f32.mrb[0].mxu0
        %v2222 = vadd.f32 %v1724, %v2221
        %v2223 = vpop.f32.mrb[0].mxu0
        %2224 = vmatprep.mubr.f32.mxu0 0.0
        %2225 = vmatmul.mubr.f32.gmra.mrb[0].mxu0 %v1757
        %v2226 = vpop.f32.mrb[0].mxu0
        %v2227 = vadd.f32 %v1724, %v2226
        %v2228 = vpop.f32.mrb[0].mxu0
        %2229 = vmatprep.mubr.f32.mxu0 0.0
        %2230 = vmatmul.mubr.f32.gmra.mrb[0].mxu0 %v1760
        %v2231 = vpop.f32.mrb[0].mxu0
        %v2232 = vadd.f32 %v1724, %v2231
        %v2233 = vpop.f32.mrb[0].mxu0
        %2234 = vmatprep.mubr.f32.mxu0 0.0
        %2235 = vmatmul.mubr.f32.gmra.mrb[0].mxu0 %v1763
        %v2236 = vpop.f32.mrb[0].mxu0
        %v2237 = vadd.f32 %v1724, %v2236
        %v2238 = vpop.f32.mrb[0].mxu0
        %2239 = vmatprep.mubr.f32.mxu0 0.0
        %2240 = vmatmul.mubr.f32.gmra.mrb[0].mxu0 %v1766
        %v2241 = vpop.f32.mrb[0].mxu0
        %v2242 = vadd.f32 %v1724, %v2241
        %v2243 = vpop.f32.mrb[0].mxu0
        %2244 = vmatprep.mubr.f32.mxu0 0.0
        %2245 = vmatmul.mubr.f32.gmra.mrb[0].mxu0 %v1769
        %v2246 = vpop.f32.mrb[0].mxu0
        %v2247 = vadd.f32 %v1724, %v2246
        %v2248 = vpop.f32.mrb[0].mxu0
        %2249 = vmatprep.mubr.f32.mxu0 0.0
        %2250 = vmatmul.mubr.f32.gmra.mrb[0].mxu0 %v1772
        %v2251 = vpop.f32.mrb[0].mxu0
        %v2252 = vadd.f32 %v1724, %v2251
        %v2253 = vpop.f32.mrb[0].mxu0
        %2254 = vmatprep.mubr.f32.mxu0 0.0
        %2255 = vmatmul.mubr.f32.gmra.mrb[0].mxu0 %v1775
        %v2256 = vpop.f32.mrb[0].mxu0
        %v2257 = vadd.f32 %v1724, %v2256
        %v2258 = vpop.f32.mrb[0].mxu0
        %2259 = vmatprep.mubr.f32.mxu0 0.0
        %2260 = vmatmul.mubr.f32.gmra.mrb[0].mxu0 %v1778
        %v2261 = vpop.f32.mrb[0].mxu0
        %v2262 = vadd.f32 %v1724, %v2261
        %v2263 = vpop.f32.mrb[0].mxu0
        %2264 = vmatprep.mubr.f32.mxu0 0.0
        %2265 = vmatmul.mubr.f32.gmra.mrb[0].mxu0 %v1781
        %v2266 = vpop.f32.mrb[0].mxu0
        %v2267 = vadd.f32 %v1724, %v2266
        %v2268 = vpop.f32.mrb[0].mxu0
        %2269 = vmatprep.mubr.f32.mxu0 0.0
        %2270 = vmatmul.mubr.f32.gmra.mrb[0].mxu0 %v1784
        %v2271 = vpop.f32.mrb[0].mxu0
        %v2272 = vadd.f32 %v1724, %v2271
        %v2273 = vpop.f32.mrb[0].mxu0
        %2274 = vmatprep.mubr.f32.mxu0 0.0
        %2275 = vmatmul.mubr.f32.gmra.mrb[0].mxu0 %v1787
        %v2276 = vpop.f32.mrb[0].mxu0
        %v2277 = vadd.f32 %v1724, %v2276
        %v2278 = vpop.f32.mrb[0].mxu0
        %2279 = vmatprep.mubr.f32.mxu0 0.0
        %2280 = vmatmul.mubr.f32.gmra.mrb[0].mxu0 %v1790
        %v2281 = vpop.f32.mrb[0].mxu0
        %v2282 = vadd.f32 %v1724, %v2281
        %v2283 = vpop.f32.mrb[0].mxu0
        %2284 = vmatprep.mubr.f32.mxu0 0.0
        %2285 = vmatmul.mubr.f32.gmra.mrb[0].mxu0 %v1793
        %v2286 = vpop.f32.mrb[0].mxu0
        %v2287 = vadd.f32 %v1724, %v2286
        %v2288 = vpop.f32.mrb[0].mxu0
        %2289 = vmatprep.mubr.f32.mxu0 0.0
        %2290 = vmatmul.mubr.f32.gmra.mrb[0].mxu0 %v1796
        %v2291 = vpop.f32.mrb[0].mxu0
        %v2292 = vadd.f32 %v1724, %v2291
        %v2293 = vpop.f32.mrb[0].mxu0
        %2294 = vmatprep.mubr.f32.mxu0 0.0
        %2295 = vmatmul.mubr.f32.gmra.mrb[0].mxu0 %v1799
        %v2296 = vpop.f32.mrb[0].mxu0
        %v2297 = vadd.f32 %v1724, %v2296
        %v2298 = vpop.f32.mrb[0].mxu0
        %2299 = vmatprep.mubr.f32.mxu0 0.0
        %2300 = vmatmul.mubr.f32.gmra.mrb[0].mxu0 %v1802
        %v2301 = vpop.f32.mrb[0].mxu0
        %v2302 = vadd.f32 %v1724, %v2301
        %v2303 = vpop.f32.mrb[0].mxu0
        %2304 = vmatprep.mubr.f32.mxu0 0.0
        %2305 = vmatmul.mubr.f32.gmra.mrb[0].mxu0 %v1805
        %v2306 = vpop.f32.mrb[0].mxu0
        %v2307 = vadd.f32 %v1724, %v2306
        %v2308 = vpop.f32.mrb[0].mxu0
        %2309 = vmatprep.mubr.f32.mxu0 0.0
        %2310 = vmatmul.mubr.f32.gmra.mrb[0].mxu0 %v1808
        %v2311 = vpop.f32.mrb[0].mxu0
        %v2312 = vadd.f32 %v1724, %v2311
        %v2313 = vpop.f32.mrb[0].mxu0
        %2314 = vmatprep.mubr.f32.mxu0 0.0
        %2315 = vmatmul.mubr.f32.gmra.mrb[0].mxu0 %v1811
        %v2316 = vpop.f32.mrb[0].mxu0
        %v2317 = vadd.f32 %v1724, %v2316
        %v2318 = vpop.f32.mrb[0].mxu0
        %2319 = vmatprep.mubr.f32.mxu0 0.0
        %2320 = vmatmul.mubr.f32.gmra.mrb[0].mxu0 %v1814
        %v2321 = vpop.f32.mrb[0].mxu0
        %v2322 = vadd.f32 %v1724, %v2321
        %v2323 = vpop.f32.mrb[0].mxu0
        %2324 = vmatprep.mubr.f32.mxu0 0.0
        %2325 = vmatmul.mubr.f32.gmra.mrb[0].mxu0 %v1817
        %v2326 = vpop.f32.mrb[0].mxu0
        %v2327 = vadd.f32 %v1724, %v2326
        %v2328 = vpop.f32.mrb[0].mxu0
        %2329 = vmatprep.mubr.f32.mxu0 0.0
        %2330 = vmatmul.mubr.f32.gmra.mrb[0].mxu0 %v1820
        %v2331 = vpop.f32.mrb[0].mxu0
        %v2332 = vadd.f32 %v1724, %v2331
        %v2333 = vpop.f32.mrb[0].mxu0
        %2334 = vmatprep.mubr.f32.mxu0 0.0
        %2335 = vmatmul.mubr.f32.gmra.mrb[0].mxu0 %v1823
        %v2336 = vpop.f32.mrb[0].mxu0
        %v2337 = vadd.f32 %v1724, %v2336
        %v2338 = vpop.f32.mrb[0].mxu0
        %2339 = vmatprep.mubr.f32.mxu0 0.0
        %2340 = vmatmul.mubr.f32.gmra.mrb[0].mxu0 %v1826
        %v2341 = vpop.f32.mrb[0].mxu0
        %v2342 = vadd.f32 %v1724, %v2341
        %v2343 = vpop.f32.mrb[0].mxu0
        %2344 = vmatprep.mubr.f32.mxu0 0.0
        %2345 = vmatmul.mubr.f32.gmra.mrb[0].mxu0 %v1829
        %v2346 = vpop.f32.mrb[0].mxu0
        %v2347 = vadd.f32 %v1724, %v2346
        %v2348 = vpop.f32.mrb[0].mxu0
        %2349 = vmatprep.mubr.f32.mxu0 0.0
        %2350 = vmatmul.mubr.f32.gmra.mrb[0].mxu0 %v1832
        %v2351 = vpop.f32.mrb[0].mxu0
        %v2352 = vadd.f32 %v1724, %v2351
        %v2353 = vpop.f32.mrb[0].mxu0
        %2354 = vmatprep.mubr.f32.mxu0 0.0
        %2355 = vmatmul.mubr.f32.gmra.mrb[0].mxu0 %v1835
        %v2356 = vpop.f32.mrb[0].mxu0
        %v2357 = vadd.f32 %v1724, %v2356
        %v2358 = vpop.f32.mrb[0].mxu0
        %2359 = vmatprep.mubr.f32.mxu0 0.0
        %2360 = vmatmul.mubr.f32.gmra.mrb[0].mxu0 %v1838
        %v2361 = vpop.f32.mrb[0].mxu0
        %v2362 = vadd.f32 %v1724, %v2361
        %v2363 = vpop.f32.mrb[0].mxu0
        %2364 = vmatprep.mubr.f32.mxu0 0.0
        %2365 = vmatmul.mubr.f32.gmra.mrb[0].mxu0 %v1841
        %v2366 = vpop.f32.mrb[0].mxu0
        %v2367 = vadd.f32 %v1724, %v2366
        %v2368 = vpop.f32.mrb[0].mxu0
        %2369 = vmatprep.mubr.f32.mxu0 0.0
        %2370 = vmatmul.mubr.f32.gmra.mrb[0].mxu0 %v1844
        %v2371 = vpop.f32.mrb[0].mxu0
        %v2372 = vadd.f32 %v1724, %v2371
        %v2373 = vpop.f32.mrb[0].mxu0
        %2374 = vmatprep.mubr.f32.mxu0 0.0
        %2375 = vmatmul.mubr.f32.gmra.mrb[0].mxu0 %v1847
        %v2376 = vpop.f32.mrb[0].mxu0
        %v2377 = vadd.f32 %v1724, %v2376
        %v2378 = vpop.f32.mrb[0].mxu0
        %2379 = vmatprep.mubr.f32.mxu0 0.0
        %2380 = vmatmul.mubr.f32.gmra.mrb[0].mxu0 %v1850
        %v2381 = vpop.f32.mrb[0].mxu0
        %v2382 = vadd.f32 %v1724, %v2381
        %v2383 = vpop.f32.mrb[0].mxu0
        %2384 = vmatprep.mubr.f32.mxu0 0.0
        %2385 = vmatmul.mubr.f32.gmra.mrb[0].mxu0 %v1853
        %v2386 = vpop.f32.mrb[0].mxu0
        %v2387 = vadd.f32 %v1724, %v2386
        %v2388 = vpop.f32.mrb[0].mxu0
        %2389 = vmatprep.mubr.f32.mxu0 0.0
        %2390 = vmatmul.mubr.f32.gmra.mrb[0].mxu0 %v1856
        %v2391 = vpop.f32.mrb[0].mxu0
        %v2392 = vadd.f32 %v1724, %v2391
        %v2393 = vpop.f32.mrb[0].mxu0
        %2394 = vmatprep.mubr.f32.mxu0 0.0
        %2395 = vmatmul.mubr.f32.gmra.mrb[0].mxu0 %v1859
        %v2396 = vpop.f32.mrb[0].mxu0
        %v2397 = vadd.f32 %v1724, %v2396
        %v2398 = vpop.f32.mrb[0].mxu0
        %2399 = vmatprep.mubr.f32.mxu0 0.0
        %2400 = vmatmul.mubr.f32.gmra.mrb[0].mxu0 %v1862
        %v2401 = vpop.f32.mrb[0].mxu0
        %v2402 = vadd.f32 %v1724, %v2401
        %v2403 = vpop.f32.mrb[0].mxu0
        %2404 = vmatprep.mubr.f32.mxu0 0.0
        %2405 = vmatmul.mubr.f32.gmra.mrb[0].mxu0 %v1865
        %v2406 = vpop.f32.mrb[0].mxu0
        %v2407 = vadd.f32 %v1724, %v2406
        %v2408 = vpop.f32.mrb[0].mxu0
        %2409 = vmatprep.mubr.f32.mxu0 0.0
        %2410 = vmatmul.mubr.f32.gmra.mrb[0].mxu0 %v1868
        %v2411 = vpop.f32.mrb[0].mxu0
        %v2412 = vadd.f32 %v1724, %v2411
        %v2413 = vpop.f32.mrb[0].mxu0
        %2414 = vmatprep.mubr.f32.mxu0 0.0
        %2415 = vmatmul.mubr.f32.gmra.mrb[0].mxu0 %v1871
        %v2416 = vpop.f32.mrb[0].mxu0
        %v2417 = vadd.f32 %v1724, %v2416
        %v2418 = vpop.f32.mrb[0].mxu0
        %2419 = vmatprep.mubr.f32.mxu0 0.0
        %2420 = vmatmul.mubr.f32.gmra.mrb[0].mxu0 %v1874
        %v2421 = vpop.f32.mrb[0].mxu0
        %v2422 = vadd.f32 %v1724, %v2421
        %v2423 = vpop.f32.mrb[0].mxu0
        %2424 = vmatprep.mubr.f32.mxu0 0.0
        %2425 = vmatmul.mubr.f32.gmra.mrb[0].mxu0 %v1877
        %v2426 = vpop.f32.mrb[0].mxu0
        %v2427 = vadd.f32 %v1724, %v2426
        %v2428 = vpop.f32.mrb[0].mxu0
        %2429 = vmatprep.mubr.f32.mxu0 0.0
        %2430 = vmatmul.mubr.f32.gmra.mrb[0].mxu0 %v1880
        %v2431 = vpop.f32.mrb[0].mxu0
        %v2432 = vadd.f32 %v1724, %v2431
        %v2433 = vpop.f32.mrb[0].mxu0
        %2434 = vmatprep.mubr.f32.mxu0 0.0
        %2435 = vmatmul.mubr.f32.gmra.mrb[0].mxu0 %v1883
        %v2436 = vpop.f32.mrb[0].mxu0
        %v2437 = vadd.f32 %v1724, %v2436
        %v2438 = vpop.f32.mrb[0].mxu0
        %2439 = vmatprep.mubr.f32.mxu0 0.0
        %2440 = vmatmul.mubr.f32.gmra.mrb[0].mxu0 %v1886
        %v2441 = vpop.f32.mrb[0].mxu0
        %v2442 = vadd.f32 %v1724, %v2441
        %v2443 = vpop.f32.mrb[0].mxu0
        %2444 = vmatprep.mubr.f32.mxu0 0.0
        %2445 = vmatmul.mubr.f32.gmra.mrb[0].mxu0 %v1889
        %v2446 = vpop.f32.mrb[0].mxu0
        %v2447 = vadd.f32 %v1724, %v2446
        %v2448 = vpop.f32.mrb[0].mxu0
        %2449 = vmatprep.mubr.f32.mxu0 0.0
        %2450 = vmatmul.mubr.f32.gmra.mrb[0].mxu0 %v1892
        %v2451 = vpop.f32.mrb[0].mxu0
        %v2452 = vadd.f32 %v1724, %v2451
        %v2453 = vpop.f32.mrb[0].mxu0
        %2454 = vmatprep.mubr.f32.mxu0 0.0
        %2455 = vmatmul.mubr.f32.gmra.mrb[0].mxu0 %v1895
        %v2456 = vpop.f32.mrb[0].mxu0
        %v2457 = vadd.f32 %v1724, %v2456
        %v2458 = vpop.f32.mrb[0].mxu0
        %2459 = vmatprep.mubr.f32.mxu0 0.0
        %2460 = vmatmul.mubr.f32.gmra.mrb[0].mxu0 %v1898
        %v2461 = vpop.f32.mrb[0].mxu0
        %v2462 = vadd.f32 %v1724, %v2461
        %v2463 = vpop.f32.mrb[0].mxu0
        %2464 = vmatprep.mubr.f32.mxu0 0.0
        %2465 = vmatmul.mubr.f32.gmra.mrb[0].mxu0 %v1901
        %v2466 = vpop.f32.mrb[0].mxu0
        %v2467 = vadd.f32 %v1724, %v2466
        %v2468 = vpop.f32.mrb[0].mxu0
        %2469 = vmatprep.mubr.f32.mxu0 0.0
        %2470 = vmatmul.mubr.f32.gmra.mrb[0].mxu0 %v1904
        %v2471 = vpop.f32.mrb[0].mxu0
        %v2472 = vadd.f32 %v1724, %v2471
        %v2473 = vpop.f32.mrb[0].mxu0
        %2474 = vmatprep.mubr.f32.mxu0 0.0
        %2475 = vmatmul.mubr.f32.gmra.mrb[0].mxu0 %v1907
        %v2476 = vpop.f32.mrb[0].mxu0
        %v2477 = vadd.f32 %v1724, %v2476
        %v2478 = vpop.f32.mrb[0].mxu0
        %2479 = vmatprep.mubr.f32.mxu0 0.0
        %2480 = vmatmul.mubr.f32.gmra.mrb[0].mxu0 %v1910
        %v2481 = vpop.f32.mrb[0].mxu0
        %v2482 = vadd.f32 %v1724, %v2481
        %v2483 = vpop.f32.mrb[0].mxu0
        %2484 = vmatprep.mubr.f32.mxu0 0.0
        %2485 = vmatmul.mubr.f32.gmra.mrb[0].mxu0 %v1913
        %v2486 = vpop.f32.mrb[0].mxu0
        %v2487 = vadd.f32 %v1724, %v2486
        %v2488 = vpop.f32.mrb[0].mxu0
        %2489 = vmatprep.mubr.f32.mxu0 0.0
        %2490 = vmatmul.mubr.f32.gmra.mrb[0].mxu0 %v1916
        %v2491 = vpop.f32.mrb[0].mxu0
        %v2492 = vadd.f32 %v1724, %v2491
        %v2493 = vpop.f32.mrb[0].mxu0
        %2494 = vmatprep.mubr.f32.mxu0 0.0
        %2495 = vmatmul.mubr.f32.gmra.mrb[0].mxu0 %v1919
        %v2496 = vpop.f32.mrb[0].mxu0
        %v2497 = vadd.f32 %v1724, %v2496
        %v2498 = vpop.f32.mrb[0].mxu0
        %2499 = vmatprep.mubr.f32.mxu0 0.0
        %2500 = vmatmul.mubr.f32.gmra.mrb[0].mxu0 %v1922
        %v2501 = vpop.f32.mrb[0].mxu0
        %v2502 = vadd.f32 %v1724, %v2501
        %v2503 = vpop.f32.mrb[0].mxu0
        %2504 = vmatprep.mubr.f32.mxu0 0.0
        %2505 = vmatmul.mubr.f32.gmra.mrb[0].mxu0 %v1925
        %v2506 = vpop.f32.mrb[0].mxu0
        %v2507 = vadd.f32 %v1724, %v2506
        %v2508 = vpop.f32.mrb[0].mxu0
        %2509 = vmatprep.mubr.f32.mxu0 0.0
        %2510 = vmatmul.mubr.f32.gmra.mrb[0].mxu0 %v1928
        %v2511 = vpop.f32.mrb[0].mxu0
        %v2512 = vadd.f32 %v1724, %v2511
        %v2513 = vpop.f32.mrb[0].mxu0
        %2514 = vmatprep.mubr.f32.mxu0 0.0
        %2515 = vmatmul.mubr.f32.gmra.mrb[0].mxu0 %v1931
        %v2516 = vpop.f32.mrb[0].mxu0
        %v2517 = vadd.f32 %v1724, %v2516
        %v2518 = vpop.f32.mrb[0].mxu0
        %2519 = vmatprep.mubr.f32.mxu0 0.0
        %2520 = vmatmul.mubr.f32.gmra.mrb[0].mxu0 %v1934
        %v2521 = vpop.f32.mrb[0].mxu0
        %v2522 = vadd.f32 %v1724, %v2521
        %v2523 = vpop.f32.mrb[0].mxu0
        %2524 = vmatprep.mubr.f32.mxu0 0.0
        %2525 = vmatmul.mubr.f32.gmra.mrb[0].mxu0 %v1937
        %v2526 = vpop.f32.mrb[0].mxu0
        %v2527 = vadd.f32 %v1724, %v2526
        %v2528 = vpop.f32.mrb[0].mxu0
        %2529 = vmatprep.mubr.f32.mxu0 0.0
        %2530 = vmatmul.mubr.f32.gmra.mrb[0].mxu0 %v1940
        %v2531 = vpop.f32.mrb[0].mxu0
        %v2532 = vadd.f32 %v1724, %v2531
        %v2533 = vpop.f32.mrb[0].mxu0
        %2534 = vmatprep.mubr.f32.mxu0 0.0
        %2535 = vmatmul.mubr.f32.gmra.mrb[0].mxu0 %v1943
        %v2536 = vpop.f32.mrb[0].mxu0
        %v2537 = vadd.f32 %v1724, %v2536
        %v2538 = vpop.f32.mrb[0].mxu0
        %2539 = vmatprep.mubr.f32.mxu0 0.0
        %2540 = vmatmul.mubr.f32.gmra.mrb[0].mxu0 %v1946
        %v2541 = vpop.f32.mrb[0].mxu0
        %v2542 = vadd.f32 %v1724, %v2541
        %v2543 = vpop.f32.mrb[0].mxu0
        %2544 = vmatprep.mubr.f32.mxu0 0.0
        %2545 = vmatmul.mubr.f32.gmra.mrb[0].mxu0 %v1949
        %v2546 = vpop.f32.mrb[0].mxu0
        %v2547 = vadd.f32 %v1724, %v2546
        %v2548 = vpop.f32.mrb[0].mxu0
        %2549 = vmatprep.mubr.f32.mxu0 0.0
        %2550 = vmatmul.mubr.f32.gmra.mrb[0].mxu0 %v1952
        %v2551 = vpop.f32.mrb[0].mxu0
        %v2552 = vadd.f32 %v1724, %v2551
        %v2553 = vpop.f32.mrb[0].mxu0
        %2554 = vmatprep.mubr.f32.mxu0 0.0
        %2555 = vmatmul.mubr.f32.gmra.mrb[0].mxu0 %v1955
        %v2556 = vpop.f32.mrb[0].mxu0
        %v2557 = vadd.f32 %v1724, %v2556
        %v2558 = vpop.f32.mrb[0].mxu0
        %2559 = vmatprep.mubr.f32.mxu0 0.0
        %2560 = vmatmul.mubr.f32.gmra.mrb[0].mxu0 %v1958
        %v2561 = vpop.f32.mrb[0].mxu0
        %v2562 = vadd.f32 %v1724, %v2561
        %v2563 = vpop.f32.mrb[0].mxu0
        %2564 = vmatprep.mubr.f32.mxu0 0.0
        %2565 = vmatmul.mubr.f32.gmra.mrb[0].mxu0 %v1961
        %v2566 = vpop.f32.mrb[0].mxu0
        %v2567 = vadd.f32 %v1724, %v2566
        %v2568 = vpop.f32.mrb[0].mxu0
        %2569 = vmatprep.mubr.f32.mxu0 0.0
        %2570 = vmatmul.mubr.f32.gmra.mrb[0].mxu0 %v1964
        %v2571 = vpop.f32.mrb[0].mxu0
        %v2572 = vadd.f32 %v1724, %v2571
        %v2573 = vpop.f32.mrb[0].mxu0
        %2574 = vmatprep.mubr.f32.mxu0 0.0
        %2575 = vmatmul.mubr.f32.gmra.mrb[0].mxu0 %v1967
        %v2576 = vpop.f32.mrb[0].mxu0
        %v2577 = vadd.f32 %v1724, %v2576
        %v2578 = vpop.f32.mrb[0].mxu0
        %2579 = vmatprep.mubr.f32.mxu0 0.0
        %2580 = vmatmul.mubr.f32.gmra.mrb[0].mxu0 %v1970
        %v2581 = vpop.f32.mrb[0].mxu0
        %v2582 = vadd.f32 %v1724, %v2581
        %v2583 = vpop.f32.mrb[0].mxu0
        %2584 = vmatprep.mubr.f32.mxu0 0.0
        %2585 = vmatmul.mubr.f32.gmra.mrb[0].mxu0 %v1973
        %v2586 = vpop.f32.mrb[0].mxu0
        %v2587 = vadd.f32 %v1724, %v2586
        %v2588 = vpop.f32.mrb[0].mxu0
        %2589 = vmatprep.mubr.f32.mxu0 0.0
        %2590 = vmatmul.mubr.f32.gmra.mrb[0].mxu0 %v1976
        %v2591 = vpop.f32.mrb[0].mxu0
        %v2592 = vadd.f32 %v1724, %v2591
        %v2593 = vpop.f32.mrb[0].mxu0
        %2594 = vmatprep.mubr.f32.mxu0 0.0
        %2595 = vmatmul.mubr.f32.gmra.mrb[0].mxu0 %v1979
        %v2596 = vpop.f32.mrb[0].mxu0
        %v2597 = vadd.f32 %v1724, %v2596
        %v2598 = vpop.f32.mrb[0].mxu0
        %2599 = vmatprep.mubr.f32.mxu0 0.0
        %2600 = vmatmul.mubr.f32.gmra.mrb[0].mxu0 %v1982
        %v2601 = vpop.f32.mrb[0].mxu0
        %v2602 = vadd.f32 %v1724, %v2601
        %v2603 = vpop.f32.mrb[0].mxu0
        %2604 = vmatprep.mubr.f32.mxu0 0.0
        %2605 = vmatmul.mubr.f32.gmra.mrb[0].mxu0 %v1985
        %v2606 = vpop.f32.mrb[0].mxu0
        %v2607 = vadd.f32 %v1724, %v2606
        %v2608 = vpop.f32.mrb[0].mxu0
        %2609 = vmatprep.mubr.f32.mxu0 0.0
        %2610 = vmatmul.mubr.f32.gmra.mrb[0].mxu0 %v1988
        %v2611 = vpop.f32.mrb[0].mxu0
        %v2612 = vadd.f32 %v1724, %v2611
        %v2613 = vpop.f32.mrb[0].mxu0
        %2614 = vmatprep.mubr.f32.mxu0 0.0
        %2615 = vmatmul.mubr.f32.gmra.mrb[0].mxu0 %v1991
        %v2616 = vpop.f32.mrb[0].mxu0
        %v2617 = vadd.f32 %v1724, %v2616
        %v2618 = vpop.f32.mrb[0].mxu0
        %2619 = vmatprep.mubr.f32.mxu0 0.0
        %2620 = vmatmul.mubr.f32.gmra.mrb[0].mxu0 %v1994
        %v2621 = vpop.f32.mrb[0].mxu0
        %v2622 = vadd.f32 %v1724, %v2621
        %v2623 = vpop.f32.mrb[0].mxu0
        %2624 = vmatprep.mubr.f32.mxu0 0.0
        %2625 = vmatmul.mubr.f32.gmra.mrb[0].mxu0 %v1997
        %v2626 = vpop.f32.mrb[0].mxu0
        %v2627 = vadd.f32 %v1724, %v2626
        %v2628 = vpop.f32.mrb[0].mxu0
        %2629 = vmatprep.mubr.f32.mxu0 0.0
        %2630 = vmatmul.mubr.f32.gmra.mrb[0].mxu0 %v2000
        %v2631 = vpop.f32.mrb[0].mxu0
        %v2632 = vadd.f32 %v1724, %v2631
        %v2633 = vpop.f32.mrb[0].mxu0
        %2634 = vmatprep.mubr.f32.mxu0 0.0
        %2635 = vmatmul.mubr.f32.gmra.mrb[0].mxu0 %v2003
        %v2636 = vpop.f32.mrb[0].mxu0
        %v2637 = vadd.f32 %v1724, %v2636
        %v2638 = vpop.f32.mrb[0].mxu0
        %2639 = vmatprep.mubr.f32.mxu0 0.0
        %2640 = vmatmul.mubr.f32.gmra.mrb[0].mxu0 %v2006
        %v2641 = vpop.f32.mrb[0].mxu0
        %v2642 = vadd.f32 %v1724, %v2641
        %v2643 = vpop.f32.mrb[0].mxu0
        %2644 = vmatprep.mubr.f32.mxu0 0.0
        %2645 = vmatmul.mubr.f32.gmra.mrb[0].mxu0 %v2009
        %v2646 = vpop.f32.mrb[0].mxu0
        %v2647 = vadd.f32 %v1724, %v2646
        %v2648 = vpop.f32.mrb[0].mxu0
        %2649 = vmatprep.mubr.f32.mxu0 0.0
        %2650 = vmatmul.mubr.f32.gmra.mrb[0].mxu0 %v2012
        %v2651 = vpop.f32.mrb[0].mxu0
        %v2652 = vadd.f32 %v1724, %v2651
        %v2653 = vpop.f32.mrb[0].mxu0
        %2654 = vmatprep.mubr.f32.mxu0 0.0
        %2655 = vmatmul.mubr.f32.gmra.mrb[0].mxu0 %v2015
        %v2656 = vpop.f32.mrb[0].mxu0
        %v2657 = vadd.f32 %v1724, %v2656
        %v2658 = vpop.f32.mrb[0].mxu0
        %2659 = vmatprep.mubr.f32.mxu0 0.0
        %2660 = vmatmul.mubr.f32.gmra.mrb[0].mxu0 %v2018
        %v2661 = vpop.f32.mrb[0].mxu0
        %v2662 = vadd.f32 %v1724, %v2661
        %v2663 = vpop.f32.mrb[0].mxu0
        %2664 = vmatprep.mubr.f32.mxu0 0.0
        %2665 = vmatmul.mubr.f32.gmra.mrb[0].mxu0 %v2021
        %v2666 = vpop.f32.mrb[0].mxu0
        %v2667 = vadd.f32 %v1724, %v2666
        %v2668 = vpop.f32.mrb[0].mxu0
        %2669 = vmatprep.mubr.f32.mxu0 0.0
        %2670 = vmatmul.mubr.f32.gmra.mrb[0].mxu0 %v2024
        %v2671 = vpop.f32.mrb[0].mxu0
        %v2672 = vadd.f32 %v1724, %v2671
        %v2673 = vpop.f32.mrb[0].mxu0
        %2674 = vmatprep.mubr.f32.mxu0 0.0
        %2675 = vmatmul.mubr.f32.gmra.mrb[0].mxu0 %v2027
        %v2676 = vpop.f32.mrb[0].mxu0
        %v2677 = vadd.f32 %v1724, %v2676
        %v2678 = vpop.f32.mrb[0].mxu0
        %2679 = vmatprep.mubr.f32.mxu0 0.0
        %2680 = vmatmul.mubr.f32.gmra.mrb[0].mxu0 %v2030
        %v2681 = vpop.f32.mrb[0].mxu0
        %v2682 = vadd.f32 %v1724, %v2681
        %v2683 = vpop.f32.mrb[0].mxu0
        %2684 = vmatprep.mubr.f32.mxu0 0.0
        %2685 = vmatmul.mubr.f32.gmra.mrb[0].mxu0 %v2033
        %v2686 = vpop.f32.mrb[0].mxu0
        %v2687 = vadd.f32 %v1724, %v2686
        %v2688 = vpop.f32.mrb[0].mxu0
        %2689 = vmatprep.mubr.f32.mxu0 0.0
        %2690 = vmatmul.mubr.f32.gmra.mrb[0].mxu0 %v2036
        %v2691 = vpop.f32.mrb[0].mxu0
        %v2692 = vadd.f32 %v1724, %v2691
        %v2693 = vpop.f32.mrb[0].mxu0
        %2694 = vmatprep.mubr.f32.mxu0 0.0
        %2695 = vmatmul.mubr.f32.gmra.mrb[0].mxu0 %v2039
        %v2696 = vpop.f32.mrb[0].mxu0
        %v2697 = vadd.f32 %v1724, %v2696
        %v2698 = vpop.f32.mrb[0].mxu0
        %2699 = vmatprep.mubr.f32.mxu0 0.0
        %2700 = vmatmul.mubr.f32.gmra.mrb[0].mxu0 %v2042
        %v2701 = vpop.f32.mrb[0].mxu0
        %v2702 = vadd.f32 %v1724, %v2701
        %v2703 = vpop.f32.mrb[0].mxu0
        %2704 = vmatprep.mubr.f32.mxu0 0.0
        %2705 = vmatmul.mubr.f32.gmra.mrb[0].mxu0 %v2045
        %v2706 = vpop.f32.mrb[0].mxu0
        %v2707 = vadd.f32 %v1724, %v2706
        %v2708 = vpop.f32.mrb[0].mxu0
        %2709 = vmatprep.mubr.f32.mxu0 0.0
        %2710 = vmatmul.mubr.f32.gmra.mrb[0].mxu0 %v2048
        %v2711 = vpop.f32.mrb[0].mxu0
        %v2712 = vadd.f32 %v1724, %v2711
        %v2713 = vpop.f32.mrb[0].mxu0
        %2714 = vmatprep.mubr.f32.mxu0 0.0
        %2715 = vmatmul.mubr.f32.gmra.mrb[0].mxu0 %v2051
        %v2716 = vpop.f32.mrb[0].mxu0
        %v2717 = vadd.f32 %v1724, %v2716
        %v2718 = vpop.f32.mrb[0].mxu0
        %2719 = vmatprep.mubr.f32.mxu0 0.0
        %2720 = vmatmul.mubr.f32.gmra.mrb[0].mxu0 %v2054
        %v2721 = vpop.f32.mrb[0].mxu0
        %v2722 = vadd.f32 %v1724, %v2721
        %v2723 = vpop.f32.mrb[0].mxu0
        %2724 = vmatprep.mubr.f32.mxu0 0.0
        %2725 = vmatmul.mubr.f32.gmra.mrb[0].mxu0 %v2057
        %v2726 = vpop.f32.mrb[0].mxu0
        %v2727 = vadd.f32 %v1724, %v2726
        %v2728 = vpop.f32.mrb[0].mxu0
        %2729 = vmatprep.mubr.f32.mxu0 0.0
        %2730 = vmatmul.mubr.f32.gmra.mrb[0].mxu0 %v2060
        %v2731 = vpop.f32.mrb[0].mxu0
        %v2732 = vadd.f32 %v1724, %v2731
        %v2733 = vpop.f32.mrb[0].mxu0
        %2734 = vmatprep.mubr.f32.mxu0 0.0
        %2735 = vmatmul.mubr.f32.gmra.mrb[0].mxu0 %v2063
        %v2736 = vpop.f32.mrb[0].mxu0
        %v2737 = vadd.f32 %v1724, %v2736
        %v2738 = vpop.f32.mrb[0].mxu0
        %2739 = vmatprep.mubr.f32.mxu0 0.0
        %2740 = vmatmul.mubr.f32.gmra.mrb[0].mxu0 %v2066
        %v2741 = vpop.f32.mrb[0].mxu0
        %v2742 = vadd.f32 %v1724, %v2741
        %v2743 = vpop.f32.mrb[0].mxu0
        %2744 = vmatprep.mubr.f32.mxu0 0.0
        %2745 = vmatmul.mubr.f32.gmra.mrb[0].mxu0 %v2069
        %v2746 = vpop.f32.mrb[0].mxu0
        %v2747 = vadd.f32 %v1724, %v2746
        %v2748 = vpop.f32.mrb[0].mxu0
        %2749 = vmatprep.mubr.f32.mxu0 0.0
        %2750 = vmatmul.mubr.f32.gmra.mrb[0].mxu0 %v2072
        %v2751 = vpop.f32.mrb[0].mxu0
        %v2752 = vadd.f32 %v1724, %v2751
        %v2753 = vpop.f32.mrb[0].mxu0
        %2754 = vmatprep.mubr.f32.mxu0 0.0
        %2755 = vmatmul.mubr.f32.gmra.mrb[0].mxu0 %v2075
        %v2756 = vpop.f32.mrb[0].mxu0
        %v2757 = vadd.f32 %v1724, %v2756
        %v2758 = vpop.f32.mrb[0].mxu0
        %2759 = vmatprep.mubr.f32.mxu0 0.0
        %2760 = vmatmul.mubr.f32.gmra.mrb[0].mxu0 %v2078
        %v2761 = vpop.f32.mrb[0].mxu0
        %v2762 = vadd.f32 %v1724, %v2761
        %v2763 = vpop.f32.mrb[0].mxu0
        %2764 = vmatprep.mubr.f32.mxu0 0.0
        %2765 = vmatmul.mubr.f32.gmra.mrb[0].mxu0 %v2081
        %v2766 = vpop.f32.mrb[0].mxu0
        %v2767 = vadd.f32 %v1724, %v2766
        %v2768 = vpop.f32.mrb[0].mxu0
        %2769 = vmatprep.mubr.f32.mxu0 0.0
        %2770 = vmatmul.mubr.f32.gmra.mrb[0].mxu0 %v2084
        %v2771 = vpop.f32.mrb[0].mxu0
        %v2772 = vadd.f32 %v1724, %v2771
        %v2773 = vpop.f32.mrb[0].mxu0
        %2774 = vmatprep.mubr.f32.mxu0 0.0
        %2775 = vmatmul.mubr.f32.gmra.mrb[0].mxu0 %v2087
        %v2776 = vpop.f32.mrb[0].mxu0
        %v2777 = vadd.f32 %v1724, %v2776
        %v2778 = vpop.f32.mrb[0].mxu0
        %2779 = vmatprep.mubr.f32.mxu0 0.0
        %2780 = vmatmul.mubr.f32.gmra.mrb[0].mxu0 %v2090
        %v2781 = vpop.f32.mrb[0].mxu0
        %v2782 = vadd.f32 %v1724, %v2781
        %v2783 = vpop.f32.mrb[0].mxu0
        %2784 = vmatprep.mubr.f32.mxu0 0.0
        %2785 = vmatmul.mubr.f32.gmra.mrb[0].mxu0 %v2093
        %v2786 = vpop.f32.mrb[0].mxu0
        %v2787 = vadd.f32 %v1724, %v2786
        %v2788 = vpop.f32.mrb[0].mxu0
        %2789 = vmatprep.mubr.f32.mxu0 0.0
        %2790 = vmatmul.mubr.f32.gmra.mrb[0].mxu0 %v2096
        %v2791 = vpop.f32.mrb[0].mxu0
        %v2792 = vadd.f32 %v1724, %v2791
        %v2793 = vpop.f32.mrb[0].mxu0
        %2794 = vmatprep.mubr.f32.mxu0 0.0
        %2795 = vmatmul.mubr.f32.gmra.mrb[0].mxu0 %v2099
        %v2796 = vpop.f32.mrb[0].mxu0
        %v2797 = vadd.f32 %v1724, %v2796
        %v2798 = vpop.f32.mrb[0].mxu0
        %2799 = vmatprep.mubr.f32.mxu0 0.0
        %2800 = vmatmul.mubr.f32.gmra.mrb[0].mxu0 %v2102
        %v2801 = vpop.f32.mrb[0].mxu0
        %v2802 = vadd.f32 %v1724, %v2801
        %v2803 = vpop.f32.mrb[0].mxu0
        %2804 = vmatprep.mubr.f32.mxu0 0.0
        %2805 = vmatmul.mubr.f32.gmra.mrb[0].mxu0 %v2105
        %v2806 = vpop.f32.mrb[0].mxu0
        %v2807 = vadd.f32 %v1724, %v2806
        %v2808 = vpop.f32.mrb[0].mxu0
        %2809 = vmatprep.mubr.f32.mxu0 0.0
        %2810 = vmatmul.mubr.f32.gmra.mrb[0].mxu0 %v2108
        %v2811 = vpop.f32.mrb[0].mxu0
        %v2812 = vadd.f32 %v1724, %v2811
        %v2813 = vpop.f32.mrb[0].mxu0
        %2814 = vdwg.mxu0
        %vm2815 = vcmask 130048
        %2816 = vst.msk [vmem:[%s350] sm:$0xff] %vm2815, %v949
        %2817 = vst.msk [vmem:[%s350 + $0x8] sm:$0xff] %vm2815, %v954
        %2818 = vst.msk [vmem:[%s350 + $0x10] sm:$0xff] %vm2815, %v959
        %2819 = vst.msk [vmem:[%s350 + $0x18] sm:$0xff] %vm2815, %v964
        %2820 = vst.msk [vmem:[%s350 + $0x20] sm:$0xff] %vm2815, %v969
        %2821 = vst.msk [vmem:[%s350 + $0x28] sm:$0xff] %vm2815, %v974
        %2822 = vst.msk [vmem:[%s350 + $0x30] sm:$0xff] %vm2815, %v979
        %2823 = vst.msk [vmem:[%s350 + $0x38] sm:$0xff] %vm2815, %v984
        %2824 = vst.msk [vmem:[%s350 + $0x40] sm:$0xff] %vm2815, %v989
        %2825 = vst.msk [vmem:[%s350 + $0x48] sm:$0xff] %vm2815, %v994
        %2826 = vst.msk [vmem:[%s350 + $0x50] sm:$0xff] %vm2815, %v999
        %2827 = vst.msk [vmem:[%s350 + $0x58] sm:$0xff] %vm2815, %v1004
        %2828 = vst.msk [vmem:[%s350 + $0x60] sm:$0xff] %vm2815, %v1009
        %2829 = vst.msk [vmem:[%s350 + $0x68] sm:$0xff] %vm2815, %v1014
        %2830 = vst.msk [vmem:[%s350 + $0x70] sm:$0xff] %vm2815, %v1019
        %2831 = vst.msk [vmem:[%s350 + $0x78] sm:$0xff] %vm2815, %v1024
        %2832 = vst.msk [vmem:[%s350 + $0x80] sm:$0xff] %vm2815, %v1029
        %2833 = vst.msk [vmem:[%s350 + $0x88] sm:$0xff] %vm2815, %v1034
        %2834 = vst.msk [vmem:[%s350 + $0x90] sm:$0xff] %vm2815, %v1039
        %2835 = vst.msk [vmem:[%s350 + $0x98] sm:$0xff] %vm2815, %v1044
        %2836 = vst.msk [vmem:[%s350 + $0xa0] sm:$0xff] %vm2815, %v1049
        %2837 = vst.msk [vmem:[%s350 + $0xa8] sm:$0xff] %vm2815, %v1054
        %2838 = vst.msk [vmem:[%s350 + $0xb0] sm:$0xff] %vm2815, %v1059
        %2839 = vst.msk [vmem:[%s350 + $0xb8] sm:$0xff] %vm2815, %v1064
        %2840 = vst.msk [vmem:[%s350 + $0xc0] sm:$0xff] %vm2815, %v1069
        %2841 = vst.msk [vmem:[%s350 + $0xc8] sm:$0xff] %vm2815, %v1074
        %2842 = vst.msk [vmem:[%s350 + $0xd0] sm:$0xff] %vm2815, %v1079
        %2843 = vst.msk [vmem:[%s350 + $0xd8] sm:$0xff] %vm2815, %v1084
        %2844 = vst.msk [vmem:[%s350 + $0xe0] sm:$0xff] %vm2815, %v1089
        %2845 = vst.msk [vmem:[%s350 + $0xe8] sm:$0xff] %vm2815, %v1094
        %2846 = vst.msk [vmem:[%s350 + $0xf0] sm:$0xff] %vm2815, %v1099
        %2847 = vst.msk [vmem:[%s350 + $0xf8] sm:$0xff] %vm2815, %v1104
        %2848 = vst.msk [vmem:[%s350 + $0x100] sm:$0xff] %vm2815, %v1109
        %2849 = vst.msk [vmem:[%s350 + $0x108] sm:$0xff] %vm2815, %v1114
        %2850 = vst.msk [vmem:[%s350 + $0x110] sm:$0xff] %vm2815, %v1119
        %2851 = vst.msk [vmem:[%s350 + $0x118] sm:$0xff] %vm2815, %v1124
        %2852 = vst.msk [vmem:[%s350 + $0x120] sm:$0xff] %vm2815, %v1129
        %2853 = vst.msk [vmem:[%s350 + $0x128] sm:$0xff] %vm2815, %v1134
        %2854 = vst.msk [vmem:[%s350 + $0x130] sm:$0xff] %vm2815, %v1139
        %2855 = vst.msk [vmem:[%s350 + $0x138] sm:$0xff] %vm2815, %v1144
        %2856 = vst.msk [vmem:[%s350 + $0x140] sm:$0xff] %vm2815, %v1149
        %2857 = vst.msk [vmem:[%s350 + $0x148] sm:$0xff] %vm2815, %v1154
        %2858 = vst.msk [vmem:[%s350 + $0x150] sm:$0xff] %vm2815, %v1159
        %2859 = vst.msk [vmem:[%s350 + $0x158] sm:$0xff] %vm2815, %v1164
        %2860 = vst.msk [vmem:[%s350 + $0x160] sm:$0xff] %vm2815, %v1169
        %2861 = vst.msk [vmem:[%s350 + $0x168] sm:$0xff] %vm2815, %v1174
        %2862 = vst.msk [vmem:[%s350 + $0x170] sm:$0xff] %vm2815, %v1179
        %2863 = vst.msk [vmem:[%s350 + $0x178] sm:$0xff] %vm2815, %v1184
        %2864 = vst.msk [vmem:[%s350 + $0x180] sm:$0xff] %vm2815, %v1189
        %2865 = vst.msk [vmem:[%s350 + $0x188] sm:$0xff] %vm2815, %v1194
        %2866 = vst.msk [vmem:[%s350 + $0x190] sm:$0xff] %vm2815, %v1199
        %2867 = vst.msk [vmem:[%s350 + $0x198] sm:$0xff] %vm2815, %v1204
        %2868 = vst.msk [vmem:[%s350 + $0x1a0] sm:$0xff] %vm2815, %v1209
        %2869 = vst.msk [vmem:[%s350 + $0x1a8] sm:$0xff] %vm2815, %v1214
        %2870 = vst.msk [vmem:[%s350 + $0x1b0] sm:$0xff] %vm2815, %v1219
        %2871 = vst.msk [vmem:[%s350 + $0x1b8] sm:$0xff] %vm2815, %v1224
        %2872 = vst.msk [vmem:[%s350 + $0x1c0] sm:$0xff] %vm2815, %v1229
        %2873 = vst.msk [vmem:[%s350 + $0x1c8] sm:$0xff] %vm2815, %v1234
        %2874 = vst.msk [vmem:[%s350 + $0x1d0] sm:$0xff] %vm2815, %v1239
        %2875 = vst.msk [vmem:[%s350 + $0x1d8] sm:$0xff] %vm2815, %v1244
        %2876 = vst.msk [vmem:[%s350 + $0x1e0] sm:$0xff] %vm2815, %v1249
        %2877 = vst.msk [vmem:[%s350 + $0x1e8] sm:$0xff] %vm2815, %v1254
        %2878 = vst.msk [vmem:[%s350 + $0x1f0] sm:$0xff] %vm2815, %v1259
        %2879 = vst.msk [vmem:[%s350 + $0x1f8] sm:$0xff] %vm2815, %v1264
        %2880 = vst.msk [vmem:[%s350 + $0x200] sm:$0xff] %vm2815, %v1269
        %2881 = vst.msk [vmem:[%s350 + $0x208] sm:$0xff] %vm2815, %v1274
        %2882 = vst.msk [vmem:[%s350 + $0x210] sm:$0xff] %vm2815, %v1279
        %2883 = vst.msk [vmem:[%s350 + $0x218] sm:$0xff] %vm2815, %v1284
        %2884 = vst.msk [vmem:[%s350 + $0x220] sm:$0xff] %vm2815, %v1289
        %2885 = vst.msk [vmem:[%s350 + $0x228] sm:$0xff] %vm2815, %v1294
        %2886 = vst.msk [vmem:[%s350 + $0x230] sm:$0xff] %vm2815, %v1299
        %2887 = vst.msk [vmem:[%s350 + $0x238] sm:$0xff] %vm2815, %v1304
        %2888 = vst.msk [vmem:[%s350 + $0x240] sm:$0xff] %vm2815, %v1309
        %2889 = vst.msk [vmem:[%s350 + $0x248] sm:$0xff] %vm2815, %v1314
        %2890 = vst.msk [vmem:[%s350 + $0x250] sm:$0xff] %vm2815, %v1319
        %2891 = vst.msk [vmem:[%s350 + $0x258] sm:$0xff] %vm2815, %v1324
        %2892 = vst.msk [vmem:[%s350 + $0x260] sm:$0xff] %vm2815, %v1329
        %2893 = vst.msk [vmem:[%s350 + $0x268] sm:$0xff] %vm2815, %v1334
        %2894 = vst.msk [vmem:[%s350 + $0x270] sm:$0xff] %vm2815, %v1339
        %2895 = vst.msk [vmem:[%s350 + $0x278] sm:$0xff] %vm2815, %v1344
        %2896 = vst.msk [vmem:[%s350 + $0x280] sm:$0xff] %vm2815, %v1349
        %2897 = vst.msk [vmem:[%s350 + $0x288] sm:$0xff] %vm2815, %v1354
        %2898 = vst.msk [vmem:[%s350 + $0x290] sm:$0xff] %vm2815, %v1359
        %2899 = vst.msk [vmem:[%s350 + $0x298] sm:$0xff] %vm2815, %v1364
        %2900 = vst.msk [vmem:[%s350 + $0x2a0] sm:$0xff] %vm2815, %v1369
        %2901 = vst.msk [vmem:[%s350 + $0x2a8] sm:$0xff] %vm2815, %v1374
        %2902 = vst.msk [vmem:[%s350 + $0x2b0] sm:$0xff] %vm2815, %v1379
        %2903 = vst.msk [vmem:[%s350 + $0x2b8] sm:$0xff] %vm2815, %v1384
        %2904 = vst.msk [vmem:[%s350 + $0x2c0] sm:$0xff] %vm2815, %v1389
        %2905 = vst.msk [vmem:[%s350 + $0x2c8] sm:$0xff] %vm2815, %v1394
        %2906 = vst.msk [vmem:[%s350 + $0x2d0] sm:$0xff] %vm2815, %v1399
        %2907 = vst.msk [vmem:[%s350 + $0x2d8] sm:$0xff] %vm2815, %v1404
        %2908 = vst.msk [vmem:[%s350 + $0x2e0] sm:$0xff] %vm2815, %v1409
        %2909 = vst.msk [vmem:[%s350 + $0x2e8] sm:$0xff] %vm2815, %v1414
        %2910 = vst.msk [vmem:[%s350 + $0x2f0] sm:$0xff] %vm2815, %v1419
        %2911 = vst.msk [vmem:[%s350 + $0x2f8] sm:$0xff] %vm2815, %v1424
        %2912 = vst.msk [vmem:[%s350 + $0x300] sm:$0xff] %vm2815, %v1429
        %2913 = vst.msk [vmem:[%s350 + $0x308] sm:$0xff] %vm2815, %v1434
        %2914 = vst.msk [vmem:[%s350 + $0x310] sm:$0xff] %vm2815, %v1439
        %2915 = vst.msk [vmem:[%s350 + $0x318] sm:$0xff] %vm2815, %v1444
        %2916 = vst.msk [vmem:[%s350 + $0x320] sm:$0xff] %vm2815, %v1449
        %2917 = vst.msk [vmem:[%s350 + $0x328] sm:$0xff] %vm2815, %v1454
        %2918 = vst.msk [vmem:[%s350 + $0x330] sm:$0xff] %vm2815, %v1459
        %2919 = vst.msk [vmem:[%s350 + $0x338] sm:$0xff] %vm2815, %v1464
        %2920 = vst.msk [vmem:[%s350 + $0x340] sm:$0xff] %vm2815, %v1469
        %2921 = vst.msk [vmem:[%s350 + $0x348] sm:$0xff] %vm2815, %v1474
        %2922 = vst.msk [vmem:[%s350 + $0x350] sm:$0xff] %vm2815, %v1479
        %2923 = vst.msk [vmem:[%s350 + $0x358] sm:$0xff] %vm2815, %v1484
        %2924 = vst.msk [vmem:[%s350 + $0x360] sm:$0xff] %vm2815, %v1489
        %2925 = vst.msk [vmem:[%s350 + $0x368] sm:$0xff] %vm2815, %v1494
        %2926 = vst.msk [vmem:[%s350 + $0x370] sm:$0xff] %vm2815, %v1499
        %2927 = vst.msk [vmem:[%s350 + $0x378] sm:$0xff] %vm2815, %v1504
        %2928 = vst.msk [vmem:[%s350 + $0x380] sm:$0xff] %vm2815, %v1509
        %2929 = vst.msk [vmem:[%s350 + $0x388] sm:$0xff] %vm2815, %v1514
        %2930 = vst.msk [vmem:[%s350 + $0x390] sm:$0xff] %vm2815, %v1519
        %2931 = vst.msk [vmem:[%s350 + $0x398] sm:$0xff] %vm2815, %v1524
        %2932 = vst.msk [vmem:[%s350 + $0x3a0] sm:$0xff] %vm2815, %v1529
        %2933 = vst.msk [vmem:[%s350 + $0x3a8] sm:$0xff] %vm2815, %v1534
        %2934 = vst.msk [vmem:[%s350 + $0x3b0] sm:$0xff] %vm2815, %v1539
        %2935 = vst.msk [vmem:[%s350 + $0x3b8] sm:$0xff] %vm2815, %v1544
        %2936 = vst.msk [vmem:[%s350 + $0x3c0] sm:$0xff] %vm2815, %v1549
        %2937 = vst.msk [vmem:[%s350 + $0x3c8] sm:$0xff] %vm2815, %v1554
        %2938 = vst.msk [vmem:[%s350 + $0x3d0] sm:$0xff] %vm2815, %v1559
        %2939 = vst.msk [vmem:[%s350 + $0x3d8] sm:$0xff] %vm2815, %v1564
        %2940 = vst.msk [vmem:[%s350 + $0x3e0] sm:$0xff] %vm2815, %v1569
        %2941 = vst.msk [vmem:[%s350 + $0x3e8] sm:$0xff] %vm2815, %v1574
        %2942 = vst.msk [vmem:[%s350 + $0x3f0] sm:$0xff] %vm2815, %v1579
        %2943 = vst.msk [vmem:[%s350 + $0x3f8] sm:$0xff] %vm2815, %v1584
        %2944 = vst.msk [vmem:[%s356] sm:$0xff] %vm497, %v2177
        %2945 = vst.msk [vmem:[%s356 + $0x8] sm:$0xff] %vm497, %v2182
        %2946 = vst.msk [vmem:[%s356 + $0x10] sm:$0xff] %vm497, %v2187
        %2947 = vst.msk [vmem:[%s356 + $0x18] sm:$0xff] %vm497, %v2192
        %2948 = vst.msk [vmem:[%s356 + $0x20] sm:$0xff] %vm497, %v2197
        %2949 = vst.msk [vmem:[%s356 + $0x28] sm:$0xff] %vm497, %v2202
        %2950 = vst.msk [vmem:[%s356 + $0x30] sm:$0xff] %vm497, %v2207
        %2951 = vst.msk [vmem:[%s356 + $0x38] sm:$0xff] %vm497, %v2212
        %2952 = vst.msk [vmem:[%s356 + $0x40] sm:$0xff] %vm497, %v2217
        %2953 = vst.msk [vmem:[%s356 + $0x48] sm:$0xff] %vm497, %v2222
        %2954 = vst.msk [vmem:[%s356 + $0x50] sm:$0xff] %vm497, %v2227
        %2955 = vst.msk [vmem:[%s356 + $0x58] sm:$0xff] %vm497, %v2232
        %2956 = vst.msk [vmem:[%s356 + $0x60] sm:$0xff] %vm497, %v2237
        %2957 = vst.msk [vmem:[%s356 + $0x68] sm:$0xff] %vm497, %v2242
        %2958 = vst.msk [vmem:[%s356 + $0x70] sm:$0xff] %vm497, %v2247
        %2959 = vst.msk [vmem:[%s356 + $0x78] sm:$0xff] %vm497, %v2252
        %2960 = vst.msk [vmem:[%s356 + $0x80] sm:$0xff] %vm497, %v2257
        %2961 = vst.msk [vmem:[%s356 + $0x88] sm:$0xff] %vm497, %v2262
        %2962 = vst.msk [vmem:[%s356 + $0x90] sm:$0xff] %vm497, %v2267
        %2963 = vst.msk [vmem:[%s356 + $0x98] sm:$0xff] %vm497, %v2272
        %2964 = vst.msk [vmem:[%s356 + $0xa0] sm:$0xff] %vm497, %v2277
        %2965 = vst.msk [vmem:[%s356 + $0xa8] sm:$0xff] %vm497, %v2282
        %2966 = vst.msk [vmem:[%s356 + $0xb0] sm:$0xff] %vm497, %v2287
        %2967 = vst.msk [vmem:[%s356 + $0xb8] sm:$0xff] %vm497, %v2292
        %2968 = vst.msk [vmem:[%s356 + $0xc0] sm:$0xff] %vm497, %v2297
        %2969 = vst.msk [vmem:[%s356 + $0xc8] sm:$0xff] %vm497, %v2302
        %2970 = vst.msk [vmem:[%s356 + $0xd0] sm:$0xff] %vm497, %v2307
        %2971 = vst.msk [vmem:[%s356 + $0xd8] sm:$0xff] %vm497, %v2312
        %2972 = vst.msk [vmem:[%s356 + $0xe0] sm:$0xff] %vm497, %v2317
        %2973 = vst.msk [vmem:[%s356 + $0xe8] sm:$0xff] %vm497, %v2322
        %2974 = vst.msk [vmem:[%s356 + $0xf0] sm:$0xff] %vm497, %v2327
        %2975 = vst.msk [vmem:[%s356 + $0xf8] sm:$0xff] %vm497, %v2332
        %2976 = vst.msk [vmem:[%s356 + $0x100] sm:$0xff] %vm497, %v2337
        %2977 = vst.msk [vmem:[%s356 + $0x108] sm:$0xff] %vm497, %v2342
        %2978 = vst.msk [vmem:[%s356 + $0x110] sm:$0xff] %vm497, %v2347
        %2979 = vst.msk [vmem:[%s356 + $0x118] sm:$0xff] %vm497, %v2352
        %2980 = vst.msk [vmem:[%s356 + $0x120] sm:$0xff] %vm497, %v2357
        %2981 = vst.msk [vmem:[%s356 + $0x128] sm:$0xff] %vm497, %v2362
        %2982 = vst.msk [vmem:[%s356 + $0x130] sm:$0xff] %vm497, %v2367
        %2983 = vst.msk [vmem:[%s356 + $0x138] sm:$0xff] %vm497, %v2372
        %2984 = vst.msk [vmem:[%s356 + $0x140] sm:$0xff] %vm497, %v2377
        %2985 = vst.msk [vmem:[%s356 + $0x148] sm:$0xff] %vm497, %v2382
        %2986 = vst.msk [vmem:[%s356 + $0x150] sm:$0xff] %vm497, %v2387
        %2987 = vst.msk [vmem:[%s356 + $0x158] sm:$0xff] %vm497, %v2392
        %2988 = vst.msk [vmem:[%s356 + $0x160] sm:$0xff] %vm497, %v2397
        %2989 = vst.msk [vmem:[%s356 + $0x168] sm:$0xff] %vm497, %v2402
        %2990 = vst.msk [vmem:[%s356 + $0x170] sm:$0xff] %vm497, %v2407
        %2991 = vst.msk [vmem:[%s356 + $0x178] sm:$0xff] %vm497, %v2412
        %2992 = vst.msk [vmem:[%s356 + $0x180] sm:$0xff] %vm497, %v2417
        %2993 = vst.msk [vmem:[%s356 + $0x188] sm:$0xff] %vm497, %v2422
        %2994 = vst.msk [vmem:[%s356 + $0x190] sm:$0xff] %vm497, %v2427
        %2995 = vst.msk [vmem:[%s356 + $0x198] sm:$0xff] %vm497, %v2432
        %2996 = vst.msk [vmem:[%s356 + $0x1a0] sm:$0xff] %vm497, %v2437
        %2997 = vst.msk [vmem:[%s356 + $0x1a8] sm:$0xff] %vm497, %v2442
        %2998 = vst.msk [vmem:[%s356 + $0x1b0] sm:$0xff] %vm497, %v2447
        %2999 = vst.msk [vmem:[%s356 + $0x1b8] sm:$0xff] %vm497, %v2452
        %3000 = vst.msk [vmem:[%s356 + $0x1c0] sm:$0xff] %vm497, %v2457
        %3001 = vst.msk [vmem:[%s356 + $0x1c8] sm:$0xff] %vm497, %v2462
        %3002 = vst.msk [vmem:[%s356 + $0x1d0] sm:$0xff] %vm497, %v2467
        %3003 = vst.msk [vmem:[%s356 + $0x1d8] sm:$0xff] %vm497, %v2472
        %3004 = vst.msk [vmem:[%s356 + $0x1e0] sm:$0xff] %vm497, %v2477
        %3005 = vst.msk [vmem:[%s356 + $0x1e8] sm:$0xff] %vm497, %v2482
        %3006 = vst.msk [vmem:[%s356 + $0x1f0] sm:$0xff] %vm497, %v2487
        %3007 = vst.msk [vmem:[%s356 + $0x1f8] sm:$0xff] %vm497, %v2492
        %3008 = vst.msk [vmem:[%s356 + $0x200] sm:$0xff] %vm497, %v2497
        %3009 = vst.msk [vmem:[%s356 + $0x208] sm:$0xff] %vm497, %v2502
        %3010 = vst.msk [vmem:[%s356 + $0x210] sm:$0xff] %vm497, %v2507
        %3011 = vst.msk [vmem:[%s356 + $0x218] sm:$0xff] %vm497, %v2512
        %3012 = vst.msk [vmem:[%s356 + $0x220] sm:$0xff] %vm497, %v2517
        %3013 = vst.msk [vmem:[%s356 + $0x228] sm:$0xff] %vm497, %v2522
        %3014 = vst.msk [vmem:[%s356 + $0x230] sm:$0xff] %vm497, %v2527
        %3015 = vst.msk [vmem:[%s356 + $0x238] sm:$0xff] %vm497, %v2532
        %3016 = vst.msk [vmem:[%s356 + $0x240] sm:$0xff] %vm497, %v2537
        %3017 = vst.msk [vmem:[%s356 + $0x248] sm:$0xff] %vm497, %v2542
        %3018 = vst.msk [vmem:[%s356 + $0x250] sm:$0xff] %vm497, %v2547
        %3019 = vst.msk [vmem:[%s356 + $0x258] sm:$0xff] %vm497, %v2552
        %3020 = vst.msk [vmem:[%s356 + $0x260] sm:$0xff] %vm497, %v2557
        %3021 = vst.msk [vmem:[%s356 + $0x268] sm:$0xff] %vm497, %v2562
        %3022 = vst.msk [vmem:[%s356 + $0x270] sm:$0xff] %vm497, %v2567
        %3023 = vst.msk [vmem:[%s356 + $0x278] sm:$0xff] %vm497, %v2572
        %3024 = vst.msk [vmem:[%s356 + $0x280] sm:$0xff] %vm497, %v2577
        %3025 = vst.msk [vmem:[%s356 + $0x288] sm:$0xff] %vm497, %v2582
        %3026 = vst.msk [vmem:[%s356 + $0x290] sm:$0xff] %vm497, %v2587
        %3027 = vst.msk [vmem:[%s356 + $0x298] sm:$0xff] %vm497, %v2592
        %3028 = vst.msk [vmem:[%s356 + $0x2a0] sm:$0xff] %vm497, %v2597
        %3029 = vst.msk [vmem:[%s356 + $0x2a8] sm:$0xff] %vm497, %v2602
        %3030 = vst.msk [vmem:[%s356 + $0x2b0] sm:$0xff] %vm497, %v2607
        %3031 = vst.msk [vmem:[%s356 + $0x2b8] sm:$0xff] %vm497, %v2612
        %3032 = vst.msk [vmem:[%s356 + $0x2c0] sm:$0xff] %vm497, %v2617
        %3033 = vst.msk [vmem:[%s356 + $0x2c8] sm:$0xff] %vm497, %v2622
        %3034 = vst.msk [vmem:[%s356 + $0x2d0] sm:$0xff] %vm497, %v2627
        %3035 = vst.msk [vmem:[%s356 + $0x2d8] sm:$0xff] %vm497, %v2632
        %3036 = vst.msk [vmem:[%s356 + $0x2e0] sm:$0xff] %vm497, %v2637
        %3037 = vst.msk [vmem:[%s356 + $0x2e8] sm:$0xff] %vm497, %v2642
        %3038 = vst.msk [vmem:[%s356 + $0x2f0] sm:$0xff] %vm497, %v2647
        %3039 = vst.msk [vmem:[%s356 + $0x2f8] sm:$0xff] %vm497, %v2652
        %3040 = vst.msk [vmem:[%s356 + $0x300] sm:$0xff] %vm497, %v2657
        %3041 = vst.msk [vmem:[%s356 + $0x308] sm:$0xff] %vm497, %v2662
        %3042 = vst.msk [vmem:[%s356 + $0x310] sm:$0xff] %vm497, %v2667
        %3043 = vst.msk [vmem:[%s356 + $0x318] sm:$0xff] %vm497, %v2672
        %3044 = vst.msk [vmem:[%s356 + $0x320] sm:$0xff] %vm497, %v2677
        %3045 = vst.msk [vmem:[%s356 + $0x328] sm:$0xff] %vm497, %v2682
        %3046 = vst.msk [vmem:[%s356 + $0x330] sm:$0xff] %vm497, %v2687
        %3047 = vst.msk [vmem:[%s356 + $0x338] sm:$0xff] %vm497, %v2692
        %3048 = vst.msk [vmem:[%s356 + $0x340] sm:$0xff] %vm497, %v2697
        %3049 = vst.msk [vmem:[%s356 + $0x348] sm:$0xff] %vm497, %v2702
        %3050 = vst.msk [vmem:[%s356 + $0x350] sm:$0xff] %vm497, %v2707
        %3051 = vst.msk [vmem:[%s356 + $0x358] sm:$0xff] %vm497, %v2712
        %3052 = vst.msk [vmem:[%s356 + $0x360] sm:$0xff] %vm497, %v2717
        %3053 = vst.msk [vmem:[%s356 + $0x368] sm:$0xff] %vm497, %v2722
        %3054 = vst.msk [vmem:[%s356 + $0x370] sm:$0xff] %vm497, %v2727
        %3055 = vst.msk [vmem:[%s356 + $0x378] sm:$0xff] %vm497, %v2732
        %3056 = vst.msk [vmem:[%s356 + $0x380] sm:$0xff] %vm497, %v2737
        %3057 = vst.msk [vmem:[%s356 + $0x388] sm:$0xff] %vm497, %v2742
        %3058 = vst.msk [vmem:[%s356 + $0x390] sm:$0xff] %vm497, %v2747
        %3059 = vst.msk [vmem:[%s356 + $0x398] sm:$0xff] %vm497, %v2752
        %3060 = vst.msk [vmem:[%s356 + $0x3a0] sm:$0xff] %vm497, %v2757
        %3061 = vst.msk [vmem:[%s356 + $0x3a8] sm:$0xff] %vm497, %v2762
        %3062 = vst.msk [vmem:[%s356 + $0x3b0] sm:$0xff] %vm497, %v2767
        %3063 = vst.msk [vmem:[%s356 + $0x3b8] sm:$0xff] %vm497, %v2772
        %3064 = vst.msk [vmem:[%s356 + $0x3c0] sm:$0xff] %vm497, %v2777
        %3065 = vst.msk [vmem:[%s356 + $0x3c8] sm:$0xff] %vm497, %v2782
        %3066 = vst.msk [vmem:[%s356 + $0x3d0] sm:$0xff] %vm497, %v2787
        %3067 = vst.msk [vmem:[%s356 + $0x3d8] sm:$0xff] %vm497, %v2792
        %3068 = vst.msk [vmem:[%s356 + $0x3e0] sm:$0xff] %vm497, %v2797
        %3069 = vst.msk [vmem:[%s356 + $0x3e8] sm:$0xff] %vm497, %v2802
        %3070 = vst.msk [vmem:[%s356 + $0x3f0] sm:$0xff] %vm497, %v2807
        %3071 = vst.msk [vmem:[%s356 + $0x3f8] sm:$0xff] %vm497, %v2812
        %s3072 = smul.u32 128, %s21
        %p3073 = scmp.lt.s32.totalorder %s3072, 255
        %s3074 = scalar_select %p3073, %s3072, 255
        %s3075 = smul.addr %s3074, 8
        %s3076 = scalar_lea.vmem %s6, %s3075
        %s3077 = smul.u32 128, %s21
        %p3078 = scmp.lt.s32.totalorder %s3077, 255
        %s3079 = scalar_select %p3078, %s3077, 255
        %s3080 = smul.addr %s3079, 8
        %s3081 = scalar_lea.vmem %s7, %s3080
        // Predicated region
        $region57: #{nonlocal_block_forward.2} parent=43 // pred_check
          %p3082 = pneg %p175
        $region58: #{nonlocal_block_forward.2} parent=43 // pred_check_branch
          %3084 = sbr.rel (%p3082) target = $region60
        $region59: #{nonlocal_block_forward.2} parent=43 // pred_region
          %s3085 = smul.u32 128, %s21
        $region60: #{nonlocal_block_forward.2} parent=43 // pred_fallthru
          _
        // Predicated region
        $region61: #{nonlocal_block_forward.2} parent=43 // pred_check
          %p3086 = pneg %p201
        $region62: #{nonlocal_block_forward.2} parent=43 // pred_check_branch
          %3088 = sbr.rel (%p3086) target = $region64
        $region63: #{nonlocal_block_forward.2} parent=43 // pred_region
          %s3089 = smul.u32 128, %s21
        $region64: #{nonlocal_block_forward.2} parent=43 // pred_fallthru
          _
      $region44: #{nonlocal_block_forward.2} parent=5 // pred_fallthru
        _
      %p3090 = scmp.le.s32.totalorder 2, %s16
      // Predicated region
      $region65: #{nonlocal_block_forward.2} parent=5 // pred_check
        %p3091 = pneg %p3090
      $region66: #{nonlocal_block_forward.2} parent=5 // pred_check_branch
        %3093 = sbr.rel (%p3091) target = $region68
      $region67: #{nonlocal_block_forward.2} parent=5 // pred_region
        %s3094 = ssub.s32 %s16, 2
        // Predicated region
        $region69: #{nonlocal_block_forward.2} parent=67 // pred_check
          %p3095 = pneg %p181
        $region70: #{nonlocal_block_forward.2} parent=67 // pred_check_branch
          %3097 = sbr.rel (%p3095) target = $region72
        $region71: #{nonlocal_block_forward.2} parent=67 // pred_region
          %s3098 = smul.u32 128, %s22
          %p3099 = scmp.lt.s32.totalorder %s3098, 255
          %s3100 = scalar_select %p3099, %s3098, 255
          %s3101 = smul.addr %s3100, 8
          %s3102 = scalar_lea.vmem %s6, %s3101
        $region72: #{nonlocal_block_forward.2} parent=67 // pred_fallthru
          _
        // Predicated region
        $region73: #{nonlocal_block_forward.2} parent=67 // pred_check
          %p3103 = pneg %p207
        $region74: #{nonlocal_block_forward.2} parent=67 // pred_check_branch
          %3105 = sbr.rel (%p3103) target = $region76
        $region75: #{nonlocal_block_forward.2} parent=67 // pred_region
          %s3106 = smul.u32 128, %s22
          %p3107 = scmp.lt.s32.totalorder %s3106, 255
          %s3108 = scalar_select %p3107, %s3106, 255
          %s3109 = smul.addr %s3108, 8
          %s3110 = scalar_lea.vmem %s7, %s3109
        $region76: #{nonlocal_block_forward.2} parent=67 // pred_fallthru
          _
      $region68: #{nonlocal_block_forward.2} parent=5 // pred_fallthru
        _
    $region6: #{nonlocal_block_forward.2} parent=1 // loop_footer
      %s20 = sadd.s32 1, %s16
    $region7: #{nonlocal_block_forward.2} parent=1 // loop_footer_branch
      %15 = sbr.rel target = $region3
    $region8: #{nonlocal_block_forward.2} parent=1 // loop_exit
      _
    %3111 = vsyncpa [#allocation3], 1
    %s3112 = scalar_lea.sflag [#allocation3], 1
    %3113 = vsyncpa %s3112, 1
    %3114 = vsyncpa [#allocation5], 1

</llo_original>
